<compile_context>
chip_gen: v6e
topology: v6e:2x2x1
jax: 0.10.0
libtpu: 0.0.40
codegen_flags: <defaults>
</compile_context>

<pallas_src>
import functools

import jax
import jax.numpy as jnp
from jax.experimental import pallas as pl
from jax.experimental.pallas import tpu as pltpu

_LANE = 128          # TPU lane width; Co is padded to a multiple of this
_EPS = 1e-5          # BatchNorm3d eps (PyTorch default)
_LRELU = 0.2         # LeakyReLU negative slope
_VMEM_LIMIT = 48 * 1024 * 1024   # fits v7x's 64 MiB VMEM with headroom


def _round_up(x, m):
    return (x + m - 1) // m * m


# ----------------------------------------------------------------------------
# Kernel 1: tiled matmul (bf16 in, f32 accumulate) + bias
#           + streamed per-channel sum / sum-of-squares (for BatchNorm)
# ----------------------------------------------------------------------------
def _matmul_kernel(x_ref, w_ref, b_ref, o_ref, s_ref, q_ref, acc_ref):
    @pl.when(pl.program_id(2) == 0)
    def _():
        acc_ref[...] = jnp.zeros_like(acc_ref)

    acc_ref[...] += jnp.dot(x_ref[...], w_ref[...],
                            preferred_element_type=jnp.float32)

    @pl.when(pl.program_id(2) == pl.num_programs(2) - 1)
    def _():
        y = acc_ref[...] + b_ref[...]
        o_ref[...] = y
        # Per-channel partial sums over this M tile, streamed out so
        # BatchNorm never re-reads the full (M, Co) matrix.  Zero-padded rows
        # of the im2col matrix contribute exactly 0 because the BN path uses
        # a zero bias (the stats of biased layers are unused).
        s_ref[...] = jnp.broadcast_to(
            jnp.sum(y, axis=0, keepdims=True), s_ref.shape)
        q_ref[...] = jnp.broadcast_to(
            jnp.sum(y * y, axis=0, keepdims=True), q_ref.shape)


def _fused_matmul(x2d, wmat, bias, *, tm_pref=512, tk_pref=512, tn=_LANE):
    """y = x2d @ wmat + bias  on the MXU (bf16 inputs, f32 accumulation).

    Returns (y_padded[(Mp, Cop) f32], ch_sum[(Cop,)], ch_sumsq[(Cop,)]).
    M/K/Co are zero-padded to the tile grid; the caller slices the result.
    """
    M, K = x2d.shape
    Co = wmat.shape[1]

    tm = min(tm_pref, _round_up(M, 8))
    tk = min(tk_pref, _round_up(K, _LANE))
    Mp, Kp, Cop = _round_up(M, tm), _round_up(K, tk), _round_up(Co, tn)
    gm, gn, gk = Mp // tm, Cop // tn, Kp // tk

    xp = jnp.pad(x2d.astype(jnp.bfloat16), ((0, Mp - M), (0, Kp - K)))
    wp = jnp.pad(wmat.astype(jnp.bfloat16), ((0, Kp - K), (0, Cop - Co)))
    bp = jnp.pad(bias.astype(jnp.float32).reshape(1, Co),
                 ((0, 0), (0, Cop - Co)))

    y, s, q = pl.pallas_call(
        _matmul_kernel,
        out_shape=(jax.ShapeDtypeStruct((Mp, Cop), jnp.float32),
                   jax.ShapeDtypeStruct((gm, 8, Cop), jnp.float32),
                   jax.ShapeDtypeStruct((gm, 8, Cop), jnp.float32)),
        grid=(gm, gn, gk),
        in_specs=[pl.BlockSpec((tm, tk), lambda i, j, k: (i, k)),
                  pl.BlockSpec((tk, tn), lambda i, j, k: (k, j)),
                  pl.BlockSpec((1, tn), lambda i, j, k: (0, j))],
        out_specs=(pl.BlockSpec((tm, tn), lambda i, j, k: (i, j)),
                   pl.BlockSpec((1, 8, tn), lambda i, j, k: (i, 0, j)),
                   pl.BlockSpec((1, 8, tn), lambda i, j, k: (i, 0, j))),
        scratch_shapes=[pltpu.VMEM((tm, tn), jnp.float32)],
        compiler_params=pltpu.CompilerParams(
            dimension_semantics=("parallel", "parallel", "arbitrary"),
            vmem_limit_bytes=_VMEM_LIMIT),
    )(xp, wp, bp)

    ch_sum = jnp.sum(s[:, 0, :], axis=0)
    ch_ssq = jnp.sum(q[:, 0, :], axis=0)
    return y, ch_sum, ch_ssq


# ----------------------------------------------------------------------------
# Kernel 2: fused per-channel scale/shift (folded BatchNorm) + LeakyReLU(0.2)
# ----------------------------------------------------------------------------
def _scale_shift_lrelu_kernel(y_ref, sc_ref, sh_ref, o_ref):
    y = y_ref[...] * sc_ref[...] + sh_ref[...]
    o_ref[...] = jnp.where(y > 0.0, y, _LRELU * y)


def _apply_bn_lrelu(y_pad, scale, shift, m_rows, *, tm_pref=512, tn=_LANE):
    Mp, Cop = y_pad.shape
    tm = min(tm_pref, _round_up(m_rows, 8))   # same tiling rule as pass 1
    gm, gn = Mp // tm, Cop // tn
    return pl.pallas_call(
        _scale_shift_lrelu_kernel,
        out_shape=jax.ShapeDtypeStruct((Mp, Cop), jnp.float32),
        grid=(gm, gn),
        in_specs=[pl.BlockSpec((tm, tn), lambda i, j: (i, j)),
                  pl.BlockSpec((1, tn), lambda i, j: (0, j)),
                  pl.BlockSpec((1, tn), lambda i, j: (0, j))],
        out_specs=pl.BlockSpec((tm, tn), lambda i, j: (i, j)),
        compiler_params=pltpu.CompilerParams(
            dimension_semantics=("parallel", "parallel"),
            vmem_limit_bytes=_VMEM_LIMIT),
    )(y_pad, scale.reshape(1, Cop), shift.reshape(1, Cop))


# ----------------------------------------------------------------------------
# Conv3d / ConvTranspose3d / MaxPool3d built on top of the two kernels
# ----------------------------------------------------------------------------
def _im2col(x, k, pad):
    """x: (N,D,H,W,C) -> bf16 (N*Do*Ho*Wo, k^3*C) patch matrix (consumed
    block-wise by the tiled Pallas matmul)."""
    N, D, H, W, C = x.shape
    x = x.astype(jnp.bfloat16)
    if pad:
        x = jnp.pad(x, ((0, 0), (pad, pad), (pad, pad), (pad, pad), (0, 0)))
    Do, Ho, Wo = D + 2 * pad - k + 1, H + 2 * pad - k + 1, W + 2 * pad - k + 1
    cols = []
    for kd in range(k):
        for kh in range(k):
            for kw in range(k):
                cols.append(x[:, kd:kd + Do, kh:kh + Ho, kw:kw + Wo, :])
    col = jnp.concatenate(cols, axis=-1) if len(cols) > 1 else cols[0]
    return col.reshape(N * Do * Ho * Wo, k * k * k * C), (N, Do, Ho, Wo)


def conv3x3_bn_lrelu(x, p):
    """Conv3d(k=3, pad=1) -> BatchNorm3d (batch stats) -> LeakyReLU(0.2)."""
    Co = p["gamma"].shape[0]
    col, (N, Do, Ho, Wo) = _im2col(x, 3, 1)
    M = N * Do * Ho * Wo
    # Conv bias is omitted: it is exactly cancelled by the BN mean subtraction.
    zero_b = jnp.zeros((Co,), jnp.float32)
    y_pad, ch_sum, ch_ssq = _fused_matmul(col, p["wmat"], zero_b)

    mean = ch_sum[:Co] / M
    var = jnp.maximum(ch_ssq[:Co] / M - mean * mean, 0.0)   # biased (PyTorch)
    scale = p["gamma"] * jax.lax.rsqrt(var + _EPS)
    shift = p["beta"] - mean * scale
    Cop = y_pad.shape[1]
    scale = jnp.pad(scale, (0, Cop - Co))
    shift = jnp.pad(shift, (0, Cop - Co))

    y = _apply_bn_lrelu(y_pad, scale, shift, M)
    return y[:M, :Co].reshape(N, Do, Ho, Wo, Co)


def conv1x1_bias(x, p):
    """Conv3d(k=1) + bias, no normalization / activation (outc layer)."""
    N, D, H, W, C = x.shape
    Co = p["b"].shape[0]
    col = x.astype(jnp.bfloat16).reshape(N * D * H * W, C)
    y_pad, _, _ = _fused_matmul(col, p["wmat"], p["b"])
    M = N * D * H * W
    return y_pad[:M, :Co].reshape(N, D, H, W, Co)


def _dim_taps(parity):
    """(kernel index, input offset) pairs feeding output parity `parity`
    for ConvTranspose(k=3, stride=2, pad=1, output_pad=1) in one dim."""
    return ((1, 0),) if parity == 0 else ((2, 0), (0, 1))


def _phase_taps(pd, ph, pw):
    return [((kd, kh, kw), (od, oh, ow))
            for kd, od in _dim_taps(pd)
            for kh, oh in _dim_taps(ph)
            for kw, ow in _dim_taps(pw)]


def conv_transpose3d(x, p):
    """ConvTranspose3d(k=3, stride=2, pad=1, output_pad=1) via sub-pixel
    phase decomposition (8 small stride-1 convs, interleaved)."""
    N, D, H, W, C = x.shape
    Co = p["b"].shape[0]
    xp = jnp.pad(x.astype(jnp.bfloat16),
                 ((0, 0), (0, 1), (0, 1), (0, 1), (0, 0)))
    M = N * D * H * W
    outs = []
    for pd in (0, 1):
        for ph in (0, 1):
            for pw in (0, 1):
                taps = _phase_taps(pd, ph, pw)
                cols = [xp[:, od:od + D, oh:oh + H, ow:ow + W, :]
                        for _, (od, oh, ow) in taps]
                col = jnp.concatenate(cols, axis=-1) if len(cols) > 1 else cols[0]
                col = col.reshape(M, len(taps) * C)
                y_pad, _, _ = _fused_matmul(col, p["phase_w"][(pd, ph, pw)],
                                            p["b"])
                outs.append(y_pad[:M, :Co].reshape(N, D, H, W, Co))
    y = jnp.stack(outs, axis=0).reshape(2, 2, 2, N, D, H, W, Co)
    y = jnp.transpose(y, (3, 4, 0, 5, 1, 6, 2, 7))
    return y.reshape(N, 2 * D, 2 * H, 2 * W, Co)


def maxpool3d_2(x):
    """MaxPool3d(kernel_size=2, stride=2) on (N,D,H,W,C)."""
    N, D, H, W, C = x.shape
    x = x.reshape(N, D // 2, 2, H // 2, 2, W // 2, 2, C)
    return jnp.max(x, axis=(2, 4, 6))


# ----------------------------------------------------------------------------
# Deterministic parameter init (pre-laid-out matmul weights, bf16)
# ----------------------------------------------------------------------------
def _conv_matmul_weight(w, k):
    """PyTorch (Co,Ci,k,k,k) -> (k^3*Ci, Co) matching _im2col ordering."""
    co, ci = w.shape[0], w.shape[1]
    return jnp.transpose(w, (2, 3, 4, 1, 0)).reshape(k ** 3 * ci, co)


def _conv_bn_params(key, ci, co, k=3):
    fan_in = ci * k ** 3
    w = jax.random.normal(key, (co, ci, k, k, k), jnp.float32) / jnp.sqrt(
        float(fan_in))
    return {"wmat": _conv_matmul_weight(w, k).astype(jnp.bfloat16),
            "gamma": jnp.ones((co,), jnp.float32),
            "beta": jnp.zeros((co,), jnp.float32)}


def _conv_bias_params(key, ci, co, k):
    kw, kb = jax.random.split(key)
    fan_in = ci * k ** 3
    w = jax.random.normal(kw, (co, ci, k, k, k), jnp.float32) / jnp.sqrt(
        float(fan_in))
    b = jax.random.normal(kb, (co,), jnp.float32) * 0.01
    return {"wmat": _conv_matmul_weight(w, k).astype(jnp.bfloat16), "b": b}


def _convt_params(key, ci, co):
    kw, kb = jax.random.split(key)
    fan_in = ci * 27
    w_t = jax.random.normal(kw, (ci, co, 3, 3, 3), jnp.float32) / jnp.sqrt(
        float(fan_in))                                  # PyTorch (Ci,Co,k,k,k)
    b = jax.random.normal(kb, (co,), jnp.float32) * 0.01
    phase_w = {}
    for pd in (0, 1):
        for ph in (0, 1):
            for pw in (0, 1):
                mats = [w_t[:, :, kd, kh, kw]
                        for (kd, kh, kw), _ in _phase_taps(pd, ph, pw)]
                phase_w[(pd, ph, pw)] = jnp.concatenate(
                    mats, axis=0).astype(jnp.bfloat16)
    return {"phase_w": phase_w, "b": b}


def init_unet3d_params(key, in_ch, out_ch, level, init_ch):
    chs = [in_ch] + [(2 ** i) * init_ch for i in range(level)]
    keys = iter(jax.random.split(key, 2 * level + 3 * (level - 1) + 1))
    params = {"down": [], "up": []}
    for i in range(level):
        params["down"].append({
            "conv1": _conv_bn_params(next(keys), chs[i], chs[i + 1]),
            "conv2": _conv_bn_params(next(keys), chs[i + 1], chs[i + 1]),
        })
    for i in range(level - 1):
        ci, co = chs[level - i], chs[level - 1 - i]
        params["up"].append({
            "upconv": _convt_params(next(keys), ci, co),
            "conv1": _conv_bn_params(next(keys), ci, co),   # in = cat(co, co)
            "conv2": _conv_bn_params(next(keys), co, co),
        })
    params["outc"] = _conv_bias_params(next(keys), chs[1], out_ch, k=1)
    return params, chs


# ----------------------------------------------------------------------------
# Unet3D forward (mirrors the PyTorch module)
# ----------------------------------------------------------------------------
def unet3d_forward(params, x_ncdhw, level):
    to_ndhwc = lambda a: jnp.transpose(a, (0, 2, 3, 4, 1))
    to_ncdhw = lambda a: jnp.transpose(a, (0, 4, 1, 2, 3))

    x = to_ndhwc(x_ncdhw).astype(jnp.float32)
    xs = [x]
    for i in range(level):
        h = xs[i] if i == 0 else maxpool3d_2(xs[i])   # first block: no pooling
        dp = params["down"][i]
        h = conv3x3_bn_lrelu(h, dp["conv1"])
        h = conv3x3_bn_lrelu(h, dp["conv2"])
        xs.append(h)

    x = xs[-1]
    decoder_feat = [x]
    for i in range(level - 1):
        up = params["up"][i]
        x1 = conv_transpose3d(x, up["upconv"])
        x2 = xs[level - 1 - i]
        x = jnp.concatenate([x1, x2], axis=-1)        # torch.cat((x1, x2), 1)
        x = conv3x3_bn_lrelu(x, up["conv1"])
        x = conv3x3_bn_lrelu(x, up["conv2"])
        decoder_feat.append(x)

    tisse_seg = conv1x1_bias(x, params["outc"])
    return to_ncdhw(tisse_seg), [to_ncdhw(f) for f in decoder_feat]


# ----------------------------------------------------------------------------
if __name__ == "__main__":
    # Small shapes consistent with the module: Unet3D(in_ch=2, out_ch=3, level=3, init_ch=4)
    IN_CH, OUT_CH, LEVEL, INIT_CH = 2, 3, 3, 4
    N, D, H, W = 1, 8, 8, 8

    key = jax.random.PRNGKey(0)
    pkey, xkey = jax.random.split(key)
    params, chs = init_unet3d_params(pkey, IN_CH, OUT_CH, LEVEL, INIT_CH)

    x = jax.random.normal(xkey, (N, IN_CH, D, H, W), jnp.float32)

    fwd = jax.jit(functools.partial(unet3d_forward, level=LEVEL))
    tisse_seg, decoder_feat = fwd(params, x)
    tisse_seg = jax.block_until_ready(tisse_seg)
    decoder_feat = [jax.block_until_ready(f) for f in decoder_feat]

    assert tisse_seg.shape == (N, OUT_CH, D, H, W), tisse_seg.shape
    assert decoder_feat[0].shape == (N, chs[-1], D // 4, H // 4, W // 4)
    assert decoder_feat[-1].shape == (N, chs[1], D, H, W)
    assert bool(jnp.all(jnp.isfinite(tisse_seg)))

    print("KERNEL_OK")
</pallas_src>

<mosaic_0001>
module attributes {stable_mosaic.version = 11 : i64} {
  func.func @_scale_shift_lrelu_kernel(%arg0: i32, %arg1: i32, %arg2: memref<512x128xf32, #tpu.memory_space<vmem>>, %arg3: memref<1x128xf32, #tpu.memory_space<vmem>>, %arg4: memref<1x128xf32, #tpu.memory_space<vmem>>, %arg5: memref<512x128xf32, #tpu.memory_space<vmem>>) attributes {dimension_semantics = [#tpu.dimension_semantics<parallel>, #tpu.dimension_semantics<parallel>], iteration_bounds = array<i64: 1, 1>, scalar_prefetch = 0 : i64, scratch_operands = 0 : i64, tpu.core_type = #tpu.core_type<tc>, window_params = [{transform_indices = @transform_0, window_bounds = array<i64: 512, 128>}, {transform_indices = @transform_1, window_bounds = array<i64: 1, 128>}, {transform_indices = @transform_2, window_bounds = array<i64: 1, 128>}, {transform_indices = @transform_3, window_bounds = array<i64: 512, 128>}]} {
    %c0 = arith.constant 0 : index
    %c0_0 = arith.constant 0 : index
    %0 = vector.load %arg2[%c0, %c0_0] : memref<512x128xf32, #tpu.memory_space<vmem>>, vector<512x128xf32>
    %c0_1 = arith.constant 0 : index
    %c0_2 = arith.constant 0 : index
    %1 = vector.load %arg3[%c0_1, %c0_2] : memref<1x128xf32, #tpu.memory_space<vmem>>, vector<1x128xf32>
    %2 = vector.broadcast %1 : vector<1x128xf32> to vector<512x128xf32>
    %3 = arith.mulf %0, %2 : vector<512x128xf32>
    %c0_3 = arith.constant 0 : index
    %c0_4 = arith.constant 0 : index
    %4 = vector.load %arg4[%c0_3, %c0_4] : memref<1x128xf32, #tpu.memory_space<vmem>>, vector<1x128xf32>
    %5 = vector.broadcast %4 : vector<1x128xf32> to vector<512x128xf32>
    %6 = arith.addf %3, %5 : vector<512x128xf32>
    %cst = arith.constant 0.000000e+00 : f32
    %7 = vector.broadcast %cst : f32 to vector<512x128xf32>
    %8 = arith.cmpf ogt, %6, %7 : vector<512x128xf32>
    %cst_5 = arith.constant 2.000000e-01 : f32
    %9 = vector.broadcast %cst_5 : f32 to vector<512x128xf32>
    %10 = arith.mulf %9, %6 : vector<512x128xf32>
    %11 = arith.select %8, %6, %10 : vector<512x128xi1>, vector<512x128xf32>
    %c0_6 = arith.constant 0 : index
    %c0_7 = arith.constant 0 : index
    %12 = vector.load %arg5[%c0_6, %c0_7] : memref<512x128xf32, #tpu.memory_space<vmem>>, vector<512x128xf32>
    tpu.vector_store %arg5[%c0_6, %c0_7], %11 {strides = array<i32>} : memref<512x128xf32, #tpu.memory_space<vmem>>, vector<512x128xf32>,
    return
  }
  func.func @transform_0(%arg0: i32, %arg1: i32) -> (i32, i32) {
    %c0_i32 = arith.constant 0 : i32
    return %arg0, %arg1 : i32, i32
  }
  func.func @transform_1(%arg0: i32, %arg1: i32) -> (i32, i32) {
    %c0_i32 = arith.constant 0 : i32
    %c0_i32_0 = arith.constant 0 : i32
    return %c0_i32, %arg1 : i32, i32
  }
  func.func @transform_2(%arg0: i32, %arg1: i32) -> (i32, i32) {
    %c0_i32 = arith.constant 0 : i32
    %c0_i32_0 = arith.constant 0 : i32
    return %c0_i32, %arg1 : i32, i32
  }
  func.func @transform_3(%arg0: i32, %arg1: i32) -> (i32, i32) {
    %c0_i32 = arith.constant 0 : i32
    return %arg0, %arg1 : i32, i32
  }
}

module attributes {stable_mosaic.version = 11 : i64} {
  func.func @_matmul_kernel(%arg0: i32, %arg1: i32, %arg2: i32, %arg3: memref<512x128xbf16, #tpu.memory_space<vmem>>, %arg4: memref<128x128xbf16, #tpu.memory_space<vmem>>, %arg5: memref<1x128xf32, #tpu.memory_space<vmem>>, %arg6: memref<512x128xf32, #tpu.memory_space<vmem>>, %arg7: memref<1x8x128xf32, #tpu.memory_space<vmem>>, %arg8: memref<1x8x128xf32, #tpu.memory_space<vmem>>, %arg9: memref<512x128xf32, #tpu.memory_space<vmem>>) attributes {dimension_semantics = [#tpu.dimension_semantics<parallel>, #tpu.dimension_semantics<parallel>, #tpu.dimension_semantics<arbitrary>], iteration_bounds = array<i64: 1, 1, 1>, scalar_prefetch = 0 : i64, scratch_operands = 1 : i64, tpu.core_type = #tpu.core_type<tc>, window_params = [{transform_indices = @transform_0, window_bounds = array<i64: 512, 128>}, {transform_indices = @transform_1, window_bounds = array<i64: 128, 128>}, {transform_indices = @transform_2, window_bounds = array<i64: 1, 128>}, {transform_indices = @transform_3, window_bounds = array<i64: 512, 128>}, {transform_indices = @transform_4, window_bounds = array<i64: 1, 8, 128>}, {transform_indices = @transform_5, window_bounds = array<i64: 1, 8, 128>}]} {
    %c0_i32 = arith.constant 0 : i32
    %0 = arith.cmpi eq, %arg2, %c0_i32 : i32
    %1 = arith.extui %0 : i1 to i32
    %c0_i32_0 = arith.constant 0 : i32
    %2 = arith.cmpi ne, %1, %c0_i32_0 : i32
    scf.if %2 {
      %cst_10 = arith.constant 0.000000e+00 : f32
      %12 = vector.broadcast %cst_10 : f32 to vector<512x128xf32>
      %c0_11 = arith.constant 0 : index
      %c0_12 = arith.constant 0 : index
      %13 = vector.load %arg9[%c0_11, %c0_12] : memref<512x128xf32, #tpu.memory_space<vmem>>, vector<512x128xf32>
      tpu.vector_store %arg9[%c0_11, %c0_12], %12 {strides = array<i32>} : memref<512x128xf32, #tpu.memory_space<vmem>>, vector<512x128xf32>,
    } else {
    }
    %c0 = arith.constant 0 : index
    %c0_1 = arith.constant 0 : index
    %3 = vector.load %arg9[%c0, %c0_1] : memref<512x128xf32, #tpu.memory_space<vmem>>, vector<512x128xf32>
    %c0_2 = arith.constant 0 : index
    %c0_3 = arith.constant 0 : index
    %4 = vector.load %arg3[%c0_2, %c0_3] : memref<512x128xbf16, #tpu.memory_space<vmem>>, vector<512x128xbf16>
    %c0_4 = arith.constant 0 : index
    %c0_5 = arith.constant 0 : index
    %5 = vector.load %arg4[%c0_4, %c0_5] : memref<128x128xbf16, #tpu.memory_space<vmem>>, vector<128x128xbf16>
    %cst = arith.constant dense<0.000000e+00> : vector<512x128xf32>
    %6 = tpu.matmul %4, %5, %cst {dimension_numbers = #tpu.dot_dimension_numbers<[1], [0], [0], [1], [0, 0, 1, 1], [], []>} : vector<512x128xbf16>, vector<128x128xbf16>, vector<512x128xf32> -> vector<512x128xf32>
    %7 = arith.addf %3, %6 : vector<512x128xf32>
    %c0_6 = arith.constant 0 : index
    %c0_7 = arith.constant 0 : index
    %8 = vector.load %arg9[%c0_6, %c0_7] : memref<512x128xf32, #tpu.memory_space<vmem>>, vector<512x128xf32>
    tpu.vector_store %arg9[%c0_6, %c0_7], %7 {strides = array<i32>} : memref<512x128xf32, #tpu.memory_space<vmem>>, vector<512x128xf32>,
    %c0_i32_8 = arith.constant 0 : i32
    %9 = arith.cmpi eq, %arg2, %c0_i32_8 : i32
    %10 = arith.extui %9 : i1 to i32
    %c0_i32_9 = arith.constant 0 : i32
    %11 = arith.cmpi ne, %10, %c0_i32_9 : i32
    scf.if %11 {
      %c0_10 = arith.constant 0 : index
      %c0_11 = arith.constant 0 : index
      %12 = vector.load %arg9[%c0_10, %c0_11] : memref<512x128xf32, #tpu.memory_space<vmem>>, vector<512x128xf32>
      %c0_12 = arith.constant 0 : index
      %c0_13 = arith.constant 0 : index
      %13 = vector.load %arg5[%c0_12, %c0_13] : memref<1x128xf32, #tpu.memory_space<vmem>>, vector<1x128xf32>
      %14 = vector.broadcast %13 : vector<1x128xf32> to vector<512x128xf32>
      %15 = arith.addf %12, %14 : vector<512x128xf32>
      %c0_14 = arith.constant 0 : index
      %c0_15 = arith.constant 0 : index
      %16 = vector.load %arg6[%c0_14, %c0_15] : memref<512x128xf32, #tpu.memory_space<vmem>>, vector<512x128xf32>
      tpu.vector_store %arg6[%c0_14, %c0_15], %15 {strides = array<i32>} : memref<512x128xf32, #tpu.memory_space<vmem>>, vector<512x128xf32>,
      %cst_16 = arith.constant dense<0.000000e+00> : vector<128xf32>
      %17 = vector.multi_reduction <add>, %15, %cst_16 [0] : vector<512x128xf32> to vector<128xf32>
      %18 = vector.shape_cast %17 : vector<128xf32> to vector<1x128xf32>
      %19 = vector.shape_cast %18 : vector<1x128xf32> to vector<1x1x128xf32>
      %20 = vector.broadcast %19 : vector<1x1x128xf32> to vector<1x8x128xf32>
      %c0_17 = arith.constant 0 : index
      %c0_18 = arith.constant 0 : index
      %c0_19 = arith.constant 0 : index
      %21 = vector.load %arg7[%c0_17, %c0_18, %c0_19] : memref<1x8x128xf32, #tpu.memory_space<vmem>>, vector<1x8x128xf32>
      tpu.vector_store %arg7[%c0_17, %c0_18, %c0_19], %20 {strides = array<i32>} : memref<1x8x128xf32, #tpu.memory_space<vmem>>, vector<1x8x128xf32>,
      %22 = arith.mulf %15, %15 : vector<512x128xf32>
      %cst_20 = arith.constant dense<0.000000e+00> : vector<128xf32>
      %23 = vector.multi_reduction <add>, %22, %cst_20 [0] : vector<512x128xf32> to vector<128xf32>
      %24 = vector.shape_cast %23 : vector<128xf32> to vector<1x128xf32>
      %25 = vector.shape_cast %24 : vector<1x128xf32> to vector<1x1x128xf32>
      %26 = vector.broadcast %25 : vector<1x1x128xf32> to vector<1x8x128xf32>
      %c0_21 = arith.constant 0 : index
      %c0_22 = arith.constant 0 : index
      %c0_23 = arith.constant 0 : index
      %27 = vector.load %arg8[%c0_21, %c0_22, %c0_23] : memref<1x8x128xf32, #tpu.memory_space<vmem>>, vector<1x8x128xf32>
      tpu.vector_store %arg8[%c0_21, %c0_22, %c0_23], %26 {strides = array<i32>} : memref<1x8x128xf32, #tpu.memory_space<vmem>>, vector<1x8x128xf32>,
    } else {
    }
    return
  }
  func.func @transform_0(%arg0: i32, %arg1: i32, %arg2: i32) -> (i32, i32) {
    %c0_i32 = arith.constant 0 : i32
    return %arg0, %arg2 : i32, i32
  }
  func.func @transform_1(%arg0: i32, %arg1: i32, %arg2: i32) -> (i32, i32) {
    %c0_i32 = arith.constant 0 : i32
    return %arg2, %arg1 : i32, i32
  }
  func.func @transform_2(%arg0: i32, %arg1: i32, %arg2: i32) -> (i32, i32) {
    %c0_i32 = arith.constant 0 : i32
    %c0_i32_0 = arith.constant 0 : i32
    return %c0_i32, %arg1 : i32, i32
  }
  func.func @transform_3(%arg0: i32, %arg1: i32, %arg2: i32) -> (i32, i32) {
    %c0_i32 = arith.constant 0 : i32
    return %arg0, %arg1 : i32, i32
  }
  func.func @transform_4(%arg0: i32, %arg1: i32, %arg2: i32) -> (i32, i32, i32) {
    %c0_i32 = arith.constant 0 : i32
    %c0_i32_0 = arith.constant 0 : i32
    return %arg0, %c0_i32, %arg1 : i32, i32, i32
  }
  func.func @transform_5(%arg0: i32, %arg1: i32, %arg2: i32) -> (i32, i32, i32) {
    %c0_i32 = arith.constant 0 : i32
    %c0_i32_0 = arith.constant 0 : i32
    return %arg0, %c0_i32, %arg1 : i32, i32, i32
  }
}

module attributes {stable_mosaic.version = 11 : i64} {
  func.func @_matmul_kernel(%arg0: i32, %arg1: i32, %arg2: i32, %arg3: memref<64x128xbf16, #tpu.memory_space<vmem>>, %arg4: memref<128x128xbf16, #tpu.memory_space<vmem>>, %arg5: memref<1x128xf32, #tpu.memory_space<vmem>>, %arg6: memref<64x128xf32, #tpu.memory_space<vmem>>, %arg7: memref<1x8x128xf32, #tpu.memory_space<vmem>>, %arg8: memref<1x8x128xf32, #tpu.memory_space<vmem>>, %arg9: memref<64x128xf32, #tpu.memory_space<vmem>>) attributes {dimension_semantics = [#tpu.dimension_semantics<parallel>, #tpu.dimension_semantics<parallel>, #tpu.dimension_semantics<arbitrary>], iteration_bounds = array<i64: 1, 1, 1>, scalar_prefetch = 0 : i64, scratch_operands = 1 : i64, tpu.core_type = #tpu.core_type<tc>, window_params = [{transform_indices = @transform_0, window_bounds = array<i64: 64, 128>}, {transform_indices = @transform_1, window_bounds = array<i64: 128, 128>}, {transform_indices = @transform_2, window_bounds = array<i64: 1, 128>}, {transform_indices = @transform_3, window_bounds = array<i64: 64, 128>}, {transform_indices = @transform_4, window_bounds = array<i64: 1, 8, 128>}, {transform_indices = @transform_5, window_bounds = array<i64: 1, 8, 128>}]} {
    %c0_i32 = arith.constant 0 : i32
    %0 = arith.cmpi eq, %arg2, %c0_i32 : i32
    %1 = arith.extui %0 : i1 to i32
    %c0_i32_0 = arith.constant 0 : i32
    %2 = arith.cmpi ne, %1, %c0_i32_0 : i32
    scf.if %2 {
      %cst_10 = arith.constant 0.000000e+00 : f32
      %12 = vector.broadcast %cst_10 : f32 to vector<64x128xf32>
      %c0_11 = arith.constant 0 : index
      %c0_12 = arith.constant 0 : index
      %13 = vector.load %arg9[%c0_11, %c0_12] : memref<64x128xf32, #tpu.memory_space<vmem>>, vector<64x128xf32>
      tpu.vector_store %arg9[%c0_11, %c0_12], %12 {strides = array<i32>} : memref<64x128xf32, #tpu.memory_space<vmem>>, vector<64x128xf32>,
    } else {
    }
    %c0 = arith.constant 0 : index
    %c0_1 = arith.constant 0 : index
    %3 = vector.load %arg9[%c0, %c0_1] : memref<64x128xf32, #tpu.memory_space<vmem>>, vector<64x128xf32>
    %c0_2 = arith.constant 0 : index
    %c0_3 = arith.constant 0 : index
    %4 = vector.load %arg3[%c0_2, %c0_3] : memref<64x128xbf16, #tpu.memory_space<vmem>>, vector<64x128xbf16>
    %c0_4 = arith.constant 0 : index
    %c0_5 = arith.constant 0 : index
    %5 = vector.load %arg4[%c0_4, %c0_5] : memref<128x128xbf16, #tpu.memory_space<vmem>>, vector<128x128xbf16>
    %cst = arith.constant dense<0.000000e+00> : vector<64x128xf32>
    %6 = tpu.matmul %4, %5, %cst {dimension_numbers = #tpu.dot_dimension_numbers<[1], [0], [0], [1], [0, 0, 1, 1], [], []>} : vector<64x128xbf16>, vector<128x128xbf16>, vector<64x128xf32> -> vector<64x128xf32>
    %7 = arith.addf %3, %6 : vector<64x128xf32>
    %c0_6 = arith.constant 0 : index
    %c0_7 = arith.constant 0 : index
    %8 = vector.load %arg9[%c0_6, %c0_7] : memref<64x128xf32, #tpu.memory_space<vmem>>, vector<64x128xf32>
    tpu.vector_store %arg9[%c0_6, %c0_7], %7 {strides = array<i32>} : memref<64x128xf32, #tpu.memory_space<vmem>>, vector<64x128xf32>,
    %c0_i32_8 = arith.constant 0 : i32
    %9 = arith.cmpi eq, %arg2, %c0_i32_8 : i32
    %10 = arith.extui %9 : i1 to i32
    %c0_i32_9 = arith.constant 0 : i32
    %11 = arith.cmpi ne, %10, %c0_i32_9 : i32
    scf.if %11 {
      %c0_10 = arith.constant 0 : index
      %c0_11 = arith.constant 0 : index
      %12 = vector.load %arg9[%c0_10, %c0_11] : memref<64x128xf32, #tpu.memory_space<vmem>>, vector<64x128xf32>
      %c0_12 = arith.constant 0 : index
      %c0_13 = arith.constant 0 : index
      %13 = vector.load %arg5[%c0_12, %c0_13] : memref<1x128xf32, #tpu.memory_space<vmem>>, vector<1x128xf32>
      %14 = vector.broadcast %13 : vector<1x128xf32> to vector<64x128xf32>
      %15 = arith.addf %12, %14 : vector<64x128xf32>
      %c0_14 = arith.constant 0 : index
      %c0_15 = arith.constant 0 : index
      %16 = vector.load %arg6[%c0_14, %c0_15] : memref<64x128xf32, #tpu.memory_space<vmem>>, vector<64x128xf32>
      tpu.vector_store %arg6[%c0_14, %c0_15], %15 {strides = array<i32>} : memref<64x128xf32, #tpu.memory_space<vmem>>, vector<64x128xf32>,
      %cst_16 = arith.constant dense<0.000000e+00> : vector<128xf32>
      %17 = vector.multi_reduction <add>, %15, %cst_16 [0] : vector<64x128xf32> to vector<128xf32>
      %18 = vector.shape_cast %17 : vector<128xf32> to vector<1x128xf32>
      %19 = vector.shape_cast %18 : vector<1x128xf32> to vector<1x1x128xf32>
      %20 = vector.broadcast %19 : vector<1x1x128xf32> to vector<1x8x128xf32>
      %c0_17 = arith.constant 0 : index
      %c0_18 = arith.constant 0 : index
      %c0_19 = arith.constant 0 : index
      %21 = vector.load %arg7[%c0_17, %c0_18, %c0_19] : memref<1x8x128xf32, #tpu.memory_space<vmem>>, vector<1x8x128xf32>
      tpu.vector_store %arg7[%c0_17, %c0_18, %c0_19], %20 {strides = array<i32>} : memref<1x8x128xf32, #tpu.memory_space<vmem>>, vector<1x8x128xf32>,
      %22 = arith.mulf %15, %15 : vector<64x128xf32>
      %cst_20 = arith.constant dense<0.000000e+00> : vector<128xf32>
      %23 = vector.multi_reduction <add>, %22, %cst_20 [0] : vector<64x128xf32> to vector<128xf32>
      %24 = vector.shape_cast %23 : vector<128xf32> to vector<1x128xf32>
      %25 = vector.shape_cast %24 : vector<1x128xf32> to vector<1x1x128xf32>
      %26 = vector.broadcast %25 : vector<1x1x128xf32> to vector<1x8x128xf32>
      %c0_21 = arith.constant 0 : index
      %c0_22 = arith.constant 0 : index
      %c0_23 = arith.constant 0 : index
      %27 = vector.load %arg8[%c0_21, %c0_22, %c0_23] : memref<1x8x128xf32, #tpu.memory_space<vmem>>, vector<1x8x128xf32>
      tpu.vector_store %arg8[%c0_21, %c0_22, %c0_23], %26 {strides = array<i32>} : memref<1x8x128xf32, #tpu.memory_space<vmem>>, vector<1x8x128xf32>,
    } else {
    }
    return
  }
  func.func @transform_0(%arg0: i32, %arg1: i32, %arg2: i32) -> (i32, i32) {
    %c0_i32 = arith.constant 0 : i32
    return %arg0, %arg2 : i32, i32
  }
  func.func @transform_1(%arg0: i32, %arg1: i32, %arg2: i32) -> (i32, i32) {
    %c0_i32 = arith.constant 0 : i32
    return %arg2, %arg1 : i32, i32
  }
  func.func @transform_2(%arg0: i32, %arg1: i32, %arg2: i32) -> (i32, i32) {
    %c0_i32 = arith.constant 0 : i32
    %c0_i32_0 = arith.constant 0 : i32
    return %c0_i32, %arg1 : i32, i32
  }
  func.func @transform_3(%arg0: i32, %arg1: i32, %arg2: i32) -> (i32, i32) {
    %c0_i32 = arith.constant 0 : i32
    return %arg0, %arg1 : i32, i32
  }
  func.func @transform_4(%arg0: i32, %arg1: i32, %arg2: i32) -> (i32, i32, i32) {
    %c0_i32 = arith.constant 0 : i32
    %c0_i32_0 = arith.constant 0 : i32
    return %arg0, %c0_i32, %arg1 : i32, i32, i32
  }
  func.func @transform_5(%arg0: i32, %arg1: i32, %arg2: i32) -> (i32, i32, i32) {
    %c0_i32 = arith.constant 0 : i32
    %c0_i32_0 = arith.constant 0 : i32
    return %arg0, %c0_i32, %arg1 : i32, i32, i32
  }
}

module attributes {stable_mosaic.version = 11 : i64} {
  func.func @_scale_shift_lrelu_kernel(%arg0: i32, %arg1: i32, %arg2: memref<64x128xf32, #tpu.memory_space<vmem>>, %arg3: memref<1x128xf32, #tpu.memory_space<vmem>>, %arg4: memref<1x128xf32, #tpu.memory_space<vmem>>, %arg5: memref<64x128xf32, #tpu.memory_space<vmem>>) attributes {dimension_semantics = [#tpu.dimension_semantics<parallel>, #tpu.dimension_semantics<parallel>], iteration_bounds = array<i64: 1, 1>, scalar_prefetch = 0 : i64, scratch_operands = 0 : i64, tpu.core_type = #tpu.core_type<tc>, window_params = [{transform_indices = @transform_0, window_bounds = array<i64: 64, 128>}, {transform_indices = @transform_1, window_bounds = array<i64: 1, 128>}, {transform_indices = @transform_2, window_bounds = array<i64: 1, 128>}, {transform_indices = @transform_3, window_bounds = array<i64: 64, 128>}]} {
    %c0 = arith.constant 0 : index
    %c0_0 = arith.constant 0 : index
    %0 = vector.load %arg2[%c0, %c0_0] : memref<64x128xf32, #tpu.memory_space<vmem>>, vector<64x128xf32>
    %c0_1 = arith.constant 0 : index
    %c0_2 = arith.constant 0 : index
    %1 = vector.load %arg3[%c0_1, %c0_2] : memref<1x128xf32, #tpu.memory_space<vmem>>, vector<1x128xf32>
    %2 = vector.broadcast %1 : vector<1x128xf32> to vector<64x128xf32>
    %3 = arith.mulf %0, %2 : vector<64x128xf32>
    %c0_3 = arith.constant 0 : index
    %c0_4 = arith.constant 0 : index
    %4 = vector.load %arg4[%c0_3, %c0_4] : memref<1x128xf32, #tpu.memory_space<vmem>>, vector<1x128xf32>
    %5 = vector.broadcast %4 : vector<1x128xf32> to vector<64x128xf32>
    %6 = arith.addf %3, %5 : vector<64x128xf32>
    %cst = arith.constant 0.000000e+00 : f32
    %7 = vector.broadcast %cst : f32 to vector<64x128xf32>
    %8 = arith.cmpf ogt, %6, %7 : vector<64x128xf32>
    %cst_5 = arith.constant 2.000000e-01 : f32
    %9 = vector.broadcast %cst_5 : f32 to vector<64x128xf32>
    %10 = arith.mulf %9, %6 : vector<64x128xf32>
    %11 = arith.select %8, %6, %10 : vector<64x128xi1>, vector<64x128xf32>
    %c0_6 = arith.constant 0 : index
    %c0_7 = arith.constant 0 : index
    %12 = vector.load %arg5[%c0_6, %c0_7] : memref<64x128xf32, #tpu.memory_space<vmem>>, vector<64x128xf32>
    tpu.vector_store %arg5[%c0_6, %c0_7], %11 {strides = array<i32>} : memref<64x128xf32, #tpu.memory_space<vmem>>, vector<64x128xf32>,
    return
  }
  func.func @transform_0(%arg0: i32, %arg1: i32) -> (i32, i32) {
    %c0_i32 = arith.constant 0 : i32
    return %arg0, %arg1 : i32, i32
  }
  func.func @transform_1(%arg0: i32, %arg1: i32) -> (i32, i32) {
    %c0_i32 = arith.constant 0 : i32
    %c0_i32_0 = arith.constant 0 : i32
    return %c0_i32, %arg1 : i32, i32
  }
  func.func @transform_2(%arg0: i32, %arg1: i32) -> (i32, i32) {
    %c0_i32 = arith.constant 0 : i32
    %c0_i32_0 = arith.constant 0 : i32
    return %c0_i32, %arg1 : i32, i32
  }
  func.func @transform_3(%arg0: i32, %arg1: i32) -> (i32, i32) {
    %c0_i32 = arith.constant 0 : i32
    return %arg0, %arg1 : i32, i32
  }
}

module attributes {stable_mosaic.version = 11 : i64} {
  func.func @_matmul_kernel(%arg0: i32, %arg1: i32, %arg2: i32, %arg3: memref<64x256xbf16, #tpu.memory_space<vmem>>, %arg4: memref<256x128xbf16, #tpu.memory_space<vmem>>, %arg5: memref<1x128xf32, #tpu.memory_space<vmem>>, %arg6: memref<64x128xf32, #tpu.memory_space<vmem>>, %arg7: memref<1x8x128xf32, #tpu.memory_space<vmem>>, %arg8: memref<1x8x128xf32, #tpu.memory_space<vmem>>, %arg9: memref<64x128xf32, #tpu.memory_space<vmem>>) attributes {dimension_semantics = [#tpu.dimension_semantics<parallel>, #tpu.dimension_semantics<parallel>, #tpu.dimension_semantics<arbitrary>], iteration_bounds = array<i64: 1, 1, 1>, scalar_prefetch = 0 : i64, scratch_operands = 1 : i64, tpu.core_type = #tpu.core_type<tc>, window_params = [{transform_indices = @transform_0, window_bounds = array<i64: 64, 256>}, {transform_indices = @transform_1, window_bounds = array<i64: 256, 128>}, {transform_indices = @transform_2, window_bounds = array<i64: 1, 128>}, {transform_indices = @transform_3, window_bounds = array<i64: 64, 128>}, {transform_indices = @transform_4, window_bounds = array<i64: 1, 8, 128>}, {transform_indices = @transform_5, window_bounds = array<i64: 1, 8, 128>}]} {
    %c0_i32 = arith.constant 0 : i32
    %0 = arith.cmpi eq, %arg2, %c0_i32 : i32
    %1 = arith.extui %0 : i1 to i32
    %c0_i32_0 = arith.constant 0 : i32
    %2 = arith.cmpi ne, %1, %c0_i32_0 : i32
    scf.if %2 {
      %cst_10 = arith.constant 0.000000e+00 : f32
      %12 = vector.broadcast %cst_10 : f32 to vector<64x128xf32>
      %c0_11 = arith.constant 0 : index
      %c0_12 = arith.constant 0 : index
      %13 = vector.load %arg9[%c0_11, %c0_12] : memref<64x128xf32, #tpu.memory_space<vmem>>, vector<64x128xf32>
      tpu.vector_store %arg9[%c0_11, %c0_12], %12 {strides = array<i32>} : memref<64x128xf32, #tpu.memory_space<vmem>>, vector<64x128xf32>,
    } else {
    }
    %c0 = arith.constant 0 : index
    %c0_1 = arith.constant 0 : index
    %3 = vector.load %arg9[%c0, %c0_1] : memref<64x128xf32, #tpu.memory_space<vmem>>, vector<64x128xf32>
    %c0_2 = arith.constant 0 : index
    %c0_3 = arith.constant 0 : index
    %4 = vector.load %arg3[%c0_2, %c0_3] : memref<64x256xbf16, #tpu.memory_space<vmem>>, vector<64x256xbf16>
    %c0_4 = arith.constant 0 : index
    %c0_5 = arith.constant 0 : index
    %5 = vector.load %arg4[%c0_4, %c0_5] : memref<256x128xbf16, #tpu.memory_space<vmem>>, vector<256x128xbf16>
    %cst = arith.constant dense<0.000000e+00> : vector<64x128xf32>
    %6 = tpu.matmul %4, %5, %cst {dimension_numbers = #tpu.dot_dimension_numbers<[1], [0], [0], [1], [0, 0, 1, 1], [], []>} : vector<64x256xbf16>, vector<256x128xbf16>, vector<64x128xf32> -> vector<64x128xf32>
    %7 = arith.addf %3, %6 : vector<64x128xf32>
    %c0_6 = arith.constant 0 : index
    %c0_7 = arith.constant 0 : index
    %8 = vector.load %arg9[%c0_6, %c0_7] : memref<64x128xf32, #tpu.memory_space<vmem>>, vector<64x128xf32>
    tpu.vector_store %arg9[%c0_6, %c0_7], %7 {strides = array<i32>} : memref<64x128xf32, #tpu.memory_space<vmem>>, vector<64x128xf32>,
    %c0_i32_8 = arith.constant 0 : i32
    %9 = arith.cmpi eq, %arg2, %c0_i32_8 : i32
    %10 = arith.extui %9 : i1 to i32
    %c0_i32_9 = arith.constant 0 : i32
    %11 = arith.cmpi ne, %10, %c0_i32_9 : i32
    scf.if %11 {
      %c0_10 = arith.constant 0 : index
      %c0_11 = arith.constant 0 : index
      %12 = vector.load %arg9[%c0_10, %c0_11] : memref<64x128xf32, #tpu.memory_space<vmem>>, vector<64x128xf32>
      %c0_12 = arith.constant 0 : index
      %c0_13 = arith.constant 0 : index
      %13 = vector.load %arg5[%c0_12, %c0_13] : memref<1x128xf32, #tpu.memory_space<vmem>>, vector<1x128xf32>
      %14 = vector.broadcast %13 : vector<1x128xf32> to vector<64x128xf32>
      %15 = arith.addf %12, %14 : vector<64x128xf32>
      %c0_14 = arith.constant 0 : index
      %c0_15 = arith.constant 0 : index
      %16 = vector.load %arg6[%c0_14, %c0_15] : memref<64x128xf32, #tpu.memory_space<vmem>>, vector<64x128xf32>
      tpu.vector_store %arg6[%c0_14, %c0_15], %15 {strides = array<i32>} : memref<64x128xf32, #tpu.memory_space<vmem>>, vector<64x128xf32>,
      %cst_16 = arith.constant dense<0.000000e+00> : vector<128xf32>
      %17 = vector.multi_reduction <add>, %15, %cst_16 [0] : vector<64x128xf32> to vector<128xf32>
      %18 = vector.shape_cast %17 : vector<128xf32> to vector<1x128xf32>
      %19 = vector.shape_cast %18 : vector<1x128xf32> to vector<1x1x128xf32>
      %20 = vector.broadcast %19 : vector<1x1x128xf32> to vector<1x8x128xf32>
      %c0_17 = arith.constant 0 : index
      %c0_18 = arith.constant 0 : index
      %c0_19 = arith.constant 0 : index
      %21 = vector.load %arg7[%c0_17, %c0_18, %c0_19] : memref<1x8x128xf32, #tpu.memory_space<vmem>>, vector<1x8x128xf32>
      tpu.vector_store %arg7[%c0_17, %c0_18, %c0_19], %20 {strides = array<i32>} : memref<1x8x128xf32, #tpu.memory_space<vmem>>, vector<1x8x128xf32>,
      %22 = arith.mulf %15, %15 : vector<64x128xf32>
      %cst_20 = arith.constant dense<0.000000e+00> : vector<128xf32>
      %23 = vector.multi_reduction <add>, %22, %cst_20 [0] : vector<64x128xf32> to vector<128xf32>
      %24 = vector.shape_cast %23 : vector<128xf32> to vector<1x128xf32>
      %25 = vector.shape_cast %24 : vector<1x128xf32> to vector<1x1x128xf32>
      %26 = vector.broadcast %25 : vector<1x1x128xf32> to vector<1x8x128xf32>
      %c0_21 = arith.constant 0 : index
      %c0_22 = arith.constant 0 : index
      %c0_23 = arith.constant 0 : index
      %27 = vector.load %arg8[%c0_21, %c0_22, %c0_23] : memref<1x8x128xf32, #tpu.memory_space<vmem>>, vector<1x8x128xf32>
      tpu.vector_store %arg8[%c0_21, %c0_22, %c0_23], %26 {strides = array<i32>} : memref<1x8x128xf32, #tpu.memory_space<vmem>>, vector<1x8x128xf32>,
    } else {
    }
    return
  }
  func.func @transform_0(%arg0: i32, %arg1: i32, %arg2: i32) -> (i32, i32) {
    %c0_i32 = arith.constant 0 : i32
    return %arg0, %arg2 : i32, i32
  }
  func.func @transform_1(%arg0: i32, %arg1: i32, %arg2: i32) -> (i32, i32) {
    %c0_i32 = arith.constant 0 : i32
    return %arg2, %arg1 : i32, i32
  }
  func.func @transform_2(%arg0: i32, %arg1: i32, %arg2: i32) -> (i32, i32) {
    %c0_i32 = arith.constant 0 : i32
    %c0_i32_0 = arith.constant 0 : i32
    return %c0_i32, %arg1 : i32, i32
  }
  func.func @transform_3(%arg0: i32, %arg1: i32, %arg2: i32) -> (i32, i32) {
    %c0_i32 = arith.constant 0 : i32
    return %arg0, %arg1 : i32, i32
  }
  func.func @transform_4(%arg0: i32, %arg1: i32, %arg2: i32) -> (i32, i32, i32) {
    %c0_i32 = arith.constant 0 : i32
    %c0_i32_0 = arith.constant 0 : i32
    return %arg0, %c0_i32, %arg1 : i32, i32, i32
  }
  func.func @transform_5(%arg0: i32, %arg1: i32, %arg2: i32) -> (i32, i32, i32) {
    %c0_i32 = arith.constant 0 : i32
    %c0_i32_0 = arith.constant 0 : i32
    return %arg0, %c0_i32, %arg1 : i32, i32, i32
  }
}

module attributes {stable_mosaic.version = 11 : i64} {
  func.func @_scale_shift_lrelu_kernel(%arg0: i32, %arg1: i32, %arg2: memref<8x128xf32, #tpu.memory_space<vmem>>, %arg3: memref<1x128xf32, #tpu.memory_space<vmem>>, %arg4: memref<1x128xf32, #tpu.memory_space<vmem>>, %arg5: memref<8x128xf32, #tpu.memory_space<vmem>>) attributes {dimension_semantics = [#tpu.dimension_semantics<parallel>, #tpu.dimension_semantics<parallel>], iteration_bounds = array<i64: 1, 1>, scalar_prefetch = 0 : i64, scratch_operands = 0 : i64, tpu.core_type = #tpu.core_type<tc>, window_params = [{transform_indices = @transform_0, window_bounds = array<i64: 8, 128>}, {transform_indices = @transform_1, window_bounds = array<i64: 1, 128>}, {transform_indices = @transform_2, window_bounds = array<i64: 1, 128>}, {transform_indices = @transform_3, window_bounds = array<i64: 8, 128>}]} {
    %c0 = arith.constant 0 : index
    %c0_0 = arith.constant 0 : index
    %0 = vector.load %arg2[%c0, %c0_0] : memref<8x128xf32, #tpu.memory_space<vmem>>, vector<8x128xf32>
    %c0_1 = arith.constant 0 : index
    %c0_2 = arith.constant 0 : index
    %1 = vector.load %arg3[%c0_1, %c0_2] : memref<1x128xf32, #tpu.memory_space<vmem>>, vector<1x128xf32>
    %2 = vector.broadcast %1 : vector<1x128xf32> to vector<8x128xf32>
    %3 = arith.mulf %0, %2 : vector<8x128xf32>
    %c0_3 = arith.constant 0 : index
    %c0_4 = arith.constant 0 : index
    %4 = vector.load %arg4[%c0_3, %c0_4] : memref<1x128xf32, #tpu.memory_space<vmem>>, vector<1x128xf32>
    %5 = vector.broadcast %4 : vector<1x128xf32> to vector<8x128xf32>
    %6 = arith.addf %3, %5 : vector<8x128xf32>
    %cst = arith.constant 0.000000e+00 : f32
    %7 = vector.broadcast %cst : f32 to vector<8x128xf32>
    %8 = arith.cmpf ogt, %6, %7 : vector<8x128xf32>
    %cst_5 = arith.constant 2.000000e-01 : f32
    %9 = vector.broadcast %cst_5 : f32 to vector<8x128xf32>
    %10 = arith.mulf %9, %6 : vector<8x128xf32>
    %11 = arith.select %8, %6, %10 : vector<8x128xi1>, vector<8x128xf32>
    %c0_6 = arith.constant 0 : index
    %c0_7 = arith.constant 0 : index
    %12 = vector.load %arg5[%c0_6, %c0_7] : memref<8x128xf32, #tpu.memory_space<vmem>>, vector<8x128xf32>
    tpu.vector_store %arg5[%c0_6, %c0_7], %11 {strides = array<i32>} : memref<8x128xf32, #tpu.memory_space<vmem>>, vector<8x128xf32>,
    return
  }
  func.func @transform_0(%arg0: i32, %arg1: i32) -> (i32, i32) {
    %c0_i32 = arith.constant 0 : i32
    return %arg0, %arg1 : i32, i32
  }
  func.func @transform_1(%arg0: i32, %arg1: i32) -> (i32, i32) {
    %c0_i32 = arith.constant 0 : i32
    %c0_i32_0 = arith.constant 0 : i32
    return %c0_i32, %arg1 : i32, i32
  }
  func.func @transform_2(%arg0: i32, %arg1: i32) -> (i32, i32) {
    %c0_i32 = arith.constant 0 : i32
    %c0_i32_0 = arith.constant 0 : i32
    return %c0_i32, %arg1 : i32, i32
  }
  func.func @transform_3(%arg0: i32, %arg1: i32) -> (i32, i32) {
    %c0_i32 = arith.constant 0 : i32
    return %arg0, %arg1 : i32, i32
  }
}

module attributes {stable_mosaic.version = 11 : i64} {
  func.func @_matmul_kernel(%arg0: i32, %arg1: i32, %arg2: i32, %arg3: memref<8x256xbf16, #tpu.memory_space<vmem>>, %arg4: memref<256x128xbf16, #tpu.memory_space<vmem>>, %arg5: memref<1x128xf32, #tpu.memory_space<vmem>>, %arg6: memref<8x128xf32, #tpu.memory_space<vmem>>, %arg7: memref<1x8x128xf32, #tpu.memory_space<vmem>>, %arg8: memref<1x8x128xf32, #tpu.memory_space<vmem>>, %arg9: memref<8x128xf32, #tpu.memory_space<vmem>>) attributes {dimension_semantics = [#tpu.dimension_semantics<parallel>, #tpu.dimension_semantics<parallel>, #tpu.dimension_semantics<arbitrary>], iteration_bounds = array<i64: 1, 1, 1>, scalar_prefetch = 0 : i64, scratch_operands = 1 : i64, tpu.core_type = #tpu.core_type<tc>, window_params = [{transform_indices = @transform_0, window_bounds = array<i64: 8, 256>}, {transform_indices = @transform_1, window_bounds = array<i64: 256, 128>}, {transform_indices = @transform_2, window_bounds = array<i64: 1, 128>}, {transform_indices = @transform_3, window_bounds = array<i64: 8, 128>}, {transform_indices = @transform_4, window_bounds = array<i64: 1, 8, 128>}, {transform_indices = @transform_5, window_bounds = array<i64: 1, 8, 128>}]} {
    %c0_i32 = arith.constant 0 : i32
    %0 = arith.cmpi eq, %arg2, %c0_i32 : i32
    %1 = arith.extui %0 : i1 to i32
    %c0_i32_0 = arith.constant 0 : i32
    %2 = arith.cmpi ne, %1, %c0_i32_0 : i32
    scf.if %2 {
      %cst_10 = arith.constant 0.000000e+00 : f32
      %12 = vector.broadcast %cst_10 : f32 to vector<8x128xf32>
      %c0_11 = arith.constant 0 : index
      %c0_12 = arith.constant 0 : index
      %13 = vector.load %arg9[%c0_11, %c0_12] : memref<8x128xf32, #tpu.memory_space<vmem>>, vector<8x128xf32>
      tpu.vector_store %arg9[%c0_11, %c0_12], %12 {strides = array<i32>} : memref<8x128xf32, #tpu.memory_space<vmem>>, vector<8x128xf32>,
    } else {
    }
    %c0 = arith.constant 0 : index
    %c0_1 = arith.constant 0 : index
    %3 = vector.load %arg9[%c0, %c0_1] : memref<8x128xf32, #tpu.memory_space<vmem>>, vector<8x128xf32>
    %c0_2 = arith.constant 0 : index
    %c0_3 = arith.constant 0 : index
    %4 = vector.load %arg3[%c0_2, %c0_3] : memref<8x256xbf16, #tpu.memory_space<vmem>>, vector<8x256xbf16>
    %c0_4 = arith.constant 0 : index
    %c0_5 = arith.constant 0 : index
    %5 = vector.load %arg4[%c0_4, %c0_5] : memref<256x128xbf16, #tpu.memory_space<vmem>>, vector<256x128xbf16>
    %cst = arith.constant dense<0.000000e+00> : vector<8x128xf32>
    %6 = tpu.matmul %4, %5, %cst {dimension_numbers = #tpu.dot_dimension_numbers<[1], [0], [0], [1], [0, 0, 1, 1], [], []>} : vector<8x256xbf16>, vector<256x128xbf16>, vector<8x128xf32> -> vector<8x128xf32>
    %7 = arith.addf %3, %6 : vector<8x128xf32>
    %c0_6 = arith.constant 0 : index
    %c0_7 = arith.constant 0 : index
    %8 = vector.load %arg9[%c0_6, %c0_7] : memref<8x128xf32, #tpu.memory_space<vmem>>, vector<8x128xf32>
    tpu.vector_store %arg9[%c0_6, %c0_7], %7 {strides = array<i32>} : memref<8x128xf32, #tpu.memory_space<vmem>>, vector<8x128xf32>,
    %c0_i32_8 = arith.constant 0 : i32
    %9 = arith.cmpi eq, %arg2, %c0_i32_8 : i32
    %10 = arith.extui %9 : i1 to i32
    %c0_i32_9 = arith.constant 0 : i32
    %11 = arith.cmpi ne, %10, %c0_i32_9 : i32
    scf.if %11 {
      %c0_10 = arith.constant 0 : index
      %c0_11 = arith.constant 0 : index
      %12 = vector.load %arg9[%c0_10, %c0_11] : memref<8x128xf32, #tpu.memory_space<vmem>>, vector<8x128xf32>
      %c0_12 = arith.constant 0 : index
      %c0_13 = arith.constant 0 : index
      %13 = vector.load %arg5[%c0_12, %c0_13] : memref<1x128xf32, #tpu.memory_space<vmem>>, vector<1x128xf32>
      %14 = vector.broadcast %13 : vector<1x128xf32> to vector<8x128xf32>
      %15 = arith.addf %12, %14 : vector<8x128xf32>
      %c0_14 = arith.constant 0 : index
      %c0_15 = arith.constant 0 : index
      %16 = vector.load %arg6[%c0_14, %c0_15] : memref<8x128xf32, #tpu.memory_space<vmem>>, vector<8x128xf32>
      tpu.vector_store %arg6[%c0_14, %c0_15], %15 {strides = array<i32>} : memref<8x128xf32, #tpu.memory_space<vmem>>, vector<8x128xf32>,
      %cst_16 = arith.constant dense<0.000000e+00> : vector<128xf32>
      %17 = vector.multi_reduction <add>, %15, %cst_16 [0] : vector<8x128xf32> to vector<128xf32>
      %18 = vector.shape_cast %17 : vector<128xf32> to vector<1x128xf32>
      %19 = vector.shape_cast %18 : vector<1x128xf32> to vector<1x1x128xf32>
      %20 = vector.broadcast %19 : vector<1x1x128xf32> to vector<1x8x128xf32>
      %c0_17 = arith.constant 0 : index
      %c0_18 = arith.constant 0 : index
      %c0_19 = arith.constant 0 : index
      %21 = vector.load %arg7[%c0_17, %c0_18, %c0_19] : memref<1x8x128xf32, #tpu.memory_space<vmem>>, vector<1x8x128xf32>
      tpu.vector_store %arg7[%c0_17, %c0_18, %c0_19], %20 {strides = array<i32>} : memref<1x8x128xf32, #tpu.memory_space<vmem>>, vector<1x8x128xf32>,
      %22 = arith.mulf %15, %15 : vector<8x128xf32>
      %cst_20 = arith.constant dense<0.000000e+00> : vector<128xf32>
      %23 = vector.multi_reduction <add>, %22, %cst_20 [0] : vector<8x128xf32> to vector<128xf32>
      %24 = vector.shape_cast %23 : vector<128xf32> to vector<1x128xf32>
      %25 = vector.shape_cast %24 : vector<1x128xf32> to vector<1x1x128xf32>
      %26 = vector.broadcast %25 : vector<1x1x128xf32> to vector<1x8x128xf32>
      %c0_21 = arith.constant 0 : index
      %c0_22 = arith.constant 0 : index
      %c0_23 = arith.constant 0 : index
      %27 = vector.load %arg8[%c0_21, %c0_22, %c0_23] : memref<1x8x128xf32, #tpu.memory_space<vmem>>, vector<1x8x128xf32>
      tpu.vector_store %arg8[%c0_21, %c0_22, %c0_23], %26 {strides = array<i32>} : memref<1x8x128xf32, #tpu.memory_space<vmem>>, vector<1x8x128xf32>,
    } else {
    }
    return
  }
  func.func @transform_0(%arg0: i32, %arg1: i32, %arg2: i32) -> (i32, i32) {
    %c0_i32 = arith.constant 0 : i32
    return %arg0, %arg2 : i32, i32
  }
  func.func @transform_1(%arg0: i32, %arg1: i32, %arg2: i32) -> (i32, i32) {
    %c0_i32 = arith.constant 0 : i32
    return %arg2, %arg1 : i32, i32
  }
  func.func @transform_2(%arg0: i32, %arg1: i32, %arg2: i32) -> (i32, i32) {
    %c0_i32 = arith.constant 0 : i32
    %c0_i32_0 = arith.constant 0 : i32
    return %c0_i32, %arg1 : i32, i32
  }
  func.func @transform_3(%arg0: i32, %arg1: i32, %arg2: i32) -> (i32, i32) {
    %c0_i32 = arith.constant 0 : i32
    return %arg0, %arg1 : i32, i32
  }
  func.func @transform_4(%arg0: i32, %arg1: i32, %arg2: i32) -> (i32, i32, i32) {
    %c0_i32 = arith.constant 0 : i32
    %c0_i32_0 = arith.constant 0 : i32
    return %arg0, %c0_i32, %arg1 : i32, i32, i32
  }
  func.func @transform_5(%arg0: i32, %arg1: i32, %arg2: i32) -> (i32, i32, i32) {
    %c0_i32 = arith.constant 0 : i32
    %c0_i32_0 = arith.constant 0 : i32
    return %arg0, %c0_i32, %arg1 : i32, i32, i32
  }
}

module attributes {stable_mosaic.version = 11 : i64} {
  func.func @_matmul_kernel(%arg0: i32, %arg1: i32, %arg2: i32, %arg3: memref<8x512xbf16, #tpu.memory_space<vmem>>, %arg4: memref<512x128xbf16, #tpu.memory_space<vmem>>, %arg5: memref<1x128xf32, #tpu.memory_space<vmem>>, %arg6: memref<8x128xf32, #tpu.memory_space<vmem>>, %arg7: memref<1x8x128xf32, #tpu.memory_space<vmem>>, %arg8: memref<1x8x128xf32, #tpu.memory_space<vmem>>, %arg9: memref<8x128xf32, #tpu.memory_space<vmem>>) attributes {dimension_semantics = [#tpu.dimension_semantics<parallel>, #tpu.dimension_semantics<parallel>, #tpu.dimension_semantics<arbitrary>], iteration_bounds = array<i64: 1, 1, 1>, scalar_prefetch = 0 : i64, scratch_operands = 1 : i64, tpu.core_type = #tpu.core_type<tc>, window_params = [{transform_indices = @transform_0, window_bounds = array<i64: 8, 512>}, {transform_indices = @transform_1, window_bounds = array<i64: 512, 128>}, {transform_indices = @transform_2, window_bounds = array<i64: 1, 128>}, {transform_indices = @transform_3, window_bounds = array<i64: 8, 128>}, {transform_indices = @transform_4, window_bounds = array<i64: 1, 8, 128>}, {transform_indices = @transform_5, window_bounds = array<i64: 1, 8, 128>}]} {
    %c0_i32 = arith.constant 0 : i32
    %0 = arith.cmpi eq, %arg2, %c0_i32 : i32
    %1 = arith.extui %0 : i1 to i32
    %c0_i32_0 = arith.constant 0 : i32
    %2 = arith.cmpi ne, %1, %c0_i32_0 : i32
    scf.if %2 {
      %cst_10 = arith.constant 0.000000e+00 : f32
      %12 = vector.broadcast %cst_10 : f32 to vector<8x128xf32>
      %c0_11 = arith.constant 0 : index
      %c0_12 = arith.constant 0 : index
      %13 = vector.load %arg9[%c0_11, %c0_12] : memref<8x128xf32, #tpu.memory_space<vmem>>, vector<8x128xf32>
      tpu.vector_store %arg9[%c0_11, %c0_12], %12 {strides = array<i32>} : memref<8x128xf32, #tpu.memory_space<vmem>>, vector<8x128xf32>,
    } else {
    }
    %c0 = arith.constant 0 : index
    %c0_1 = arith.constant 0 : index
    %3 = vector.load %arg9[%c0, %c0_1] : memref<8x128xf32, #tpu.memory_space<vmem>>, vector<8x128xf32>
    %c0_2 = arith.constant 0 : index
    %c0_3 = arith.constant 0 : index
    %4 = vector.load %arg3[%c0_2, %c0_3] : memref<8x512xbf16, #tpu.memory_space<vmem>>, vector<8x512xbf16>
    %c0_4 = arith.constant 0 : index
    %c0_5 = arith.constant 0 : index
    %5 = vector.load %arg4[%c0_4, %c0_5] : memref<512x128xbf16, #tpu.memory_space<vmem>>, vector<512x128xbf16>
    %cst = arith.constant dense<0.000000e+00> : vector<8x128xf32>
    %6 = tpu.matmul %4, %5, %cst {dimension_numbers = #tpu.dot_dimension_numbers<[1], [0], [0], [1], [0, 0, 1, 1], [], []>} : vector<8x512xbf16>, vector<512x128xbf16>, vector<8x128xf32> -> vector<8x128xf32>
    %7 = arith.addf %3, %6 : vector<8x128xf32>
    %c0_6 = arith.constant 0 : index
    %c0_7 = arith.constant 0 : index
    %8 = vector.load %arg9[%c0_6, %c0_7] : memref<8x128xf32, #tpu.memory_space<vmem>>, vector<8x128xf32>
    tpu.vector_store %arg9[%c0_6, %c0_7], %7 {strides = array<i32>} : memref<8x128xf32, #tpu.memory_space<vmem>>, vector<8x128xf32>,
    %c0_i32_8 = arith.constant 0 : i32
    %9 = arith.cmpi eq, %arg2, %c0_i32_8 : i32
    %10 = arith.extui %9 : i1 to i32
    %c0_i32_9 = arith.constant 0 : i32
    %11 = arith.cmpi ne, %10, %c0_i32_9 : i32
    scf.if %11 {
      %c0_10 = arith.constant 0 : index
      %c0_11 = arith.constant 0 : index
      %12 = vector.load %arg9[%c0_10, %c0_11] : memref<8x128xf32, #tpu.memory_space<vmem>>, vector<8x128xf32>
      %c0_12 = arith.constant 0 : index
      %c0_13 = arith.constant 0 : index
      %13 = vector.load %arg5[%c0_12, %c0_13] : memref<1x128xf32, #tpu.memory_space<vmem>>, vector<1x128xf32>
      %14 = vector.broadcast %13 : vector<1x128xf32> to vector<8x128xf32>
      %15 = arith.addf %12, %14 : vector<8x128xf32>
      %c0_14 = arith.constant 0 : index
      %c0_15 = arith.constant 0 : index
      %16 = vector.load %arg6[%c0_14, %c0_15] : memref<8x128xf32, #tpu.memory_space<vmem>>, vector<8x128xf32>
      tpu.vector_store %arg6[%c0_14, %c0_15], %15 {strides = array<i32>} : memref<8x128xf32, #tpu.memory_space<vmem>>, vector<8x128xf32>,
      %cst_16 = arith.constant dense<0.000000e+00> : vector<128xf32>
      %17 = vector.multi_reduction <add>, %15, %cst_16 [0] : vector<8x128xf32> to vector<128xf32>
      %18 = vector.shape_cast %17 : vector<128xf32> to vector<1x128xf32>
      %19 = vector.shape_cast %18 : vector<1x128xf32> to vector<1x1x128xf32>
      %20 = vector.broadcast %19 : vector<1x1x128xf32> to vector<1x8x128xf32>
      %c0_17 = arith.constant 0 : index
      %c0_18 = arith.constant 0 : index
      %c0_19 = arith.constant 0 : index
      %21 = vector.load %arg7[%c0_17, %c0_18, %c0_19] : memref<1x8x128xf32, #tpu.memory_space<vmem>>, vector<1x8x128xf32>
      tpu.vector_store %arg7[%c0_17, %c0_18, %c0_19], %20 {strides = array<i32>} : memref<1x8x128xf32, #tpu.memory_space<vmem>>, vector<1x8x128xf32>,
      %22 = arith.mulf %15, %15 : vector<8x128xf32>
      %cst_20 = arith.constant dense<0.000000e+00> : vector<128xf32>
      %23 = vector.multi_reduction <add>, %22, %cst_20 [0] : vector<8x128xf32> to vector<128xf32>
      %24 = vector.shape_cast %23 : vector<128xf32> to vector<1x128xf32>
      %25 = vector.shape_cast %24 : vector<1x128xf32> to vector<1x1x128xf32>
      %26 = vector.broadcast %25 : vector<1x1x128xf32> to vector<1x8x128xf32>
      %c0_21 = arith.constant 0 : index
      %c0_22 = arith.constant 0 : index
      %c0_23 = arith.constant 0 : index
      %27 = vector.load %arg8[%c0_21, %c0_22, %c0_23] : memref<1x8x128xf32, #tpu.memory_space<vmem>>, vector<1x8x128xf32>
      tpu.vector_store %arg8[%c0_21, %c0_22, %c0_23], %26 {strides = array<i32>} : memref<1x8x128xf32, #tpu.memory_space<vmem>>, vector<1x8x128xf32>,
    } else {
    }
    return
  }
  func.func @transform_0(%arg0: i32, %arg1: i32, %arg2: i32) -> (i32, i32) {
    %c0_i32 = arith.constant 0 : i32
    return %arg0, %arg2 : i32, i32
  }
  func.func @transform_1(%arg0: i32, %arg1: i32, %arg2: i32) -> (i32, i32) {
    %c0_i32 = arith.constant 0 : i32
    return %arg2, %arg1 : i32, i32
  }
  func.func @transform_2(%arg0: i32, %arg1: i32, %arg2: i32) -> (i32, i32) {
    %c0_i32 = arith.constant 0 : i32
    %c0_i32_0 = arith.constant 0 : i32
    return %c0_i32, %arg1 : i32, i32
  }
  func.func @transform_3(%arg0: i32, %arg1: i32, %arg2: i32) -> (i32, i32) {
    %c0_i32 = arith.constant 0 : i32
    return %arg0, %arg1 : i32, i32
  }
  func.func @transform_4(%arg0: i32, %arg1: i32, %arg2: i32) -> (i32, i32, i32) {
    %c0_i32 = arith.constant 0 : i32
    %c0_i32_0 = arith.constant 0 : i32
    return %arg0, %c0_i32, %arg1 : i32, i32, i32
  }
  func.func @transform_5(%arg0: i32, %arg1: i32, %arg2: i32) -> (i32, i32, i32) {
    %c0_i32 = arith.constant 0 : i32
    %c0_i32_0 = arith.constant 0 : i32
    return %arg0, %c0_i32, %arg1 : i32, i32, i32
  }
}

module attributes {stable_mosaic.version = 11 : i64} {
  func.func @_matmul_kernel(%arg0: i32, %arg1: i32, %arg2: i32, %arg3: memref<8x128xbf16, #tpu.memory_space<vmem>>, %arg4: memref<128x128xbf16, #tpu.memory_space<vmem>>, %arg5: memref<1x128xf32, #tpu.memory_space<vmem>>, %arg6: memref<8x128xf32, #tpu.memory_space<vmem>>, %arg7: memref<1x8x128xf32, #tpu.memory_space<vmem>>, %arg8: memref<1x8x128xf32, #tpu.memory_space<vmem>>, %arg9: memref<8x128xf32, #tpu.memory_space<vmem>>) attributes {dimension_semantics = [#tpu.dimension_semantics<parallel>, #tpu.dimension_semantics<parallel>, #tpu.dimension_semantics<arbitrary>], iteration_bounds = array<i64: 1, 1, 1>, scalar_prefetch = 0 : i64, scratch_operands = 1 : i64, tpu.core_type = #tpu.core_type<tc>, window_params = [{transform_indices = @transform_0, window_bounds = array<i64: 8, 128>}, {transform_indices = @transform_1, window_bounds = array<i64: 128, 128>}, {transform_indices = @transform_2, window_bounds = array<i64: 1, 128>}, {transform_indices = @transform_3, window_bounds = array<i64: 8, 128>}, {transform_indices = @transform_4, window_bounds = array<i64: 1, 8, 128>}, {transform_indices = @transform_5, window_bounds = array<i64: 1, 8, 128>}]} {
    %c0_i32 = arith.constant 0 : i32
    %0 = arith.cmpi eq, %arg2, %c0_i32 : i32
    %1 = arith.extui %0 : i1 to i32
    %c0_i32_0 = arith.constant 0 : i32
    %2 = arith.cmpi ne, %1, %c0_i32_0 : i32
    scf.if %2 {
      %cst_10 = arith.constant 0.000000e+00 : f32
      %12 = vector.broadcast %cst_10 : f32 to vector<8x128xf32>
      %c0_11 = arith.constant 0 : index
      %c0_12 = arith.constant 0 : index
      %13 = vector.load %arg9[%c0_11, %c0_12] : memref<8x128xf32, #tpu.memory_space<vmem>>, vector<8x128xf32>
      tpu.vector_store %arg9[%c0_11, %c0_12], %12 {strides = array<i32>} : memref<8x128xf32, #tpu.memory_space<vmem>>, vector<8x128xf32>,
    } else {
    }
    %c0 = arith.constant 0 : index
    %c0_1 = arith.constant 0 : index
    %3 = vector.load %arg9[%c0, %c0_1] : memref<8x128xf32, #tpu.memory_space<vmem>>, vector<8x128xf32>
    %c0_2 = arith.constant 0 : index
    %c0_3 = arith.constant 0 : index
    %4 = vector.load %arg3[%c0_2, %c0_3] : memref<8x128xbf16, #tpu.memory_space<vmem>>, vector<8x128xbf16>
    %c0_4 = arith.constant 0 : index
    %c0_5 = arith.constant 0 : index
    %5 = vector.load %arg4[%c0_4, %c0_5] : memref<128x128xbf16, #tpu.memory_space<vmem>>, vector<128x128xbf16>
    %cst = arith.constant dense<0.000000e+00> : vector<8x128xf32>
    %6 = tpu.matmul %4, %5, %cst {dimension_numbers = #tpu.dot_dimension_numbers<[1], [0], [0], [1], [0, 0, 1, 1], [], []>} : vector<8x128xbf16>, vector<128x128xbf16>, vector<8x128xf32> -> vector<8x128xf32>
    %7 = arith.addf %3, %6 : vector<8x128xf32>
    %c0_6 = arith.constant 0 : index
    %c0_7 = arith.constant 0 : index
    %8 = vector.load %arg9[%c0_6, %c0_7] : memref<8x128xf32, #tpu.memory_space<vmem>>, vector<8x128xf32>
    tpu.vector_store %arg9[%c0_6, %c0_7], %7 {strides = array<i32>} : memref<8x128xf32, #tpu.memory_space<vmem>>, vector<8x128xf32>,
    %c0_i32_8 = arith.constant 0 : i32
    %9 = arith.cmpi eq, %arg2, %c0_i32_8 : i32
    %10 = arith.extui %9 : i1 to i32
    %c0_i32_9 = arith.constant 0 : i32
    %11 = arith.cmpi ne, %10, %c0_i32_9 : i32
    scf.if %11 {
      %c0_10 = arith.constant 0 : index
      %c0_11 = arith.constant 0 : index
      %12 = vector.load %arg9[%c0_10, %c0_11] : memref<8x128xf32, #tpu.memory_space<vmem>>, vector<8x128xf32>
      %c0_12 = arith.constant 0 : index
      %c0_13 = arith.constant 0 : index
      %13 = vector.load %arg5[%c0_12, %c0_13] : memref<1x128xf32, #tpu.memory_space<vmem>>, vector<1x128xf32>
      %14 = vector.broadcast %13 : vector<1x128xf32> to vector<8x128xf32>
      %15 = arith.addf %12, %14 : vector<8x128xf32>
      %c0_14 = arith.constant 0 : index
      %c0_15 = arith.constant 0 : index
      %16 = vector.load %arg6[%c0_14, %c0_15] : memref<8x128xf32, #tpu.memory_space<vmem>>, vector<8x128xf32>
      tpu.vector_store %arg6[%c0_14, %c0_15], %15 {strides = array<i32>} : memref<8x128xf32, #tpu.memory_space<vmem>>, vector<8x128xf32>,
      %cst_16 = arith.constant dense<0.000000e+00> : vector<128xf32>
      %17 = vector.multi_reduction <add>, %15, %cst_16 [0] : vector<8x128xf32> to vector<128xf32>
      %18 = vector.shape_cast %17 : vector<128xf32> to vector<1x128xf32>
      %19 = vector.shape_cast %18 : vector<1x128xf32> to vector<1x1x128xf32>
      %20 = vector.broadcast %19 : vector<1x1x128xf32> to vector<1x8x128xf32>
      %c0_17 = arith.constant 0 : index
      %c0_18 = arith.constant 0 : index
      %c0_19 = arith.constant 0 : index
      %21 = vector.load %arg7[%c0_17, %c0_18, %c0_19] : memref<1x8x128xf32, #tpu.memory_space<vmem>>, vector<1x8x128xf32>
      tpu.vector_store %arg7[%c0_17, %c0_18, %c0_19], %20 {strides = array<i32>} : memref<1x8x128xf32, #tpu.memory_space<vmem>>, vector<1x8x128xf32>,
      %22 = arith.mulf %15, %15 : vector<8x128xf32>
      %cst_20 = arith.constant dense<0.000000e+00> : vector<128xf32>
      %23 = vector.multi_reduction <add>, %22, %cst_20 [0] : vector<8x128xf32> to vector<128xf32>
      %24 = vector.shape_cast %23 : vector<128xf32> to vector<1x128xf32>
      %25 = vector.shape_cast %24 : vector<1x128xf32> to vector<1x1x128xf32>
      %26 = vector.broadcast %25 : vector<1x1x128xf32> to vector<1x8x128xf32>
      %c0_21 = arith.constant 0 : index
      %c0_22 = arith.constant 0 : index
      %c0_23 = arith.constant 0 : index
      %27 = vector.load %arg8[%c0_21, %c0_22, %c0_23] : memref<1x8x128xf32, #tpu.memory_space<vmem>>, vector<1x8x128xf32>
      tpu.vector_store %arg8[%c0_21, %c0_22, %c0_23], %26 {strides = array<i32>} : memref<1x8x128xf32, #tpu.memory_space<vmem>>, vector<1x8x128xf32>,
    } else {
    }
    return
  }
  func.func @transform_0(%arg0: i32, %arg1: i32, %arg2: i32) -> (i32, i32) {
    %c0_i32 = arith.constant 0 : i32
    return %arg0, %arg2 : i32, i32
  }
  func.func @transform_1(%arg0: i32, %arg1: i32, %arg2: i32) -> (i32, i32) {
    %c0_i32 = arith.constant 0 : i32
    return %arg2, %arg1 : i32, i32
  }
  func.func @transform_2(%arg0: i32, %arg1: i32, %arg2: i32) -> (i32, i32) {
    %c0_i32 = arith.constant 0 : i32
    %c0_i32_0 = arith.constant 0 : i32
    return %c0_i32, %arg1 : i32, i32
  }
  func.func @transform_3(%arg0: i32, %arg1: i32, %arg2: i32) -> (i32, i32) {
    %c0_i32 = arith.constant 0 : i32
    return %arg0, %arg1 : i32, i32
  }
  func.func @transform_4(%arg0: i32, %arg1: i32, %arg2: i32) -> (i32, i32, i32) {
    %c0_i32 = arith.constant 0 : i32
    %c0_i32_0 = arith.constant 0 : i32
    return %arg0, %c0_i32, %arg1 : i32, i32, i32
  }
  func.func @transform_5(%arg0: i32, %arg1: i32, %arg2: i32) -> (i32, i32, i32) {
    %c0_i32 = arith.constant 0 : i32
    %c0_i32_0 = arith.constant 0 : i32
    return %arg0, %c0_i32, %arg1 : i32, i32, i32
  }
}

module attributes {stable_mosaic.version = 11 : i64} {
  func.func @_matmul_kernel(%arg0: i32, %arg1: i32, %arg2: i32, %arg3: memref<64x512xbf16, #tpu.memory_space<vmem>>, %arg4: memref<512x128xbf16, #tpu.memory_space<vmem>>, %arg5: memref<1x128xf32, #tpu.memory_space<vmem>>, %arg6: memref<64x128xf32, #tpu.memory_space<vmem>>, %arg7: memref<1x8x128xf32, #tpu.memory_space<vmem>>, %arg8: memref<1x8x128xf32, #tpu.memory_space<vmem>>, %arg9: memref<64x128xf32, #tpu.memory_space<vmem>>) attributes {dimension_semantics = [#tpu.dimension_semantics<parallel>, #tpu.dimension_semantics<parallel>, #tpu.dimension_semantics<arbitrary>], iteration_bounds = array<i64: 1, 1, 1>, scalar_prefetch = 0 : i64, scratch_operands = 1 : i64, tpu.core_type = #tpu.core_type<tc>, window_params = [{transform_indices = @transform_0, window_bounds = array<i64: 64, 512>}, {transform_indices = @transform_1, window_bounds = array<i64: 512, 128>}, {transform_indices = @transform_2, window_bounds = array<i64: 1, 128>}, {transform_indices = @transform_3, window_bounds = array<i64: 64, 128>}, {transform_indices = @transform_4, window_bounds = array<i64: 1, 8, 128>}, {transform_indices = @transform_5, window_bounds = array<i64: 1, 8, 128>}]} {
    %c0_i32 = arith.constant 0 : i32
    %0 = arith.cmpi eq, %arg2, %c0_i32 : i32
    %1 = arith.extui %0 : i1 to i32
    %c0_i32_0 = arith.constant 0 : i32
    %2 = arith.cmpi ne, %1, %c0_i32_0 : i32
    scf.if %2 {
      %cst_10 = arith.constant 0.000000e+00 : f32
      %12 = vector.broadcast %cst_10 : f32 to vector<64x128xf32>
      %c0_11 = arith.constant 0 : index
      %c0_12 = arith.constant 0 : index
      %13 = vector.load %arg9[%c0_11, %c0_12] : memref<64x128xf32, #tpu.memory_space<vmem>>, vector<64x128xf32>
      tpu.vector_store %arg9[%c0_11, %c0_12], %12 {strides = array<i32>} : memref<64x128xf32, #tpu.memory_space<vmem>>, vector<64x128xf32>,
    } else {
    }
    %c0 = arith.constant 0 : index
    %c0_1 = arith.constant 0 : index
    %3 = vector.load %arg9[%c0, %c0_1] : memref<64x128xf32, #tpu.memory_space<vmem>>, vector<64x128xf32>
    %c0_2 = arith.constant 0 : index
    %c0_3 = arith.constant 0 : index
    %4 = vector.load %arg3[%c0_2, %c0_3] : memref<64x512xbf16, #tpu.memory_space<vmem>>, vector<64x512xbf16>
    %c0_4 = arith.constant 0 : index
    %c0_5 = arith.constant 0 : index
    %5 = vector.load %arg4[%c0_4, %c0_5] : memref<512x128xbf16, #tpu.memory_space<vmem>>, vector<512x128xbf16>
    %cst = arith.constant dense<0.000000e+00> : vector<64x128xf32>
    %6 = tpu.matmul %4, %5, %cst {dimension_numbers = #tpu.dot_dimension_numbers<[1], [0], [0], [1], [0, 0, 1, 1], [], []>} : vector<64x512xbf16>, vector<512x128xbf16>, vector<64x128xf32> -> vector<64x128xf32>
    %7 = arith.addf %3, %6 : vector<64x128xf32>
    %c0_6 = arith.constant 0 : index
    %c0_7 = arith.constant 0 : index
    %8 = vector.load %arg9[%c0_6, %c0_7] : memref<64x128xf32, #tpu.memory_space<vmem>>, vector<64x128xf32>
    tpu.vector_store %arg9[%c0_6, %c0_7], %7 {strides = array<i32>} : memref<64x128xf32, #tpu.memory_space<vmem>>, vector<64x128xf32>,
    %c0_i32_8 = arith.constant 0 : i32
    %9 = arith.cmpi eq, %arg2, %c0_i32_8 : i32
    %10 = arith.extui %9 : i1 to i32
    %c0_i32_9 = arith.constant 0 : i32
    %11 = arith.cmpi ne, %10, %c0_i32_9 : i32
    scf.if %11 {
      %c0_10 = arith.constant 0 : index
      %c0_11 = arith.constant 0 : index
      %12 = vector.load %arg9[%c0_10, %c0_11] : memref<64x128xf32, #tpu.memory_space<vmem>>, vector<64x128xf32>
      %c0_12 = arith.constant 0 : index
      %c0_13 = arith.constant 0 : index
      %13 = vector.load %arg5[%c0_12, %c0_13] : memref<1x128xf32, #tpu.memory_space<vmem>>, vector<1x128xf32>
      %14 = vector.broadcast %13 : vector<1x128xf32> to vector<64x128xf32>
      %15 = arith.addf %12, %14 : vector<64x128xf32>
      %c0_14 = arith.constant 0 : index
      %c0_15 = arith.constant 0 : index
      %16 = vector.load %arg6[%c0_14, %c0_15] : memref<64x128xf32, #tpu.memory_space<vmem>>, vector<64x128xf32>
      tpu.vector_store %arg6[%c0_14, %c0_15], %15 {strides = array<i32>} : memref<64x128xf32, #tpu.memory_space<vmem>>, vector<64x128xf32>,
      %cst_16 = arith.constant dense<0.000000e+00> : vector<128xf32>
      %17 = vector.multi_reduction <add>, %15, %cst_16 [0] : vector<64x128xf32> to vector<128xf32>
      %18 = vector.shape_cast %17 : vector<128xf32> to vector<1x128xf32>
      %19 = vector.shape_cast %18 : vector<1x128xf32> to vector<1x1x128xf32>
      %20 = vector.broadcast %19 : vector<1x1x128xf32> to vector<1x8x128xf32>
      %c0_17 = arith.constant 0 : index
      %c0_18 = arith.constant 0 : index
      %c0_19 = arith.constant 0 : index
      %21 = vector.load %arg7[%c0_17, %c0_18, %c0_19] : memref<1x8x128xf32, #tpu.memory_space<vmem>>, vector<1x8x128xf32>
      tpu.vector_store %arg7[%c0_17, %c0_18, %c0_19], %20 {strides = array<i32>} : memref<1x8x128xf32, #tpu.memory_space<vmem>>, vector<1x8x128xf32>,
      %22 = arith.mulf %15, %15 : vector<64x128xf32>
      %cst_20 = arith.constant dense<0.000000e+00> : vector<128xf32>
      %23 = vector.multi_reduction <add>, %22, %cst_20 [0] : vector<64x128xf32> to vector<128xf32>
      %24 = vector.shape_cast %23 : vector<128xf32> to vector<1x128xf32>
      %25 = vector.shape_cast %24 : vector<1x128xf32> to vector<1x1x128xf32>
      %26 = vector.broadcast %25 : vector<1x1x128xf32> to vector<1x8x128xf32>
      %c0_21 = arith.constant 0 : index
      %c0_22 = arith.constant 0 : index
      %c0_23 = arith.constant 0 : index
      %27 = vector.load %arg8[%c0_21, %c0_22, %c0_23] : memref<1x8x128xf32, #tpu.memory_space<vmem>>, vector<1x8x128xf32>
      tpu.vector_store %arg8[%c0_21, %c0_22, %c0_23], %26 {strides = array<i32>} : memref<1x8x128xf32, #tpu.memory_space<vmem>>, vector<1x8x128xf32>,
    } else {
    }
    return
  }
  func.func @transform_0(%arg0: i32, %arg1: i32, %arg2: i32) -> (i32, i32) {
    %c0_i32 = arith.constant 0 : i32
    return %arg0, %arg2 : i32, i32
  }
  func.func @transform_1(%arg0: i32, %arg1: i32, %arg2: i32) -> (i32, i32) {
    %c0_i32 = arith.constant 0 : i32
    return %arg2, %arg1 : i32, i32
  }
  func.func @transform_2(%arg0: i32, %arg1: i32, %arg2: i32) -> (i32, i32) {
    %c0_i32 = arith.constant 0 : i32
    %c0_i32_0 = arith.constant 0 : i32
    return %c0_i32, %arg1 : i32, i32
  }
  func.func @transform_3(%arg0: i32, %arg1: i32, %arg2: i32) -> (i32, i32) {
    %c0_i32 = arith.constant 0 : i32
    return %arg0, %arg1 : i32, i32
  }
  func.func @transform_4(%arg0: i32, %arg1: i32, %arg2: i32) -> (i32, i32, i32) {
    %c0_i32 = arith.constant 0 : i32
    %c0_i32_0 = arith.constant 0 : i32
    return %arg0, %c0_i32, %arg1 : i32, i32, i32
  }
  func.func @transform_5(%arg0: i32, %arg1: i32, %arg2: i32) -> (i32, i32, i32) {
    %c0_i32 = arith.constant 0 : i32
    %c0_i32_0 = arith.constant 0 : i32
    return %arg0, %c0_i32, %arg1 : i32, i32, i32
  }
}

module attributes {stable_mosaic.version = 11 : i64} {
  func.func @_matmul_kernel(%arg0: i32, %arg1: i32, %arg2: i32, %arg3: memref<64x128xbf16, #tpu.memory_space<vmem>>, %arg4: memref<128x128xbf16, #tpu.memory_space<vmem>>, %arg5: memref<1x128xf32, #tpu.memory_space<vmem>>, %arg6: memref<64x128xf32, #tpu.memory_space<vmem>>, %arg7: memref<1x8x128xf32, #tpu.memory_space<vmem>>, %arg8: memref<1x8x128xf32, #tpu.memory_space<vmem>>, %arg9: memref<64x128xf32, #tpu.memory_space<vmem>>) attributes {dimension_semantics = [#tpu.dimension_semantics<parallel>, #tpu.dimension_semantics<parallel>, #tpu.dimension_semantics<arbitrary>], iteration_bounds = array<i64: 1, 1, 1>, scalar_prefetch = 0 : i64, scratch_operands = 1 : i64, tpu.core_type = #tpu.core_type<tc>, window_params = [{transform_indices = @transform_0, window_bounds = array<i64: 64, 128>}, {transform_indices = @transform_1, window_bounds = array<i64: 128, 128>}, {transform_indices = @transform_2, window_bounds = array<i64: 1, 128>}, {transform_indices = @transform_3, window_bounds = array<i64: 64, 128>}, {transform_indices = @transform_4, window_bounds = array<i64: 1, 8, 128>}, {transform_indices = @transform_5, window_bounds = array<i64: 1, 8, 128>}]} {
    %c0_i32 = arith.constant 0 : i32
    %0 = arith.cmpi eq, %arg2, %c0_i32 : i32
    %1 = arith.extui %0 : i1 to i32
    %c0_i32_0 = arith.constant 0 : i32
    %2 = arith.cmpi ne, %1, %c0_i32_0 : i32
    scf.if %2 {
      %cst_10 = arith.constant 0.000000e+00 : f32
      %12 = vector.broadcast %cst_10 : f32 to vector<64x128xf32>
      %c0_11 = arith.constant 0 : index
      %c0_12 = arith.constant 0 : index
      %13 = vector.load %arg9[%c0_11, %c0_12] : memref<64x128xf32, #tpu.memory_space<vmem>>, vector<64x128xf32>
      tpu.vector_store %arg9[%c0_11, %c0_12], %12 {strides = array<i32>} : memref<64x128xf32, #tpu.memory_space<vmem>>, vector<64x128xf32>,
    } else {
    }
    %c0 = arith.constant 0 : index
    %c0_1 = arith.constant 0 : index
    %3 = vector.load %arg9[%c0, %c0_1] : memref<64x128xf32, #tpu.memory_space<vmem>>, vector<64x128xf32>
    %c0_2 = arith.constant 0 : index
    %c0_3 = arith.constant 0 : index
    %4 = vector.load %arg3[%c0_2, %c0_3] : memref<64x128xbf16, #tpu.memory_space<vmem>>, vector<64x128xbf16>
    %c0_4 = arith.constant 0 : index
    %c0_5 = arith.constant 0 : index
    %5 = vector.load %arg4[%c0_4, %c0_5] : memref<128x128xbf16, #tpu.memory_space<vmem>>, vector<128x128xbf16>
    %cst = arith.constant dense<0.000000e+00> : vector<64x128xf32>
    %6 = tpu.matmul %4, %5, %cst {dimension_numbers = #tpu.dot_dimension_numbers<[1], [0], [0], [1], [0, 0, 1, 1], [], []>} : vector<64x128xbf16>, vector<128x128xbf16>, vector<64x128xf32> -> vector<64x128xf32>
    %7 = arith.addf %3, %6 : vector<64x128xf32>
    %c0_6 = arith.constant 0 : index
    %c0_7 = arith.constant 0 : index
    %8 = vector.load %arg9[%c0_6, %c0_7] : memref<64x128xf32, #tpu.memory_space<vmem>>, vector<64x128xf32>
    tpu.vector_store %arg9[%c0_6, %c0_7], %7 {strides = array<i32>} : memref<64x128xf32, #tpu.memory_space<vmem>>, vector<64x128xf32>,
    %c0_i32_8 = arith.constant 0 : i32
    %9 = arith.cmpi eq, %arg2, %c0_i32_8 : i32
    %10 = arith.extui %9 : i1 to i32
    %c0_i32_9 = arith.constant 0 : i32
    %11 = arith.cmpi ne, %10, %c0_i32_9 : i32
    scf.if %11 {
      %c0_10 = arith.constant 0 : index
      %c0_11 = arith.constant 0 : index
      %12 = vector.load %arg9[%c0_10, %c0_11] : memref<64x128xf32, #tpu.memory_space<vmem>>, vector<64x128xf32>
      %c0_12 = arith.constant 0 : index
      %c0_13 = arith.constant 0 : index
      %13 = vector.load %arg5[%c0_12, %c0_13] : memref<1x128xf32, #tpu.memory_space<vmem>>, vector<1x128xf32>
      %14 = vector.broadcast %13 : vector<1x128xf32> to vector<64x128xf32>
      %15 = arith.addf %12, %14 : vector<64x128xf32>
      %c0_14 = arith.constant 0 : index
      %c0_15 = arith.constant 0 : index
      %16 = vector.load %arg6[%c0_14, %c0_15] : memref<64x128xf32, #tpu.memory_space<vmem>>, vector<64x128xf32>
      tpu.vector_store %arg6[%c0_14, %c0_15], %15 {strides = array<i32>} : memref<64x128xf32, #tpu.memory_space<vmem>>, vector<64x128xf32>,
      %cst_16 = arith.constant dense<0.000000e+00> : vector<128xf32>
      %17 = vector.multi_reduction <add>, %15, %cst_16 [0] : vector<64x128xf32> to vector<128xf32>
      %18 = vector.shape_cast %17 : vector<128xf32> to vector<1x128xf32>
      %19 = vector.shape_cast %18 : vector<1x128xf32> to vector<1x1x128xf32>
      %20 = vector.broadcast %19 : vector<1x1x128xf32> to vector<1x8x128xf32>
      %c0_17 = arith.constant 0 : index
      %c0_18 = arith.constant 0 : index
      %c0_19 = arith.constant 0 : index
      %21 = vector.load %arg7[%c0_17, %c0_18, %c0_19] : memref<1x8x128xf32, #tpu.memory_space<vmem>>, vector<1x8x128xf32>
      tpu.vector_store %arg7[%c0_17, %c0_18, %c0_19], %20 {strides = array<i32>} : memref<1x8x128xf32, #tpu.memory_space<vmem>>, vector<1x8x128xf32>,
      %22 = arith.mulf %15, %15 : vector<64x128xf32>
      %cst_20 = arith.constant dense<0.000000e+00> : vector<128xf32>
      %23 = vector.multi_reduction <add>, %22, %cst_20 [0] : vector<64x128xf32> to vector<128xf32>
      %24 = vector.shape_cast %23 : vector<128xf32> to vector<1x128xf32>
      %25 = vector.shape_cast %24 : vector<1x128xf32> to vector<1x1x128xf32>
      %26 = vector.broadcast %25 : vector<1x1x128xf32> to vector<1x8x128xf32>
      %c0_21 = arith.constant 0 : index
      %c0_22 = arith.constant 0 : index
      %c0_23 = arith.constant 0 : index
      %27 = vector.load %arg8[%c0_21, %c0_22, %c0_23] : memref<1x8x128xf32, #tpu.memory_space<vmem>>, vector<1x8x128xf32>
      tpu.vector_store %arg8[%c0_21, %c0_22, %c0_23], %26 {strides = array<i32>} : memref<1x8x128xf32, #tpu.memory_space<vmem>>, vector<1x8x128xf32>,
    } else {
    }
    return
  }
  func.func @transform_0(%arg0: i32, %arg1: i32, %arg2: i32) -> (i32, i32) {
    %c0_i32 = arith.constant 0 : i32
    return %arg0, %arg2 : i32, i32
  }
  func.func @transform_1(%arg0: i32, %arg1: i32, %arg2: i32) -> (i32, i32) {
    %c0_i32 = arith.constant 0 : i32
    return %arg2, %arg1 : i32, i32
  }
  func.func @transform_2(%arg0: i32, %arg1: i32, %arg2: i32) -> (i32, i32) {
    %c0_i32 = arith.constant 0 : i32
    %c0_i32_0 = arith.constant 0 : i32
    return %c0_i32, %arg1 : i32, i32
  }
  func.func @transform_3(%arg0: i32, %arg1: i32, %arg2: i32) -> (i32, i32) {
    %c0_i32 = arith.constant 0 : i32
    return %arg0, %arg1 : i32, i32
  }
  func.func @transform_4(%arg0: i32, %arg1: i32, %arg2: i32) -> (i32, i32, i32) {
    %c0_i32 = arith.constant 0 : i32
    %c0_i32_0 = arith.constant 0 : i32
    return %arg0, %c0_i32, %arg1 : i32, i32, i32
  }
  func.func @transform_5(%arg0: i32, %arg1: i32, %arg2: i32) -> (i32, i32, i32) {
    %c0_i32 = arith.constant 0 : i32
    %c0_i32_0 = arith.constant 0 : i32
    return %arg0, %c0_i32, %arg1 : i32, i32, i32
  }
}

module attributes {stable_mosaic.version = 11 : i64} {
  func.func @_matmul_kernel(%arg0: i32, %arg1: i32, %arg2: i32, %arg3: memref<512x256xbf16, #tpu.memory_space<vmem>>, %arg4: memref<256x128xbf16, #tpu.memory_space<vmem>>, %arg5: memref<1x128xf32, #tpu.memory_space<vmem>>, %arg6: memref<512x128xf32, #tpu.memory_space<vmem>>, %arg7: memref<1x8x128xf32, #tpu.memory_space<vmem>>, %arg8: memref<1x8x128xf32, #tpu.memory_space<vmem>>, %arg9: memref<512x128xf32, #tpu.memory_space<vmem>>) attributes {dimension_semantics = [#tpu.dimension_semantics<parallel>, #tpu.dimension_semantics<parallel>, #tpu.dimension_semantics<arbitrary>], iteration_bounds = array<i64: 1, 1, 1>, scalar_prefetch = 0 : i64, scratch_operands = 1 : i64, tpu.core_type = #tpu.core_type<tc>, window_params = [{transform_indices = @transform_0, window_bounds = array<i64: 512, 256>}, {transform_indices = @transform_1, window_bounds = array<i64: 256, 128>}, {transform_indices = @transform_2, window_bounds = array<i64: 1, 128>}, {transform_indices = @transform_3, window_bounds = array<i64: 512, 128>}, {transform_indices = @transform_4, window_bounds = array<i64: 1, 8, 128>}, {transform_indices = @transform_5, window_bounds = array<i64: 1, 8, 128>}]} {
    %c0_i32 = arith.constant 0 : i32
    %0 = arith.cmpi eq, %arg2, %c0_i32 : i32
    %1 = arith.extui %0 : i1 to i32
    %c0_i32_0 = arith.constant 0 : i32
    %2 = arith.cmpi ne, %1, %c0_i32_0 : i32
    scf.if %2 {
      %cst_10 = arith.constant 0.000000e+00 : f32
      %12 = vector.broadcast %cst_10 : f32 to vector<512x128xf32>
      %c0_11 = arith.constant 0 : index
      %c0_12 = arith.constant 0 : index
      %13 = vector.load %arg9[%c0_11, %c0_12] : memref<512x128xf32, #tpu.memory_space<vmem>>, vector<512x128xf32>
      tpu.vector_store %arg9[%c0_11, %c0_12], %12 {strides = array<i32>} : memref<512x128xf32, #tpu.memory_space<vmem>>, vector<512x128xf32>,
    } else {
    }
    %c0 = arith.constant 0 : index
    %c0_1 = arith.constant 0 : index
    %3 = vector.load %arg9[%c0, %c0_1] : memref<512x128xf32, #tpu.memory_space<vmem>>, vector<512x128xf32>
    %c0_2 = arith.constant 0 : index
    %c0_3 = arith.constant 0 : index
    %4 = vector.load %arg3[%c0_2, %c0_3] : memref<512x256xbf16, #tpu.memory_space<vmem>>, vector<512x256xbf16>
    %c0_4 = arith.constant 0 : index
    %c0_5 = arith.constant 0 : index
    %5 = vector.load %arg4[%c0_4, %c0_5] : memref<256x128xbf16, #tpu.memory_space<vmem>>, vector<256x128xbf16>
    %cst = arith.constant dense<0.000000e+00> : vector<512x128xf32>
    %6 = tpu.matmul %4, %5, %cst {dimension_numbers = #tpu.dot_dimension_numbers<[1], [0], [0], [1], [0, 0, 1, 1], [], []>} : vector<512x256xbf16>, vector<256x128xbf16>, vector<512x128xf32> -> vector<512x128xf32>
    %7 = arith.addf %3, %6 : vector<512x128xf32>
    %c0_6 = arith.constant 0 : index
    %c0_7 = arith.constant 0 : index
    %8 = vector.load %arg9[%c0_6, %c0_7] : memref<512x128xf32, #tpu.memory_space<vmem>>, vector<512x128xf32>
    tpu.vector_store %arg9[%c0_6, %c0_7], %7 {strides = array<i32>} : memref<512x128xf32, #tpu.memory_space<vmem>>, vector<512x128xf32>,
    %c0_i32_8 = arith.constant 0 : i32
    %9 = arith.cmpi eq, %arg2, %c0_i32_8 : i32
    %10 = arith.extui %9 : i1 to i32
    %c0_i32_9 = arith.constant 0 : i32
    %11 = arith.cmpi ne, %10, %c0_i32_9 : i32
    scf.if %11 {
      %c0_10 = arith.constant 0 : index
      %c0_11 = arith.constant 0 : index
      %12 = vector.load %arg9[%c0_10, %c0_11] : memref<512x128xf32, #tpu.memory_space<vmem>>, vector<512x128xf32>
      %c0_12 = arith.constant 0 : index
      %c0_13 = arith.constant 0 : index
      %13 = vector.load %arg5[%c0_12, %c0_13] : memref<1x128xf32, #tpu.memory_space<vmem>>, vector<1x128xf32>
      %14 = vector.broadcast %13 : vector<1x128xf32> to vector<512x128xf32>
      %15 = arith.addf %12, %14 : vector<512x128xf32>
      %c0_14 = arith.constant 0 : index
      %c0_15 = arith.constant 0 : index
      %16 = vector.load %arg6[%c0_14, %c0_15] : memref<512x128xf32, #tpu.memory_space<vmem>>, vector<512x128xf32>
      tpu.vector_store %arg6[%c0_14, %c0_15], %15 {strides = array<i32>} : memref<512x128xf32, #tpu.memory_space<vmem>>, vector<512x128xf32>,
      %cst_16 = arith.constant dense<0.000000e+00> : vector<128xf32>
      %17 = vector.multi_reduction <add>, %15, %cst_16 [0] : vector<512x128xf32> to vector<128xf32>
      %18 = vector.shape_cast %17 : vector<128xf32> to vector<1x128xf32>
      %19 = vector.shape_cast %18 : vector<1x128xf32> to vector<1x1x128xf32>
      %20 = vector.broadcast %19 : vector<1x1x128xf32> to vector<1x8x128xf32>
      %c0_17 = arith.constant 0 : index
      %c0_18 = arith.constant 0 : index
      %c0_19 = arith.constant 0 : index
      %21 = vector.load %arg7[%c0_17, %c0_18, %c0_19] : memref<1x8x128xf32, #tpu.memory_space<vmem>>, vector<1x8x128xf32>
      tpu.vector_store %arg7[%c0_17, %c0_18, %c0_19], %20 {strides = array<i32>} : memref<1x8x128xf32, #tpu.memory_space<vmem>>, vector<1x8x128xf32>,
      %22 = arith.mulf %15, %15 : vector<512x128xf32>
      %cst_20 = arith.constant dense<0.000000e+00> : vector<128xf32>
      %23 = vector.multi_reduction <add>, %22, %cst_20 [0] : vector<512x128xf32> to vector<128xf32>
      %24 = vector.shape_cast %23 : vector<128xf32> to vector<1x128xf32>
      %25 = vector.shape_cast %24 : vector<1x128xf32> to vector<1x1x128xf32>
      %26 = vector.broadcast %25 : vector<1x1x128xf32> to vector<1x8x128xf32>
      %c0_21 = arith.constant 0 : index
      %c0_22 = arith.constant 0 : index
      %c0_23 = arith.constant 0 : index
      %27 = vector.load %arg8[%c0_21, %c0_22, %c0_23] : memref<1x8x128xf32, #tpu.memory_space<vmem>>, vector<1x8x128xf32>
      tpu.vector_store %arg8[%c0_21, %c0_22, %c0_23], %26 {strides = array<i32>} : memref<1x8x128xf32, #tpu.memory_space<vmem>>, vector<1x8x128xf32>,
    } else {
    }
    return
  }
  func.func @transform_0(%arg0: i32, %arg1: i32, %arg2: i32) -> (i32, i32) {
    %c0_i32 = arith.constant 0 : i32
    return %arg0, %arg2 : i32, i32
  }
  func.func @transform_1(%arg0: i32, %arg1: i32, %arg2: i32) -> (i32, i32) {
    %c0_i32 = arith.constant 0 : i32
    return %arg2, %arg1 : i32, i32
  }
  func.func @transform_2(%arg0: i32, %arg1: i32, %arg2: i32) -> (i32, i32) {
    %c0_i32 = arith.constant 0 : i32
    %c0_i32_0 = arith.constant 0 : i32
    return %c0_i32, %arg1 : i32, i32
  }
  func.func @transform_3(%arg0: i32, %arg1: i32, %arg2: i32) -> (i32, i32) {
    %c0_i32 = arith.constant 0 : i32
    return %arg0, %arg1 : i32, i32
  }
  func.func @transform_4(%arg0: i32, %arg1: i32, %arg2: i32) -> (i32, i32, i32) {
    %c0_i32 = arith.constant 0 : i32
    %c0_i32_0 = arith.constant 0 : i32
    return %arg0, %c0_i32, %arg1 : i32, i32, i32
  }
  func.func @transform_5(%arg0: i32, %arg1: i32, %arg2: i32) -> (i32, i32, i32) {
    %c0_i32 = arith.constant 0 : i32
    %c0_i32_0 = arith.constant 0 : i32
    return %arg0, %c0_i32, %arg1 : i32, i32, i32
  }
}

module attributes {stable_mosaic.version = 11 : i64} {
  func.func @_matmul_kernel(%arg0: i32, %arg1: i32, %arg2: i32, %arg3: memref<512x128xbf16, #tpu.memory_space<vmem>>, %arg4: memref<128x128xbf16, #tpu.memory_space<vmem>>, %arg5: memref<1x128xf32, #tpu.memory_space<vmem>>, %arg6: memref<512x128xf32, #tpu.memory_space<vmem>>, %arg7: memref<1x8x128xf32, #tpu.memory_space<vmem>>, %arg8: memref<1x8x128xf32, #tpu.memory_space<vmem>>, %arg9: memref<512x128xf32, #tpu.memory_space<vmem>>) attributes {dimension_semantics = [#tpu.dimension_semantics<parallel>, #tpu.dimension_semantics<parallel>, #tpu.dimension_semantics<arbitrary>], iteration_bounds = array<i64: 1, 1, 1>, scalar_prefetch = 0 : i64, scratch_operands = 1 : i64, tpu.core_type = #tpu.core_type<tc>, window_params = [{transform_indices = @transform_0, window_bounds = array<i64: 512, 128>}, {transform_indices = @transform_1, window_bounds = array<i64: 128, 128>}, {transform_indices = @transform_2, window_bounds = array<i64: 1, 128>}, {transform_indices = @transform_3, window_bounds = array<i64: 512, 128>}, {transform_indices = @transform_4, window_bounds = array<i64: 1, 8, 128>}, {transform_indices = @transform_5, window_bounds = array<i64: 1, 8, 128>}]} {
    %c0_i32 = arith.constant 0 : i32
    %0 = arith.cmpi eq, %arg2, %c0_i32 : i32
    %1 = arith.extui %0 : i1 to i32
    %c0_i32_0 = arith.constant 0 : i32
    %2 = arith.cmpi ne, %1, %c0_i32_0 : i32
    scf.if %2 {
      %cst_10 = arith.constant 0.000000e+00 : f32
      %12 = vector.broadcast %cst_10 : f32 to vector<512x128xf32>
      %c0_11 = arith.constant 0 : index
      %c0_12 = arith.constant 0 : index
      %13 = vector.load %arg9[%c0_11, %c0_12] : memref<512x128xf32, #tpu.memory_space<vmem>>, vector<512x128xf32>
      tpu.vector_store %arg9[%c0_11, %c0_12], %12 {strides = array<i32>} : memref<512x128xf32, #tpu.memory_space<vmem>>, vector<512x128xf32>,
    } else {
    }
    %c0 = arith.constant 0 : index
    %c0_1 = arith.constant 0 : index
    %3 = vector.load %arg9[%c0, %c0_1] : memref<512x128xf32, #tpu.memory_space<vmem>>, vector<512x128xf32>
    %c0_2 = arith.constant 0 : index
    %c0_3 = arith.constant 0 : index
    %4 = vector.load %arg3[%c0_2, %c0_3] : memref<512x128xbf16, #tpu.memory_space<vmem>>, vector<512x128xbf16>
    %c0_4 = arith.constant 0 : index
    %c0_5 = arith.constant 0 : index
    %5 = vector.load %arg4[%c0_4, %c0_5] : memref<128x128xbf16, #tpu.memory_space<vmem>>, vector<128x128xbf16>
    %cst = arith.constant dense<0.000000e+00> : vector<512x128xf32>
    %6 = tpu.matmul %4, %5, %cst {dimension_numbers = #tpu.dot_dimension_numbers<[1], [0], [0], [1], [0, 0, 1, 1], [], []>} : vector<512x128xbf16>, vector<128x128xbf16>, vector<512x128xf32> -> vector<512x128xf32>
    %7 = arith.addf %3, %6 : vector<512x128xf32>
    %c0_6 = arith.constant 0 : index
    %c0_7 = arith.constant 0 : index
    %8 = vector.load %arg9[%c0_6, %c0_7] : memref<512x128xf32, #tpu.memory_space<vmem>>, vector<512x128xf32>
    tpu.vector_store %arg9[%c0_6, %c0_7], %7 {strides = array<i32>} : memref<512x128xf32, #tpu.memory_space<vmem>>, vector<512x128xf32>,
    %c0_i32_8 = arith.constant 0 : i32
    %9 = arith.cmpi eq, %arg2, %c0_i32_8 : i32
    %10 = arith.extui %9 : i1 to i32
    %c0_i32_9 = arith.constant 0 : i32
    %11 = arith.cmpi ne, %10, %c0_i32_9 : i32
    scf.if %11 {
      %c0_10 = arith.constant 0 : index
      %c0_11 = arith.constant 0 : index
      %12 = vector.load %arg9[%c0_10, %c0_11] : memref<512x128xf32, #tpu.memory_space<vmem>>, vector<512x128xf32>
      %c0_12 = arith.constant 0 : index
      %c0_13 = arith.constant 0 : index
      %13 = vector.load %arg5[%c0_12, %c0_13] : memref<1x128xf32, #tpu.memory_space<vmem>>, vector<1x128xf32>
      %14 = vector.broadcast %13 : vector<1x128xf32> to vector<512x128xf32>
      %15 = arith.addf %12, %14 : vector<512x128xf32>
      %c0_14 = arith.constant 0 : index
      %c0_15 = arith.constant 0 : index
      %16 = vector.load %arg6[%c0_14, %c0_15] : memref<512x128xf32, #tpu.memory_space<vmem>>, vector<512x128xf32>
      tpu.vector_store %arg6[%c0_14, %c0_15], %15 {strides = array<i32>} : memref<512x128xf32, #tpu.memory_space<vmem>>, vector<512x128xf32>,
      %cst_16 = arith.constant dense<0.000000e+00> : vector<128xf32>
      %17 = vector.multi_reduction <add>, %15, %cst_16 [0] : vector<512x128xf32> to vector<128xf32>
      %18 = vector.shape_cast %17 : vector<128xf32> to vector<1x128xf32>
      %19 = vector.shape_cast %18 : vector<1x128xf32> to vector<1x1x128xf32>
      %20 = vector.broadcast %19 : vector<1x1x128xf32> to vector<1x8x128xf32>
      %c0_17 = arith.constant 0 : index
      %c0_18 = arith.constant 0 : index
      %c0_19 = arith.constant 0 : index
      %21 = vector.load %arg7[%c0_17, %c0_18, %c0_19] : memref<1x8x128xf32, #tpu.memory_space<vmem>>, vector<1x8x128xf32>
      tpu.vector_store %arg7[%c0_17, %c0_18, %c0_19], %20 {strides = array<i32>} : memref<1x8x128xf32, #tpu.memory_space<vmem>>, vector<1x8x128xf32>,
      %22 = arith.mulf %15, %15 : vector<512x128xf32>
      %cst_20 = arith.constant dense<0.000000e+00> : vector<128xf32>
      %23 = vector.multi_reduction <add>, %22, %cst_20 [0] : vector<512x128xf32> to vector<128xf32>
      %24 = vector.shape_cast %23 : vector<128xf32> to vector<1x128xf32>
      %25 = vector.shape_cast %24 : vector<1x128xf32> to vector<1x1x128xf32>
      %26 = vector.broadcast %25 : vector<1x1x128xf32> to vector<1x8x128xf32>
      %c0_21 = arith.constant 0 : index
      %c0_22 = arith.constant 0 : index
      %c0_23 = arith.constant 0 : index
      %27 = vector.load %arg8[%c0_21, %c0_22, %c0_23] : memref<1x8x128xf32, #tpu.memory_space<vmem>>, vector<1x8x128xf32>
      tpu.vector_store %arg8[%c0_21, %c0_22, %c0_23], %26 {strides = array<i32>} : memref<1x8x128xf32, #tpu.memory_space<vmem>>, vector<1x8x128xf32>,
    } else {
    }
    return
  }
  func.func @transform_0(%arg0: i32, %arg1: i32, %arg2: i32) -> (i32, i32) {
    %c0_i32 = arith.constant 0 : i32
    return %arg0, %arg2 : i32, i32
  }
  func.func @transform_1(%arg0: i32, %arg1: i32, %arg2: i32) -> (i32, i32) {
    %c0_i32 = arith.constant 0 : i32
    return %arg2, %arg1 : i32, i32
  }
  func.func @transform_2(%arg0: i32, %arg1: i32, %arg2: i32) -> (i32, i32) {
    %c0_i32 = arith.constant 0 : i32
    %c0_i32_0 = arith.constant 0 : i32
    return %c0_i32, %arg1 : i32, i32
  }
  func.func @transform_3(%arg0: i32, %arg1: i32, %arg2: i32) -> (i32, i32) {
    %c0_i32 = arith.constant 0 : i32
    return %arg0, %arg1 : i32, i32
  }
  func.func @transform_4(%arg0: i32, %arg1: i32, %arg2: i32) -> (i32, i32, i32) {
    %c0_i32 = arith.constant 0 : i32
    %c0_i32_0 = arith.constant 0 : i32
    return %arg0, %c0_i32, %arg1 : i32, i32, i32
  }
  func.func @transform_5(%arg0: i32, %arg1: i32, %arg2: i32) -> (i32, i32, i32) {
    %c0_i32 = arith.constant 0 : i32
    %c0_i32_0 = arith.constant 0 : i32
    return %arg0, %c0_i32, %arg1 : i32, i32, i32
  }
}

</mosaic_0001>

<llo_original>
// kernel: unet3d_forward.38
$region0: #{unet3d_forward.38}
  #allocation0 [shape = 'u32[]', space=smem, size = 0x4, offset = 0x4, fixed_abs, tag = 'smem constant byte address 0x4 - core index']
  #allocation1 [shape = 'u32[144,128]{1,0:T(1,128)}', space=vmem, size = 0x12000, scoped, tag = 'internal scratch']
  %s0 = inlined_call_operand.vmem [shape: f32[512,128], index: 0, kind: input, shape index: {}]
  %s1 = inlined_call_operand.vmem [shape: f32[1,128], index: 1, kind: input, shape index: {}]
  %s2 = inlined_call_operand.vmem [shape: f32[1,128], index: 2, kind: input, shape index: {}]
  %s3 = inlined_call_operand.vmem [shape: f32[512,128], index: 3, kind: output, shape index: {}]
  %s4 = sld [smem:[#allocation0]]
  $region22: #{unet3d_forward.38} parent=0
    _
  %s6 = ssub.s32 1, %s4
  %s7 = scalar_select 0, %s6, %s4
  // Predicated region
  $region2: #{unet3d_forward.38} parent=0 // pred_check
    _
  $region3: #{unet3d_forward.38} parent=0 // pred_check_branch
    %9 = sbr.rel (0) target = $region5
  $region4: #{unet3d_forward.38} parent=0 // pred_region
    _
  $region5: #{unet3d_forward.38} parent=0 // pred_fallthru
    _
  // Predicated region
  $region6: #{unet3d_forward.38} parent=0 // pred_check
    _
  $region7: #{unet3d_forward.38} parent=0 // pred_check_branch
    %11 = sbr.rel (0) target = $region9
  $region8: #{unet3d_forward.38} parent=0 // pred_region
    _
  $region9: #{unet3d_forward.38} parent=0 // pred_fallthru
    _
  // Predicated region
  $region10: #{unet3d_forward.38} parent=0 // pred_check
    _
  $region11: #{unet3d_forward.38} parent=0 // pred_check_branch
    %13 = sbr.rel (0) target = $region13
  $region12: #{unet3d_forward.38} parent=0 // pred_region
    _
  $region13: #{unet3d_forward.38} parent=0 // pred_fallthru
    _
  %v14 = vld [vmem:[%s0] sm:$0xff]
  %v15 = vld [vmem:[%s0 + $0x8] sm:$0xff]
  %v16 = vld [vmem:[%s0 + $0x10] sm:$0xff]
  %v17 = vld [vmem:[%s0 + $0x18] sm:$0xff]
  %v18 = vld [vmem:[%s0 + $0x20] sm:$0xff]
  %v19 = vld [vmem:[%s0 + $0x28] sm:$0xff]
  %v20 = vld [vmem:[%s0 + $0x30] sm:$0xff]
  %v21 = vld [vmem:[%s0 + $0x38] sm:$0xff]
  %v22 = vld [vmem:[%s0 + $0x40] sm:$0xff]
  %v23 = vld [vmem:[%s0 + $0x48] sm:$0xff]
  %v24 = vld [vmem:[%s0 + $0x50] sm:$0xff]
  %v25 = vld [vmem:[%s0 + $0x58] sm:$0xff]
  %v26 = vld [vmem:[%s0 + $0x60] sm:$0xff]
  %v27 = vld [vmem:[%s0 + $0x68] sm:$0xff]
  %v28 = vld [vmem:[%s0 + $0x70] sm:$0xff]
  %v29 = vld [vmem:[%s0 + $0x78] sm:$0xff]
  %v30 = vld [vmem:[%s0 + $0x80] sm:$0xff]
  %v31 = vld [vmem:[%s0 + $0x88] sm:$0xff]
  %v32 = vld [vmem:[%s0 + $0x90] sm:$0xff]
  %v33 = vld [vmem:[%s0 + $0x98] sm:$0xff]
  %v34 = vld [vmem:[%s0 + $0xa0] sm:$0xff]
  %v35 = vld [vmem:[%s0 + $0xa8] sm:$0xff]
  %v36 = vld [vmem:[%s0 + $0xb0] sm:$0xff]
  %v37 = vld [vmem:[%s0 + $0xb8] sm:$0xff]
  %v38 = vld [vmem:[%s0 + $0xc0] sm:$0xff]
  %v39 = vld [vmem:[%s0 + $0xc8] sm:$0xff]
  %v40 = vld [vmem:[%s0 + $0xd0] sm:$0xff]
  %v41 = vld [vmem:[%s0 + $0xd8] sm:$0xff]
  %v42 = vld [vmem:[%s0 + $0xe0] sm:$0xff]
  %v43 = vld [vmem:[%s0 + $0xe8] sm:$0xff]
  %v44 = vld [vmem:[%s0 + $0xf0] sm:$0xff]
  %v45 = vld [vmem:[%s0 + $0xf8] sm:$0xff]
  %v46 = vld [vmem:[%s0 + $0x100] sm:$0xff]
  %v47 = vld [vmem:[%s0 + $0x108] sm:$0xff]
  %v48 = vld [vmem:[%s0 + $0x110] sm:$0xff]
  %v49 = vld [vmem:[%s0 + $0x118] sm:$0xff]
  %v50 = vld [vmem:[%s0 + $0x120] sm:$0xff]
  %v51 = vld [vmem:[%s0 + $0x128] sm:$0xff]
  %v52 = vld [vmem:[%s0 + $0x130] sm:$0xff]
  %v53 = vld [vmem:[%s0 + $0x138] sm:$0xff]
  %v54 = vld [vmem:[%s0 + $0x140] sm:$0xff]
  %v55 = vld [vmem:[%s0 + $0x148] sm:$0xff]
  %v56 = vld [vmem:[%s0 + $0x150] sm:$0xff]
  %v57 = vld [vmem:[%s0 + $0x158] sm:$0xff]
  %v58 = vld [vmem:[%s0 + $0x160] sm:$0xff]
  %v59 = vld [vmem:[%s0 + $0x168] sm:$0xff]
  %v60 = vld [vmem:[%s0 + $0x170] sm:$0xff]
  %v61 = vld [vmem:[%s0 + $0x178] sm:$0xff]
  %v62 = vld [vmem:[%s0 + $0x180] sm:$0xff]
  %v63 = vld [vmem:[%s0 + $0x188] sm:$0xff]
  %v64 = vld [vmem:[%s0 + $0x190] sm:$0xff]
  %v65 = vld [vmem:[%s0 + $0x198] sm:$0xff]
  %v66 = vld [vmem:[%s0 + $0x1a0] sm:$0xff]
  %v67 = vld [vmem:[%s0 + $0x1a8] sm:$0xff]
  %v68 = vld [vmem:[%s0 + $0x1b0] sm:$0xff]
  %v69 = vld [vmem:[%s0 + $0x1b8] sm:$0xff]
  %v70 = vld [vmem:[%s0 + $0x1c0] sm:$0xff]
  %v71 = vld [vmem:[%s0 + $0x1c8] sm:$0xff]
  %v72 = vld [vmem:[%s0 + $0x1d0] sm:$0xff]
  %v73 = vld [vmem:[%s0 + $0x1d8] sm:$0xff]
  %v74 = vld [vmem:[%s0 + $0x1e0] sm:$0xff]
  %v75 = vld [vmem:[%s0 + $0x1e8] sm:$0xff]
  %v76 = vld [vmem:[%s0 + $0x1f0] sm:$0xff]
  %v77 = vld [vmem:[%s0 + $0x1f8] sm:$0xff]
  %v78 = vld [vmem:[%s1] sm:$0x1]
  %v80 = vlaneseq
  %v81 = vshrl.u32 %v80, 7
  %v82 = vsub.s32 0, %v81
  %v83 = vrot.slane %v78, %v82
  %v85 = vmul.f32 %v14, %v83
  %v86 = vmul.f32 %v15, %v83
  %v87 = vmul.f32 %v16, %v83
  %v88 = vmul.f32 %v17, %v83
  %v89 = vmul.f32 %v18, %v83
  %v90 = vmul.f32 %v19, %v83
  %v91 = vmul.f32 %v20, %v83
  %v92 = vmul.f32 %v21, %v83
  %v93 = vmul.f32 %v22, %v83
  %v94 = vmul.f32 %v23, %v83
  %v95 = vmul.f32 %v24, %v83
  %v96 = vmul.f32 %v25, %v83
  %v97 = vmul.f32 %v26, %v83
  %v98 = vmul.f32 %v27, %v83
  %v99 = vmul.f32 %v28, %v83
  %v100 = vmul.f32 %v29, %v83
  %v101 = vmul.f32 %v30, %v83
  %v102 = vmul.f32 %v31, %v83
  %v103 = vmul.f32 %v32, %v83
  %v104 = vmul.f32 %v33, %v83
  %v105 = vmul.f32 %v34, %v83
  %v106 = vmul.f32 %v35, %v83
  %v107 = vmul.f32 %v36, %v83
  %v108 = vmul.f32 %v37, %v83
  %v109 = vmul.f32 %v38, %v83
  %v110 = vmul.f32 %v39, %v83
  %v111 = vmul.f32 %v40, %v83
  %v112 = vmul.f32 %v41, %v83
  %v113 = vmul.f32 %v42, %v83
  %v114 = vmul.f32 %v43, %v83
  %v115 = vmul.f32 %v44, %v83
  %v116 = vmul.f32 %v45, %v83
  %v117 = vmul.f32 %v46, %v83
  %v118 = vmul.f32 %v47, %v83
  %v119 = vmul.f32 %v48, %v83
  %v120 = vmul.f32 %v49, %v83
  %v121 = vmul.f32 %v50, %v83
  %v122 = vmul.f32 %v51, %v83
  %v123 = vmul.f32 %v52, %v83
  %v124 = vmul.f32 %v53, %v83
  %v125 = vmul.f32 %v54, %v83
  %v126 = vmul.f32 %v55, %v83
  %v127 = vmul.f32 %v56, %v83
  %v128 = vmul.f32 %v57, %v83
  %v129 = vmul.f32 %v58, %v83
  %v130 = vmul.f32 %v59, %v83
  %v131 = vmul.f32 %v60, %v83
  %v132 = vmul.f32 %v61, %v83
  %v133 = vmul.f32 %v62, %v83
  %v134 = vmul.f32 %v63, %v83
  %v135 = vmul.f32 %v64, %v83
  %v136 = vmul.f32 %v65, %v83
  %v137 = vmul.f32 %v66, %v83
  %v138 = vmul.f32 %v67, %v83
  %v139 = vmul.f32 %v68, %v83
  %v140 = vmul.f32 %v69, %v83
  %v141 = vmul.f32 %v70, %v83
  %v142 = vmul.f32 %v71, %v83
  %v143 = vmul.f32 %v72, %v83
  %v144 = vmul.f32 %v73, %v83
  %v145 = vmul.f32 %v74, %v83
  %v146 = vmul.f32 %v75, %v83
  %v147 = vmul.f32 %v76, %v83
  %v148 = vmul.f32 %v77, %v83
  %v149 = vld [vmem:[%s2] sm:$0x1]
  %v151 = vlaneseq
  %v152 = vshrl.u32 %v151, 7
  %v153 = vsub.s32 0, %v152
  %v154 = vrot.slane %v149, %v153
  %v156 = vadd.f32 %v85, %v154
  %v157 = vadd.f32 %v86, %v154
  %v158 = vadd.f32 %v87, %v154
  %v159 = vadd.f32 %v88, %v154
  %v160 = vadd.f32 %v89, %v154
  %v161 = vadd.f32 %v90, %v154
  %v162 = vadd.f32 %v91, %v154
  %v163 = vadd.f32 %v92, %v154
  %v164 = vadd.f32 %v93, %v154
  %v165 = vadd.f32 %v94, %v154
  %v166 = vadd.f32 %v95, %v154
  %v167 = vadd.f32 %v96, %v154
  %v168 = vadd.f32 %v97, %v154
  %v169 = vadd.f32 %v98, %v154
  %v170 = vadd.f32 %v99, %v154
  %v171 = vadd.f32 %v100, %v154
  %v172 = vadd.f32 %v101, %v154
  %v173 = vadd.f32 %v102, %v154
  %v174 = vadd.f32 %v103, %v154
  %v175 = vadd.f32 %v104, %v154
  %v176 = vadd.f32 %v105, %v154
  %v177 = vadd.f32 %v106, %v154
  %v178 = vadd.f32 %v107, %v154
  %v179 = vadd.f32 %v108, %v154
  %v180 = vadd.f32 %v109, %v154
  %v181 = vadd.f32 %v110, %v154
  %v182 = vadd.f32 %v111, %v154
  %v183 = vadd.f32 %v112, %v154
  %v184 = vadd.f32 %v113, %v154
  %v185 = vadd.f32 %v114, %v154
  %v186 = vadd.f32 %v115, %v154
  %v187 = vadd.f32 %v116, %v154
  %v188 = vadd.f32 %v117, %v154
  %v189 = vadd.f32 %v118, %v154
  %v190 = vadd.f32 %v119, %v154
  %v191 = vadd.f32 %v120, %v154
  %v192 = vadd.f32 %v121, %v154
  %v193 = vadd.f32 %v122, %v154
  %v194 = vadd.f32 %v123, %v154
  %v195 = vadd.f32 %v124, %v154
  %v196 = vadd.f32 %v125, %v154
  %v197 = vadd.f32 %v126, %v154
  %v198 = vadd.f32 %v127, %v154
  %v199 = vadd.f32 %v128, %v154
  %v200 = vadd.f32 %v129, %v154
  %v201 = vadd.f32 %v130, %v154
  %v202 = vadd.f32 %v131, %v154
  %v203 = vadd.f32 %v132, %v154
  %v204 = vadd.f32 %v133, %v154
  %v205 = vadd.f32 %v134, %v154
  %v206 = vadd.f32 %v135, %v154
  %v207 = vadd.f32 %v136, %v154
  %v208 = vadd.f32 %v137, %v154
  %v209 = vadd.f32 %v138, %v154
  %v210 = vadd.f32 %v139, %v154
  %v211 = vadd.f32 %v140, %v154
  %v212 = vadd.f32 %v141, %v154
  %v213 = vadd.f32 %v142, %v154
  %v214 = vadd.f32 %v143, %v154
  %v215 = vadd.f32 %v144, %v154
  %v216 = vadd.f32 %v145, %v154
  %v217 = vadd.f32 %v146, %v154
  %v218 = vadd.f32 %v147, %v154
  %v219 = vadd.f32 %v148, %v154
  %vm220 = vcmp.gt.f32.partialorder %v156, 0.0
  %vm221 = vcmp.gt.f32.partialorder %v157, 0.0
  %vm222 = vcmp.gt.f32.partialorder %v158, 0.0
  %vm223 = vcmp.gt.f32.partialorder %v159, 0.0
  %vm224 = vcmp.gt.f32.partialorder %v160, 0.0
  %vm225 = vcmp.gt.f32.partialorder %v161, 0.0
  %vm226 = vcmp.gt.f32.partialorder %v162, 0.0
  %vm227 = vcmp.gt.f32.partialorder %v163, 0.0
  %vm228 = vcmp.gt.f32.partialorder %v164, 0.0
  %vm229 = vcmp.gt.f32.partialorder %v165, 0.0
  %vm230 = vcmp.gt.f32.partialorder %v166, 0.0
  %vm231 = vcmp.gt.f32.partialorder %v167, 0.0
  %vm232 = vcmp.gt.f32.partialorder %v168, 0.0
  %vm233 = vcmp.gt.f32.partialorder %v169, 0.0
  %vm234 = vcmp.gt.f32.partialorder %v170, 0.0
  %vm235 = vcmp.gt.f32.partialorder %v171, 0.0
  %vm236 = vcmp.gt.f32.partialorder %v172, 0.0
  %vm237 = vcmp.gt.f32.partialorder %v173, 0.0
  %vm238 = vcmp.gt.f32.partialorder %v174, 0.0
  %vm239 = vcmp.gt.f32.partialorder %v175, 0.0
  %vm240 = vcmp.gt.f32.partialorder %v176, 0.0
  %vm241 = vcmp.gt.f32.partialorder %v177, 0.0
  %vm242 = vcmp.gt.f32.partialorder %v178, 0.0
  %vm243 = vcmp.gt.f32.partialorder %v179, 0.0
  %vm244 = vcmp.gt.f32.partialorder %v180, 0.0
  %vm245 = vcmp.gt.f32.partialorder %v181, 0.0
  %vm246 = vcmp.gt.f32.partialorder %v182, 0.0
  %vm247 = vcmp.gt.f32.partialorder %v183, 0.0
  %vm248 = vcmp.gt.f32.partialorder %v184, 0.0
  %vm249 = vcmp.gt.f32.partialorder %v185, 0.0
  %vm250 = vcmp.gt.f32.partialorder %v186, 0.0
  %vm251 = vcmp.gt.f32.partialorder %v187, 0.0
  %vm252 = vcmp.gt.f32.partialorder %v188, 0.0
  %vm253 = vcmp.gt.f32.partialorder %v189, 0.0
  %vm254 = vcmp.gt.f32.partialorder %v190, 0.0
  %vm255 = vcmp.gt.f32.partialorder %v191, 0.0
  %vm256 = vcmp.gt.f32.partialorder %v192, 0.0
  %vm257 = vcmp.gt.f32.partialorder %v193, 0.0
  %vm258 = vcmp.gt.f32.partialorder %v194, 0.0
  %vm259 = vcmp.gt.f32.partialorder %v195, 0.0
  %vm260 = vcmp.gt.f32.partialorder %v196, 0.0
  %vm261 = vcmp.gt.f32.partialorder %v197, 0.0
  %vm262 = vcmp.gt.f32.partialorder %v198, 0.0
  %vm263 = vcmp.gt.f32.partialorder %v199, 0.0
  %vm264 = vcmp.gt.f32.partialorder %v200, 0.0
  %vm265 = vcmp.gt.f32.partialorder %v201, 0.0
  %vm266 = vcmp.gt.f32.partialorder %v202, 0.0
  %vm267 = vcmp.gt.f32.partialorder %v203, 0.0
  %vm268 = vcmp.gt.f32.partialorder %v204, 0.0
  %vm269 = vcmp.gt.f32.partialorder %v205, 0.0
  %vm270 = vcmp.gt.f32.partialorder %v206, 0.0
  %vm271 = vcmp.gt.f32.partialorder %v207, 0.0
  %vm272 = vcmp.gt.f32.partialorder %v208, 0.0
  %vm273 = vcmp.gt.f32.partialorder %v209, 0.0
  %vm274 = vcmp.gt.f32.partialorder %v210, 0.0
  %vm275 = vcmp.gt.f32.partialorder %v211, 0.0
  %vm276 = vcmp.gt.f32.partialorder %v212, 0.0
  %vm277 = vcmp.gt.f32.partialorder %v213, 0.0
  %vm278 = vcmp.gt.f32.partialorder %v214, 0.0
  %vm279 = vcmp.gt.f32.partialorder %v215, 0.0
  %vm280 = vcmp.gt.f32.partialorder %v216, 0.0
  %vm281 = vcmp.gt.f32.partialorder %v217, 0.0
  %vm282 = vcmp.gt.f32.partialorder %v218, 0.0
  %vm283 = vcmp.gt.f32.partialorder %v219, 0.0
  %v284 = vmul.f32 %v156, 0.2
  %v285 = vmul.f32 %v157, 0.2
  %v286 = vmul.f32 %v158, 0.2
  %v287 = vmul.f32 %v159, 0.2
  %v288 = vmul.f32 %v160, 0.2
  %v289 = vmul.f32 %v161, 0.2
  %v290 = vmul.f32 %v162, 0.2
  %v291 = vmul.f32 %v163, 0.2
  %v292 = vmul.f32 %v164, 0.2
  %v293 = vmul.f32 %v165, 0.2
  %v294 = vmul.f32 %v166, 0.2
  %v295 = vmul.f32 %v167, 0.2
  %v296 = vmul.f32 %v168, 0.2
  %v297 = vmul.f32 %v169, 0.2
  %v298 = vmul.f32 %v170, 0.2
  %v299 = vmul.f32 %v171, 0.2
  %v300 = vmul.f32 %v172, 0.2
  %v301 = vmul.f32 %v173, 0.2
  %v302 = vmul.f32 %v174, 0.2
  %v303 = vmul.f32 %v175, 0.2
  %v304 = vmul.f32 %v176, 0.2
  %v305 = vmul.f32 %v177, 0.2
  %v306 = vmul.f32 %v178, 0.2
  %v307 = vmul.f32 %v179, 0.2
  %v308 = vmul.f32 %v180, 0.2
  %v309 = vmul.f32 %v181, 0.2
  %v310 = vmul.f32 %v182, 0.2
  %v311 = vmul.f32 %v183, 0.2
  %v312 = vmul.f32 %v184, 0.2
  %v313 = vmul.f32 %v185, 0.2
  %v314 = vmul.f32 %v186, 0.2
  %v315 = vmul.f32 %v187, 0.2
  %v316 = vmul.f32 %v188, 0.2
  %v317 = vmul.f32 %v189, 0.2
  %v318 = vmul.f32 %v190, 0.2
  %v319 = vmul.f32 %v191, 0.2
  %v320 = vmul.f32 %v192, 0.2
  %v321 = vmul.f32 %v193, 0.2
  %v322 = vmul.f32 %v194, 0.2
  %v323 = vmul.f32 %v195, 0.2
  %v324 = vmul.f32 %v196, 0.2
  %v325 = vmul.f32 %v197, 0.2
  %v326 = vmul.f32 %v198, 0.2
  %v327 = vmul.f32 %v199, 0.2
  %v328 = vmul.f32 %v200, 0.2
  %v329 = vmul.f32 %v201, 0.2
  %v330 = vmul.f32 %v202, 0.2
  %v331 = vmul.f32 %v203, 0.2
  %v332 = vmul.f32 %v204, 0.2
  %v333 = vmul.f32 %v205, 0.2
  %v334 = vmul.f32 %v206, 0.2
  %v335 = vmul.f32 %v207, 0.2
  %v336 = vmul.f32 %v208, 0.2
  %v337 = vmul.f32 %v209, 0.2
  %v338 = vmul.f32 %v210, 0.2
  %v339 = vmul.f32 %v211, 0.2
  %v340 = vmul.f32 %v212, 0.2
  %v341 = vmul.f32 %v213, 0.2
  %v342 = vmul.f32 %v214, 0.2
  %v343 = vmul.f32 %v215, 0.2
  %v344 = vmul.f32 %v216, 0.2
  %v345 = vmul.f32 %v217, 0.2
  %v346 = vmul.f32 %v218, 0.2
  %v347 = vmul.f32 %v219, 0.2
  %v348 = vsel %vm220, %v156, %v284
  %v349 = vsel %vm221, %v157, %v285
  %v350 = vsel %vm222, %v158, %v286
  %v351 = vsel %vm223, %v159, %v287
  %v352 = vsel %vm224, %v160, %v288
  %v353 = vsel %vm225, %v161, %v289
  %v354 = vsel %vm226, %v162, %v290
  %v355 = vsel %vm227, %v163, %v291
  %v356 = vsel %vm228, %v164, %v292
  %v357 = vsel %vm229, %v165, %v293
  %v358 = vsel %vm230, %v166, %v294
  %v359 = vsel %vm231, %v167, %v295
  %v360 = vsel %vm232, %v168, %v296
  %v361 = vsel %vm233, %v169, %v297
  %v362 = vsel %vm234, %v170, %v298
  %v363 = vsel %vm235, %v171, %v299
  %v364 = vsel %vm236, %v172, %v300
  %v365 = vsel %vm237, %v173, %v301
  %v366 = vsel %vm238, %v174, %v302
  %v367 = vsel %vm239, %v175, %v303
  %v368 = vsel %vm240, %v176, %v304
  %v369 = vsel %vm241, %v177, %v305
  %v370 = vsel %vm242, %v178, %v306
  %v371 = vsel %vm243, %v179, %v307
  %v372 = vsel %vm244, %v180, %v308
  %v373 = vsel %vm245, %v181, %v309
  %v374 = vsel %vm246, %v182, %v310
  %v375 = vsel %vm247, %v183, %v311
  %v376 = vsel %vm248, %v184, %v312
  %v377 = vsel %vm249, %v185, %v313
  %v378 = vsel %vm250, %v186, %v314
  %v379 = vsel %vm251, %v187, %v315
  %v380 = vsel %vm252, %v188, %v316
  %v381 = vsel %vm253, %v189, %v317
  %v382 = vsel %vm254, %v190, %v318
  %v383 = vsel %vm255, %v191, %v319
  %v384 = vsel %vm256, %v192, %v320
  %v385 = vsel %vm257, %v193, %v321
  %v386 = vsel %vm258, %v194, %v322
  %v387 = vsel %vm259, %v195, %v323
  %v388 = vsel %vm260, %v196, %v324
  %v389 = vsel %vm261, %v197, %v325
  %v390 = vsel %vm262, %v198, %v326
  %v391 = vsel %vm263, %v199, %v327
  %v392 = vsel %vm264, %v200, %v328
  %v393 = vsel %vm265, %v201, %v329
  %v394 = vsel %vm266, %v202, %v330
  %v395 = vsel %vm267, %v203, %v331
  %v396 = vsel %vm268, %v204, %v332
  %v397 = vsel %vm269, %v205, %v333
  %v398 = vsel %vm270, %v206, %v334
  %v399 = vsel %vm271, %v207, %v335
  %v400 = vsel %vm272, %v208, %v336
  %v401 = vsel %vm273, %v209, %v337
  %v402 = vsel %vm274, %v210, %v338
  %v403 = vsel %vm275, %v211, %v339
  %v404 = vsel %vm276, %v212, %v340
  %v405 = vsel %vm277, %v213, %v341
  %v406 = vsel %vm278, %v214, %v342
  %v407 = vsel %vm279, %v215, %v343
  %v408 = vsel %vm280, %v216, %v344
  %v409 = vsel %vm281, %v217, %v345
  %v410 = vsel %vm282, %v218, %v346
  %v411 = vsel %vm283, %v219, %v347
  %412 = vst [vmem:[%s3] sm:$0xff] %v348
  %413 = vst [vmem:[%s3 + $0x8] sm:$0xff] %v349
  %414 = vst [vmem:[%s3 + $0x10] sm:$0xff] %v350
  %415 = vst [vmem:[%s3 + $0x18] sm:$0xff] %v351
  %416 = vst [vmem:[%s3 + $0x20] sm:$0xff] %v352
  %417 = vst [vmem:[%s3 + $0x28] sm:$0xff] %v353
  %418 = vst [vmem:[%s3 + $0x30] sm:$0xff] %v354
  %419 = vst [vmem:[%s3 + $0x38] sm:$0xff] %v355
  %420 = vst [vmem:[%s3 + $0x40] sm:$0xff] %v356
  %421 = vst [vmem:[%s3 + $0x48] sm:$0xff] %v357
  %422 = vst [vmem:[%s3 + $0x50] sm:$0xff] %v358
  %423 = vst [vmem:[%s3 + $0x58] sm:$0xff] %v359
  %424 = vst [vmem:[%s3 + $0x60] sm:$0xff] %v360
  %425 = vst [vmem:[%s3 + $0x68] sm:$0xff] %v361
  %426 = vst [vmem:[%s3 + $0x70] sm:$0xff] %v362
  %427 = vst [vmem:[%s3 + $0x78] sm:$0xff] %v363
  %428 = vst [vmem:[%s3 + $0x80] sm:$0xff] %v364
  %429 = vst [vmem:[%s3 + $0x88] sm:$0xff] %v365
  %430 = vst [vmem:[%s3 + $0x90] sm:$0xff] %v366
  %431 = vst [vmem:[%s3 + $0x98] sm:$0xff] %v367
  %432 = vst [vmem:[%s3 + $0xa0] sm:$0xff] %v368
  %433 = vst [vmem:[%s3 + $0xa8] sm:$0xff] %v369
  %434 = vst [vmem:[%s3 + $0xb0] sm:$0xff] %v370
  %435 = vst [vmem:[%s3 + $0xb8] sm:$0xff] %v371
  %436 = vst [vmem:[%s3 + $0xc0] sm:$0xff] %v372
  %437 = vst [vmem:[%s3 + $0xc8] sm:$0xff] %v373
  %438 = vst [vmem:[%s3 + $0xd0] sm:$0xff] %v374
  %439 = vst [vmem:[%s3 + $0xd8] sm:$0xff] %v375
  %440 = vst [vmem:[%s3 + $0xe0] sm:$0xff] %v376
  %441 = vst [vmem:[%s3 + $0xe8] sm:$0xff] %v377
  %442 = vst [vmem:[%s3 + $0xf0] sm:$0xff] %v378
  %443 = vst [vmem:[%s3 + $0xf8] sm:$0xff] %v379
  %444 = vst [vmem:[%s3 + $0x100] sm:$0xff] %v380
  %445 = vst [vmem:[%s3 + $0x108] sm:$0xff] %v381
  %446 = vst [vmem:[%s3 + $0x110] sm:$0xff] %v382
  %447 = vst [vmem:[%s3 + $0x118] sm:$0xff] %v383
  %448 = vst [vmem:[%s3 + $0x120] sm:$0xff] %v384
  %449 = vst [vmem:[%s3 + $0x128] sm:$0xff] %v385
  %450 = vst [vmem:[%s3 + $0x130] sm:$0xff] %v386
  %451 = vst [vmem:[%s3 + $0x138] sm:$0xff] %v387
  %452 = vst [vmem:[%s3 + $0x140] sm:$0xff] %v388
  %453 = vst [vmem:[%s3 + $0x148] sm:$0xff] %v389
  %454 = vst [vmem:[%s3 + $0x150] sm:$0xff] %v390
  %455 = vst [vmem:[%s3 + $0x158] sm:$0xff] %v391
  %456 = vst [vmem:[%s3 + $0x160] sm:$0xff] %v392
  %457 = vst [vmem:[%s3 + $0x168] sm:$0xff] %v393
  %458 = vst [vmem:[%s3 + $0x170] sm:$0xff] %v394
  %459 = vst [vmem:[%s3 + $0x178] sm:$0xff] %v395
  %460 = vst [vmem:[%s3 + $0x180] sm:$0xff] %v396
  %461 = vst [vmem:[%s3 + $0x188] sm:$0xff] %v397
  %462 = vst [vmem:[%s3 + $0x190] sm:$0xff] %v398
  %463 = vst [vmem:[%s3 + $0x198] sm:$0xff] %v399
  %464 = vst [vmem:[%s3 + $0x1a0] sm:$0xff] %v400
  %465 = vst [vmem:[%s3 + $0x1a8] sm:$0xff] %v401
  %466 = vst [vmem:[%s3 + $0x1b0] sm:$0xff] %v402
  %467 = vst [vmem:[%s3 + $0x1b8] sm:$0xff] %v403
  %468 = vst [vmem:[%s3 + $0x1c0] sm:$0xff] %v404
  %469 = vst [vmem:[%s3 + $0x1c8] sm:$0xff] %v405
  %470 = vst [vmem:[%s3 + $0x1d0] sm:$0xff] %v406
  %471 = vst [vmem:[%s3 + $0x1d8] sm:$0xff] %v407
  %472 = vst [vmem:[%s3 + $0x1e0] sm:$0xff] %v408
  %473 = vst [vmem:[%s3 + $0x1e8] sm:$0xff] %v409
  %474 = vst [vmem:[%s3 + $0x1f0] sm:$0xff] %v410
  %475 = vst [vmem:[%s3 + $0x1f8] sm:$0xff] %v411
  // Predicated region
  $region14: #{unet3d_forward.38} parent=0 // pred_check
    _
  $region15: #{unet3d_forward.38} parent=0 // pred_check_branch
    %477 = sbr.rel (0) target = $region17
  $region16: #{unet3d_forward.38} parent=0 // pred_region
    _
  $region17: #{unet3d_forward.38} parent=0 // pred_fallthru
    _
  // Predicated region
  $region18: #{unet3d_forward.38} parent=0 // pred_check
    _
  $region19: #{unet3d_forward.38} parent=0 // pred_check_branch
    %479 = sbr.rel (0) target = $region21
  $region20: #{unet3d_forward.38} parent=0 // pred_region
    _
  $region21: #{unet3d_forward.38} parent=0 // pred_fallthru
    _

// kernel: unet3d_forward.37
$region0: #{unet3d_forward.37}
  #allocation0 [shape = 'u32[]', space=smem, size = 0x4, offset = 0x4, fixed_abs, tag = 'smem constant byte address 0x4 - core index']
  #allocation1 [shape = 'u32[144,128]{1,0:T(1,128)}', space=vmem, size = 0x12000, scoped, tag = 'internal scratch']
  #allocation2 [shape = 'f32[512,128]{1,0:T(8,128)}', space=vmem, size = 0x40000, scoped, tag = 'scratch operand']
  %s0 = inlined_call_operand.vmem [shape: bf16[512,128], index: 0, kind: input, shape index: {}]
  %s1 = inlined_call_operand.vmem [shape: bf16[128,128], index: 1, kind: input, shape index: {}]
  %s2 = inlined_call_operand.vmem [shape: f32[1,128], index: 2, kind: input, shape index: {}]
  %s3 = inlined_call_operand.vmem [shape: f32[512,128], index: 3, kind: output, shape index: {0}]
  %s4 = inlined_call_operand.vmem [shape: f32[1,8,128], index: 4, kind: output, shape index: {1}]
  %s5 = inlined_call_operand.vmem [shape: f32[1,8,128], index: 5, kind: output, shape index: {2}]
  %6 = xla_tuple %s3, %s4, %s5
  %s7 = sld [smem:[#allocation0]]
  $region46: #{unet3d_forward.37} parent=0
    _
  %s9 = ssub.s32 1, %s7
  %s10 = scalar_select 0, %s9, %s7
  // Predicated region
  $region2: #{unet3d_forward.37} parent=0 // pred_check
    _
  $region3: #{unet3d_forward.37} parent=0 // pred_check_branch
    %12 = sbr.rel (0) target = $region5
  $region4: #{unet3d_forward.37} parent=0 // pred_region
    _
  $region5: #{unet3d_forward.37} parent=0 // pred_fallthru
    _
  // Predicated region
  $region6: #{unet3d_forward.37} parent=0 // pred_check
    _
  $region7: #{unet3d_forward.37} parent=0 // pred_check_branch
    %14 = sbr.rel (0) target = $region9
  $region8: #{unet3d_forward.37} parent=0 // pred_region
    _
  $region9: #{unet3d_forward.37} parent=0 // pred_fallthru
    _
  // Predicated region
  $region10: #{unet3d_forward.37} parent=0 // pred_check
    _
  $region11: #{unet3d_forward.37} parent=0 // pred_check_branch
    %16 = sbr.rel (0) target = $region13
  $region12: #{unet3d_forward.37} parent=0 // pred_region
    _
  $region13: #{unet3d_forward.37} parent=0 // pred_fallthru
    _
  %p18 = scmp.eq.s32.totalorder 0, 0
  // Predicated region
  $region14: #{unet3d_forward.37} parent=0 // pred_check
    %p19 = pneg %p18
  $region15: #{unet3d_forward.37} parent=0 // pred_check_branch
    %21 = sbr.rel (%p19) target = $region17
  $region16: #{unet3d_forward.37} parent=0 // pred_region
    %22 = vst [vmem:[#allocation2] sm:$0xff] 0.0
    %23 = vst [vmem:[#allocation2 + $0x8] sm:$0xff] 0.0
    %24 = vst [vmem:[#allocation2 + $0x10] sm:$0xff] 0.0
    %25 = vst [vmem:[#allocation2 + $0x18] sm:$0xff] 0.0
    %26 = vst [vmem:[#allocation2 + $0x20] sm:$0xff] 0.0
    %27 = vst [vmem:[#allocation2 + $0x28] sm:$0xff] 0.0
    %28 = vst [vmem:[#allocation2 + $0x30] sm:$0xff] 0.0
    %29 = vst [vmem:[#allocation2 + $0x38] sm:$0xff] 0.0
    %30 = vst [vmem:[#allocation2 + $0x40] sm:$0xff] 0.0
    %31 = vst [vmem:[#allocation2 + $0x48] sm:$0xff] 0.0
    %32 = vst [vmem:[#allocation2 + $0x50] sm:$0xff] 0.0
    %33 = vst [vmem:[#allocation2 + $0x58] sm:$0xff] 0.0
    %34 = vst [vmem:[#allocation2 + $0x60] sm:$0xff] 0.0
    %35 = vst [vmem:[#allocation2 + $0x68] sm:$0xff] 0.0
    %36 = vst [vmem:[#allocation2 + $0x70] sm:$0xff] 0.0
    %37 = vst [vmem:[#allocation2 + $0x78] sm:$0xff] 0.0
    %38 = vst [vmem:[#allocation2 + $0x80] sm:$0xff] 0.0
    %39 = vst [vmem:[#allocation2 + $0x88] sm:$0xff] 0.0
    %40 = vst [vmem:[#allocation2 + $0x90] sm:$0xff] 0.0
    %41 = vst [vmem:[#allocation2 + $0x98] sm:$0xff] 0.0
    %42 = vst [vmem:[#allocation2 + $0xa0] sm:$0xff] 0.0
    %43 = vst [vmem:[#allocation2 + $0xa8] sm:$0xff] 0.0
    %44 = vst [vmem:[#allocation2 + $0xb0] sm:$0xff] 0.0
    %45 = vst [vmem:[#allocation2 + $0xb8] sm:$0xff] 0.0
    %46 = vst [vmem:[#allocation2 + $0xc0] sm:$0xff] 0.0
    %47 = vst [vmem:[#allocation2 + $0xc8] sm:$0xff] 0.0
    %48 = vst [vmem:[#allocation2 + $0xd0] sm:$0xff] 0.0
    %49 = vst [vmem:[#allocation2 + $0xd8] sm:$0xff] 0.0
    %50 = vst [vmem:[#allocation2 + $0xe0] sm:$0xff] 0.0
    %51 = vst [vmem:[#allocation2 + $0xe8] sm:$0xff] 0.0
    %52 = vst [vmem:[#allocation2 + $0xf0] sm:$0xff] 0.0
    %53 = vst [vmem:[#allocation2 + $0xf8] sm:$0xff] 0.0
    %54 = vst [vmem:[#allocation2 + $0x100] sm:$0xff] 0.0
    %55 = vst [vmem:[#allocation2 + $0x108] sm:$0xff] 0.0
    %56 = vst [vmem:[#allocation2 + $0x110] sm:$0xff] 0.0
    %57 = vst [vmem:[#allocation2 + $0x118] sm:$0xff] 0.0
    %58 = vst [vmem:[#allocation2 + $0x120] sm:$0xff] 0.0
    %59 = vst [vmem:[#allocation2 + $0x128] sm:$0xff] 0.0
    %60 = vst [vmem:[#allocation2 + $0x130] sm:$0xff] 0.0
    %61 = vst [vmem:[#allocation2 + $0x138] sm:$0xff] 0.0
    %62 = vst [vmem:[#allocation2 + $0x140] sm:$0xff] 0.0
    %63 = vst [vmem:[#allocation2 + $0x148] sm:$0xff] 0.0
    %64 = vst [vmem:[#allocation2 + $0x150] sm:$0xff] 0.0
    %65 = vst [vmem:[#allocation2 + $0x158] sm:$0xff] 0.0
    %66 = vst [vmem:[#allocation2 + $0x160] sm:$0xff] 0.0
    %67 = vst [vmem:[#allocation2 + $0x168] sm:$0xff] 0.0
    %68 = vst [vmem:[#allocation2 + $0x170] sm:$0xff] 0.0
    %69 = vst [vmem:[#allocation2 + $0x178] sm:$0xff] 0.0
    %70 = vst [vmem:[#allocation2 + $0x180] sm:$0xff] 0.0
    %71 = vst [vmem:[#allocation2 + $0x188] sm:$0xff] 0.0
    %72 = vst [vmem:[#allocation2 + $0x190] sm:$0xff] 0.0
    %73 = vst [vmem:[#allocation2 + $0x198] sm:$0xff] 0.0
    %74 = vst [vmem:[#allocation2 + $0x1a0] sm:$0xff] 0.0
    %75 = vst [vmem:[#allocation2 + $0x1a8] sm:$0xff] 0.0
    %76 = vst [vmem:[#allocation2 + $0x1b0] sm:$0xff] 0.0
    %77 = vst [vmem:[#allocation2 + $0x1b8] sm:$0xff] 0.0
    %78 = vst [vmem:[#allocation2 + $0x1c0] sm:$0xff] 0.0
    %79 = vst [vmem:[#allocation2 + $0x1c8] sm:$0xff] 0.0
    %80 = vst [vmem:[#allocation2 + $0x1d0] sm:$0xff] 0.0
    %81 = vst [vmem:[#allocation2 + $0x1d8] sm:$0xff] 0.0
    %82 = vst [vmem:[#allocation2 + $0x1e0] sm:$0xff] 0.0
    %83 = vst [vmem:[#allocation2 + $0x1e8] sm:$0xff] 0.0
    %84 = vst [vmem:[#allocation2 + $0x1f0] sm:$0xff] 0.0
    %85 = vst [vmem:[#allocation2 + $0x1f8] sm:$0xff] 0.0
  $region17: #{unet3d_forward.37} parent=0 // pred_fallthru
    _
  %v86 = vld [vmem:[#allocation2] sm:$0xff]
  %v87 = vld [vmem:[#allocation2 + $0x8] sm:$0xff]
  %v88 = vld [vmem:[#allocation2 + $0x10] sm:$0xff]
  %v89 = vld [vmem:[#allocation2 + $0x18] sm:$0xff]
  %v90 = vld [vmem:[#allocation2 + $0x20] sm:$0xff]
  %v91 = vld [vmem:[#allocation2 + $0x28] sm:$0xff]
  %v92 = vld [vmem:[#allocation2 + $0x30] sm:$0xff]
  %v93 = vld [vmem:[#allocation2 + $0x38] sm:$0xff]
  %v94 = vld [vmem:[#allocation2 + $0x40] sm:$0xff]
  %v95 = vld [vmem:[#allocation2 + $0x48] sm:$0xff]
  %v96 = vld [vmem:[#allocation2 + $0x50] sm:$0xff]
  %v97 = vld [vmem:[#allocation2 + $0x58] sm:$0xff]
  %v98 = vld [vmem:[#allocation2 + $0x60] sm:$0xff]
  %v99 = vld [vmem:[#allocation2 + $0x68] sm:$0xff]
  %v100 = vld [vmem:[#allocation2 + $0x70] sm:$0xff]
  %v101 = vld [vmem:[#allocation2 + $0x78] sm:$0xff]
  %v102 = vld [vmem:[#allocation2 + $0x80] sm:$0xff]
  %v103 = vld [vmem:[#allocation2 + $0x88] sm:$0xff]
  %v104 = vld [vmem:[#allocation2 + $0x90] sm:$0xff]
  %v105 = vld [vmem:[#allocation2 + $0x98] sm:$0xff]
  %v106 = vld [vmem:[#allocation2 + $0xa0] sm:$0xff]
  %v107 = vld [vmem:[#allocation2 + $0xa8] sm:$0xff]
  %v108 = vld [vmem:[#allocation2 + $0xb0] sm:$0xff]
  %v109 = vld [vmem:[#allocation2 + $0xb8] sm:$0xff]
  %v110 = vld [vmem:[#allocation2 + $0xc0] sm:$0xff]
  %v111 = vld [vmem:[#allocation2 + $0xc8] sm:$0xff]
  %v112 = vld [vmem:[#allocation2 + $0xd0] sm:$0xff]
  %v113 = vld [vmem:[#allocation2 + $0xd8] sm:$0xff]
  %v114 = vld [vmem:[#allocation2 + $0xe0] sm:$0xff]
  %v115 = vld [vmem:[#allocation2 + $0xe8] sm:$0xff]
  %v116 = vld [vmem:[#allocation2 + $0xf0] sm:$0xff]
  %v117 = vld [vmem:[#allocation2 + $0xf8] sm:$0xff]
  %v118 = vld [vmem:[#allocation2 + $0x100] sm:$0xff]
  %v119 = vld [vmem:[#allocation2 + $0x108] sm:$0xff]
  %v120 = vld [vmem:[#allocation2 + $0x110] sm:$0xff]
  %v121 = vld [vmem:[#allocation2 + $0x118] sm:$0xff]
  %v122 = vld [vmem:[#allocation2 + $0x120] sm:$0xff]
  %v123 = vld [vmem:[#allocation2 + $0x128] sm:$0xff]
  %v124 = vld [vmem:[#allocation2 + $0x130] sm:$0xff]
  %v125 = vld [vmem:[#allocation2 + $0x138] sm:$0xff]
  %v126 = vld [vmem:[#allocation2 + $0x140] sm:$0xff]
  %v127 = vld [vmem:[#allocation2 + $0x148] sm:$0xff]
  %v128 = vld [vmem:[#allocation2 + $0x150] sm:$0xff]
  %v129 = vld [vmem:[#allocation2 + $0x158] sm:$0xff]
  %v130 = vld [vmem:[#allocation2 + $0x160] sm:$0xff]
  %v131 = vld [vmem:[#allocation2 + $0x168] sm:$0xff]
  %v132 = vld [vmem:[#allocation2 + $0x170] sm:$0xff]
  %v133 = vld [vmem:[#allocation2 + $0x178] sm:$0xff]
  %v134 = vld [vmem:[#allocation2 + $0x180] sm:$0xff]
  %v135 = vld [vmem:[#allocation2 + $0x188] sm:$0xff]
  %v136 = vld [vmem:[#allocation2 + $0x190] sm:$0xff]
  %v137 = vld [vmem:[#allocation2 + $0x198] sm:$0xff]
  %v138 = vld [vmem:[#allocation2 + $0x1a0] sm:$0xff]
  %v139 = vld [vmem:[#allocation2 + $0x1a8] sm:$0xff]
  %v140 = vld [vmem:[#allocation2 + $0x1b0] sm:$0xff]
  %v141 = vld [vmem:[#allocation2 + $0x1b8] sm:$0xff]
  %v142 = vld [vmem:[#allocation2 + $0x1c0] sm:$0xff]
  %v143 = vld [vmem:[#allocation2 + $0x1c8] sm:$0xff]
  %v144 = vld [vmem:[#allocation2 + $0x1d0] sm:$0xff]
  %v145 = vld [vmem:[#allocation2 + $0x1d8] sm:$0xff]
  %v146 = vld [vmem:[#allocation2 + $0x1e0] sm:$0xff]
  %v147 = vld [vmem:[#allocation2 + $0x1e8] sm:$0xff]
  %v148 = vld [vmem:[#allocation2 + $0x1f0] sm:$0xff]
  %v149 = vld [vmem:[#allocation2 + $0x1f8] sm:$0xff]
  %v150 = vld [vmem:[%s0] sm:$0xf]
  %v151 = vld [vmem:[%s0 + $0x4] sm:$0xf]
  %v152 = vld [vmem:[%s0 + $0x8] sm:$0xf]
  %v153 = vld [vmem:[%s0 + $0xc] sm:$0xf]
  %v154 = vld [vmem:[%s0 + $0x10] sm:$0xf]
  %v155 = vld [vmem:[%s0 + $0x14] sm:$0xf]
  %v156 = vld [vmem:[%s0 + $0x18] sm:$0xf]
  %v157 = vld [vmem:[%s0 + $0x1c] sm:$0xf]
  %v158 = vld [vmem:[%s0 + $0x20] sm:$0xf]
  %v159 = vld [vmem:[%s0 + $0x24] sm:$0xf]
  %v160 = vld [vmem:[%s0 + $0x28] sm:$0xf]
  %v161 = vld [vmem:[%s0 + $0x2c] sm:$0xf]
  %v162 = vld [vmem:[%s0 + $0x30] sm:$0xf]
  %v163 = vld [vmem:[%s0 + $0x34] sm:$0xf]
  %v164 = vld [vmem:[%s0 + $0x38] sm:$0xf]
  %v165 = vld [vmem:[%s0 + $0x3c] sm:$0xf]
  %v166 = vld [vmem:[%s0 + $0x40] sm:$0xf]
  %v167 = vld [vmem:[%s0 + $0x44] sm:$0xf]
  %v168 = vld [vmem:[%s0 + $0x48] sm:$0xf]
  %v169 = vld [vmem:[%s0 + $0x4c] sm:$0xf]
  %v170 = vld [vmem:[%s0 + $0x50] sm:$0xf]
  %v171 = vld [vmem:[%s0 + $0x54] sm:$0xf]
  %v172 = vld [vmem:[%s0 + $0x58] sm:$0xf]
  %v173 = vld [vmem:[%s0 + $0x5c] sm:$0xf]
  %v174 = vld [vmem:[%s0 + $0x60] sm:$0xf]
  %v175 = vld [vmem:[%s0 + $0x64] sm:$0xf]
  %v176 = vld [vmem:[%s0 + $0x68] sm:$0xf]
  %v177 = vld [vmem:[%s0 + $0x6c] sm:$0xf]
  %v178 = vld [vmem:[%s0 + $0x70] sm:$0xf]
  %v179 = vld [vmem:[%s0 + $0x74] sm:$0xf]
  %v180 = vld [vmem:[%s0 + $0x78] sm:$0xf]
  %v181 = vld [vmem:[%s0 + $0x7c] sm:$0xf]
  %v182 = vld [vmem:[%s0 + $0x80] sm:$0xf]
  %v183 = vld [vmem:[%s0 + $0x84] sm:$0xf]
  %v184 = vld [vmem:[%s0 + $0x88] sm:$0xf]
  %v185 = vld [vmem:[%s0 + $0x8c] sm:$0xf]
  %v186 = vld [vmem:[%s0 + $0x90] sm:$0xf]
  %v187 = vld [vmem:[%s0 + $0x94] sm:$0xf]
  %v188 = vld [vmem:[%s0 + $0x98] sm:$0xf]
  %v189 = vld [vmem:[%s0 + $0x9c] sm:$0xf]
  %v190 = vld [vmem:[%s0 + $0xa0] sm:$0xf]
  %v191 = vld [vmem:[%s0 + $0xa4] sm:$0xf]
  %v192 = vld [vmem:[%s0 + $0xa8] sm:$0xf]
  %v193 = vld [vmem:[%s0 + $0xac] sm:$0xf]
  %v194 = vld [vmem:[%s0 + $0xb0] sm:$0xf]
  %v195 = vld [vmem:[%s0 + $0xb4] sm:$0xf]
  %v196 = vld [vmem:[%s0 + $0xb8] sm:$0xf]
  %v197 = vld [vmem:[%s0 + $0xbc] sm:$0xf]
  %v198 = vld [vmem:[%s0 + $0xc0] sm:$0xf]
  %v199 = vld [vmem:[%s0 + $0xc4] sm:$0xf]
  %v200 = vld [vmem:[%s0 + $0xc8] sm:$0xf]
  %v201 = vld [vmem:[%s0 + $0xcc] sm:$0xf]
  %v202 = vld [vmem:[%s0 + $0xd0] sm:$0xf]
  %v203 = vld [vmem:[%s0 + $0xd4] sm:$0xf]
  %v204 = vld [vmem:[%s0 + $0xd8] sm:$0xf]
  %v205 = vld [vmem:[%s0 + $0xdc] sm:$0xf]
  %v206 = vld [vmem:[%s0 + $0xe0] sm:$0xf]
  %v207 = vld [vmem:[%s0 + $0xe4] sm:$0xf]
  %v208 = vld [vmem:[%s0 + $0xe8] sm:$0xf]
  %v209 = vld [vmem:[%s0 + $0xec] sm:$0xf]
  %v210 = vld [vmem:[%s0 + $0xf0] sm:$0xf]
  %v211 = vld [vmem:[%s0 + $0xf4] sm:$0xf]
  %v212 = vld [vmem:[%s0 + $0xf8] sm:$0xf]
  %v213 = vld [vmem:[%s0 + $0xfc] sm:$0xf]
  %v214 = vld [vmem:[%s1] sm:$0xf]
  %v215 = vld [vmem:[%s1 + $0x4] sm:$0xf]
  %v216 = vld [vmem:[%s1 + $0x8] sm:$0xf]
  %v217 = vld [vmem:[%s1 + $0xc] sm:$0xf]
  %v218 = vld [vmem:[%s1 + $0x10] sm:$0xf]
  %v219 = vld [vmem:[%s1 + $0x14] sm:$0xf]
  %v220 = vld [vmem:[%s1 + $0x18] sm:$0xf]
  %v221 = vld [vmem:[%s1 + $0x1c] sm:$0xf]
  %v222 = vld [vmem:[%s1 + $0x20] sm:$0xf]
  %v223 = vld [vmem:[%s1 + $0x24] sm:$0xf]
  %v224 = vld [vmem:[%s1 + $0x28] sm:$0xf]
  %v225 = vld [vmem:[%s1 + $0x2c] sm:$0xf]
  %v226 = vld [vmem:[%s1 + $0x30] sm:$0xf]
  %v227 = vld [vmem:[%s1 + $0x34] sm:$0xf]
  %v228 = vld [vmem:[%s1 + $0x38] sm:$0xf]
  %v229 = vld [vmem:[%s1 + $0x3c] sm:$0xf]
  %v294 = vunpack.c.l.b16 %v150
  %v295 = vunpack.c.l.b16 %v151
  %v296 = vunpack.c.l.b16 %v152
  %v297 = vunpack.c.l.b16 %v153
  %v298 = vunpack.c.l.b16 %v154
  %v299 = vunpack.c.l.b16 %v155
  %v300 = vunpack.c.l.b16 %v156
  %v301 = vunpack.c.l.b16 %v157
  %v302 = vunpack.c.l.b16 %v158
  %v303 = vunpack.c.l.b16 %v159
  %v304 = vunpack.c.l.b16 %v160
  %v305 = vunpack.c.l.b16 %v161
  %v306 = vunpack.c.l.b16 %v162
  %v307 = vunpack.c.l.b16 %v163
  %v308 = vunpack.c.l.b16 %v164
  %v309 = vunpack.c.l.b16 %v165
  %v310 = vunpack.c.l.b16 %v166
  %v311 = vunpack.c.l.b16 %v167
  %v312 = vunpack.c.l.b16 %v168
  %v313 = vunpack.c.l.b16 %v169
  %v314 = vunpack.c.l.b16 %v170
  %v315 = vunpack.c.l.b16 %v171
  %v316 = vunpack.c.l.b16 %v172
  %v317 = vunpack.c.l.b16 %v173
  %v318 = vunpack.c.l.b16 %v174
  %v319 = vunpack.c.l.b16 %v175
  %v320 = vunpack.c.l.b16 %v176
  %v321 = vunpack.c.l.b16 %v177
  %v322 = vunpack.c.l.b16 %v178
  %v323 = vunpack.c.l.b16 %v179
  %v324 = vunpack.c.l.b16 %v180
  %v325 = vunpack.c.l.b16 %v181
  %v326 = vunpack.c.l.b16 %v182
  %v327 = vunpack.c.l.b16 %v183
  %v328 = vunpack.c.l.b16 %v184
  %v329 = vunpack.c.l.b16 %v185
  %v330 = vunpack.c.l.b16 %v186
  %v331 = vunpack.c.l.b16 %v187
  %v332 = vunpack.c.l.b16 %v188
  %v333 = vunpack.c.l.b16 %v189
  %v334 = vunpack.c.l.b16 %v190
  %v335 = vunpack.c.l.b16 %v191
  %v336 = vunpack.c.l.b16 %v192
  %v337 = vunpack.c.l.b16 %v193
  %v338 = vunpack.c.l.b16 %v194
  %v339 = vunpack.c.l.b16 %v195
  %v340 = vunpack.c.l.b16 %v196
  %v341 = vunpack.c.l.b16 %v197
  %v342 = vunpack.c.l.b16 %v198
  %v343 = vunpack.c.l.b16 %v199
  %v344 = vunpack.c.l.b16 %v200
  %v345 = vunpack.c.l.b16 %v201
  %v346 = vunpack.c.l.b16 %v202
  %v347 = vunpack.c.l.b16 %v203
  %v348 = vunpack.c.l.b16 %v204
  %v349 = vunpack.c.l.b16 %v205
  %v350 = vunpack.c.l.b16 %v206
  %v351 = vunpack.c.l.b16 %v207
  %v352 = vunpack.c.l.b16 %v208
  %v353 = vunpack.c.l.b16 %v209
  %v354 = vunpack.c.l.b16 %v210
  %v355 = vunpack.c.l.b16 %v211
  %v356 = vunpack.c.l.b16 %v212
  %v357 = vunpack.c.l.b16 %v213
  %v358 = vpack.c.b16 %v295, %v294
  %v359 = vpack.c.b16 %v297, %v296
  %v360 = vpack.c.b16 %v299, %v298
  %v361 = vpack.c.b16 %v301, %v300
  %v362 = vpack.c.b16 %v303, %v302
  %v363 = vpack.c.b16 %v305, %v304
  %v364 = vpack.c.b16 %v307, %v306
  %v365 = vpack.c.b16 %v309, %v308
  %v366 = vpack.c.b16 %v311, %v310
  %v367 = vpack.c.b16 %v313, %v312
  %v368 = vpack.c.b16 %v315, %v314
  %v369 = vpack.c.b16 %v317, %v316
  %v370 = vpack.c.b16 %v319, %v318
  %v371 = vpack.c.b16 %v321, %v320
  %v372 = vpack.c.b16 %v323, %v322
  %v373 = vpack.c.b16 %v325, %v324
  %v374 = vpack.c.b16 %v327, %v326
  %v375 = vpack.c.b16 %v329, %v328
  %v376 = vpack.c.b16 %v331, %v330
  %v377 = vpack.c.b16 %v333, %v332
  %v378 = vpack.c.b16 %v335, %v334
  %v379 = vpack.c.b16 %v337, %v336
  %v380 = vpack.c.b16 %v339, %v338
  %v381 = vpack.c.b16 %v341, %v340
  %v382 = vpack.c.b16 %v343, %v342
  %v383 = vpack.c.b16 %v345, %v344
  %v384 = vpack.c.b16 %v347, %v346
  %v385 = vpack.c.b16 %v349, %v348
  %v386 = vpack.c.b16 %v351, %v350
  %v387 = vpack.c.b16 %v353, %v352
  %v388 = vpack.c.b16 %v355, %v354
  %v389 = vpack.c.b16 %v357, %v356
  %v438 = vunpack.c.l.b16 %v214
  %v439 = vunpack.c.l.b16 %v215
  %v440 = vunpack.c.l.b16 %v216
  %v441 = vunpack.c.l.b16 %v217
  %v442 = vunpack.c.l.b16 %v218
  %v443 = vunpack.c.l.b16 %v219
  %v444 = vunpack.c.l.b16 %v220
  %v445 = vunpack.c.l.b16 %v221
  %v446 = vunpack.c.l.b16 %v222
  %v447 = vunpack.c.l.b16 %v223
  %v448 = vunpack.c.l.b16 %v224
  %v449 = vunpack.c.l.b16 %v225
  %v450 = vunpack.c.l.b16 %v226
  %v451 = vunpack.c.l.b16 %v227
  %v452 = vunpack.c.l.b16 %v228
  %v453 = vunpack.c.l.b16 %v229
  %v454 = vpack.c.b16 %v439, %v438
  %v455 = vpack.c.b16 %v441, %v440
  %v456 = vpack.c.b16 %v443, %v442
  %v457 = vpack.c.b16 %v445, %v444
  %v458 = vpack.c.b16 %v447, %v446
  %v459 = vpack.c.b16 %v449, %v448
  %v460 = vpack.c.b16 %v451, %v450
  %v461 = vpack.c.b16 %v453, %v452
  %470 = vmatprep.subr.bf16.mxu0 0
  %471 = vmatpush1.bf16.msra.mxu0 %v461
  %472 = vmatprep.subr.bf16.mxu0 0
  %473 = vmatpush1.bf16.msra.mxu0 %v460
  %474 = vmatprep.subr.bf16.mxu0 0
  %475 = vmatpush1.bf16.msra.mxu0 %v459
  %476 = vmatprep.subr.bf16.mxu0 0
  %477 = vmatpush1.bf16.msra.mxu0 %v458
  %478 = vmatprep.subr.bf16.mxu0 0
  %479 = vmatpush1.bf16.msra.mxu0 %v457
  %480 = vmatprep.subr.bf16.mxu0 0
  %481 = vmatpush1.bf16.msra.mxu0 %v456
  %482 = vmatprep.subr.bf16.mxu0 0
  %483 = vmatpush1.bf16.msra.mxu0 %v455
  %484 = vmatprep.subr.bf16.mxu0 0
  %485 = vmatpush1.bf16.msra.mxu0 %v454
  %486 = vmatprep.subr.bf16.mxu0 0
  %487 = vmatpush2.bf16.msra.mxu0 0
  %488 = vmatprep.subr.bf16.mxu0 0
  %489 = vmatpush2.bf16.msra.mxu0 0
  %490 = vmatprep.subr.bf16.mxu0 0
  %491 = vmatpush2.bf16.msra.mxu0 0
  %492 = vmatprep.subr.bf16.mxu0 0
  %493 = vmatpush2.bf16.msra.mxu0 0
  %494 = vmatprep.subr.bf16.mxu0 0
  %495 = vmatpush2.bf16.msra.mxu0 0
  %496 = vmatprep.subr.bf16.mxu0 0
  %497 = vmatpush2.bf16.msra.mxu0 0
  %498 = vmatprep.subr.bf16.mxu0 0
  %499 = vmatpush2.bf16.msra.mxu0 0
  %500 = vmatprep.subr.bf16.mxu0 0
  %501 = vmatpush2.bf16.msra.mxu0 0
  %502 = vmatprep.mubr.bf16.mxu0 0
  %503 = vmatmul.mubr.bf16.gmra.mxu0 %v358
  %v504 = vpop.f32.mrf.mxu0
  %v505 = vadd.f32 0.0, %v504
  %v506 = vpop.f32.mrf.mxu0
  %v507 = vpop.f32.mrf.mxu0
  %v508 = vadd.f32 0.0, %v507
  %v509 = vpop.f32.mrf.mxu0
  %510 = vmatprep.mubr.bf16.mxu0 0
  %511 = vmatmul.mubr.bf16.gmra.mxu0 %v359
  %v512 = vpop.f32.mrf.mxu0
  %v513 = vadd.f32 0.0, %v512
  %v514 = vpop.f32.mrf.mxu0
  %v515 = vpop.f32.mrf.mxu0
  %v516 = vadd.f32 0.0, %v515
  %v517 = vpop.f32.mrf.mxu0
  %518 = vmatprep.mubr.bf16.mxu0 0
  %519 = vmatmul.mubr.bf16.gmra.mxu0 %v360
  %v520 = vpop.f32.mrf.mxu0
  %v521 = vadd.f32 0.0, %v520
  %v522 = vpop.f32.mrf.mxu0
  %v523 = vpop.f32.mrf.mxu0
  %v524 = vadd.f32 0.0, %v523
  %v525 = vpop.f32.mrf.mxu0
  %526 = vmatprep.mubr.bf16.mxu0 0
  %527 = vmatmul.mubr.bf16.gmra.mxu0 %v361
  %v528 = vpop.f32.mrf.mxu0
  %v529 = vadd.f32 0.0, %v528
  %v530 = vpop.f32.mrf.mxu0
  %v531 = vpop.f32.mrf.mxu0
  %v532 = vadd.f32 0.0, %v531
  %v533 = vpop.f32.mrf.mxu0
  %534 = vmatprep.mubr.bf16.mxu0 0
  %535 = vmatmul.mubr.bf16.gmra.mxu0 %v362
  %v536 = vpop.f32.mrf.mxu0
  %v537 = vadd.f32 0.0, %v536
  %v538 = vpop.f32.mrf.mxu0
  %v539 = vpop.f32.mrf.mxu0
  %v540 = vadd.f32 0.0, %v539
  %v541 = vpop.f32.mrf.mxu0
  %542 = vmatprep.mubr.bf16.mxu0 0
  %543 = vmatmul.mubr.bf16.gmra.mxu0 %v363
  %v544 = vpop.f32.mrf.mxu0
  %v545 = vadd.f32 0.0, %v544
  %v546 = vpop.f32.mrf.mxu0
  %v547 = vpop.f32.mrf.mxu0
  %v548 = vadd.f32 0.0, %v547
  %v549 = vpop.f32.mrf.mxu0
  %550 = vmatprep.mubr.bf16.mxu0 0
  %551 = vmatmul.mubr.bf16.gmra.mxu0 %v364
  %v552 = vpop.f32.mrf.mxu0
  %v553 = vadd.f32 0.0, %v552
  %v554 = vpop.f32.mrf.mxu0
  %v555 = vpop.f32.mrf.mxu0
  %v556 = vadd.f32 0.0, %v555
  %v557 = vpop.f32.mrf.mxu0
  %558 = vmatprep.mubr.bf16.mxu0 0
  %559 = vmatmul.mubr.bf16.gmra.mxu0 %v365
  %v560 = vpop.f32.mrf.mxu0
  %v561 = vadd.f32 0.0, %v560
  %v562 = vpop.f32.mrf.mxu0
  %v563 = vpop.f32.mrf.mxu0
  %v564 = vadd.f32 0.0, %v563
  %v565 = vpop.f32.mrf.mxu0
  %566 = vmatprep.mubr.bf16.mxu0 0
  %567 = vmatmul.mubr.bf16.gmra.mxu0 %v366
  %v568 = vpop.f32.mrf.mxu0
  %v569 = vadd.f32 0.0, %v568
  %v570 = vpop.f32.mrf.mxu0
  %v571 = vpop.f32.mrf.mxu0
  %v572 = vadd.f32 0.0, %v571
  %v573 = vpop.f32.mrf.mxu0
  %574 = vmatprep.mubr.bf16.mxu0 0
  %575 = vmatmul.mubr.bf16.gmra.mxu0 %v367
  %v576 = vpop.f32.mrf.mxu0
  %v577 = vadd.f32 0.0, %v576
  %v578 = vpop.f32.mrf.mxu0
  %v579 = vpop.f32.mrf.mxu0
  %v580 = vadd.f32 0.0, %v579
  %v581 = vpop.f32.mrf.mxu0
  %582 = vmatprep.mubr.bf16.mxu0 0
  %583 = vmatmul.mubr.bf16.gmra.mxu0 %v368
  %v584 = vpop.f32.mrf.mxu0
  %v585 = vadd.f32 0.0, %v584
  %v586 = vpop.f32.mrf.mxu0
  %v587 = vpop.f32.mrf.mxu0
  %v588 = vadd.f32 0.0, %v587
  %v589 = vpop.f32.mrf.mxu0
  %590 = vmatprep.mubr.bf16.mxu0 0
  %591 = vmatmul.mubr.bf16.gmra.mxu0 %v369
  %v592 = vpop.f32.mrf.mxu0
  %v593 = vadd.f32 0.0, %v592
  %v594 = vpop.f32.mrf.mxu0
  %v595 = vpop.f32.mrf.mxu0
  %v596 = vadd.f32 0.0, %v595
  %v597 = vpop.f32.mrf.mxu0
  %598 = vmatprep.mubr.bf16.mxu0 0
  %599 = vmatmul.mubr.bf16.gmra.mxu0 %v370
  %v600 = vpop.f32.mrf.mxu0
  %v601 = vadd.f32 0.0, %v600
  %v602 = vpop.f32.mrf.mxu0
  %v603 = vpop.f32.mrf.mxu0
  %v604 = vadd.f32 0.0, %v603
  %v605 = vpop.f32.mrf.mxu0
  %606 = vmatprep.mubr.bf16.mxu0 0
  %607 = vmatmul.mubr.bf16.gmra.mxu0 %v371
  %v608 = vpop.f32.mrf.mxu0
  %v609 = vadd.f32 0.0, %v608
  %v610 = vpop.f32.mrf.mxu0
  %v611 = vpop.f32.mrf.mxu0
  %v612 = vadd.f32 0.0, %v611
  %v613 = vpop.f32.mrf.mxu0
  %614 = vmatprep.mubr.bf16.mxu0 0
  %615 = vmatmul.mubr.bf16.gmra.mxu0 %v372
  %v616 = vpop.f32.mrf.mxu0
  %v617 = vadd.f32 0.0, %v616
  %v618 = vpop.f32.mrf.mxu0
  %v619 = vpop.f32.mrf.mxu0
  %v620 = vadd.f32 0.0, %v619
  %v621 = vpop.f32.mrf.mxu0
  %622 = vmatprep.mubr.bf16.mxu0 0
  %623 = vmatmul.mubr.bf16.gmra.mxu0 %v373
  %v624 = vpop.f32.mrf.mxu0
  %v625 = vadd.f32 0.0, %v624
  %v626 = vpop.f32.mrf.mxu0
  %v627 = vpop.f32.mrf.mxu0
  %v628 = vadd.f32 0.0, %v627
  %v629 = vpop.f32.mrf.mxu0
  %630 = vmatprep.mubr.bf16.mxu0 0
  %631 = vmatmul.mubr.bf16.gmra.mxu0 %v374
  %v632 = vpop.f32.mrf.mxu0
  %v633 = vadd.f32 0.0, %v632
  %v634 = vpop.f32.mrf.mxu0
  %v635 = vpop.f32.mrf.mxu0
  %v636 = vadd.f32 0.0, %v635
  %v637 = vpop.f32.mrf.mxu0
  %638 = vmatprep.mubr.bf16.mxu0 0
  %639 = vmatmul.mubr.bf16.gmra.mxu0 %v375
  %v640 = vpop.f32.mrf.mxu0
  %v641 = vadd.f32 0.0, %v640
  %v642 = vpop.f32.mrf.mxu0
  %v643 = vpop.f32.mrf.mxu0
  %v644 = vadd.f32 0.0, %v643
  %v645 = vpop.f32.mrf.mxu0
  %646 = vmatprep.mubr.bf16.mxu0 0
  %647 = vmatmul.mubr.bf16.gmra.mxu0 %v376
  %v648 = vpop.f32.mrf.mxu0
  %v649 = vadd.f32 0.0, %v648
  %v650 = vpop.f32.mrf.mxu0
  %v651 = vpop.f32.mrf.mxu0
  %v652 = vadd.f32 0.0, %v651
  %v653 = vpop.f32.mrf.mxu0
  %654 = vmatprep.mubr.bf16.mxu0 0
  %655 = vmatmul.mubr.bf16.gmra.mxu0 %v377
  %v656 = vpop.f32.mrf.mxu0
  %v657 = vadd.f32 0.0, %v656
  %v658 = vpop.f32.mrf.mxu0
  %v659 = vpop.f32.mrf.mxu0
  %v660 = vadd.f32 0.0, %v659
  %v661 = vpop.f32.mrf.mxu0
  %662 = vmatprep.mubr.bf16.mxu0 0
  %663 = vmatmul.mubr.bf16.gmra.mxu0 %v378
  %v664 = vpop.f32.mrf.mxu0
  %v665 = vadd.f32 0.0, %v664
  %v666 = vpop.f32.mrf.mxu0
  %v667 = vpop.f32.mrf.mxu0
  %v668 = vadd.f32 0.0, %v667
  %v669 = vpop.f32.mrf.mxu0
  %670 = vmatprep.mubr.bf16.mxu0 0
  %671 = vmatmul.mubr.bf16.gmra.mxu0 %v379
  %v672 = vpop.f32.mrf.mxu0
  %v673 = vadd.f32 0.0, %v672
  %v674 = vpop.f32.mrf.mxu0
  %v675 = vpop.f32.mrf.mxu0
  %v676 = vadd.f32 0.0, %v675
  %v677 = vpop.f32.mrf.mxu0
  %678 = vmatprep.mubr.bf16.mxu0 0
  %679 = vmatmul.mubr.bf16.gmra.mxu0 %v380
  %v680 = vpop.f32.mrf.mxu0
  %v681 = vadd.f32 0.0, %v680
  %v682 = vpop.f32.mrf.mxu0
  %v683 = vpop.f32.mrf.mxu0
  %v684 = vadd.f32 0.0, %v683
  %v685 = vpop.f32.mrf.mxu0
  %686 = vmatprep.mubr.bf16.mxu0 0
  %687 = vmatmul.mubr.bf16.gmra.mxu0 %v381
  %v688 = vpop.f32.mrf.mxu0
  %v689 = vadd.f32 0.0, %v688
  %v690 = vpop.f32.mrf.mxu0
  %v691 = vpop.f32.mrf.mxu0
  %v692 = vadd.f32 0.0, %v691
  %v693 = vpop.f32.mrf.mxu0
  %694 = vmatprep.mubr.bf16.mxu0 0
  %695 = vmatmul.mubr.bf16.gmra.mxu0 %v382
  %v696 = vpop.f32.mrf.mxu0
  %v697 = vadd.f32 0.0, %v696
  %v698 = vpop.f32.mrf.mxu0
  %v699 = vpop.f32.mrf.mxu0
  %v700 = vadd.f32 0.0, %v699
  %v701 = vpop.f32.mrf.mxu0
  %702 = vmatprep.mubr.bf16.mxu0 0
  %703 = vmatmul.mubr.bf16.gmra.mxu0 %v383
  %v704 = vpop.f32.mrf.mxu0
  %v705 = vadd.f32 0.0, %v704
  %v706 = vpop.f32.mrf.mxu0
  %v707 = vpop.f32.mrf.mxu0
  %v708 = vadd.f32 0.0, %v707
  %v709 = vpop.f32.mrf.mxu0
  %710 = vmatprep.mubr.bf16.mxu0 0
  %711 = vmatmul.mubr.bf16.gmra.mxu0 %v384
  %v712 = vpop.f32.mrf.mxu0
  %v713 = vadd.f32 0.0, %v712
  %v714 = vpop.f32.mrf.mxu0
  %v715 = vpop.f32.mrf.mxu0
  %v716 = vadd.f32 0.0, %v715
  %v717 = vpop.f32.mrf.mxu0
  %718 = vmatprep.mubr.bf16.mxu0 0
  %719 = vmatmul.mubr.bf16.gmra.mxu0 %v385
  %v720 = vpop.f32.mrf.mxu0
  %v721 = vadd.f32 0.0, %v720
  %v722 = vpop.f32.mrf.mxu0
  %v723 = vpop.f32.mrf.mxu0
  %v724 = vadd.f32 0.0, %v723
  %v725 = vpop.f32.mrf.mxu0
  %726 = vmatprep.mubr.bf16.mxu0 0
  %727 = vmatmul.mubr.bf16.gmra.mxu0 %v386
  %v728 = vpop.f32.mrf.mxu0
  %v729 = vadd.f32 0.0, %v728
  %v730 = vpop.f32.mrf.mxu0
  %v731 = vpop.f32.mrf.mxu0
  %v732 = vadd.f32 0.0, %v731
  %v733 = vpop.f32.mrf.mxu0
  %734 = vmatprep.mubr.bf16.mxu0 0
  %735 = vmatmul.mubr.bf16.gmra.mxu0 %v387
  %v736 = vpop.f32.mrf.mxu0
  %v737 = vadd.f32 0.0, %v736
  %v738 = vpop.f32.mrf.mxu0
  %v739 = vpop.f32.mrf.mxu0
  %v740 = vadd.f32 0.0, %v739
  %v741 = vpop.f32.mrf.mxu0
  %742 = vmatprep.mubr.bf16.mxu0 0
  %743 = vmatmul.mubr.bf16.gmra.mxu0 %v388
  %v744 = vpop.f32.mrf.mxu0
  %v745 = vadd.f32 0.0, %v744
  %v746 = vpop.f32.mrf.mxu0
  %v747 = vpop.f32.mrf.mxu0
  %v748 = vadd.f32 0.0, %v747
  %v749 = vpop.f32.mrf.mxu0
  %750 = vmatprep.mubr.bf16.mxu0 0
  %751 = vmatmul.mubr.bf16.gmra.mxu0 %v389
  %v752 = vpop.f32.mrf.mxu0
  %v753 = vadd.f32 0.0, %v752
  %v754 = vpop.f32.mrf.mxu0
  %v755 = vpop.f32.mrf.mxu0
  %v756 = vadd.f32 0.0, %v755
  %v757 = vpop.f32.mrf.mxu0
  %758 = vdwg.mxu0
  %v759 = vadd.f32 %v86, %v505
  %v760 = vadd.f32 %v87, %v508
  %v761 = vadd.f32 %v88, %v513
  %v762 = vadd.f32 %v89, %v516
  %v763 = vadd.f32 %v90, %v521
  %v764 = vadd.f32 %v91, %v524
  %v765 = vadd.f32 %v92, %v529
  %v766 = vadd.f32 %v93, %v532
  %v767 = vadd.f32 %v94, %v537
  %v768 = vadd.f32 %v95, %v540
  %v769 = vadd.f32 %v96, %v545
  %v770 = vadd.f32 %v97, %v548
  %v771 = vadd.f32 %v98, %v553
  %v772 = vadd.f32 %v99, %v556
  %v773 = vadd.f32 %v100, %v561
  %v774 = vadd.f32 %v101, %v564
  %v775 = vadd.f32 %v102, %v569
  %v776 = vadd.f32 %v103, %v572
  %v777 = vadd.f32 %v104, %v577
  %v778 = vadd.f32 %v105, %v580
  %v779 = vadd.f32 %v106, %v585
  %v780 = vadd.f32 %v107, %v588
  %v781 = vadd.f32 %v108, %v593
  %v782 = vadd.f32 %v109, %v596
  %v783 = vadd.f32 %v110, %v601
  %v784 = vadd.f32 %v111, %v604
  %v785 = vadd.f32 %v112, %v609
  %v786 = vadd.f32 %v113, %v612
  %v787 = vadd.f32 %v114, %v617
  %v788 = vadd.f32 %v115, %v620
  %v789 = vadd.f32 %v116, %v625
  %v790 = vadd.f32 %v117, %v628
  %v791 = vadd.f32 %v118, %v633
  %v792 = vadd.f32 %v119, %v636
  %v793 = vadd.f32 %v120, %v641
  %v794 = vadd.f32 %v121, %v644
  %v795 = vadd.f32 %v122, %v649
  %v796 = vadd.f32 %v123, %v652
  %v797 = vadd.f32 %v124, %v657
  %v798 = vadd.f32 %v125, %v660
  %v799 = vadd.f32 %v126, %v665
  %v800 = vadd.f32 %v127, %v668
  %v801 = vadd.f32 %v128, %v673
  %v802 = vadd.f32 %v129, %v676
  %v803 = vadd.f32 %v130, %v681
  %v804 = vadd.f32 %v131, %v684
  %v805 = vadd.f32 %v132, %v689
  %v806 = vadd.f32 %v133, %v692
  %v807 = vadd.f32 %v134, %v697
  %v808 = vadd.f32 %v135, %v700
  %v809 = vadd.f32 %v136, %v705
  %v810 = vadd.f32 %v137, %v708
  %v811 = vadd.f32 %v138, %v713
  %v812 = vadd.f32 %v139, %v716
  %v813 = vadd.f32 %v140, %v721
  %v814 = vadd.f32 %v141, %v724
  %v815 = vadd.f32 %v142, %v729
  %v816 = vadd.f32 %v143, %v732
  %v817 = vadd.f32 %v144, %v737
  %v818 = vadd.f32 %v145, %v740
  %v819 = vadd.f32 %v146, %v745
  %v820 = vadd.f32 %v147, %v748
  %v821 = vadd.f32 %v148, %v753
  %v822 = vadd.f32 %v149, %v756
  %823 = vst [vmem:[#allocation2] sm:$0xff] %v759
  %824 = vst [vmem:[#allocation2 + $0x8] sm:$0xff] %v760
  %825 = vst [vmem:[#allocation2 + $0x10] sm:$0xff] %v761
  %826 = vst [vmem:[#allocation2 + $0x18] sm:$0xff] %v762
  %827 = vst [vmem:[#allocation2 + $0x20] sm:$0xff] %v763
  %828 = vst [vmem:[#allocation2 + $0x28] sm:$0xff] %v764
  %829 = vst [vmem:[#allocation2 + $0x30] sm:$0xff] %v765
  %830 = vst [vmem:[#allocation2 + $0x38] sm:$0xff] %v766
  %831 = vst [vmem:[#allocation2 + $0x40] sm:$0xff] %v767
  %832 = vst [vmem:[#allocation2 + $0x48] sm:$0xff] %v768
  %833 = vst [vmem:[#allocation2 + $0x50] sm:$0xff] %v769
  %834 = vst [vmem:[#allocation2 + $0x58] sm:$0xff] %v770
  %835 = vst [vmem:[#allocation2 + $0x60] sm:$0xff] %v771
  %836 = vst [vmem:[#allocation2 + $0x68] sm:$0xff] %v772
  %837 = vst [vmem:[#allocation2 + $0x70] sm:$0xff] %v773
  %838 = vst [vmem:[#allocation2 + $0x78] sm:$0xff] %v774
  %839 = vst [vmem:[#allocation2 + $0x80] sm:$0xff] %v775
  %840 = vst [vmem:[#allocation2 + $0x88] sm:$0xff] %v776
  %841 = vst [vmem:[#allocation2 + $0x90] sm:$0xff] %v777
  %842 = vst [vmem:[#allocation2 + $0x98] sm:$0xff] %v778
  %843 = vst [vmem:[#allocation2 + $0xa0] sm:$0xff] %v779
  %844 = vst [vmem:[#allocation2 + $0xa8] sm:$0xff] %v780
  %845 = vst [vmem:[#allocation2 + $0xb0] sm:$0xff] %v781
  %846 = vst [vmem:[#allocation2 + $0xb8] sm:$0xff] %v782
  %847 = vst [vmem:[#allocation2 + $0xc0] sm:$0xff] %v783
  %848 = vst [vmem:[#allocation2 + $0xc8] sm:$0xff] %v784
  %849 = vst [vmem:[#allocation2 + $0xd0] sm:$0xff] %v785
  %850 = vst [vmem:[#allocation2 + $0xd8] sm:$0xff] %v786
  %851 = vst [vmem:[#allocation2 + $0xe0] sm:$0xff] %v787
  %852 = vst [vmem:[#allocation2 + $0xe8] sm:$0xff] %v788
  %853 = vst [vmem:[#allocation2 + $0xf0] sm:$0xff] %v789
  %854 = vst [vmem:[#allocation2 + $0xf8] sm:$0xff] %v790
  %855 = vst [vmem:[#allocation2 + $0x100] sm:$0xff] %v791
  %856 = vst [vmem:[#allocation2 + $0x108] sm:$0xff] %v792
  %857 = vst [vmem:[#allocation2 + $0x110] sm:$0xff] %v793
  %858 = vst [vmem:[#allocation2 + $0x118] sm:$0xff] %v794
  %859 = vst [vmem:[#allocation2 + $0x120] sm:$0xff] %v795
  %860 = vst [vmem:[#allocation2 + $0x128] sm:$0xff] %v796
  %861 = vst [vmem:[#allocation2 + $0x130] sm:$0xff] %v797
  %862 = vst [vmem:[#allocation2 + $0x138] sm:$0xff] %v798
  %863 = vst [vmem:[#allocation2 + $0x140] sm:$0xff] %v799
  %864 = vst [vmem:[#allocation2 + $0x148] sm:$0xff] %v800
  %865 = vst [vmem:[#allocation2 + $0x150] sm:$0xff] %v801
  %866 = vst [vmem:[#allocation2 + $0x158] sm:$0xff] %v802
  %867 = vst [vmem:[#allocation2 + $0x160] sm:$0xff] %v803
  %868 = vst [vmem:[#allocation2 + $0x168] sm:$0xff] %v804
  %869 = vst [vmem:[#allocation2 + $0x170] sm:$0xff] %v805
  %870 = vst [vmem:[#allocation2 + $0x178] sm:$0xff] %v806
  %871 = vst [vmem:[#allocation2 + $0x180] sm:$0xff] %v807
  %872 = vst [vmem:[#allocation2 + $0x188] sm:$0xff] %v808
  %873 = vst [vmem:[#allocation2 + $0x190] sm:$0xff] %v809
  %874 = vst [vmem:[#allocation2 + $0x198] sm:$0xff] %v810
  %875 = vst [vmem:[#allocation2 + $0x1a0] sm:$0xff] %v811
  %876 = vst [vmem:[#allocation2 + $0x1a8] sm:$0xff] %v812
  %877 = vst [vmem:[#allocation2 + $0x1b0] sm:$0xff] %v813
  %878 = vst [vmem:[#allocation2 + $0x1b8] sm:$0xff] %v814
  %879 = vst [vmem:[#allocation2 + $0x1c0] sm:$0xff] %v815
  %880 = vst [vmem:[#allocation2 + $0x1c8] sm:$0xff] %v816
  %881 = vst [vmem:[#allocation2 + $0x1d0] sm:$0xff] %v817
  %882 = vst [vmem:[#allocation2 + $0x1d8] sm:$0xff] %v818
  %883 = vst [vmem:[#allocation2 + $0x1e0] sm:$0xff] %v819
  %884 = vst [vmem:[#allocation2 + $0x1e8] sm:$0xff] %v820
  %885 = vst [vmem:[#allocation2 + $0x1f0] sm:$0xff] %v821
  %886 = vst [vmem:[#allocation2 + $0x1f8] sm:$0xff] %v822
  // Predicated region
  $region18: #{unet3d_forward.37} parent=0 // pred_check
    %p887 = pneg %p18
  $region19: #{unet3d_forward.37} parent=0 // pred_check_branch
    %889 = sbr.rel (%p887) target = $region21
  $region20: #{unet3d_forward.37} parent=0 // pred_region
    %v890 = vld [vmem:[#allocation2] sm:$0xff]
    %v891 = vld [vmem:[#allocation2 + $0x8] sm:$0xff]
    %v892 = vld [vmem:[#allocation2 + $0x10] sm:$0xff]
    %v893 = vld [vmem:[#allocation2 + $0x18] sm:$0xff]
    %v894 = vld [vmem:[#allocation2 + $0x20] sm:$0xff]
    %v895 = vld [vmem:[#allocation2 + $0x28] sm:$0xff]
    %v896 = vld [vmem:[#allocation2 + $0x30] sm:$0xff]
    %v897 = vld [vmem:[#allocation2 + $0x38] sm:$0xff]
    %v898 = vld [vmem:[#allocation2 + $0x40] sm:$0xff]
    %v899 = vld [vmem:[#allocation2 + $0x48] sm:$0xff]
    %v900 = vld [vmem:[#allocation2 + $0x50] sm:$0xff]
    %v901 = vld [vmem:[#allocation2 + $0x58] sm:$0xff]
    %v902 = vld [vmem:[#allocation2 + $0x60] sm:$0xff]
    %v903 = vld [vmem:[#allocation2 + $0x68] sm:$0xff]
    %v904 = vld [vmem:[#allocation2 + $0x70] sm:$0xff]
    %v905 = vld [vmem:[#allocation2 + $0x78] sm:$0xff]
    %v906 = vld [vmem:[#allocation2 + $0x80] sm:$0xff]
    %v907 = vld [vmem:[#allocation2 + $0x88] sm:$0xff]
    %v908 = vld [vmem:[#allocation2 + $0x90] sm:$0xff]
    %v909 = vld [vmem:[#allocation2 + $0x98] sm:$0xff]
    %v910 = vld [vmem:[#allocation2 + $0xa0] sm:$0xff]
    %v911 = vld [vmem:[#allocation2 + $0xa8] sm:$0xff]
    %v912 = vld [vmem:[#allocation2 + $0xb0] sm:$0xff]
    %v913 = vld [vmem:[#allocation2 + $0xb8] sm:$0xff]
    %v914 = vld [vmem:[#allocation2 + $0xc0] sm:$0xff]
    %v915 = vld [vmem:[#allocation2 + $0xc8] sm:$0xff]
    %v916 = vld [vmem:[#allocation2 + $0xd0] sm:$0xff]
    %v917 = vld [vmem:[#allocation2 + $0xd8] sm:$0xff]
    %v918 = vld [vmem:[#allocation2 + $0xe0] sm:$0xff]
    %v919 = vld [vmem:[#allocation2 + $0xe8] sm:$0xff]
    %v920 = vld [vmem:[#allocation2 + $0xf0] sm:$0xff]
    %v921 = vld [vmem:[#allocation2 + $0xf8] sm:$0xff]
    %v922 = vld [vmem:[#allocation2 + $0x100] sm:$0xff]
    %v923 = vld [vmem:[#allocation2 + $0x108] sm:$0xff]
    %v924 = vld [vmem:[#allocation2 + $0x110] sm:$0xff]
    %v925 = vld [vmem:[#allocation2 + $0x118] sm:$0xff]
    %v926 = vld [vmem:[#allocation2 + $0x120] sm:$0xff]
    %v927 = vld [vmem:[#allocation2 + $0x128] sm:$0xff]
    %v928 = vld [vmem:[#allocation2 + $0x130] sm:$0xff]
    %v929 = vld [vmem:[#allocation2 + $0x138] sm:$0xff]
    %v930 = vld [vmem:[#allocation2 + $0x140] sm:$0xff]
    %v931 = vld [vmem:[#allocation2 + $0x148] sm:$0xff]
    %v932 = vld [vmem:[#allocation2 + $0x150] sm:$0xff]
    %v933 = vld [vmem:[#allocation2 + $0x158] sm:$0xff]
    %v934 = vld [vmem:[#allocation2 + $0x160] sm:$0xff]
    %v935 = vld [vmem:[#allocation2 + $0x168] sm:$0xff]
    %v936 = vld [vmem:[#allocation2 + $0x170] sm:$0xff]
    %v937 = vld [vmem:[#allocation2 + $0x178] sm:$0xff]
    %v938 = vld [vmem:[#allocation2 + $0x180] sm:$0xff]
    %v939 = vld [vmem:[#allocation2 + $0x188] sm:$0xff]
    %v940 = vld [vmem:[#allocation2 + $0x190] sm:$0xff]
    %v941 = vld [vmem:[#allocation2 + $0x198] sm:$0xff]
    %v942 = vld [vmem:[#allocation2 + $0x1a0] sm:$0xff]
    %v943 = vld [vmem:[#allocation2 + $0x1a8] sm:$0xff]
    %v944 = vld [vmem:[#allocation2 + $0x1b0] sm:$0xff]
    %v945 = vld [vmem:[#allocation2 + $0x1b8] sm:$0xff]
    %v946 = vld [vmem:[#allocation2 + $0x1c0] sm:$0xff]
    %v947 = vld [vmem:[#allocation2 + $0x1c8] sm:$0xff]
    %v948 = vld [vmem:[#allocation2 + $0x1d0] sm:$0xff]
    %v949 = vld [vmem:[#allocation2 + $0x1d8] sm:$0xff]
    %v950 = vld [vmem:[#allocation2 + $0x1e0] sm:$0xff]
    %v951 = vld [vmem:[#allocation2 + $0x1e8] sm:$0xff]
    %v952 = vld [vmem:[#allocation2 + $0x1f0] sm:$0xff]
    %v953 = vld [vmem:[#allocation2 + $0x1f8] sm:$0xff]
    %v954 = vld [vmem:[%s2] sm:$0x1]
    %v956 = vlaneseq
    %v957 = vshrl.u32 %v956, 7
    %v958 = vsub.s32 0, %v957
    %v959 = vrot.slane %v954, %v958
    %v961 = vadd.f32 %v890, %v959
    %v962 = vadd.f32 %v891, %v959
    %v963 = vadd.f32 %v892, %v959
    %v964 = vadd.f32 %v893, %v959
    %v965 = vadd.f32 %v894, %v959
    %v966 = vadd.f32 %v895, %v959
    %v967 = vadd.f32 %v896, %v959
    %v968 = vadd.f32 %v897, %v959
    %v969 = vadd.f32 %v898, %v959
    %v970 = vadd.f32 %v899, %v959
    %v971 = vadd.f32 %v900, %v959
    %v972 = vadd.f32 %v901, %v959
    %v973 = vadd.f32 %v902, %v959
    %v974 = vadd.f32 %v903, %v959
    %v975 = vadd.f32 %v904, %v959
    %v976 = vadd.f32 %v905, %v959
    %v977 = vadd.f32 %v906, %v959
    %v978 = vadd.f32 %v907, %v959
    %v979 = vadd.f32 %v908, %v959
    %v980 = vadd.f32 %v909, %v959
    %v981 = vadd.f32 %v910, %v959
    %v982 = vadd.f32 %v911, %v959
    %v983 = vadd.f32 %v912, %v959
    %v984 = vadd.f32 %v913, %v959
    %v985 = vadd.f32 %v914, %v959
    %v986 = vadd.f32 %v915, %v959
    %v987 = vadd.f32 %v916, %v959
    %v988 = vadd.f32 %v917, %v959
    %v989 = vadd.f32 %v918, %v959
    %v990 = vadd.f32 %v919, %v959
    %v991 = vadd.f32 %v920, %v959
    %v992 = vadd.f32 %v921, %v959
    %v993 = vadd.f32 %v922, %v959
    %v994 = vadd.f32 %v923, %v959
    %v995 = vadd.f32 %v924, %v959
    %v996 = vadd.f32 %v925, %v959
    %v997 = vadd.f32 %v926, %v959
    %v998 = vadd.f32 %v927, %v959
    %v999 = vadd.f32 %v928, %v959
    %v1000 = vadd.f32 %v929, %v959
    %v1001 = vadd.f32 %v930, %v959
    %v1002 = vadd.f32 %v931, %v959
    %v1003 = vadd.f32 %v932, %v959
    %v1004 = vadd.f32 %v933, %v959
    %v1005 = vadd.f32 %v934, %v959
    %v1006 = vadd.f32 %v935, %v959
    %v1007 = vadd.f32 %v936, %v959
    %v1008 = vadd.f32 %v937, %v959
    %v1009 = vadd.f32 %v938, %v959
    %v1010 = vadd.f32 %v939, %v959
    %v1011 = vadd.f32 %v940, %v959
    %v1012 = vadd.f32 %v941, %v959
    %v1013 = vadd.f32 %v942, %v959
    %v1014 = vadd.f32 %v943, %v959
    %v1015 = vadd.f32 %v944, %v959
    %v1016 = vadd.f32 %v945, %v959
    %v1017 = vadd.f32 %v946, %v959
    %v1018 = vadd.f32 %v947, %v959
    %v1019 = vadd.f32 %v948, %v959
    %v1020 = vadd.f32 %v949, %v959
    %v1021 = vadd.f32 %v950, %v959
    %v1022 = vadd.f32 %v951, %v959
    %v1023 = vadd.f32 %v952, %v959
    %v1024 = vadd.f32 %v953, %v959
    %1025 = vst [vmem:[%s3] sm:$0xff] %v961
    %1026 = vst [vmem:[%s3 + $0x8] sm:$0xff] %v962
    %1027 = vst [vmem:[%s3 + $0x10] sm:$0xff] %v963
    %1028 = vst [vmem:[%s3 + $0x18] sm:$0xff] %v964
    %1029 = vst [vmem:[%s3 + $0x20] sm:$0xff] %v965
    %1030 = vst [vmem:[%s3 + $0x28] sm:$0xff] %v966
    %1031 = vst [vmem:[%s3 + $0x30] sm:$0xff] %v967
    %1032 = vst [vmem:[%s3 + $0x38] sm:$0xff] %v968
    %1033 = vst [vmem:[%s3 + $0x40] sm:$0xff] %v969
    %1034 = vst [vmem:[%s3 + $0x48] sm:$0xff] %v970
    %1035 = vst [vmem:[%s3 + $0x50] sm:$0xff] %v971
    %1036 = vst [vmem:[%s3 + $0x58] sm:$0xff] %v972
    %1037 = vst [vmem:[%s3 + $0x60] sm:$0xff] %v973
    %1038 = vst [vmem:[%s3 + $0x68] sm:$0xff] %v974
    %1039 = vst [vmem:[%s3 + $0x70] sm:$0xff] %v975
    %1040 = vst [vmem:[%s3 + $0x78] sm:$0xff] %v976
    %1041 = vst [vmem:[%s3 + $0x80] sm:$0xff] %v977
    %1042 = vst [vmem:[%s3 + $0x88] sm:$0xff] %v978
    %1043 = vst [vmem:[%s3 + $0x90] sm:$0xff] %v979
    %1044 = vst [vmem:[%s3 + $0x98] sm:$0xff] %v980
    %1045 = vst [vmem:[%s3 + $0xa0] sm:$0xff] %v981
    %1046 = vst [vmem:[%s3 + $0xa8] sm:$0xff] %v982
    %1047 = vst [vmem:[%s3 + $0xb0] sm:$0xff] %v983
    %1048 = vst [vmem:[%s3 + $0xb8] sm:$0xff] %v984
    %1049 = vst [vmem:[%s3 + $0xc0] sm:$0xff] %v985
    %1050 = vst [vmem:[%s3 + $0xc8] sm:$0xff] %v986
    %1051 = vst [vmem:[%s3 + $0xd0] sm:$0xff] %v987
    %1052 = vst [vmem:[%s3 + $0xd8] sm:$0xff] %v988
    %1053 = vst [vmem:[%s3 + $0xe0] sm:$0xff] %v989
    %1054 = vst [vmem:[%s3 + $0xe8] sm:$0xff] %v990
    %1055 = vst [vmem:[%s3 + $0xf0] sm:$0xff] %v991
    %1056 = vst [vmem:[%s3 + $0xf8] sm:$0xff] %v992
    %1057 = vst [vmem:[%s3 + $0x100] sm:$0xff] %v993
    %1058 = vst [vmem:[%s3 + $0x108] sm:$0xff] %v994
    %1059 = vst [vmem:[%s3 + $0x110] sm:$0xff] %v995
    %1060 = vst [vmem:[%s3 + $0x118] sm:$0xff] %v996
    %1061 = vst [vmem:[%s3 + $0x120] sm:$0xff] %v997
    %1062 = vst [vmem:[%s3 + $0x128] sm:$0xff] %v998
    %1063 = vst [vmem:[%s3 + $0x130] sm:$0xff] %v999
    %1064 = vst [vmem:[%s3 + $0x138] sm:$0xff] %v1000
    %1065 = vst [vmem:[%s3 + $0x140] sm:$0xff] %v1001
    %1066 = vst [vmem:[%s3 + $0x148] sm:$0xff] %v1002
    %1067 = vst [vmem:[%s3 + $0x150] sm:$0xff] %v1003
    %1068 = vst [vmem:[%s3 + $0x158] sm:$0xff] %v1004
    %1069 = vst [vmem:[%s3 + $0x160] sm:$0xff] %v1005
    %1070 = vst [vmem:[%s3 + $0x168] sm:$0xff] %v1006
    %1071 = vst [vmem:[%s3 + $0x170] sm:$0xff] %v1007
    %1072 = vst [vmem:[%s3 + $0x178] sm:$0xff] %v1008
    %1073 = vst [vmem:[%s3 + $0x180] sm:$0xff] %v1009
    %1074 = vst [vmem:[%s3 + $0x188] sm:$0xff] %v1010
    %1075 = vst [vmem:[%s3 + $0x190] sm:$0xff] %v1011
    %1076 = vst [vmem:[%s3 + $0x198] sm:$0xff] %v1012
    %1077 = vst [vmem:[%s3 + $0x1a0] sm:$0xff] %v1013
    %1078 = vst [vmem:[%s3 + $0x1a8] sm:$0xff] %v1014
    %1079 = vst [vmem:[%s3 + $0x1b0] sm:$0xff] %v1015
    %1080 = vst [vmem:[%s3 + $0x1b8] sm:$0xff] %v1016
    %1081 = vst [vmem:[%s3 + $0x1c0] sm:$0xff] %v1017
    %1082 = vst [vmem:[%s3 + $0x1c8] sm:$0xff] %v1018
    %1083 = vst [vmem:[%s3 + $0x1d0] sm:$0xff] %v1019
    %1084 = vst [vmem:[%s3 + $0x1d8] sm:$0xff] %v1020
    %1085 = vst [vmem:[%s3 + $0x1e0] sm:$0xff] %v1021
    %1086 = vst [vmem:[%s3 + $0x1e8] sm:$0xff] %v1022
    %1087 = vst [vmem:[%s3 + $0x1f0] sm:$0xff] %v1023
    %1088 = vst [vmem:[%s3 + $0x1f8] sm:$0xff] %v1024
    %v1089 = vadd.f32 %v961, %v962
    %v1090 = vadd.f32 %v1089, %v963
    %v1091 = vadd.f32 %v1090, %v964
    %v1092 = vadd.f32 %v1091, %v965
    %v1093 = vadd.f32 %v1092, %v966
    %v1094 = vadd.f32 %v1093, %v967
    %v1095 = vadd.f32 %v1094, %v968
    %v1096 = vadd.f32 %v1095, %v969
    %v1097 = vadd.f32 %v1096, %v970
    %v1098 = vadd.f32 %v1097, %v971
    %v1099 = vadd.f32 %v1098, %v972
    %v1100 = vadd.f32 %v1099, %v973
    %v1101 = vadd.f32 %v1100, %v974
    %v1102 = vadd.f32 %v1101, %v975
    %v1103 = vadd.f32 %v1102, %v976
    %v1104 = vadd.f32 %v1103, %v977
    %v1105 = vadd.f32 %v1104, %v978
    %v1106 = vadd.f32 %v1105, %v979
    %v1107 = vadd.f32 %v1106, %v980
    %v1108 = vadd.f32 %v1107, %v981
    %v1109 = vadd.f32 %v1108, %v982
    %v1110 = vadd.f32 %v1109, %v983
    %v1111 = vadd.f32 %v1110, %v984
    %v1112 = vadd.f32 %v1111, %v985
    %v1113 = vadd.f32 %v1112, %v986
    %v1114 = vadd.f32 %v1113, %v987
    %v1115 = vadd.f32 %v1114, %v988
    %v1116 = vadd.f32 %v1115, %v989
    %v1117 = vadd.f32 %v1116, %v990
    %v1118 = vadd.f32 %v1117, %v991
    %v1119 = vadd.f32 %v1118, %v992
    %v1120 = vadd.f32 %v1119, %v993
    %v1121 = vadd.f32 %v1120, %v994
    %v1122 = vadd.f32 %v1121, %v995
    %v1123 = vadd.f32 %v1122, %v996
    %v1124 = vadd.f32 %v1123, %v997
    %v1125 = vadd.f32 %v1124, %v998
    %v1126 = vadd.f32 %v1125, %v999
    %v1127 = vadd.f32 %v1126, %v1000
    %v1128 = vadd.f32 %v1127, %v1001
    %v1129 = vadd.f32 %v1128, %v1002
    %v1130 = vadd.f32 %v1129, %v1003
    %v1131 = vadd.f32 %v1130, %v1004
    %v1132 = vadd.f32 %v1131, %v1005
    %v1133 = vadd.f32 %v1132, %v1006
    %v1134 = vadd.f32 %v1133, %v1007
    %v1135 = vadd.f32 %v1134, %v1008
    %v1136 = vadd.f32 %v1135, %v1009
    %v1137 = vadd.f32 %v1136, %v1010
    %v1138 = vadd.f32 %v1137, %v1011
    %v1139 = vadd.f32 %v1138, %v1012
    %v1140 = vadd.f32 %v1139, %v1013
    %v1141 = vadd.f32 %v1140, %v1014
    %v1142 = vadd.f32 %v1141, %v1015
    %v1143 = vadd.f32 %v1142, %v1016
    %v1144 = vadd.f32 %v1143, %v1017
    %v1145 = vadd.f32 %v1144, %v1018
    %v1146 = vadd.f32 %v1145, %v1019
    %v1147 = vadd.f32 %v1146, %v1020
    %v1148 = vadd.f32 %v1147, %v1021
    %v1149 = vadd.f32 %v1148, %v1022
    %v1150 = vadd.f32 %v1149, %v1023
    %v1151 = vadd.f32 %v1150, %v1024
    %v1152 = vrot.slane %v1151, 4
    %v1153 = vadd.f32 %v1151, %v1152
    %v1154 = vrot.slane %v1153, 2
    %v1155 = vadd.f32 %v1153, %v1154
    %v1156 = vrot.slane %v1155, 1
    %v1157 = vadd.f32 %v1155, %v1156
    %1158 = vst [vmem:[%s4] sm:$0xff] %v1157
    %v1159 = vmul.f32 %v961, %v961
    %v1160 = vmul.f32 %v962, %v962
    %v1161 = vmul.f32 %v963, %v963
    %v1162 = vmul.f32 %v964, %v964
    %v1163 = vmul.f32 %v965, %v965
    %v1164 = vmul.f32 %v966, %v966
    %v1165 = vmul.f32 %v967, %v967
    %v1166 = vmul.f32 %v968, %v968
    %v1167 = vmul.f32 %v969, %v969
    %v1168 = vmul.f32 %v970, %v970
    %v1169 = vmul.f32 %v971, %v971
    %v1170 = vmul.f32 %v972, %v972
    %v1171 = vmul.f32 %v973, %v973
    %v1172 = vmul.f32 %v974, %v974
    %v1173 = vmul.f32 %v975, %v975
    %v1174 = vmul.f32 %v976, %v976
    %v1175 = vmul.f32 %v977, %v977
    %v1176 = vmul.f32 %v978, %v978
    %v1177 = vmul.f32 %v979, %v979
    %v1178 = vmul.f32 %v980, %v980
    %v1179 = vmul.f32 %v981, %v981
    %v1180 = vmul.f32 %v982, %v982
    %v1181 = vmul.f32 %v983, %v983
    %v1182 = vmul.f32 %v984, %v984
    %v1183 = vmul.f32 %v985, %v985
    %v1184 = vmul.f32 %v986, %v986
    %v1185 = vmul.f32 %v987, %v987
    %v1186 = vmul.f32 %v988, %v988
    %v1187 = vmul.f32 %v989, %v989
    %v1188 = vmul.f32 %v990, %v990
    %v1189 = vmul.f32 %v991, %v991
    %v1190 = vmul.f32 %v992, %v992
    %v1191 = vmul.f32 %v993, %v993
    %v1192 = vmul.f32 %v994, %v994
    %v1193 = vmul.f32 %v995, %v995
    %v1194 = vmul.f32 %v996, %v996
    %v1195 = vmul.f32 %v997, %v997
    %v1196 = vmul.f32 %v998, %v998
    %v1197 = vmul.f32 %v999, %v999
    %v1198 = vmul.f32 %v1000, %v1000
    %v1199 = vmul.f32 %v1001, %v1001
    %v1200 = vmul.f32 %v1002, %v1002
    %v1201 = vmul.f32 %v1003, %v1003
    %v1202 = vmul.f32 %v1004, %v1004
    %v1203 = vmul.f32 %v1005, %v1005
    %v1204 = vmul.f32 %v1006, %v1006
    %v1205 = vmul.f32 %v1007, %v1007
    %v1206 = vmul.f32 %v1008, %v1008
    %v1207 = vmul.f32 %v1009, %v1009
    %v1208 = vmul.f32 %v1010, %v1010
    %v1209 = vmul.f32 %v1011, %v1011
    %v1210 = vmul.f32 %v1012, %v1012
    %v1211 = vmul.f32 %v1013, %v1013
    %v1212 = vmul.f32 %v1014, %v1014
    %v1213 = vmul.f32 %v1015, %v1015
    %v1214 = vmul.f32 %v1016, %v1016
    %v1215 = vmul.f32 %v1017, %v1017
    %v1216 = vmul.f32 %v1018, %v1018
    %v1217 = vmul.f32 %v1019, %v1019
    %v1218 = vmul.f32 %v1020, %v1020
    %v1219 = vmul.f32 %v1021, %v1021
    %v1220 = vmul.f32 %v1022, %v1022
    %v1221 = vmul.f32 %v1023, %v1023
    %v1222 = vmul.f32 %v1024, %v1024
    %v1223 = vadd.f32 %v1159, %v1160
    %v1224 = vadd.f32 %v1223, %v1161
    %v1225 = vadd.f32 %v1224, %v1162
    %v1226 = vadd.f32 %v1225, %v1163
    %v1227 = vadd.f32 %v1226, %v1164
    %v1228 = vadd.f32 %v1227, %v1165
    %v1229 = vadd.f32 %v1228, %v1166
    %v1230 = vadd.f32 %v1229, %v1167
    %v1231 = vadd.f32 %v1230, %v1168
    %v1232 = vadd.f32 %v1231, %v1169
    %v1233 = vadd.f32 %v1232, %v1170
    %v1234 = vadd.f32 %v1233, %v1171
    %v1235 = vadd.f32 %v1234, %v1172
    %v1236 = vadd.f32 %v1235, %v1173
    %v1237 = vadd.f32 %v1236, %v1174
    %v1238 = vadd.f32 %v1237, %v1175
    %v1239 = vadd.f32 %v1238, %v1176
    %v1240 = vadd.f32 %v1239, %v1177
    %v1241 = vadd.f32 %v1240, %v1178
    %v1242 = vadd.f32 %v1241, %v1179
    %v1243 = vadd.f32 %v1242, %v1180
    %v1244 = vadd.f32 %v1243, %v1181
    %v1245 = vadd.f32 %v1244, %v1182
    %v1246 = vadd.f32 %v1245, %v1183
    %v1247 = vadd.f32 %v1246, %v1184
    %v1248 = vadd.f32 %v1247, %v1185
    %v1249 = vadd.f32 %v1248, %v1186
    %v1250 = vadd.f32 %v1249, %v1187
    %v1251 = vadd.f32 %v1250, %v1188
    %v1252 = vadd.f32 %v1251, %v1189
    %v1253 = vadd.f32 %v1252, %v1190
    %v1254 = vadd.f32 %v1253, %v1191
    %v1255 = vadd.f32 %v1254, %v1192
    %v1256 = vadd.f32 %v1255, %v1193
    %v1257 = vadd.f32 %v1256, %v1194
    %v1258 = vadd.f32 %v1257, %v1195
    %v1259 = vadd.f32 %v1258, %v1196
    %v1260 = vadd.f32 %v1259, %v1197
    %v1261 = vadd.f32 %v1260, %v1198
    %v1262 = vadd.f32 %v1261, %v1199
    %v1263 = vadd.f32 %v1262, %v1200
    %v1264 = vadd.f32 %v1263, %v1201
    %v1265 = vadd.f32 %v1264, %v1202
    %v1266 = vadd.f32 %v1265, %v1203
    %v1267 = vadd.f32 %v1266, %v1204
    %v1268 = vadd.f32 %v1267, %v1205
    %v1269 = vadd.f32 %v1268, %v1206
    %v1270 = vadd.f32 %v1269, %v1207
    %v1271 = vadd.f32 %v1270, %v1208
    %v1272 = vadd.f32 %v1271, %v1209
    %v1273 = vadd.f32 %v1272, %v1210
    %v1274 = vadd.f32 %v1273, %v1211
    %v1275 = vadd.f32 %v1274, %v1212
    %v1276 = vadd.f32 %v1275, %v1213
    %v1277 = vadd.f32 %v1276, %v1214
    %v1278 = vadd.f32 %v1277, %v1215
    %v1279 = vadd.f32 %v1278, %v1216
    %v1280 = vadd.f32 %v1279, %v1217
    %v1281 = vadd.f32 %v1280, %v1218
    %v1282 = vadd.f32 %v1281, %v1219
    %v1283 = vadd.f32 %v1282, %v1220
    %v1284 = vadd.f32 %v1283, %v1221
    %v1285 = vadd.f32 %v1284, %v1222
    %v1286 = vrot.slane %v1285, 4
    %v1287 = vadd.f32 %v1285, %v1286
    %v1288 = vrot.slane %v1287, 2
    %v1289 = vadd.f32 %v1287, %v1288
    %v1290 = vrot.slane %v1289, 1
    %v1291 = vadd.f32 %v1289, %v1290
    %1292 = vst [vmem:[%s5] sm:$0xff] %v1291
  $region21: #{unet3d_forward.37} parent=0 // pred_fallthru
    _
  // Predicated region
  $region22: #{unet3d_forward.37} parent=0 // pred_check
    _
  $region23: #{unet3d_forward.37} parent=0 // pred_check_branch
    %1294 = sbr.rel (0) target = $region25
  $region24: #{unet3d_forward.37} parent=0 // pred_region
    _
  $region25: #{unet3d_forward.37} parent=0 // pred_fallthru
    _
  // Predicated region
  $region26: #{unet3d_forward.37} parent=0 // pred_check
    _
  $region27: #{unet3d_forward.37} parent=0 // pred_check_branch
    %1296 = sbr.rel (0) target = $region29
  $region28: #{unet3d_forward.37} parent=0 // pred_region
    _
  $region29: #{unet3d_forward.37} parent=0 // pred_fallthru
    _
  // Predicated region
  $region30: #{unet3d_forward.37} parent=0 // pred_check
    _
  $region31: #{unet3d_forward.37} parent=0 // pred_check_branch
    %1298 = sbr.rel (0) target = $region33
  $region32: #{unet3d_forward.37} parent=0 // pred_region
    _
  $region33: #{unet3d_forward.37} parent=0 // pred_fallthru
    _
  // Predicated region
  $region34: #{unet3d_forward.37} parent=0 // pred_check
    _
  $region35: #{unet3d_forward.37} parent=0 // pred_check_branch
    %1300 = sbr.rel (0) target = $region37
  $region36: #{unet3d_forward.37} parent=0 // pred_region
    _
  $region37: #{unet3d_forward.37} parent=0 // pred_fallthru
    _
  // Predicated region
  $region38: #{unet3d_forward.37} parent=0 // pred_check
    _
  $region39: #{unet3d_forward.37} parent=0 // pred_check_branch
    %1302 = sbr.rel (0) target = $region41
  $region40: #{unet3d_forward.37} parent=0 // pred_region
    _
  $region41: #{unet3d_forward.37} parent=0 // pred_fallthru
    _
  // Predicated region
  $region42: #{unet3d_forward.37} parent=0 // pred_check
    _
  $region43: #{unet3d_forward.37} parent=0 // pred_check_branch
    %1304 = sbr.rel (0) target = $region45
  $region44: #{unet3d_forward.37} parent=0 // pred_region
    _
  $region45: #{unet3d_forward.37} parent=0 // pred_fallthru
    _

// kernel: unet3d_forward.42
$region0: #{unet3d_forward.42}
  #allocation0 [shape = 'u32[]', space=smem, size = 0x4, offset = 0x4, fixed_abs, tag = 'smem constant byte address 0x4 - core index']
  #allocation1 [shape = 'u32[144,128]{1,0:T(1,128)}', space=vmem, size = 0x12000, scoped, tag = 'internal scratch']
  %s0 = inlined_call_operand.vmem [shape: f32[64,128], index: 0, kind: input, shape index: {}]
  %s1 = inlined_call_operand.vmem [shape: f32[1,128], index: 1, kind: input, shape index: {}]
  %s2 = inlined_call_operand.vmem [shape: f32[1,128], index: 2, kind: input, shape index: {}]
  %s3 = inlined_call_operand.vmem [shape: f32[64,128], index: 3, kind: output, shape index: {}]
  %s4 = sld [smem:[#allocation0]]
  $region22: #{unet3d_forward.42} parent=0
    _
  %s6 = ssub.s32 1, %s4
  %s7 = scalar_select 0, %s6, %s4
  // Predicated region
  $region2: #{unet3d_forward.42} parent=0 // pred_check
    _
  $region3: #{unet3d_forward.42} parent=0 // pred_check_branch
    %9 = sbr.rel (0) target = $region5
  $region4: #{unet3d_forward.42} parent=0 // pred_region
    _
  $region5: #{unet3d_forward.42} parent=0 // pred_fallthru
    _
  // Predicated region
  $region6: #{unet3d_forward.42} parent=0 // pred_check
    _
  $region7: #{unet3d_forward.42} parent=0 // pred_check_branch
    %11 = sbr.rel (0) target = $region9
  $region8: #{unet3d_forward.42} parent=0 // pred_region
    _
  $region9: #{unet3d_forward.42} parent=0 // pred_fallthru
    _
  // Predicated region
  $region10: #{unet3d_forward.42} parent=0 // pred_check
    _
  $region11: #{unet3d_forward.42} parent=0 // pred_check_branch
    %13 = sbr.rel (0) target = $region13
  $region12: #{unet3d_forward.42} parent=0 // pred_region
    _
  $region13: #{unet3d_forward.42} parent=0 // pred_fallthru
    _
  %v14 = vld [vmem:[%s0] sm:$0xff]
  %v15 = vld [vmem:[%s0 + $0x8] sm:$0xff]
  %v16 = vld [vmem:[%s0 + $0x10] sm:$0xff]
  %v17 = vld [vmem:[%s0 + $0x18] sm:$0xff]
  %v18 = vld [vmem:[%s0 + $0x20] sm:$0xff]
  %v19 = vld [vmem:[%s0 + $0x28] sm:$0xff]
  %v20 = vld [vmem:[%s0 + $0x30] sm:$0xff]
  %v21 = vld [vmem:[%s0 + $0x38] sm:$0xff]
  %v22 = vld [vmem:[%s1] sm:$0x1]
  %v24 = vlaneseq
  %v25 = vshrl.u32 %v24, 7
  %v26 = vsub.s32 0, %v25
  %v27 = vrot.slane %v22, %v26
  %v29 = vmul.f32 %v14, %v27
  %v30 = vmul.f32 %v15, %v27
  %v31 = vmul.f32 %v16, %v27
  %v32 = vmul.f32 %v17, %v27
  %v33 = vmul.f32 %v18, %v27
  %v34 = vmul.f32 %v19, %v27
  %v35 = vmul.f32 %v20, %v27
  %v36 = vmul.f32 %v21, %v27
  %v37 = vld [vmem:[%s2] sm:$0x1]
  %v39 = vlaneseq
  %v40 = vshrl.u32 %v39, 7
  %v41 = vsub.s32 0, %v40
  %v42 = vrot.slane %v37, %v41
  %v44 = vadd.f32 %v29, %v42
  %v45 = vadd.f32 %v30, %v42
  %v46 = vadd.f32 %v31, %v42
  %v47 = vadd.f32 %v32, %v42
  %v48 = vadd.f32 %v33, %v42
  %v49 = vadd.f32 %v34, %v42
  %v50 = vadd.f32 %v35, %v42
  %v51 = vadd.f32 %v36, %v42
  %vm52 = vcmp.gt.f32.partialorder %v44, 0.0
  %vm53 = vcmp.gt.f32.partialorder %v45, 0.0
  %vm54 = vcmp.gt.f32.partialorder %v46, 0.0
  %vm55 = vcmp.gt.f32.partialorder %v47, 0.0
  %vm56 = vcmp.gt.f32.partialorder %v48, 0.0
  %vm57 = vcmp.gt.f32.partialorder %v49, 0.0
  %vm58 = vcmp.gt.f32.partialorder %v50, 0.0
  %vm59 = vcmp.gt.f32.partialorder %v51, 0.0
  %v60 = vmul.f32 %v44, 0.2
  %v61 = vmul.f32 %v45, 0.2
  %v62 = vmul.f32 %v46, 0.2
  %v63 = vmul.f32 %v47, 0.2
  %v64 = vmul.f32 %v48, 0.2
  %v65 = vmul.f32 %v49, 0.2
  %v66 = vmul.f32 %v50, 0.2
  %v67 = vmul.f32 %v51, 0.2
  %v68 = vsel %vm52, %v44, %v60
  %v69 = vsel %vm53, %v45, %v61
  %v70 = vsel %vm54, %v46, %v62
  %v71 = vsel %vm55, %v47, %v63
  %v72 = vsel %vm56, %v48, %v64
  %v73 = vsel %vm57, %v49, %v65
  %v74 = vsel %vm58, %v50, %v66
  %v75 = vsel %vm59, %v51, %v67
  %76 = vst [vmem:[%s3] sm:$0xff] %v68
  %77 = vst [vmem:[%s3 + $0x8] sm:$0xff] %v69
  %78 = vst [vmem:[%s3 + $0x10] sm:$0xff] %v70
  %79 = vst [vmem:[%s3 + $0x18] sm:$0xff] %v71
  %80 = vst [vmem:[%s3 + $0x20] sm:$0xff] %v72
  %81 = vst [vmem:[%s3 + $0x28] sm:$0xff] %v73
  %82 = vst [vmem:[%s3 + $0x30] sm:$0xff] %v74
  %83 = vst [vmem:[%s3 + $0x38] sm:$0xff] %v75
  // Predicated region
  $region14: #{unet3d_forward.42} parent=0 // pred_check
    _
  $region15: #{unet3d_forward.42} parent=0 // pred_check_branch
    %85 = sbr.rel (0) target = $region17
  $region16: #{unet3d_forward.42} parent=0 // pred_region
    _
  $region17: #{unet3d_forward.42} parent=0 // pred_fallthru
    _
  // Predicated region
  $region18: #{unet3d_forward.42} parent=0 // pred_check
    _
  $region19: #{unet3d_forward.42} parent=0 // pred_check_branch
    %87 = sbr.rel (0) target = $region21
  $region20: #{unet3d_forward.42} parent=0 // pred_region
    _
  $region21: #{unet3d_forward.42} parent=0 // pred_fallthru
    _

// kernel: unet3d_forward.41
$region0: #{unet3d_forward.41}
  #allocation0 [shape = 'u32[]', space=smem, size = 0x4, offset = 0x4, fixed_abs, tag = 'smem constant byte address 0x4 - core index']
  #allocation1 [shape = 'u32[144,128]{1,0:T(1,128)}', space=vmem, size = 0x12000, scoped, tag = 'internal scratch']
  #allocation2 [shape = 'f32[64,128]{1,0:T(8,128)}', space=vmem, size = 0x8000, scoped, tag = 'scratch operand']
  %s0 = inlined_call_operand.vmem [shape: bf16[64,128], index: 0, kind: input, shape index: {}]
  %s1 = inlined_call_operand.vmem [shape: bf16[128,128], index: 1, kind: input, shape index: {}]
  %s2 = inlined_call_operand.vmem [shape: f32[1,128], index: 2, kind: input, shape index: {}]
  %s3 = inlined_call_operand.vmem [shape: f32[64,128], index: 3, kind: output, shape index: {0}]
  %s4 = inlined_call_operand.vmem [shape: f32[1,8,128], index: 4, kind: output, shape index: {1}]
  %s5 = inlined_call_operand.vmem [shape: f32[1,8,128], index: 5, kind: output, shape index: {2}]
  %6 = xla_tuple %s3, %s4, %s5
  %s7 = sld [smem:[#allocation0]]
  $region46: #{unet3d_forward.41} parent=0
    _
  %s9 = ssub.s32 1, %s7
  %s10 = scalar_select 0, %s9, %s7
  // Predicated region
  $region2: #{unet3d_forward.41} parent=0 // pred_check
    _
  $region3: #{unet3d_forward.41} parent=0 // pred_check_branch
    %12 = sbr.rel (0) target = $region5
  $region4: #{unet3d_forward.41} parent=0 // pred_region
    _
  $region5: #{unet3d_forward.41} parent=0 // pred_fallthru
    _
  // Predicated region
  $region6: #{unet3d_forward.41} parent=0 // pred_check
    _
  $region7: #{unet3d_forward.41} parent=0 // pred_check_branch
    %14 = sbr.rel (0) target = $region9
  $region8: #{unet3d_forward.41} parent=0 // pred_region
    _
  $region9: #{unet3d_forward.41} parent=0 // pred_fallthru
    _
  // Predicated region
  $region10: #{unet3d_forward.41} parent=0 // pred_check
    _
  $region11: #{unet3d_forward.41} parent=0 // pred_check_branch
    %16 = sbr.rel (0) target = $region13
  $region12: #{unet3d_forward.41} parent=0 // pred_region
    _
  $region13: #{unet3d_forward.41} parent=0 // pred_fallthru
    _
  %p18 = scmp.eq.s32.totalorder 0, 0
  // Predicated region
  $region14: #{unet3d_forward.41} parent=0 // pred_check
    %p19 = pneg %p18
  $region15: #{unet3d_forward.41} parent=0 // pred_check_branch
    %21 = sbr.rel (%p19) target = $region17
  $region16: #{unet3d_forward.41} parent=0 // pred_region
    %22 = vst [vmem:[#allocation2] sm:$0xff] 0.0
    %23 = vst [vmem:[#allocation2 + $0x8] sm:$0xff] 0.0
    %24 = vst [vmem:[#allocation2 + $0x10] sm:$0xff] 0.0
    %25 = vst [vmem:[#allocation2 + $0x18] sm:$0xff] 0.0
    %26 = vst [vmem:[#allocation2 + $0x20] sm:$0xff] 0.0
    %27 = vst [vmem:[#allocation2 + $0x28] sm:$0xff] 0.0
    %28 = vst [vmem:[#allocation2 + $0x30] sm:$0xff] 0.0
    %29 = vst [vmem:[#allocation2 + $0x38] sm:$0xff] 0.0
  $region17: #{unet3d_forward.41} parent=0 // pred_fallthru
    _
  %v30 = vld [vmem:[#allocation2] sm:$0xff]
  %v31 = vld [vmem:[#allocation2 + $0x8] sm:$0xff]
  %v32 = vld [vmem:[#allocation2 + $0x10] sm:$0xff]
  %v33 = vld [vmem:[#allocation2 + $0x18] sm:$0xff]
  %v34 = vld [vmem:[#allocation2 + $0x20] sm:$0xff]
  %v35 = vld [vmem:[#allocation2 + $0x28] sm:$0xff]
  %v36 = vld [vmem:[#allocation2 + $0x30] sm:$0xff]
  %v37 = vld [vmem:[#allocation2 + $0x38] sm:$0xff]
  %v38 = vld [vmem:[%s0] sm:$0xf]
  %v39 = vld [vmem:[%s0 + $0x4] sm:$0xf]
  %v40 = vld [vmem:[%s0 + $0x8] sm:$0xf]
  %v41 = vld [vmem:[%s0 + $0xc] sm:$0xf]
  %v42 = vld [vmem:[%s0 + $0x10] sm:$0xf]
  %v43 = vld [vmem:[%s0 + $0x14] sm:$0xf]
  %v44 = vld [vmem:[%s0 + $0x18] sm:$0xf]
  %v45 = vld [vmem:[%s0 + $0x1c] sm:$0xf]
  %v46 = vld [vmem:[%s1] sm:$0xf]
  %v47 = vld [vmem:[%s1 + $0x4] sm:$0xf]
  %v48 = vld [vmem:[%s1 + $0x8] sm:$0xf]
  %v49 = vld [vmem:[%s1 + $0xc] sm:$0xf]
  %v50 = vld [vmem:[%s1 + $0x10] sm:$0xf]
  %v51 = vld [vmem:[%s1 + $0x14] sm:$0xf]
  %v52 = vld [vmem:[%s1 + $0x18] sm:$0xf]
  %v53 = vld [vmem:[%s1 + $0x1c] sm:$0xf]
  %v54 = vld [vmem:[%s1 + $0x20] sm:$0xf]
  %v55 = vld [vmem:[%s1 + $0x24] sm:$0xf]
  %v56 = vld [vmem:[%s1 + $0x28] sm:$0xf]
  %v57 = vld [vmem:[%s1 + $0x2c] sm:$0xf]
  %v58 = vld [vmem:[%s1 + $0x30] sm:$0xf]
  %v59 = vld [vmem:[%s1 + $0x34] sm:$0xf]
  %v60 = vld [vmem:[%s1 + $0x38] sm:$0xf]
  %v61 = vld [vmem:[%s1 + $0x3c] sm:$0xf]
  %v70 = vunpack.c.l.b16 %v38
  %v71 = vunpack.c.l.b16 %v39
  %v72 = vunpack.c.l.b16 %v40
  %v73 = vunpack.c.l.b16 %v41
  %v74 = vunpack.c.l.b16 %v42
  %v75 = vunpack.c.l.b16 %v43
  %v76 = vunpack.c.l.b16 %v44
  %v77 = vunpack.c.l.b16 %v45
  %v78 = vpack.c.b16 %v71, %v70
  %v79 = vpack.c.b16 %v73, %v72
  %v80 = vpack.c.b16 %v75, %v74
  %v81 = vpack.c.b16 %v77, %v76
  %v102 = vunpack.c.l.b16 %v46
  %v103 = vunpack.c.l.b16 %v47
  %v104 = vunpack.c.l.b16 %v48
  %v105 = vunpack.c.l.b16 %v49
  %v106 = vunpack.c.l.b16 %v50
  %v107 = vunpack.c.l.b16 %v51
  %v108 = vunpack.c.l.b16 %v52
  %v109 = vunpack.c.l.b16 %v53
  %v110 = vunpack.c.l.b16 %v54
  %v111 = vunpack.c.l.b16 %v55
  %v112 = vunpack.c.l.b16 %v56
  %v113 = vunpack.c.l.b16 %v57
  %v114 = vunpack.c.l.b16 %v58
  %v115 = vunpack.c.l.b16 %v59
  %v116 = vunpack.c.l.b16 %v60
  %v117 = vunpack.c.l.b16 %v61
  %v118 = vpack.c.b16 %v103, %v102
  %v119 = vpack.c.b16 %v105, %v104
  %v120 = vpack.c.b16 %v107, %v106
  %v121 = vpack.c.b16 %v109, %v108
  %v122 = vpack.c.b16 %v111, %v110
  %v123 = vpack.c.b16 %v113, %v112
  %v124 = vpack.c.b16 %v115, %v114
  %v125 = vpack.c.b16 %v117, %v116
  %134 = vmatprep.subr.bf16.mxu0 0
  %135 = vmatpush1.bf16.msra.mxu0 %v125
  %136 = vmatprep.subr.bf16.mxu0 0
  %137 = vmatpush1.bf16.msra.mxu0 %v124
  %138 = vmatprep.subr.bf16.mxu0 0
  %139 = vmatpush1.bf16.msra.mxu0 %v123
  %140 = vmatprep.subr.bf16.mxu0 0
  %141 = vmatpush1.bf16.msra.mxu0 %v122
  %142 = vmatprep.subr.bf16.mxu0 0
  %143 = vmatpush1.bf16.msra.mxu0 %v121
  %144 = vmatprep.subr.bf16.mxu0 0
  %145 = vmatpush1.bf16.msra.mxu0 %v120
  %146 = vmatprep.subr.bf16.mxu0 0
  %147 = vmatpush1.bf16.msra.mxu0 %v119
  %148 = vmatprep.subr.bf16.mxu0 0
  %149 = vmatpush1.bf16.msra.mxu0 %v118
  %150 = vmatprep.subr.bf16.mxu0 0
  %151 = vmatpush2.bf16.msra.mxu0 0
  %152 = vmatprep.subr.bf16.mxu0 0
  %153 = vmatpush2.bf16.msra.mxu0 0
  %154 = vmatprep.subr.bf16.mxu0 0
  %155 = vmatpush2.bf16.msra.mxu0 0
  %156 = vmatprep.subr.bf16.mxu0 0
  %157 = vmatpush2.bf16.msra.mxu0 0
  %158 = vmatprep.subr.bf16.mxu0 0
  %159 = vmatpush2.bf16.msra.mxu0 0
  %160 = vmatprep.subr.bf16.mxu0 0
  %161 = vmatpush2.bf16.msra.mxu0 0
  %162 = vmatprep.subr.bf16.mxu0 0
  %163 = vmatpush2.bf16.msra.mxu0 0
  %164 = vmatprep.subr.bf16.mxu0 0
  %165 = vmatpush2.bf16.msra.mxu0 0
  %166 = vmatprep.mubr.bf16.mxu0 0
  %167 = vmatmul.mubr.bf16.gmra.mxu0 %v78
  %v168 = vpop.f32.mrf.mxu0
  %v169 = vadd.f32 0.0, %v168
  %v170 = vpop.f32.mrf.mxu0
  %v171 = vpop.f32.mrf.mxu0
  %v172 = vadd.f32 0.0, %v171
  %v173 = vpop.f32.mrf.mxu0
  %174 = vmatprep.mubr.bf16.mxu0 0
  %175 = vmatmul.mubr.bf16.gmra.mxu0 %v79
  %v176 = vpop.f32.mrf.mxu0
  %v177 = vadd.f32 0.0, %v176
  %v178 = vpop.f32.mrf.mxu0
  %v179 = vpop.f32.mrf.mxu0
  %v180 = vadd.f32 0.0, %v179
  %v181 = vpop.f32.mrf.mxu0
  %182 = vmatprep.mubr.bf16.mxu0 0
  %183 = vmatmul.mubr.bf16.gmra.mxu0 %v80
  %v184 = vpop.f32.mrf.mxu0
  %v185 = vadd.f32 0.0, %v184
  %v186 = vpop.f32.mrf.mxu0
  %v187 = vpop.f32.mrf.mxu0
  %v188 = vadd.f32 0.0, %v187
  %v189 = vpop.f32.mrf.mxu0
  %190 = vmatprep.mubr.bf16.mxu0 0
  %191 = vmatmul.mubr.bf16.gmra.mxu0 %v81
  %v192 = vpop.f32.mrf.mxu0
  %v193 = vadd.f32 0.0, %v192
  %v194 = vpop.f32.mrf.mxu0
  %v195 = vpop.f32.mrf.mxu0
  %v196 = vadd.f32 0.0, %v195
  %v197 = vpop.f32.mrf.mxu0
  %198 = vdwg.mxu0
  %v199 = vadd.f32 %v30, %v169
  %v200 = vadd.f32 %v31, %v172
  %v201 = vadd.f32 %v32, %v177
  %v202 = vadd.f32 %v33, %v180
  %v203 = vadd.f32 %v34, %v185
  %v204 = vadd.f32 %v35, %v188
  %v205 = vadd.f32 %v36, %v193
  %v206 = vadd.f32 %v37, %v196
  %207 = vst [vmem:[#allocation2] sm:$0xff] %v199
  %208 = vst [vmem:[#allocation2 + $0x8] sm:$0xff] %v200
  %209 = vst [vmem:[#allocation2 + $0x10] sm:$0xff] %v201
  %210 = vst [vmem:[#allocation2 + $0x18] sm:$0xff] %v202
  %211 = vst [vmem:[#allocation2 + $0x20] sm:$0xff] %v203
  %212 = vst [vmem:[#allocation2 + $0x28] sm:$0xff] %v204
  %213 = vst [vmem:[#allocation2 + $0x30] sm:$0xff] %v205
  %214 = vst [vmem:[#allocation2 + $0x38] sm:$0xff] %v206
  // Predicated region
  $region18: #{unet3d_forward.41} parent=0 // pred_check
    %p215 = pneg %p18
  $region19: #{unet3d_forward.41} parent=0 // pred_check_branch
    %217 = sbr.rel (%p215) target = $region21
  $region20: #{unet3d_forward.41} parent=0 // pred_region
    %v218 = vld [vmem:[#allocation2] sm:$0xff]
    %v219 = vld [vmem:[#allocation2 + $0x8] sm:$0xff]
    %v220 = vld [vmem:[#allocation2 + $0x10] sm:$0xff]
    %v221 = vld [vmem:[#allocation2 + $0x18] sm:$0xff]
    %v222 = vld [vmem:[#allocation2 + $0x20] sm:$0xff]
    %v223 = vld [vmem:[#allocation2 + $0x28] sm:$0xff]
    %v224 = vld [vmem:[#allocation2 + $0x30] sm:$0xff]
    %v225 = vld [vmem:[#allocation2 + $0x38] sm:$0xff]
    %v226 = vld [vmem:[%s2] sm:$0x1]
    %v228 = vlaneseq
    %v229 = vshrl.u32 %v228, 7
    %v230 = vsub.s32 0, %v229
    %v231 = vrot.slane %v226, %v230
    %v233 = vadd.f32 %v218, %v231
    %v234 = vadd.f32 %v219, %v231
    %v235 = vadd.f32 %v220, %v231
    %v236 = vadd.f32 %v221, %v231
    %v237 = vadd.f32 %v222, %v231
    %v238 = vadd.f32 %v223, %v231
    %v239 = vadd.f32 %v224, %v231
    %v240 = vadd.f32 %v225, %v231
    %241 = vst [vmem:[%s3] sm:$0xff] %v233
    %242 = vst [vmem:[%s3 + $0x8] sm:$0xff] %v234
    %243 = vst [vmem:[%s3 + $0x10] sm:$0xff] %v235
    %244 = vst [vmem:[%s3 + $0x18] sm:$0xff] %v236
    %245 = vst [vmem:[%s3 + $0x20] sm:$0xff] %v237
    %246 = vst [vmem:[%s3 + $0x28] sm:$0xff] %v238
    %247 = vst [vmem:[%s3 + $0x30] sm:$0xff] %v239
    %248 = vst [vmem:[%s3 + $0x38] sm:$0xff] %v240
    %v249 = vadd.f32 %v233, %v234
    %v250 = vadd.f32 %v249, %v235
    %v251 = vadd.f32 %v250, %v236
    %v252 = vadd.f32 %v251, %v237
    %v253 = vadd.f32 %v252, %v238
    %v254 = vadd.f32 %v253, %v239
    %v255 = vadd.f32 %v254, %v240
    %v256 = vrot.slane %v255, 4
    %v257 = vadd.f32 %v255, %v256
    %v258 = vrot.slane %v257, 2
    %v259 = vadd.f32 %v257, %v258
    %v260 = vrot.slane %v259, 1
    %v261 = vadd.f32 %v259, %v260
    %262 = vst [vmem:[%s4] sm:$0xff] %v261
    %v263 = vmul.f32 %v233, %v233
    %v264 = vmul.f32 %v234, %v234
    %v265 = vmul.f32 %v235, %v235
    %v266 = vmul.f32 %v236, %v236
    %v267 = vmul.f32 %v237, %v237
    %v268 = vmul.f32 %v238, %v238
    %v269 = vmul.f32 %v239, %v239
    %v270 = vmul.f32 %v240, %v240
    %v271 = vadd.f32 %v263, %v264
    %v272 = vadd.f32 %v271, %v265
    %v273 = vadd.f32 %v272, %v266
    %v274 = vadd.f32 %v273, %v267
    %v275 = vadd.f32 %v274, %v268
    %v276 = vadd.f32 %v275, %v269
    %v277 = vadd.f32 %v276, %v270
    %v278 = vrot.slane %v277, 4
    %v279 = vadd.f32 %v277, %v278
    %v280 = vrot.slane %v279, 2
    %v281 = vadd.f32 %v279, %v280
    %v282 = vrot.slane %v281, 1
    %v283 = vadd.f32 %v281, %v282
    %284 = vst [vmem:[%s5] sm:$0xff] %v283
  $region21: #{unet3d_forward.41} parent=0 // pred_fallthru
    _
  // Predicated region
  $region22: #{unet3d_forward.41} parent=0 // pred_check
    _
  $region23: #{unet3d_forward.41} parent=0 // pred_check_branch
    %286 = sbr.rel (0) target = $region25
  $region24: #{unet3d_forward.41} parent=0 // pred_region
    _
  $region25: #{unet3d_forward.41} parent=0 // pred_fallthru
    _
  // Predicated region
  $region26: #{unet3d_forward.41} parent=0 // pred_check
    _
  $region27: #{unet3d_forward.41} parent=0 // pred_check_branch
    %288 = sbr.rel (0) target = $region29
  $region28: #{unet3d_forward.41} parent=0 // pred_region
    _
  $region29: #{unet3d_forward.41} parent=0 // pred_fallthru
    _
  // Predicated region
  $region30: #{unet3d_forward.41} parent=0 // pred_check
    _
  $region31: #{unet3d_forward.41} parent=0 // pred_check_branch
    %290 = sbr.rel (0) target = $region33
  $region32: #{unet3d_forward.41} parent=0 // pred_region
    _
  $region33: #{unet3d_forward.41} parent=0 // pred_fallthru
    _
  // Predicated region
  $region34: #{unet3d_forward.41} parent=0 // pred_check
    _
  $region35: #{unet3d_forward.41} parent=0 // pred_check_branch
    %292 = sbr.rel (0) target = $region37
  $region36: #{unet3d_forward.41} parent=0 // pred_region
    _
  $region37: #{unet3d_forward.41} parent=0 // pred_fallthru
    _
  // Predicated region
  $region38: #{unet3d_forward.41} parent=0 // pred_check
    _
  $region39: #{unet3d_forward.41} parent=0 // pred_check_branch
    %294 = sbr.rel (0) target = $region41
  $region40: #{unet3d_forward.41} parent=0 // pred_region
    _
  $region41: #{unet3d_forward.41} parent=0 // pred_fallthru
    _
  // Predicated region
  $region42: #{unet3d_forward.41} parent=0 // pred_check
    _
  $region43: #{unet3d_forward.41} parent=0 // pred_check_branch
    %296 = sbr.rel (0) target = $region45
  $region44: #{unet3d_forward.41} parent=0 // pred_region
    _
  $region45: #{unet3d_forward.41} parent=0 // pred_fallthru
    _

// kernel: unet3d_forward.43
$region0: #{unet3d_forward.43}
  #allocation0 [shape = 'u32[]', space=smem, size = 0x4, offset = 0x4, fixed_abs, tag = 'smem constant byte address 0x4 - core index']
  #allocation1 [shape = 'u32[144,128]{1,0:T(1,128)}', space=vmem, size = 0x12000, scoped, tag = 'internal scratch']
  #allocation2 [shape = 'f32[64,128]{1,0:T(8,128)}', space=vmem, size = 0x8000, scoped, tag = 'scratch operand']
  %s0 = inlined_call_operand.vmem [shape: bf16[64,256], index: 0, kind: input, shape index: {}]
  %s1 = inlined_call_operand.vmem [shape: bf16[256,128], index: 1, kind: input, shape index: {}]
  %s2 = inlined_call_operand.vmem [shape: f32[1,128], index: 2, kind: input, shape index: {}]
  %s3 = inlined_call_operand.vmem [shape: f32[64,128], index: 3, kind: output, shape index: {0}]
  %s4 = inlined_call_operand.vmem [shape: f32[1,8,128], index: 4, kind: output, shape index: {1}]
  %s5 = inlined_call_operand.vmem [shape: f32[1,8,128], index: 5, kind: output, shape index: {2}]
  %6 = xla_tuple %s3, %s4, %s5
  %s7 = sld [smem:[#allocation0]]
  $region46: #{unet3d_forward.43} parent=0
    _
  %s9 = ssub.s32 1, %s7
  %s10 = scalar_select 0, %s9, %s7
  // Predicated region
  $region2: #{unet3d_forward.43} parent=0 // pred_check
    _
  $region3: #{unet3d_forward.43} parent=0 // pred_check_branch
    %12 = sbr.rel (0) target = $region5
  $region4: #{unet3d_forward.43} parent=0 // pred_region
    _
  $region5: #{unet3d_forward.43} parent=0 // pred_fallthru
    _
  // Predicated region
  $region6: #{unet3d_forward.43} parent=0 // pred_check
    _
  $region7: #{unet3d_forward.43} parent=0 // pred_check_branch
    %14 = sbr.rel (0) target = $region9
  $region8: #{unet3d_forward.43} parent=0 // pred_region
    _
  $region9: #{unet3d_forward.43} parent=0 // pred_fallthru
    _
  // Predicated region
  $region10: #{unet3d_forward.43} parent=0 // pred_check
    _
  $region11: #{unet3d_forward.43} parent=0 // pred_check_branch
    %16 = sbr.rel (0) target = $region13
  $region12: #{unet3d_forward.43} parent=0 // pred_region
    _
  $region13: #{unet3d_forward.43} parent=0 // pred_fallthru
    _
  %p18 = scmp.eq.s32.totalorder 0, 0
  // Predicated region
  $region14: #{unet3d_forward.43} parent=0 // pred_check
    %p19 = pneg %p18
  $region15: #{unet3d_forward.43} parent=0 // pred_check_branch
    %21 = sbr.rel (%p19) target = $region17
  $region16: #{unet3d_forward.43} parent=0 // pred_region
    %22 = vst [vmem:[#allocation2] sm:$0xff] 0.0
    %23 = vst [vmem:[#allocation2 + $0x8] sm:$0xff] 0.0
    %24 = vst [vmem:[#allocation2 + $0x10] sm:$0xff] 0.0
    %25 = vst [vmem:[#allocation2 + $0x18] sm:$0xff] 0.0
    %26 = vst [vmem:[#allocation2 + $0x20] sm:$0xff] 0.0
    %27 = vst [vmem:[#allocation2 + $0x28] sm:$0xff] 0.0
    %28 = vst [vmem:[#allocation2 + $0x30] sm:$0xff] 0.0
    %29 = vst [vmem:[#allocation2 + $0x38] sm:$0xff] 0.0
  $region17: #{unet3d_forward.43} parent=0 // pred_fallthru
    _
  %v30 = vld [vmem:[#allocation2] sm:$0xff]
  %v31 = vld [vmem:[#allocation2 + $0x8] sm:$0xff]
  %v32 = vld [vmem:[#allocation2 + $0x10] sm:$0xff]
  %v33 = vld [vmem:[#allocation2 + $0x18] sm:$0xff]
  %v34 = vld [vmem:[#allocation2 + $0x20] sm:$0xff]
  %v35 = vld [vmem:[#allocation2 + $0x28] sm:$0xff]
  %v36 = vld [vmem:[#allocation2 + $0x30] sm:$0xff]
  %v37 = vld [vmem:[#allocation2 + $0x38] sm:$0xff]
  %v38 = vld [vmem:[%s0] sm:$0xff]
  %v39 = vld [vmem:[%s0 + $0x8] sm:$0xff]
  %v40 = vld [vmem:[%s0 + $0x10] sm:$0xff]
  %v41 = vld [vmem:[%s0 + $0x18] sm:$0xff]
  %v42 = vld [vmem:[%s0 + $0x20] sm:$0xff]
  %v43 = vld [vmem:[%s0 + $0x28] sm:$0xff]
  %v44 = vld [vmem:[%s0 + $0x30] sm:$0xff]
  %v45 = vld [vmem:[%s0 + $0x38] sm:$0xff]
  %v46 = vld [vmem:[%s1] sm:$0xf]
  %v47 = vld [vmem:[%s1 + $0x4] sm:$0xf]
  %v48 = vld [vmem:[%s1 + $0x8] sm:$0xf]
  %v49 = vld [vmem:[%s1 + $0xc] sm:$0xf]
  %v50 = vld [vmem:[%s1 + $0x10] sm:$0xf]
  %v51 = vld [vmem:[%s1 + $0x14] sm:$0xf]
  %v52 = vld [vmem:[%s1 + $0x18] sm:$0xf]
  %v53 = vld [vmem:[%s1 + $0x1c] sm:$0xf]
  %v54 = vld [vmem:[%s1 + $0x20] sm:$0xf]
  %v55 = vld [vmem:[%s1 + $0x24] sm:$0xf]
  %v56 = vld [vmem:[%s1 + $0x28] sm:$0xf]
  %v57 = vld [vmem:[%s1 + $0x2c] sm:$0xf]
  %v58 = vld [vmem:[%s1 + $0x30] sm:$0xf]
  %v59 = vld [vmem:[%s1 + $0x34] sm:$0xf]
  %v60 = vld [vmem:[%s1 + $0x38] sm:$0xf]
  %v61 = vld [vmem:[%s1 + $0x3c] sm:$0xf]
  %v62 = vld [vmem:[%s1 + $0x40] sm:$0xf]
  %v63 = vld [vmem:[%s1 + $0x44] sm:$0xf]
  %v64 = vld [vmem:[%s1 + $0x48] sm:$0xf]
  %v65 = vld [vmem:[%s1 + $0x4c] sm:$0xf]
  %v66 = vld [vmem:[%s1 + $0x50] sm:$0xf]
  %v67 = vld [vmem:[%s1 + $0x54] sm:$0xf]
  %v68 = vld [vmem:[%s1 + $0x58] sm:$0xf]
  %v69 = vld [vmem:[%s1 + $0x5c] sm:$0xf]
  %v70 = vld [vmem:[%s1 + $0x60] sm:$0xf]
  %v71 = vld [vmem:[%s1 + $0x64] sm:$0xf]
  %v72 = vld [vmem:[%s1 + $0x68] sm:$0xf]
  %v73 = vld [vmem:[%s1 + $0x6c] sm:$0xf]
  %v74 = vld [vmem:[%s1 + $0x70] sm:$0xf]
  %v75 = vld [vmem:[%s1 + $0x74] sm:$0xf]
  %v76 = vld [vmem:[%s1 + $0x78] sm:$0xf]
  %v77 = vld [vmem:[%s1 + $0x7c] sm:$0xf]
  %v86 = vunpack.c.l.b16 %v38
  %v87 = vunpack.c.h.b16 %v38
  %v88 = vunpack.c.l.b16 %v39
  %v89 = vunpack.c.h.b16 %v39
  %v90 = vunpack.c.l.b16 %v40
  %v91 = vunpack.c.h.b16 %v40
  %v92 = vunpack.c.l.b16 %v41
  %v93 = vunpack.c.h.b16 %v41
  %v94 = vunpack.c.l.b16 %v42
  %v95 = vunpack.c.h.b16 %v42
  %v96 = vunpack.c.l.b16 %v43
  %v97 = vunpack.c.h.b16 %v43
  %v98 = vunpack.c.l.b16 %v44
  %v99 = vunpack.c.h.b16 %v44
  %v100 = vunpack.c.l.b16 %v45
  %v101 = vunpack.c.h.b16 %v45
  %v102 = vpack.c.b16 %v88, %v86
  %v103 = vpack.c.b16 %v89, %v87
  %v104 = vpack.c.b16 %v92, %v90
  %v105 = vpack.c.b16 %v93, %v91
  %v106 = vpack.c.b16 %v96, %v94
  %v107 = vpack.c.b16 %v97, %v95
  %v108 = vpack.c.b16 %v100, %v98
  %v109 = vpack.c.b16 %v101, %v99
  %v150 = vunpack.c.l.b16 %v46
  %v151 = vunpack.c.l.b16 %v47
  %v152 = vunpack.c.l.b16 %v48
  %v153 = vunpack.c.l.b16 %v49
  %v154 = vunpack.c.l.b16 %v50
  %v155 = vunpack.c.l.b16 %v51
  %v156 = vunpack.c.l.b16 %v52
  %v157 = vunpack.c.l.b16 %v53
  %v158 = vunpack.c.l.b16 %v54
  %v159 = vunpack.c.l.b16 %v55
  %v160 = vunpack.c.l.b16 %v56
  %v161 = vunpack.c.l.b16 %v57
  %v162 = vunpack.c.l.b16 %v58
  %v163 = vunpack.c.l.b16 %v59
  %v164 = vunpack.c.l.b16 %v60
  %v165 = vunpack.c.l.b16 %v61
  %v166 = vunpack.c.l.b16 %v62
  %v167 = vunpack.c.l.b16 %v63
  %v168 = vunpack.c.l.b16 %v64
  %v169 = vunpack.c.l.b16 %v65
  %v170 = vunpack.c.l.b16 %v66
  %v171 = vunpack.c.l.b16 %v67
  %v172 = vunpack.c.l.b16 %v68
  %v173 = vunpack.c.l.b16 %v69
  %v174 = vunpack.c.l.b16 %v70
  %v175 = vunpack.c.l.b16 %v71
  %v176 = vunpack.c.l.b16 %v72
  %v177 = vunpack.c.l.b16 %v73
  %v178 = vunpack.c.l.b16 %v74
  %v179 = vunpack.c.l.b16 %v75
  %v180 = vunpack.c.l.b16 %v76
  %v181 = vunpack.c.l.b16 %v77
  %v182 = vpack.c.b16 %v151, %v150
  %v183 = vpack.c.b16 %v153, %v152
  %v184 = vpack.c.b16 %v155, %v154
  %v185 = vpack.c.b16 %v157, %v156
  %v186 = vpack.c.b16 %v159, %v158
  %v187 = vpack.c.b16 %v161, %v160
  %v188 = vpack.c.b16 %v163, %v162
  %v189 = vpack.c.b16 %v165, %v164
  %v190 = vpack.c.b16 %v167, %v166
  %v191 = vpack.c.b16 %v169, %v168
  %v192 = vpack.c.b16 %v171, %v170
  %v193 = vpack.c.b16 %v173, %v172
  %v194 = vpack.c.b16 %v175, %v174
  %v195 = vpack.c.b16 %v177, %v176
  %v196 = vpack.c.b16 %v179, %v178
  %v197 = vpack.c.b16 %v181, %v180
  %214 = vmatprep.subr.bf16.mxu0 0
  %215 = vmatpush1.bf16.msra.mxu0 %v189
  %216 = vmatprep.subr.bf16.mxu0 0
  %217 = vmatpush1.bf16.msra.mxu0 %v188
  %218 = vmatprep.subr.bf16.mxu0 0
  %219 = vmatpush1.bf16.msra.mxu0 %v187
  %220 = vmatprep.subr.bf16.mxu0 0
  %221 = vmatpush1.bf16.msra.mxu0 %v186
  %222 = vmatprep.subr.bf16.mxu0 0
  %223 = vmatpush1.bf16.msra.mxu0 %v185
  %224 = vmatprep.subr.bf16.mxu0 0
  %225 = vmatpush1.bf16.msra.mxu0 %v184
  %226 = vmatprep.subr.bf16.mxu0 0
  %227 = vmatpush1.bf16.msra.mxu0 %v183
  %228 = vmatprep.subr.bf16.mxu0 0
  %229 = vmatpush1.bf16.msra.mxu0 %v182
  %230 = vmatprep.subr.bf16.mxu0 0
  %231 = vmatpush2.bf16.msra.mxu0 %v197
  %232 = vmatprep.subr.bf16.mxu0 0
  %233 = vmatpush2.bf16.msra.mxu0 %v196
  %234 = vmatprep.subr.bf16.mxu0 0
  %235 = vmatpush2.bf16.msra.mxu0 %v195
  %236 = vmatprep.subr.bf16.mxu0 0
  %237 = vmatpush2.bf16.msra.mxu0 %v194
  %238 = vmatprep.subr.bf16.mxu0 0
  %239 = vmatpush2.bf16.msra.mxu0 %v193
  %240 = vmatprep.subr.bf16.mxu0 0
  %241 = vmatpush2.bf16.msra.mxu0 %v192
  %242 = vmatprep.subr.bf16.mxu0 0
  %243 = vmatpush2.bf16.msra.mxu0 %v191
  %244 = vmatprep.subr.bf16.mxu0 0
  %245 = vmatpush2.bf16.msra.mxu0 %v190
  %246 = vmatprep.mubr.bf16.mxu0 %v103
  %247 = vmatmul.mubr.bf16.gmra.mxu0 %v102
  %v248 = vpop.f32.mrf.mxu0
  %v249 = vadd.f32 0.0, %v248
  %v250 = vpop.f32.mrf.mxu0
  %v251 = vpop.f32.mrf.mxu0
  %v252 = vadd.f32 0.0, %v251
  %v253 = vpop.f32.mrf.mxu0
  %254 = vmatprep.mubr.bf16.mxu0 %v105
  %255 = vmatmul.mubr.bf16.gmra.mxu0 %v104
  %v256 = vpop.f32.mrf.mxu0
  %v257 = vadd.f32 0.0, %v256
  %v258 = vpop.f32.mrf.mxu0
  %v259 = vpop.f32.mrf.mxu0
  %v260 = vadd.f32 0.0, %v259
  %v261 = vpop.f32.mrf.mxu0
  %262 = vmatprep.mubr.bf16.mxu0 %v107
  %263 = vmatmul.mubr.bf16.gmra.mxu0 %v106
  %v264 = vpop.f32.mrf.mxu0
  %v265 = vadd.f32 0.0, %v264
  %v266 = vpop.f32.mrf.mxu0
  %v267 = vpop.f32.mrf.mxu0
  %v268 = vadd.f32 0.0, %v267
  %v269 = vpop.f32.mrf.mxu0
  %270 = vmatprep.mubr.bf16.mxu0 %v109
  %271 = vmatmul.mubr.bf16.gmra.mxu0 %v108
  %v272 = vpop.f32.mrf.mxu0
  %v273 = vadd.f32 0.0, %v272
  %v274 = vpop.f32.mrf.mxu0
  %v275 = vpop.f32.mrf.mxu0
  %v276 = vadd.f32 0.0, %v275
  %v277 = vpop.f32.mrf.mxu0
  %278 = vdwg.mxu0
  %v279 = vadd.f32 %v30, %v249
  %v280 = vadd.f32 %v31, %v252
  %v281 = vadd.f32 %v32, %v257
  %v282 = vadd.f32 %v33, %v260
  %v283 = vadd.f32 %v34, %v265
  %v284 = vadd.f32 %v35, %v268
  %v285 = vadd.f32 %v36, %v273
  %v286 = vadd.f32 %v37, %v276
  %287 = vst [vmem:[#allocation2] sm:$0xff] %v279
  %288 = vst [vmem:[#allocation2 + $0x8] sm:$0xff] %v280
  %289 = vst [vmem:[#allocation2 + $0x10] sm:$0xff] %v281
  %290 = vst [vmem:[#allocation2 + $0x18] sm:$0xff] %v282
  %291 = vst [vmem:[#allocation2 + $0x20] sm:$0xff] %v283
  %292 = vst [vmem:[#allocation2 + $0x28] sm:$0xff] %v284
  %293 = vst [vmem:[#allocation2 + $0x30] sm:$0xff] %v285
  %294 = vst [vmem:[#allocation2 + $0x38] sm:$0xff] %v286
  // Predicated region
  $region18: #{unet3d_forward.43} parent=0 // pred_check
    %p295 = pneg %p18
  $region19: #{unet3d_forward.43} parent=0 // pred_check_branch
    %297 = sbr.rel (%p295) target = $region21
  $region20: #{unet3d_forward.43} parent=0 // pred_region
    %v298 = vld [vmem:[#allocation2] sm:$0xff]
    %v299 = vld [vmem:[#allocation2 + $0x8] sm:$0xff]
    %v300 = vld [vmem:[#allocation2 + $0x10] sm:$0xff]
    %v301 = vld [vmem:[#allocation2 + $0x18] sm:$0xff]
    %v302 = vld [vmem:[#allocation2 + $0x20] sm:$0xff]
    %v303 = vld [vmem:[#allocation2 + $0x28] sm:$0xff]
    %v304 = vld [vmem:[#allocation2 + $0x30] sm:$0xff]
    %v305 = vld [vmem:[#allocation2 + $0x38] sm:$0xff]
    %v306 = vld [vmem:[%s2] sm:$0x1]
    %v308 = vlaneseq
    %v309 = vshrl.u32 %v308, 7
    %v310 = vsub.s32 0, %v309
    %v311 = vrot.slane %v306, %v310
    %v313 = vadd.f32 %v298, %v311
    %v314 = vadd.f32 %v299, %v311
    %v315 = vadd.f32 %v300, %v311
    %v316 = vadd.f32 %v301, %v311
    %v317 = vadd.f32 %v302, %v311
    %v318 = vadd.f32 %v303, %v311
    %v319 = vadd.f32 %v304, %v311
    %v320 = vadd.f32 %v305, %v311
    %321 = vst [vmem:[%s3] sm:$0xff] %v313
    %322 = vst [vmem:[%s3 + $0x8] sm:$0xff] %v314
    %323 = vst [vmem:[%s3 + $0x10] sm:$0xff] %v315
    %324 = vst [vmem:[%s3 + $0x18] sm:$0xff] %v316
    %325 = vst [vmem:[%s3 + $0x20] sm:$0xff] %v317
    %326 = vst [vmem:[%s3 + $0x28] sm:$0xff] %v318
    %327 = vst [vmem:[%s3 + $0x30] sm:$0xff] %v319
    %328 = vst [vmem:[%s3 + $0x38] sm:$0xff] %v320
    %v329 = vadd.f32 %v313, %v314
    %v330 = vadd.f32 %v329, %v315
    %v331 = vadd.f32 %v330, %v316
    %v332 = vadd.f32 %v331, %v317
    %v333 = vadd.f32 %v332, %v318
    %v334 = vadd.f32 %v333, %v319
    %v335 = vadd.f32 %v334, %v320
    %v336 = vrot.slane %v335, 4
    %v337 = vadd.f32 %v335, %v336
    %v338 = vrot.slane %v337, 2
    %v339 = vadd.f32 %v337, %v338
    %v340 = vrot.slane %v339, 1
    %v341 = vadd.f32 %v339, %v340
    %342 = vst [vmem:[%s4] sm:$0xff] %v341
    %v343 = vmul.f32 %v313, %v313
    %v344 = vmul.f32 %v314, %v314
    %v345 = vmul.f32 %v315, %v315
    %v346 = vmul.f32 %v316, %v316
    %v347 = vmul.f32 %v317, %v317
    %v348 = vmul.f32 %v318, %v318
    %v349 = vmul.f32 %v319, %v319
    %v350 = vmul.f32 %v320, %v320
    %v351 = vadd.f32 %v343, %v344
    %v352 = vadd.f32 %v351, %v345
    %v353 = vadd.f32 %v352, %v346
    %v354 = vadd.f32 %v353, %v347
    %v355 = vadd.f32 %v354, %v348
    %v356 = vadd.f32 %v355, %v349
    %v357 = vadd.f32 %v356, %v350
    %v358 = vrot.slane %v357, 4
    %v359 = vadd.f32 %v357, %v358
    %v360 = vrot.slane %v359, 2
    %v361 = vadd.f32 %v359, %v360
    %v362 = vrot.slane %v361, 1
    %v363 = vadd.f32 %v361, %v362
    %364 = vst [vmem:[%s5] sm:$0xff] %v363
  $region21: #{unet3d_forward.43} parent=0 // pred_fallthru
    _
  // Predicated region
  $region22: #{unet3d_forward.43} parent=0 // pred_check
    _
  $region23: #{unet3d_forward.43} parent=0 // pred_check_branch
    %366 = sbr.rel (0) target = $region25
  $region24: #{unet3d_forward.43} parent=0 // pred_region
    _
  $region25: #{unet3d_forward.43} parent=0 // pred_fallthru
    _
  // Predicated region
  $region26: #{unet3d_forward.43} parent=0 // pred_check
    _
  $region27: #{unet3d_forward.43} parent=0 // pred_check_branch
    %368 = sbr.rel (0) target = $region29
  $region28: #{unet3d_forward.43} parent=0 // pred_region
    _
  $region29: #{unet3d_forward.43} parent=0 // pred_fallthru
    _
  // Predicated region
  $region30: #{unet3d_forward.43} parent=0 // pred_check
    _
  $region31: #{unet3d_forward.43} parent=0 // pred_check_branch
    %370 = sbr.rel (0) target = $region33
  $region32: #{unet3d_forward.43} parent=0 // pred_region
    _
  $region33: #{unet3d_forward.43} parent=0 // pred_fallthru
    _
  // Predicated region
  $region34: #{unet3d_forward.43} parent=0 // pred_check
    _
  $region35: #{unet3d_forward.43} parent=0 // pred_check_branch
    %372 = sbr.rel (0) target = $region37
  $region36: #{unet3d_forward.43} parent=0 // pred_region
    _
  $region37: #{unet3d_forward.43} parent=0 // pred_fallthru
    _
  // Predicated region
  $region38: #{unet3d_forward.43} parent=0 // pred_check
    _
  $region39: #{unet3d_forward.43} parent=0 // pred_check_branch
    %374 = sbr.rel (0) target = $region41
  $region40: #{unet3d_forward.43} parent=0 // pred_region
    _
  $region41: #{unet3d_forward.43} parent=0 // pred_fallthru
    _
  // Predicated region
  $region42: #{unet3d_forward.43} parent=0 // pred_check
    _
  $region43: #{unet3d_forward.43} parent=0 // pred_check_branch
    %376 = sbr.rel (0) target = $region45
  $region44: #{unet3d_forward.43} parent=0 // pred_region
    _
  $region45: #{unet3d_forward.43} parent=0 // pred_fallthru
    _

// kernel: unet3d_forward.46
$region0: #{unet3d_forward.46}
  #allocation0 [shape = 'u32[]', space=smem, size = 0x4, offset = 0x4, fixed_abs, tag = 'smem constant byte address 0x4 - core index']
  #allocation1 [shape = 'u32[144,128]{1,0:T(1,128)}', space=vmem, size = 0x12000, scoped, tag = 'internal scratch']
  %s0 = inlined_call_operand.vmem [shape: f32[8,128], index: 0, kind: input, shape index: {}]
  %s1 = inlined_call_operand.vmem [shape: f32[1,128], index: 1, kind: input, shape index: {}]
  %s2 = inlined_call_operand.vmem [shape: f32[1,128], index: 2, kind: input, shape index: {}]
  %s3 = inlined_call_operand.vmem [shape: f32[8,128], index: 3, kind: output, shape index: {}]
  %s4 = sld [smem:[#allocation0]]
  $region22: #{unet3d_forward.46} parent=0
    _
  %s6 = ssub.s32 1, %s4
  %s7 = scalar_select 0, %s6, %s4
  // Predicated region
  $region2: #{unet3d_forward.46} parent=0 // pred_check
    _
  $region3: #{unet3d_forward.46} parent=0 // pred_check_branch
    %9 = sbr.rel (0) target = $region5
  $region4: #{unet3d_forward.46} parent=0 // pred_region
    _
  $region5: #{unet3d_forward.46} parent=0 // pred_fallthru
    _
  // Predicated region
  $region6: #{unet3d_forward.46} parent=0 // pred_check
    _
  $region7: #{unet3d_forward.46} parent=0 // pred_check_branch
    %11 = sbr.rel (0) target = $region9
  $region8: #{unet3d_forward.46} parent=0 // pred_region
    _
  $region9: #{unet3d_forward.46} parent=0 // pred_fallthru
    _
  // Predicated region
  $region10: #{unet3d_forward.46} parent=0 // pred_check
    _
  $region11: #{unet3d_forward.46} parent=0 // pred_check_branch
    %13 = sbr.rel (0) target = $region13
  $region12: #{unet3d_forward.46} parent=0 // pred_region
    _
  $region13: #{unet3d_forward.46} parent=0 // pred_fallthru
    _
  %v14 = vld [vmem:[%s0] sm:$0xff]
  %v15 = vld [vmem:[%s1] sm:$0x1]
  %v17 = vlaneseq
  %v18 = vshrl.u32 %v17, 7
  %v19 = vsub.s32 0, %v18
  %v20 = vrot.slane %v15, %v19
  %v22 = vmul.f32 %v14, %v20
  %v23 = vld [vmem:[%s2] sm:$0x1]
  %v25 = vlaneseq
  %v26 = vshrl.u32 %v25, 7
  %v27 = vsub.s32 0, %v26
  %v28 = vrot.slane %v23, %v27
  %v30 = vadd.f32 %v22, %v28
  %vm31 = vcmp.gt.f32.partialorder %v30, 0.0
  %v32 = vmul.f32 %v30, 0.2
  %v33 = vsel %vm31, %v30, %v32
  %34 = vst [vmem:[%s3] sm:$0xff] %v33
  // Predicated region
  $region14: #{unet3d_forward.46} parent=0 // pred_check
    _
  $region15: #{unet3d_forward.46} parent=0 // pred_check_branch
    %36 = sbr.rel (0) target = $region17
  $region16: #{unet3d_forward.46} parent=0 // pred_region
    _
  $region17: #{unet3d_forward.46} parent=0 // pred_fallthru
    _
  // Predicated region
  $region18: #{unet3d_forward.46} parent=0 // pred_check
    _
  $region19: #{unet3d_forward.46} parent=0 // pred_check_branch
    %38 = sbr.rel (0) target = $region21
  $region20: #{unet3d_forward.46} parent=0 // pred_region
    _
  $region21: #{unet3d_forward.46} parent=0 // pred_fallthru
    _

// kernel: unet3d_forward.45
$region0: #{unet3d_forward.45}
  #allocation0 [shape = 'u32[]', space=smem, size = 0x4, offset = 0x4, fixed_abs, tag = 'smem constant byte address 0x4 - core index']
  #allocation1 [shape = 'u32[144,128]{1,0:T(1,128)}', space=vmem, size = 0x12000, scoped, tag = 'internal scratch']
  #allocation2 [shape = 'f32[8,128]{1,0:T(8,128)}', space=vmem, size = 0x1000, scoped, tag = 'scratch operand']
  %s0 = inlined_call_operand.vmem [shape: bf16[8,256], index: 0, kind: input, shape index: {}]
  %s1 = inlined_call_operand.vmem [shape: bf16[256,128], index: 1, kind: input, shape index: {}]
  %s2 = inlined_call_operand.vmem [shape: f32[1,128], index: 2, kind: input, shape index: {}]
  %s3 = inlined_call_operand.vmem [shape: f32[8,128], index: 3, kind: output, shape index: {0}]
  %s4 = inlined_call_operand.vmem [shape: f32[1,8,128], index: 4, kind: output, shape index: {1}]
  %s5 = inlined_call_operand.vmem [shape: f32[1,8,128], index: 5, kind: output, shape index: {2}]
  %6 = xla_tuple %s3, %s4, %s5
  %s7 = sld [smem:[#allocation0]]
  $region46: #{unet3d_forward.45} parent=0
    _
  %s9 = ssub.s32 1, %s7
  %s10 = scalar_select 0, %s9, %s7
  // Predicated region
  $region2: #{unet3d_forward.45} parent=0 // pred_check
    _
  $region3: #{unet3d_forward.45} parent=0 // pred_check_branch
    %12 = sbr.rel (0) target = $region5
  $region4: #{unet3d_forward.45} parent=0 // pred_region
    _
  $region5: #{unet3d_forward.45} parent=0 // pred_fallthru
    _
  // Predicated region
  $region6: #{unet3d_forward.45} parent=0 // pred_check
    _
  $region7: #{unet3d_forward.45} parent=0 // pred_check_branch
    %14 = sbr.rel (0) target = $region9
  $region8: #{unet3d_forward.45} parent=0 // pred_region
    _
  $region9: #{unet3d_forward.45} parent=0 // pred_fallthru
    _
  // Predicated region
  $region10: #{unet3d_forward.45} parent=0 // pred_check
    _
  $region11: #{unet3d_forward.45} parent=0 // pred_check_branch
    %16 = sbr.rel (0) target = $region13
  $region12: #{unet3d_forward.45} parent=0 // pred_region
    _
  $region13: #{unet3d_forward.45} parent=0 // pred_fallthru
    _
  %p18 = scmp.eq.s32.totalorder 0, 0
  // Predicated region
  $region14: #{unet3d_forward.45} parent=0 // pred_check
    %p19 = pneg %p18
  $region15: #{unet3d_forward.45} parent=0 // pred_check_branch
    %21 = sbr.rel (%p19) target = $region17
  $region16: #{unet3d_forward.45} parent=0 // pred_region
    %22 = vst [vmem:[#allocation2] sm:$0xff] 0.0
  $region17: #{unet3d_forward.45} parent=0 // pred_fallthru
    _
  %v23 = vld [vmem:[#allocation2] sm:$0xff]
  %v24 = vld [vmem:[%s0] sm:$0xff]
  %v25 = vld [vmem:[%s1] sm:$0xf]
  %v26 = vld [vmem:[%s1 + $0x4] sm:$0xf]
  %v27 = vld [vmem:[%s1 + $0x8] sm:$0xf]
  %v28 = vld [vmem:[%s1 + $0xc] sm:$0xf]
  %v29 = vld [vmem:[%s1 + $0x10] sm:$0xf]
  %v30 = vld [vmem:[%s1 + $0x14] sm:$0xf]
  %v31 = vld [vmem:[%s1 + $0x18] sm:$0xf]
  %v32 = vld [vmem:[%s1 + $0x1c] sm:$0xf]
  %v33 = vld [vmem:[%s1 + $0x20] sm:$0xf]
  %v34 = vld [vmem:[%s1 + $0x24] sm:$0xf]
  %v35 = vld [vmem:[%s1 + $0x28] sm:$0xf]
  %v36 = vld [vmem:[%s1 + $0x2c] sm:$0xf]
  %v37 = vld [vmem:[%s1 + $0x30] sm:$0xf]
  %v38 = vld [vmem:[%s1 + $0x34] sm:$0xf]
  %v39 = vld [vmem:[%s1 + $0x38] sm:$0xf]
  %v40 = vld [vmem:[%s1 + $0x3c] sm:$0xf]
  %v41 = vld [vmem:[%s1 + $0x40] sm:$0xf]
  %v42 = vld [vmem:[%s1 + $0x44] sm:$0xf]
  %v43 = vld [vmem:[%s1 + $0x48] sm:$0xf]
  %v44 = vld [vmem:[%s1 + $0x4c] sm:$0xf]
  %v45 = vld [vmem:[%s1 + $0x50] sm:$0xf]
  %v46 = vld [vmem:[%s1 + $0x54] sm:$0xf]
  %v47 = vld [vmem:[%s1 + $0x58] sm:$0xf]
  %v48 = vld [vmem:[%s1 + $0x5c] sm:$0xf]
  %v49 = vld [vmem:[%s1 + $0x60] sm:$0xf]
  %v50 = vld [vmem:[%s1 + $0x64] sm:$0xf]
  %v51 = vld [vmem:[%s1 + $0x68] sm:$0xf]
  %v52 = vld [vmem:[%s1 + $0x6c] sm:$0xf]
  %v53 = vld [vmem:[%s1 + $0x70] sm:$0xf]
  %v54 = vld [vmem:[%s1 + $0x74] sm:$0xf]
  %v55 = vld [vmem:[%s1 + $0x78] sm:$0xf]
  %v56 = vld [vmem:[%s1 + $0x7c] sm:$0xf]
  %v58 = vunpack.c.l.b16 %v24
  %v59 = vunpack.c.h.b16 %v24
  %v60 = vpack.c.b16 %v58, %v58
  %v61 = vpack.c.b16 %v59, %v59
  %v96 = vunpack.c.l.b16 %v25
  %v97 = vunpack.c.l.b16 %v26
  %v98 = vunpack.c.l.b16 %v27
  %v99 = vunpack.c.l.b16 %v28
  %v100 = vunpack.c.l.b16 %v29
  %v101 = vunpack.c.l.b16 %v30
  %v102 = vunpack.c.l.b16 %v31
  %v103 = vunpack.c.l.b16 %v32
  %v104 = vunpack.c.l.b16 %v33
  %v105 = vunpack.c.l.b16 %v34
  %v106 = vunpack.c.l.b16 %v35
  %v107 = vunpack.c.l.b16 %v36
  %v108 = vunpack.c.l.b16 %v37
  %v109 = vunpack.c.l.b16 %v38
  %v110 = vunpack.c.l.b16 %v39
  %v111 = vunpack.c.l.b16 %v40
  %v112 = vunpack.c.l.b16 %v41
  %v113 = vunpack.c.l.b16 %v42
  %v114 = vunpack.c.l.b16 %v43
  %v115 = vunpack.c.l.b16 %v44
  %v116 = vunpack.c.l.b16 %v45
  %v117 = vunpack.c.l.b16 %v46
  %v118 = vunpack.c.l.b16 %v47
  %v119 = vunpack.c.l.b16 %v48
  %v120 = vunpack.c.l.b16 %v49
  %v121 = vunpack.c.l.b16 %v50
  %v122 = vunpack.c.l.b16 %v51
  %v123 = vunpack.c.l.b16 %v52
  %v124 = vunpack.c.l.b16 %v53
  %v125 = vunpack.c.l.b16 %v54
  %v126 = vunpack.c.l.b16 %v55
  %v127 = vunpack.c.l.b16 %v56
  %v128 = vpack.c.b16 %v97, %v96
  %v129 = vpack.c.b16 %v99, %v98
  %v130 = vpack.c.b16 %v101, %v100
  %v131 = vpack.c.b16 %v103, %v102
  %v132 = vpack.c.b16 %v105, %v104
  %v133 = vpack.c.b16 %v107, %v106
  %v134 = vpack.c.b16 %v109, %v108
  %v135 = vpack.c.b16 %v111, %v110
  %v136 = vpack.c.b16 %v113, %v112
  %v137 = vpack.c.b16 %v115, %v114
  %v138 = vpack.c.b16 %v117, %v116
  %v139 = vpack.c.b16 %v119, %v118
  %v140 = vpack.c.b16 %v121, %v120
  %v141 = vpack.c.b16 %v123, %v122
  %v142 = vpack.c.b16 %v125, %v124
  %v143 = vpack.c.b16 %v127, %v126
  %160 = vmatprep.subr.bf16.mxu0 0
  %161 = vmatpush1.bf16.msra.mxu0 %v135
  %162 = vmatprep.subr.bf16.mxu0 0
  %163 = vmatpush1.bf16.msra.mxu0 %v134
  %164 = vmatprep.subr.bf16.mxu0 0
  %165 = vmatpush1.bf16.msra.mxu0 %v133
  %166 = vmatprep.subr.bf16.mxu0 0
  %167 = vmatpush1.bf16.msra.mxu0 %v132
  %168 = vmatprep.subr.bf16.mxu0 0
  %169 = vmatpush1.bf16.msra.mxu0 %v131
  %170 = vmatprep.subr.bf16.mxu0 0
  %171 = vmatpush1.bf16.msra.mxu0 %v130
  %172 = vmatprep.subr.bf16.mxu0 0
  %173 = vmatpush1.bf16.msra.mxu0 %v129
  %174 = vmatprep.subr.bf16.mxu0 0
  %175 = vmatpush1.bf16.msra.mxu0 %v128
  %176 = vmatprep.subr.bf16.mxu0 0
  %177 = vmatpush2.bf16.msra.mxu0 %v143
  %178 = vmatprep.subr.bf16.mxu0 0
  %179 = vmatpush2.bf16.msra.mxu0 %v142
  %180 = vmatprep.subr.bf16.mxu0 0
  %181 = vmatpush2.bf16.msra.mxu0 %v141
  %182 = vmatprep.subr.bf16.mxu0 0
  %183 = vmatpush2.bf16.msra.mxu0 %v140
  %184 = vmatprep.subr.bf16.mxu0 0
  %185 = vmatpush2.bf16.msra.mxu0 %v139
  %186 = vmatprep.subr.bf16.mxu0 0
  %187 = vmatpush2.bf16.msra.mxu0 %v138
  %188 = vmatprep.subr.bf16.mxu0 0
  %189 = vmatpush2.bf16.msra.mxu0 %v137
  %190 = vmatprep.subr.bf16.mxu0 0
  %191 = vmatpush2.bf16.msra.mxu0 %v136
  %192 = vmatprep.mubr.bf16.mxu0 %v61
  %193 = vmatmul.mubr.bf16.gmra.mxu0 %v60
  %v194 = vpop.f32.mrf.mxu0
  %v195 = vadd.f32 0.0, %v194
  %v196 = vpop.f32.mrf.mxu0
  %v197 = vpop.f32.mrf.mxu0
  %v198 = vpop.f32.mrf.mxu0
  %199 = vdwg.mxu0
  %v200 = vadd.f32 %v23, %v195
  %201 = vst [vmem:[#allocation2] sm:$0xff] %v200
  // Predicated region
  $region18: #{unet3d_forward.45} parent=0 // pred_check
    %p202 = pneg %p18
  $region19: #{unet3d_forward.45} parent=0 // pred_check_branch
    %204 = sbr.rel (%p202) target = $region21
  $region20: #{unet3d_forward.45} parent=0 // pred_region
    %v205 = vld [vmem:[#allocation2] sm:$0xff]
    %v206 = vld [vmem:[%s2] sm:$0x1]
    %v208 = vlaneseq
    %v209 = vshrl.u32 %v208, 7
    %v210 = vsub.s32 0, %v209
    %v211 = vrot.slane %v206, %v210
    %v213 = vadd.f32 %v205, %v211
    %214 = vst [vmem:[%s3] sm:$0xff] %v213
    %v215 = vrot.slane %v213, 4
    %v216 = vadd.f32 %v213, %v215
    %v217 = vrot.slane %v216, 2
    %v218 = vadd.f32 %v216, %v217
    %v219 = vrot.slane %v218, 1
    %v220 = vadd.f32 %v218, %v219
    %221 = vst [vmem:[%s4] sm:$0xff] %v220
    %v222 = vmul.f32 %v213, %v213
    %v223 = vrot.slane %v222, 4
    %v224 = vadd.f32 %v222, %v223
    %v225 = vrot.slane %v224, 2
    %v226 = vadd.f32 %v224, %v225
    %v227 = vrot.slane %v226, 1
    %v228 = vadd.f32 %v226, %v227
    %229 = vst [vmem:[%s5] sm:$0xff] %v228
  $region21: #{unet3d_forward.45} parent=0 // pred_fallthru
    _
  // Predicated region
  $region22: #{unet3d_forward.45} parent=0 // pred_check
    _
  $region23: #{unet3d_forward.45} parent=0 // pred_check_branch
    %231 = sbr.rel (0) target = $region25
  $region24: #{unet3d_forward.45} parent=0 // pred_region
    _
  $region25: #{unet3d_forward.45} parent=0 // pred_fallthru
    _
  // Predicated region
  $region26: #{unet3d_forward.45} parent=0 // pred_check
    _
  $region27: #{unet3d_forward.45} parent=0 // pred_check_branch
    %233 = sbr.rel (0) target = $region29
  $region28: #{unet3d_forward.45} parent=0 // pred_region
    _
  $region29: #{unet3d_forward.45} parent=0 // pred_fallthru
    _
  // Predicated region
  $region30: #{unet3d_forward.45} parent=0 // pred_check
    _
  $region31: #{unet3d_forward.45} parent=0 // pred_check_branch
    %235 = sbr.rel (0) target = $region33
  $region32: #{unet3d_forward.45} parent=0 // pred_region
    _
  $region33: #{unet3d_forward.45} parent=0 // pred_fallthru
    _
  // Predicated region
  $region34: #{unet3d_forward.45} parent=0 // pred_check
    _
  $region35: #{unet3d_forward.45} parent=0 // pred_check_branch
    %237 = sbr.rel (0) target = $region37
  $region36: #{unet3d_forward.45} parent=0 // pred_region
    _
  $region37: #{unet3d_forward.45} parent=0 // pred_fallthru
    _
  // Predicated region
  $region38: #{unet3d_forward.45} parent=0 // pred_check
    _
  $region39: #{unet3d_forward.45} parent=0 // pred_check_branch
    %239 = sbr.rel (0) target = $region41
  $region40: #{unet3d_forward.45} parent=0 // pred_region
    _
  $region41: #{unet3d_forward.45} parent=0 // pred_fallthru
    _
  // Predicated region
  $region42: #{unet3d_forward.45} parent=0 // pred_check
    _
  $region43: #{unet3d_forward.45} parent=0 // pred_check_branch
    %241 = sbr.rel (0) target = $region45
  $region44: #{unet3d_forward.45} parent=0 // pred_region
    _
  $region45: #{unet3d_forward.45} parent=0 // pred_fallthru
    _

// kernel: unet3d_forward.47
$region0: #{unet3d_forward.47}
  #allocation0 [shape = 'u32[]', space=smem, size = 0x4, offset = 0x4, fixed_abs, tag = 'smem constant byte address 0x4 - core index']
  #allocation1 [shape = 'u32[144,128]{1,0:T(1,128)}', space=vmem, size = 0x12000, scoped, tag = 'internal scratch']
  #allocation2 [shape = 'f32[8,128]{1,0:T(8,128)}', space=vmem, size = 0x1000, scoped, tag = 'scratch operand']
  %s0 = inlined_call_operand.vmem [shape: bf16[8,512], index: 0, kind: input, shape index: {}]
  %s1 = inlined_call_operand.vmem [shape: bf16[512,128], index: 1, kind: input, shape index: {}]
  %s2 = inlined_call_operand.vmem [shape: f32[1,128], index: 2, kind: input, shape index: {}]
  %s3 = inlined_call_operand.vmem [shape: f32[8,128], index: 3, kind: output, shape index: {0}]
  %s4 = inlined_call_operand.vmem [shape: f32[1,8,128], index: 4, kind: output, shape index: {1}]
  %s5 = inlined_call_operand.vmem [shape: f32[1,8,128], index: 5, kind: output, shape index: {2}]
  %6 = xla_tuple %s3, %s4, %s5
  %s7 = sld [smem:[#allocation0]]
  $region46: #{unet3d_forward.47} parent=0
    _
  %s9 = ssub.s32 1, %s7
  %s10 = scalar_select 0, %s9, %s7
  // Predicated region
  $region2: #{unet3d_forward.47} parent=0 // pred_check
    _
  $region3: #{unet3d_forward.47} parent=0 // pred_check_branch
    %12 = sbr.rel (0) target = $region5
  $region4: #{unet3d_forward.47} parent=0 // pred_region
    _
  $region5: #{unet3d_forward.47} parent=0 // pred_fallthru
    _
  // Predicated region
  $region6: #{unet3d_forward.47} parent=0 // pred_check
    _
  $region7: #{unet3d_forward.47} parent=0 // pred_check_branch
    %14 = sbr.rel (0) target = $region9
  $region8: #{unet3d_forward.47} parent=0 // pred_region
    _
  $region9: #{unet3d_forward.47} parent=0 // pred_fallthru
    _
  // Predicated region
  $region10: #{unet3d_forward.47} parent=0 // pred_check
    _
  $region11: #{unet3d_forward.47} parent=0 // pred_check_branch
    %16 = sbr.rel (0) target = $region13
  $region12: #{unet3d_forward.47} parent=0 // pred_region
    _
  $region13: #{unet3d_forward.47} parent=0 // pred_fallthru
    _
  %p18 = scmp.eq.s32.totalorder 0, 0
  // Predicated region
  $region14: #{unet3d_forward.47} parent=0 // pred_check
    %p19 = pneg %p18
  $region15: #{unet3d_forward.47} parent=0 // pred_check_branch
    %21 = sbr.rel (%p19) target = $region17
  $region16: #{unet3d_forward.47} parent=0 // pred_region
    %22 = vst [vmem:[#allocation2] sm:$0xff] 0.0
  $region17: #{unet3d_forward.47} parent=0 // pred_fallthru
    _
  %v23 = vld [vmem:[#allocation2] sm:$0xff]
  %v24 = vld [vmem:[%s0] sm:$0xff]
  %v25 = vld [vmem:[%s0 + $0x8] sm:$0xff]
  %v26 = vld [vmem:[%s1] sm:$0xf]
  %v27 = vld [vmem:[%s1 + $0x4] sm:$0xf]
  %v28 = vld [vmem:[%s1 + $0x8] sm:$0xf]
  %v29 = vld [vmem:[%s1 + $0xc] sm:$0xf]
  %v30 = vld [vmem:[%s1 + $0x10] sm:$0xf]
  %v31 = vld [vmem:[%s1 + $0x14] sm:$0xf]
  %v32 = vld [vmem:[%s1 + $0x18] sm:$0xf]
  %v33 = vld [vmem:[%s1 + $0x1c] sm:$0xf]
  %v34 = vld [vmem:[%s1 + $0x20] sm:$0xf]
  %v35 = vld [vmem:[%s1 + $0x24] sm:$0xf]
  %v36 = vld [vmem:[%s1 + $0x28] sm:$0xf]
  %v37 = vld [vmem:[%s1 + $0x2c] sm:$0xf]
  %v38 = vld [vmem:[%s1 + $0x30] sm:$0xf]
  %v39 = vld [vmem:[%s1 + $0x34] sm:$0xf]
  %v40 = vld [vmem:[%s1 + $0x38] sm:$0xf]
  %v41 = vld [vmem:[%s1 + $0x3c] sm:$0xf]
  %v42 = vld [vmem:[%s1 + $0x40] sm:$0xf]
  %v43 = vld [vmem:[%s1 + $0x44] sm:$0xf]
  %v44 = vld [vmem:[%s1 + $0x48] sm:$0xf]
  %v45 = vld [vmem:[%s1 + $0x4c] sm:$0xf]
  %v46 = vld [vmem:[%s1 + $0x50] sm:$0xf]
  %v47 = vld [vmem:[%s1 + $0x54] sm:$0xf]
  %v48 = vld [vmem:[%s1 + $0x58] sm:$0xf]
  %v49 = vld [vmem:[%s1 + $0x5c] sm:$0xf]
  %v50 = vld [vmem:[%s1 + $0x60] sm:$0xf]
  %v51 = vld [vmem:[%s1 + $0x64] sm:$0xf]
  %v52 = vld [vmem:[%s1 + $0x68] sm:$0xf]
  %v53 = vld [vmem:[%s1 + $0x6c] sm:$0xf]
  %v54 = vld [vmem:[%s1 + $0x70] sm:$0xf]
  %v55 = vld [vmem:[%s1 + $0x74] sm:$0xf]
  %v56 = vld [vmem:[%s1 + $0x78] sm:$0xf]
  %v57 = vld [vmem:[%s1 + $0x7c] sm:$0xf]
  %v58 = vld [vmem:[%s1 + $0x80] sm:$0xf]
  %v59 = vld [vmem:[%s1 + $0x84] sm:$0xf]
  %v60 = vld [vmem:[%s1 + $0x88] sm:$0xf]
  %v61 = vld [vmem:[%s1 + $0x8c] sm:$0xf]
  %v62 = vld [vmem:[%s1 + $0x90] sm:$0xf]
  %v63 = vld [vmem:[%s1 + $0x94] sm:$0xf]
  %v64 = vld [vmem:[%s1 + $0x98] sm:$0xf]
  %v65 = vld [vmem:[%s1 + $0x9c] sm:$0xf]
  %v66 = vld [vmem:[%s1 + $0xa0] sm:$0xf]
  %v67 = vld [vmem:[%s1 + $0xa4] sm:$0xf]
  %v68 = vld [vmem:[%s1 + $0xa8] sm:$0xf]
  %v69 = vld [vmem:[%s1 + $0xac] sm:$0xf]
  %v70 = vld [vmem:[%s1 + $0xb0] sm:$0xf]
  %v71 = vld [vmem:[%s1 + $0xb4] sm:$0xf]
  %v72 = vld [vmem:[%s1 + $0xb8] sm:$0xf]
  %v73 = vld [vmem:[%s1 + $0xbc] sm:$0xf]
  %v74 = vld [vmem:[%s1 + $0xc0] sm:$0xf]
  %v75 = vld [vmem:[%s1 + $0xc4] sm:$0xf]
  %v76 = vld [vmem:[%s1 + $0xc8] sm:$0xf]
  %v77 = vld [vmem:[%s1 + $0xcc] sm:$0xf]
  %v78 = vld [vmem:[%s1 + $0xd0] sm:$0xf]
  %v79 = vld [vmem:[%s1 + $0xd4] sm:$0xf]
  %v80 = vld [vmem:[%s1 + $0xd8] sm:$0xf]
  %v81 = vld [vmem:[%s1 + $0xdc] sm:$0xf]
  %v82 = vld [vmem:[%s1 + $0xe0] sm:$0xf]
  %v83 = vld [vmem:[%s1 + $0xe4] sm:$0xf]
  %v84 = vld [vmem:[%s1 + $0xe8] sm:$0xf]
  %v85 = vld [vmem:[%s1 + $0xec] sm:$0xf]
  %v86 = vld [vmem:[%s1 + $0xf0] sm:$0xf]
  %v87 = vld [vmem:[%s1 + $0xf4] sm:$0xf]
  %v88 = vld [vmem:[%s1 + $0xf8] sm:$0xf]
  %v89 = vld [vmem:[%s1 + $0xfc] sm:$0xf]
  %v92 = vunpack.c.l.b16 %v24
  %v93 = vunpack.c.h.b16 %v24
  %v94 = vunpack.c.l.b16 %v25
  %v95 = vunpack.c.h.b16 %v25
  %v96 = vpack.c.b16 %v92, %v92
  %v97 = vpack.c.b16 %v93, %v93
  %v98 = vpack.c.b16 %v94, %v94
  %v99 = vpack.c.b16 %v95, %v95
  %v168 = vunpack.c.l.b16 %v26
  %v169 = vunpack.c.l.b16 %v27
  %v170 = vunpack.c.l.b16 %v28
  %v171 = vunpack.c.l.b16 %v29
  %v172 = vunpack.c.l.b16 %v30
  %v173 = vunpack.c.l.b16 %v31
  %v174 = vunpack.c.l.b16 %v32
  %v175 = vunpack.c.l.b16 %v33
  %v176 = vunpack.c.l.b16 %v34
  %v177 = vunpack.c.l.b16 %v35
  %v178 = vunpack.c.l.b16 %v36
  %v179 = vunpack.c.l.b16 %v37
  %v180 = vunpack.c.l.b16 %v38
  %v181 = vunpack.c.l.b16 %v39
  %v182 = vunpack.c.l.b16 %v40
  %v183 = vunpack.c.l.b16 %v41
  %v184 = vunpack.c.l.b16 %v42
  %v185 = vunpack.c.l.b16 %v43
  %v186 = vunpack.c.l.b16 %v44
  %v187 = vunpack.c.l.b16 %v45
  %v188 = vunpack.c.l.b16 %v46
  %v189 = vunpack.c.l.b16 %v47
  %v190 = vunpack.c.l.b16 %v48
  %v191 = vunpack.c.l.b16 %v49
  %v192 = vunpack.c.l.b16 %v50
  %v193 = vunpack.c.l.b16 %v51
  %v194 = vunpack.c.l.b16 %v52
  %v195 = vunpack.c.l.b16 %v53
  %v196 = vunpack.c.l.b16 %v54
  %v197 = vunpack.c.l.b16 %v55
  %v198 = vunpack.c.l.b16 %v56
  %v199 = vunpack.c.l.b16 %v57
  %v200 = vunpack.c.l.b16 %v58
  %v201 = vunpack.c.l.b16 %v59
  %v202 = vunpack.c.l.b16 %v60
  %v203 = vunpack.c.l.b16 %v61
  %v204 = vunpack.c.l.b16 %v62
  %v205 = vunpack.c.l.b16 %v63
  %v206 = vunpack.c.l.b16 %v64
  %v207 = vunpack.c.l.b16 %v65
  %v208 = vunpack.c.l.b16 %v66
  %v209 = vunpack.c.l.b16 %v67
  %v210 = vunpack.c.l.b16 %v68
  %v211 = vunpack.c.l.b16 %v69
  %v212 = vunpack.c.l.b16 %v70
  %v213 = vunpack.c.l.b16 %v71
  %v214 = vunpack.c.l.b16 %v72
  %v215 = vunpack.c.l.b16 %v73
  %v216 = vunpack.c.l.b16 %v74
  %v217 = vunpack.c.l.b16 %v75
  %v218 = vunpack.c.l.b16 %v76
  %v219 = vunpack.c.l.b16 %v77
  %v220 = vunpack.c.l.b16 %v78
  %v221 = vunpack.c.l.b16 %v79
  %v222 = vunpack.c.l.b16 %v80
  %v223 = vunpack.c.l.b16 %v81
  %v224 = vunpack.c.l.b16 %v82
  %v225 = vunpack.c.l.b16 %v83
  %v226 = vunpack.c.l.b16 %v84
  %v227 = vunpack.c.l.b16 %v85
  %v228 = vunpack.c.l.b16 %v86
  %v229 = vunpack.c.l.b16 %v87
  %v230 = vunpack.c.l.b16 %v88
  %v231 = vunpack.c.l.b16 %v89
  %v232 = vpack.c.b16 %v169, %v168
  %v233 = vpack.c.b16 %v171, %v170
  %v234 = vpack.c.b16 %v173, %v172
  %v235 = vpack.c.b16 %v175, %v174
  %v236 = vpack.c.b16 %v177, %v176
  %v237 = vpack.c.b16 %v179, %v178
  %v238 = vpack.c.b16 %v181, %v180
  %v239 = vpack.c.b16 %v183, %v182
  %v240 = vpack.c.b16 %v185, %v184
  %v241 = vpack.c.b16 %v187, %v186
  %v242 = vpack.c.b16 %v189, %v188
  %v243 = vpack.c.b16 %v191, %v190
  %v244 = vpack.c.b16 %v193, %v192
  %v245 = vpack.c.b16 %v195, %v194
  %v246 = vpack.c.b16 %v197, %v196
  %v247 = vpack.c.b16 %v199, %v198
  %v248 = vpack.c.b16 %v201, %v200
  %v249 = vpack.c.b16 %v203, %v202
  %v250 = vpack.c.b16 %v205, %v204
  %v251 = vpack.c.b16 %v207, %v206
  %v252 = vpack.c.b16 %v209, %v208
  %v253 = vpack.c.b16 %v211, %v210
  %v254 = vpack.c.b16 %v213, %v212
  %v255 = vpack.c.b16 %v215, %v214
  %v256 = vpack.c.b16 %v217, %v216
  %v257 = vpack.c.b16 %v219, %v218
  %v258 = vpack.c.b16 %v221, %v220
  %v259 = vpack.c.b16 %v223, %v222
  %v260 = vpack.c.b16 %v225, %v224
  %v261 = vpack.c.b16 %v227, %v226
  %v262 = vpack.c.b16 %v229, %v228
  %v263 = vpack.c.b16 %v231, %v230
  %296 = vmatprep.subr.bf16.mxu0 0
  %297 = vmatpush1.bf16.msra.mxu0 %v239
  %298 = vmatprep.subr.bf16.mxu0 0
  %299 = vmatpush1.bf16.msra.mxu0 %v238
  %300 = vmatprep.subr.bf16.mxu0 0
  %301 = vmatpush1.bf16.msra.mxu0 %v237
  %302 = vmatprep.subr.bf16.mxu0 0
  %303 = vmatpush1.bf16.msra.mxu0 %v236
  %304 = vmatprep.subr.bf16.mxu0 0
  %305 = vmatpush1.bf16.msra.mxu0 %v235
  %306 = vmatprep.subr.bf16.mxu0 0
  %307 = vmatpush1.bf16.msra.mxu0 %v234
  %308 = vmatprep.subr.bf16.mxu0 0
  %309 = vmatpush1.bf16.msra.mxu0 %v233
  %310 = vmatprep.subr.bf16.mxu0 0
  %311 = vmatpush1.bf16.msra.mxu0 %v232
  %312 = vmatprep.subr.bf16.mxu0 0
  %313 = vmatpush2.bf16.msra.mxu0 %v247
  %314 = vmatprep.subr.bf16.mxu0 0
  %315 = vmatpush2.bf16.msra.mxu0 %v246
  %316 = vmatprep.subr.bf16.mxu0 0
  %317 = vmatpush2.bf16.msra.mxu0 %v245
  %318 = vmatprep.subr.bf16.mxu0 0
  %319 = vmatpush2.bf16.msra.mxu0 %v244
  %320 = vmatprep.subr.bf16.mxu0 0
  %321 = vmatpush2.bf16.msra.mxu0 %v243
  %322 = vmatprep.subr.bf16.mxu0 0
  %323 = vmatpush2.bf16.msra.mxu0 %v242
  %324 = vmatprep.subr.bf16.mxu0 0
  %325 = vmatpush2.bf16.msra.mxu0 %v241
  %326 = vmatprep.subr.bf16.mxu0 0
  %327 = vmatpush2.bf16.msra.mxu0 %v240
  %328 = vmatprep.mubr.bf16.mxu0 %v97
  %329 = vmatmul.mubr.bf16.gmra.mxu0 %v96
  %v330 = vpop.f32.mrf.mxu0
  %v331 = vadd.f32 0.0, %v330
  %v332 = vpop.f32.mrf.mxu0
  %v333 = vpop.f32.mrf.mxu0
  %v334 = vpop.f32.mrf.mxu0
  %335 = vdwg.mxu0
  %336 = vmatprep.subr.bf16.mxu0 0
  %337 = vmatpush1.bf16.msra.mxu0 %v255
  %338 = vmatprep.subr.bf16.mxu0 0
  %339 = vmatpush1.bf16.msra.mxu0 %v254
  %340 = vmatprep.subr.bf16.mxu0 0
  %341 = vmatpush1.bf16.msra.mxu0 %v253
  %342 = vmatprep.subr.bf16.mxu0 0
  %343 = vmatpush1.bf16.msra.mxu0 %v252
  %344 = vmatprep.subr.bf16.mxu0 0
  %345 = vmatpush1.bf16.msra.mxu0 %v251
  %346 = vmatprep.subr.bf16.mxu0 0
  %347 = vmatpush1.bf16.msra.mxu0 %v250
  %348 = vmatprep.subr.bf16.mxu0 0
  %349 = vmatpush1.bf16.msra.mxu0 %v249
  %350 = vmatprep.subr.bf16.mxu0 0
  %351 = vmatpush1.bf16.msra.mxu0 %v248
  %352 = vmatprep.subr.bf16.mxu0 0
  %353 = vmatpush2.bf16.msra.mxu0 %v263
  %354 = vmatprep.subr.bf16.mxu0 0
  %355 = vmatpush2.bf16.msra.mxu0 %v262
  %356 = vmatprep.subr.bf16.mxu0 0
  %357 = vmatpush2.bf16.msra.mxu0 %v261
  %358 = vmatprep.subr.bf16.mxu0 0
  %359 = vmatpush2.bf16.msra.mxu0 %v260
  %360 = vmatprep.subr.bf16.mxu0 0
  %361 = vmatpush2.bf16.msra.mxu0 %v259
  %362 = vmatprep.subr.bf16.mxu0 0
  %363 = vmatpush2.bf16.msra.mxu0 %v258
  %364 = vmatprep.subr.bf16.mxu0 0
  %365 = vmatpush2.bf16.msra.mxu0 %v257
  %366 = vmatprep.subr.bf16.mxu0 0
  %367 = vmatpush2.bf16.msra.mxu0 %v256
  %368 = vmatprep.mubr.bf16.mxu0 %v99
  %369 = vmatmul.mubr.bf16.gmra.mxu0 %v98
  %v370 = vpop.f32.mrf.mxu0
  %v371 = vadd.f32 %v331, %v370
  %v372 = vpop.f32.mrf.mxu0
  %v373 = vpop.f32.mrf.mxu0
  %v374 = vpop.f32.mrf.mxu0
  %375 = vdwg.mxu0
  %v376 = vadd.f32 %v23, %v371
  %377 = vst [vmem:[#allocation2] sm:$0xff] %v376
  // Predicated region
  $region18: #{unet3d_forward.47} parent=0 // pred_check
    %p378 = pneg %p18
  $region19: #{unet3d_forward.47} parent=0 // pred_check_branch
    %380 = sbr.rel (%p378) target = $region21
  $region20: #{unet3d_forward.47} parent=0 // pred_region
    %v381 = vld [vmem:[#allocation2] sm:$0xff]
    %v382 = vld [vmem:[%s2] sm:$0x1]
    %v384 = vlaneseq
    %v385 = vshrl.u32 %v384, 7
    %v386 = vsub.s32 0, %v385
    %v387 = vrot.slane %v382, %v386
    %v389 = vadd.f32 %v381, %v387
    %390 = vst [vmem:[%s3] sm:$0xff] %v389
    %v391 = vrot.slane %v389, 4
    %v392 = vadd.f32 %v389, %v391
    %v393 = vrot.slane %v392, 2
    %v394 = vadd.f32 %v392, %v393
    %v395 = vrot.slane %v394, 1
    %v396 = vadd.f32 %v394, %v395
    %397 = vst [vmem:[%s4] sm:$0xff] %v396
    %v398 = vmul.f32 %v389, %v389
    %v399 = vrot.slane %v398, 4
    %v400 = vadd.f32 %v398, %v399
    %v401 = vrot.slane %v400, 2
    %v402 = vadd.f32 %v400, %v401
    %v403 = vrot.slane %v402, 1
    %v404 = vadd.f32 %v402, %v403
    %405 = vst [vmem:[%s5] sm:$0xff] %v404
  $region21: #{unet3d_forward.47} parent=0 // pred_fallthru
    _
  // Predicated region
  $region22: #{unet3d_forward.47} parent=0 // pred_check
    _
  $region23: #{unet3d_forward.47} parent=0 // pred_check_branch
    %407 = sbr.rel (0) target = $region25
  $region24: #{unet3d_forward.47} parent=0 // pred_region
    _
  $region25: #{unet3d_forward.47} parent=0 // pred_fallthru
    _
  // Predicated region
  $region26: #{unet3d_forward.47} parent=0 // pred_check
    _
  $region27: #{unet3d_forward.47} parent=0 // pred_check_branch
    %409 = sbr.rel (0) target = $region29
  $region28: #{unet3d_forward.47} parent=0 // pred_region
    _
  $region29: #{unet3d_forward.47} parent=0 // pred_fallthru
    _
  // Predicated region
  $region30: #{unet3d_forward.47} parent=0 // pred_check
    _
  $region31: #{unet3d_forward.47} parent=0 // pred_check_branch
    %411 = sbr.rel (0) target = $region33
  $region32: #{unet3d_forward.47} parent=0 // pred_region
    _
  $region33: #{unet3d_forward.47} parent=0 // pred_fallthru
    _
  // Predicated region
  $region34: #{unet3d_forward.47} parent=0 // pred_check
    _
  $region35: #{unet3d_forward.47} parent=0 // pred_check_branch
    %413 = sbr.rel (0) target = $region37
  $region36: #{unet3d_forward.47} parent=0 // pred_region
    _
  $region37: #{unet3d_forward.47} parent=0 // pred_fallthru
    _
  // Predicated region
  $region38: #{unet3d_forward.47} parent=0 // pred_check
    _
  $region39: #{unet3d_forward.47} parent=0 // pred_check_branch
    %415 = sbr.rel (0) target = $region41
  $region40: #{unet3d_forward.47} parent=0 // pred_region
    _
  $region41: #{unet3d_forward.47} parent=0 // pred_fallthru
    _
  // Predicated region
  $region42: #{unet3d_forward.47} parent=0 // pred_check
    _
  $region43: #{unet3d_forward.47} parent=0 // pred_check_branch
    %417 = sbr.rel (0) target = $region45
  $region44: #{unet3d_forward.47} parent=0 // pred_region
    _
  $region45: #{unet3d_forward.47} parent=0 // pred_fallthru
    _

// kernel: unet3d_forward.56
$region0: #{unet3d_forward.56}
  #allocation0 [shape = 'u32[]', space=smem, size = 0x4, offset = 0x4, fixed_abs, tag = 'smem constant byte address 0x4 - core index']
  #allocation1 [shape = 'u32[144,128]{1,0:T(1,128)}', space=vmem, size = 0x12000, scoped, tag = 'internal scratch']
  #allocation2 [shape = 'f32[8,128]{1,0:T(8,128)}', space=vmem, size = 0x1000, scoped, tag = 'scratch operand']
  %s0 = inlined_call_operand.vmem [shape: bf16[8,128], index: 0, kind: input, shape index: {}]
  %s1 = inlined_call_operand.vmem [shape: bf16[128,128], index: 1, kind: input, shape index: {}]
  %s2 = inlined_call_operand.vmem [shape: f32[1,128], index: 2, kind: input, shape index: {}]
  %s3 = inlined_call_operand.vmem [shape: f32[8,128], index: 3, kind: output, shape index: {0}]
  %s4 = inlined_call_operand.hbm [shape: f32[1,8,128], index: 4, kind: output, shape index: {1}]
  %s5 = inlined_call_operand.hbm [shape: f32[1,8,128], index: 5, kind: output, shape index: {2}]
  %6 = xla_tuple %s3, %s4, %s5
  %s7 = sld [smem:[#allocation0]]
  $region46: #{unet3d_forward.56} parent=0
    _
  %s9 = ssub.s32 1, %s7
  %s10 = scalar_select 0, %s9, %s7
  $region1: #{unet3d_forward.56} parent=0
    #allocation3 [shape = 'u8[4096]{0}', space=vmem, size = 0x1000, scoped, tag = 'output window, operand 1, single buffered']
    #allocation4 [shape = 's32[1]{0}', space=sflag, size = 0x4, scoped, tag = 'scoped memory for unet3d_forward.56']
    #allocation5 [shape = 'u8[4096]{0}', space=vmem, size = 0x1000, scoped, tag = 'output window, operand 2, single buffered']
    #allocation6 [shape = 's32[1]{0}', space=sflag, size = 0x4, scoped, tag = 'scoped memory for unet3d_forward.56']
    %11 = vsyncpa [#allocation4], 0
    %12 = vsyncpa [#allocation6], 0
    // Predicated region
    $region2: #{unet3d_forward.56} parent=1 // pred_check
      _
    $region3: #{unet3d_forward.56} parent=1 // pred_check_branch
      %14 = sbr.rel (0) target = $region5
    $region4: #{unet3d_forward.56} parent=1 // pred_region
      _
    $region5: #{unet3d_forward.56} parent=1 // pred_fallthru
      _
    // Predicated region
    $region6: #{unet3d_forward.56} parent=1 // pred_check
      _
    $region7: #{unet3d_forward.56} parent=1 // pred_check_branch
      %16 = sbr.rel (0) target = $region9
    $region8: #{unet3d_forward.56} parent=1 // pred_region
      _
    $region9: #{unet3d_forward.56} parent=1 // pred_fallthru
      _
    // Predicated region
    $region10: #{unet3d_forward.56} parent=1 // pred_check
      _
    $region11: #{unet3d_forward.56} parent=1 // pred_check_branch
      %18 = sbr.rel (0) target = $region13
    $region12: #{unet3d_forward.56} parent=1 // pred_region
      _
    $region13: #{unet3d_forward.56} parent=1 // pred_fallthru
      _
    %p20 = scmp.eq.s32.totalorder 0, 0
    // Predicated region
    $region14: #{unet3d_forward.56} parent=1 // pred_check
      %p21 = pneg %p20
    $region15: #{unet3d_forward.56} parent=1 // pred_check_branch
      %23 = sbr.rel (%p21) target = $region17
    $region16: #{unet3d_forward.56} parent=1 // pred_region
      %24 = vst [vmem:[#allocation2] sm:$0xff] 0.0
    $region17: #{unet3d_forward.56} parent=1 // pred_fallthru
      _
    %v25 = vld [vmem:[#allocation2] sm:$0xff]
    %v26 = vld [vmem:[%s0] sm:$0xf]
    %v27 = vld [vmem:[%s1] sm:$0xf]
    %v28 = vld [vmem:[%s1 + $0x4] sm:$0xf]
    %v29 = vld [vmem:[%s1 + $0x8] sm:$0xf]
    %v30 = vld [vmem:[%s1 + $0xc] sm:$0xf]
    %v31 = vld [vmem:[%s1 + $0x10] sm:$0xf]
    %v32 = vld [vmem:[%s1 + $0x14] sm:$0xf]
    %v33 = vld [vmem:[%s1 + $0x18] sm:$0xf]
    %v34 = vld [vmem:[%s1 + $0x1c] sm:$0xf]
    %v35 = vld [vmem:[%s1 + $0x20] sm:$0xf]
    %v36 = vld [vmem:[%s1 + $0x24] sm:$0xf]
    %v37 = vld [vmem:[%s1 + $0x28] sm:$0xf]
    %v38 = vld [vmem:[%s1 + $0x2c] sm:$0xf]
    %v39 = vld [vmem:[%s1 + $0x30] sm:$0xf]
    %v40 = vld [vmem:[%s1 + $0x34] sm:$0xf]
    %v41 = vld [vmem:[%s1 + $0x38] sm:$0xf]
    %v42 = vld [vmem:[%s1 + $0x3c] sm:$0xf]
    %v59 = vunpack.c.l.b16 %v27
    %v60 = vunpack.c.l.b16 %v28
    %v61 = vunpack.c.l.b16 %v29
    %v62 = vunpack.c.l.b16 %v30
    %v63 = vunpack.c.l.b16 %v31
    %v64 = vunpack.c.l.b16 %v32
    %v65 = vunpack.c.l.b16 %v33
    %v66 = vunpack.c.l.b16 %v34
    %v67 = vunpack.c.l.b16 %v35
    %v68 = vunpack.c.l.b16 %v36
    %v69 = vunpack.c.l.b16 %v37
    %v70 = vunpack.c.l.b16 %v38
    %v71 = vunpack.c.l.b16 %v39
    %v72 = vunpack.c.l.b16 %v40
    %v73 = vunpack.c.l.b16 %v41
    %v74 = vunpack.c.l.b16 %v42
    %v75 = vpack.c.b16 %v60, %v59
    %v76 = vpack.c.b16 %v62, %v61
    %v77 = vpack.c.b16 %v64, %v63
    %v78 = vpack.c.b16 %v66, %v65
    %v79 = vpack.c.b16 %v68, %v67
    %v80 = vpack.c.b16 %v70, %v69
    %v81 = vpack.c.b16 %v72, %v71
    %v82 = vpack.c.b16 %v74, %v73
    %91 = vmatprep.subr.bf16.mxu0 0
    %92 = vmatpush1.bf16.msra.mxu0 %v82
    %93 = vmatprep.subr.bf16.mxu0 0
    %94 = vmatpush1.bf16.msra.mxu0 %v81
    %95 = vmatprep.subr.bf16.mxu0 0
    %96 = vmatpush1.bf16.msra.mxu0 %v80
    %97 = vmatprep.subr.bf16.mxu0 0
    %98 = vmatpush1.bf16.msra.mxu0 %v79
    %99 = vmatprep.subr.bf16.mxu0 0
    %100 = vmatpush1.bf16.msra.mxu0 %v78
    %101 = vmatprep.subr.bf16.mxu0 0
    %102 = vmatpush1.bf16.msra.mxu0 %v77
    %103 = vmatprep.subr.bf16.mxu0 0
    %104 = vmatpush1.bf16.msra.mxu0 %v76
    %105 = vmatprep.subr.bf16.mxu0 0
    %106 = vmatpush1.bf16.msra.mxu0 %v75
    %107 = vmatprep.subr.bf16.mxu0 0
    %108 = vmatpush2.bf16.msra.mxu0 0
    %109 = vmatprep.subr.bf16.mxu0 0
    %110 = vmatpush2.bf16.msra.mxu0 0
    %111 = vmatprep.subr.bf16.mxu0 0
    %112 = vmatpush2.bf16.msra.mxu0 0
    %113 = vmatprep.subr.bf16.mxu0 0
    %114 = vmatpush2.bf16.msra.mxu0 0
    %115 = vmatprep.subr.bf16.mxu0 0
    %116 = vmatpush2.bf16.msra.mxu0 0
    %117 = vmatprep.subr.bf16.mxu0 0
    %118 = vmatpush2.bf16.msra.mxu0 0
    %119 = vmatprep.subr.bf16.mxu0 0
    %120 = vmatpush2.bf16.msra.mxu0 0
    %121 = vmatprep.subr.bf16.mxu0 0
    %122 = vmatpush2.bf16.msra.mxu0 0
    %123 = vmatprep.mubr.bf16.mxu0 0
    %124 = vmatmul.mubr.bf16.gmra.mxu0 %v26
    %v125 = vpop.f32.mrf.mxu0
    %v126 = vadd.f32 0.0, %v125
    %v127 = vpop.f32.mrf.mxu0
    %v128 = vpop.f32.mrf.mxu0
    %v129 = vpop.f32.mrf.mxu0
    %130 = vdwg.mxu0
    %v131 = vadd.f32 %v25, %v126
    %132 = vst [vmem:[#allocation2] sm:$0xff] %v131
    // Predicated region
    $region18: #{unet3d_forward.56} parent=1 // pred_check
      %p133 = pneg %p20
    $region19: #{unet3d_forward.56} parent=1 // pred_check_branch
      %135 = sbr.rel (%p133) target = $region21
    $region20: #{unet3d_forward.56} parent=1 // pred_region
      %v136 = vld [vmem:[#allocation2] sm:$0xff]
      %v137 = vld [vmem:[%s2] sm:$0x1]
      %v139 = vlaneseq
      %v140 = vshrl.u32 %v139, 7
      %v141 = vsub.s32 0, %v140
      %v142 = vrot.slane %v137, %v141
      %v144 = vadd.f32 %v136, %v142
      %145 = vst [vmem:[%s3] sm:$0xff] %v144
      %v146 = vrot.slane %v144, 4
      %v147 = vadd.f32 %v144, %v146
      %v148 = vrot.slane %v147, 2
      %v149 = vadd.f32 %v147, %v148
      %v150 = vrot.slane %v149, 1
      %v151 = vadd.f32 %v149, %v150
      %152 = vst [vmem:[#allocation3] sm:$0xff] %v151
      %v153 = vmul.f32 %v144, %v144
      %v154 = vrot.slane %v153, 4
      %v155 = vadd.f32 %v153, %v154
      %v156 = vrot.slane %v155, 2
      %v157 = vadd.f32 %v155, %v156
      %v158 = vrot.slane %v157, 1
      %v159 = vadd.f32 %v157, %v158
      %160 = vst [vmem:[#allocation5] sm:$0xff] %v159
    $region21: #{unet3d_forward.56} parent=1 // pred_fallthru
      _
    // Predicated region
    $region22: #{unet3d_forward.56} parent=1 // pred_check
      _
    $region23: #{unet3d_forward.56} parent=1 // pred_check_branch
      %162 = sbr.rel (0) target = $region25
    $region24: #{unet3d_forward.56} parent=1 // pred_region
      _
    $region25: #{unet3d_forward.56} parent=1 // pred_fallthru
      _
    // Predicated region
    $region26: #{unet3d_forward.56} parent=1 // pred_check
      _
    $region27: #{unet3d_forward.56} parent=1 // pred_check_branch
      %164 = sbr.rel (0) target = $region29
    $region28: #{unet3d_forward.56} parent=1 // pred_region
      %s166 = ssub.s32 128, 128
      %167 = vsyncadd [#allocation4], %s166
      %s169 = sshll.u32 [#allocation3], 4
      %s170 = int_to_ptr.vmem [resolvable:$true] %s169
      %172 = dma.vmem_to_hbm [thread:$0]  %s170, 128, %s4, [#allocation4]
    $region29: #{unet3d_forward.56} parent=1 // pred_fallthru
      _
    // Predicated region
    $region30: #{unet3d_forward.56} parent=1 // pred_check
      _
    $region31: #{unet3d_forward.56} parent=1 // pred_check_branch
      %174 = sbr.rel (0) target = $region33
    $region32: #{unet3d_forward.56} parent=1 // pred_region
      %s176 = ssub.s32 128, 128
      %177 = vsyncadd [#allocation6], %s176
      %s179 = sshll.u32 [#allocation5], 4
      %s180 = int_to_ptr.vmem [resolvable:$true] %s179
      %182 = dma.vmem_to_hbm [thread:$0]  %s180, 128, %s5, [#allocation6]
    $region33: #{unet3d_forward.56} parent=1 // pred_fallthru
      _
    // Predicated region
    $region34: #{unet3d_forward.56} parent=1 // pred_check
      _
    $region35: #{unet3d_forward.56} parent=1 // pred_check_branch
      %184 = sbr.rel (0) target = $region37
    $region36: #{unet3d_forward.56} parent=1 // pred_region
      _
    $region37: #{unet3d_forward.56} parent=1 // pred_fallthru
      _
    // Predicated region
    $region38: #{unet3d_forward.56} parent=1 // pred_check
      _
    $region39: #{unet3d_forward.56} parent=1 // pred_check_branch
      %186 = sbr.rel (0) target = $region41
    $region40: #{unet3d_forward.56} parent=1 // pred_region
      %187 = dma.done [#allocation4], 128
    $region41: #{unet3d_forward.56} parent=1 // pred_fallthru
      _
    // Predicated region
    $region42: #{unet3d_forward.56} parent=1 // pred_check
      _
    $region43: #{unet3d_forward.56} parent=1 // pred_check_branch
      %189 = sbr.rel (0) target = $region45
    $region44: #{unet3d_forward.56} parent=1 // pred_region
      %190 = dma.done [#allocation6], 128
    $region45: #{unet3d_forward.56} parent=1 // pred_fallthru
      _
    %191 = vsyncpa [#allocation4], 1
    %192 = vsyncpa [#allocation6], 1

// kernel: unet3d_forward.57
$region0: #{unet3d_forward.57}
  #allocation0 [shape = 'u32[]', space=smem, size = 0x4, offset = 0x4, fixed_abs, tag = 'smem constant byte address 0x4 - core index']
  #allocation1 [shape = 'u32[144,128]{1,0:T(1,128)}', space=vmem, size = 0x12000, scoped, tag = 'internal scratch']
  #allocation2 [shape = 'f32[64,128]{1,0:T(8,128)}', space=vmem, size = 0x8000, scoped, tag = 'scratch operand']
  %s0 = inlined_call_operand.vmem [shape: bf16[64,512], index: 0, kind: input, shape index: {}]
  %s1 = inlined_call_operand.vmem [shape: bf16[512,128], index: 1, kind: input, shape index: {}]
  %s2 = inlined_call_operand.vmem [shape: f32[1,128], index: 2, kind: input, shape index: {}]
  %s3 = inlined_call_operand.vmem [shape: f32[64,128], index: 3, kind: output, shape index: {0}]
  %s4 = inlined_call_operand.vmem [shape: f32[1,8,128], index: 4, kind: output, shape index: {1}]
  %s5 = inlined_call_operand.vmem [shape: f32[1,8,128], index: 5, kind: output, shape index: {2}]
  %6 = xla_tuple %s3, %s4, %s5
  %s7 = sld [smem:[#allocation0]]
  $region46: #{unet3d_forward.57} parent=0
    _
  %s9 = ssub.s32 1, %s7
  %s10 = scalar_select 0, %s9, %s7
  // Predicated region
  $region2: #{unet3d_forward.57} parent=0 // pred_check
    _
  $region3: #{unet3d_forward.57} parent=0 // pred_check_branch
    %12 = sbr.rel (0) target = $region5
  $region4: #{unet3d_forward.57} parent=0 // pred_region
    _
  $region5: #{unet3d_forward.57} parent=0 // pred_fallthru
    _
  // Predicated region
  $region6: #{unet3d_forward.57} parent=0 // pred_check
    _
  $region7: #{unet3d_forward.57} parent=0 // pred_check_branch
    %14 = sbr.rel (0) target = $region9
  $region8: #{unet3d_forward.57} parent=0 // pred_region
    _
  $region9: #{unet3d_forward.57} parent=0 // pred_fallthru
    _
  // Predicated region
  $region10: #{unet3d_forward.57} parent=0 // pred_check
    _
  $region11: #{unet3d_forward.57} parent=0 // pred_check_branch
    %16 = sbr.rel (0) target = $region13
  $region12: #{unet3d_forward.57} parent=0 // pred_region
    _
  $region13: #{unet3d_forward.57} parent=0 // pred_fallthru
    _
  %p18 = scmp.eq.s32.totalorder 0, 0
  // Predicated region
  $region14: #{unet3d_forward.57} parent=0 // pred_check
    %p19 = pneg %p18
  $region15: #{unet3d_forward.57} parent=0 // pred_check_branch
    %21 = sbr.rel (%p19) target = $region17
  $region16: #{unet3d_forward.57} parent=0 // pred_region
    %22 = vst [vmem:[#allocation2] sm:$0xff] 0.0
    %23 = vst [vmem:[#allocation2 + $0x8] sm:$0xff] 0.0
    %24 = vst [vmem:[#allocation2 + $0x10] sm:$0xff] 0.0
    %25 = vst [vmem:[#allocation2 + $0x18] sm:$0xff] 0.0
    %26 = vst [vmem:[#allocation2 + $0x20] sm:$0xff] 0.0
    %27 = vst [vmem:[#allocation2 + $0x28] sm:$0xff] 0.0
    %28 = vst [vmem:[#allocation2 + $0x30] sm:$0xff] 0.0
    %29 = vst [vmem:[#allocation2 + $0x38] sm:$0xff] 0.0
  $region17: #{unet3d_forward.57} parent=0 // pred_fallthru
    _
  %v30 = vld [vmem:[#allocation2] sm:$0xff]
  %v31 = vld [vmem:[#allocation2 + $0x8] sm:$0xff]
  %v32 = vld [vmem:[#allocation2 + $0x10] sm:$0xff]
  %v33 = vld [vmem:[#allocation2 + $0x18] sm:$0xff]
  %v34 = vld [vmem:[#allocation2 + $0x20] sm:$0xff]
  %v35 = vld [vmem:[#allocation2 + $0x28] sm:$0xff]
  %v36 = vld [vmem:[#allocation2 + $0x30] sm:$0xff]
  %v37 = vld [vmem:[#allocation2 + $0x38] sm:$0xff]
  %v38 = vld [vmem:[%s0] sm:$0xff]
  %v39 = vld [vmem:[%s0 + $0x8] sm:$0xff]
  %v40 = vld [vmem:[%s0 + $0x10] sm:$0xff]
  %v41 = vld [vmem:[%s0 + $0x18] sm:$0xff]
  %v42 = vld [vmem:[%s0 + $0x20] sm:$0xff]
  %v43 = vld [vmem:[%s0 + $0x28] sm:$0xff]
  %v44 = vld [vmem:[%s0 + $0x30] sm:$0xff]
  %v45 = vld [vmem:[%s0 + $0x38] sm:$0xff]
  %v46 = vld [vmem:[%s0 + $0x40] sm:$0xff]
  %v47 = vld [vmem:[%s0 + $0x48] sm:$0xff]
  %v48 = vld [vmem:[%s0 + $0x50] sm:$0xff]
  %v49 = vld [vmem:[%s0 + $0x58] sm:$0xff]
  %v50 = vld [vmem:[%s0 + $0x60] sm:$0xff]
  %v51 = vld [vmem:[%s0 + $0x68] sm:$0xff]
  %v52 = vld [vmem:[%s0 + $0x70] sm:$0xff]
  %v53 = vld [vmem:[%s0 + $0x78] sm:$0xff]
  %v54 = vld [vmem:[%s1] sm:$0xf]
  %v55 = vld [vmem:[%s1 + $0x4] sm:$0xf]
  %v56 = vld [vmem:[%s1 + $0x8] sm:$0xf]
  %v57 = vld [vmem:[%s1 + $0xc] sm:$0xf]
  %v58 = vld [vmem:[%s1 + $0x10] sm:$0xf]
  %v59 = vld [vmem:[%s1 + $0x14] sm:$0xf]
  %v60 = vld [vmem:[%s1 + $0x18] sm:$0xf]
  %v61 = vld [vmem:[%s1 + $0x1c] sm:$0xf]
  %v62 = vld [vmem:[%s1 + $0x20] sm:$0xf]
  %v63 = vld [vmem:[%s1 + $0x24] sm:$0xf]
  %v64 = vld [vmem:[%s1 + $0x28] sm:$0xf]
  %v65 = vld [vmem:[%s1 + $0x2c] sm:$0xf]
  %v66 = vld [vmem:[%s1 + $0x30] sm:$0xf]
  %v67 = vld [vmem:[%s1 + $0x34] sm:$0xf]
  %v68 = vld [vmem:[%s1 + $0x38] sm:$0xf]
  %v69 = vld [vmem:[%s1 + $0x3c] sm:$0xf]
  %v70 = vld [vmem:[%s1 + $0x40] sm:$0xf]
  %v71 = vld [vmem:[%s1 + $0x44] sm:$0xf]
  %v72 = vld [vmem:[%s1 + $0x48] sm:$0xf]
  %v73 = vld [vmem:[%s1 + $0x4c] sm:$0xf]
  %v74 = vld [vmem:[%s1 + $0x50] sm:$0xf]
  %v75 = vld [vmem:[%s1 + $0x54] sm:$0xf]
  %v76 = vld [vmem:[%s1 + $0x58] sm:$0xf]
  %v77 = vld [vmem:[%s1 + $0x5c] sm:$0xf]
  %v78 = vld [vmem:[%s1 + $0x60] sm:$0xf]
  %v79 = vld [vmem:[%s1 + $0x64] sm:$0xf]
  %v80 = vld [vmem:[%s1 + $0x68] sm:$0xf]
  %v81 = vld [vmem:[%s1 + $0x6c] sm:$0xf]
  %v82 = vld [vmem:[%s1 + $0x70] sm:$0xf]
  %v83 = vld [vmem:[%s1 + $0x74] sm:$0xf]
  %v84 = vld [vmem:[%s1 + $0x78] sm:$0xf]
  %v85 = vld [vmem:[%s1 + $0x7c] sm:$0xf]
  %v86 = vld [vmem:[%s1 + $0x80] sm:$0xf]
  %v87 = vld [vmem:[%s1 + $0x84] sm:$0xf]
  %v88 = vld [vmem:[%s1 + $0x88] sm:$0xf]
  %v89 = vld [vmem:[%s1 + $0x8c] sm:$0xf]
  %v90 = vld [vmem:[%s1 + $0x90] sm:$0xf]
  %v91 = vld [vmem:[%s1 + $0x94] sm:$0xf]
  %v92 = vld [vmem:[%s1 + $0x98] sm:$0xf]
  %v93 = vld [vmem:[%s1 + $0x9c] sm:$0xf]
  %v94 = vld [vmem:[%s1 + $0xa0] sm:$0xf]
  %v95 = vld [vmem:[%s1 + $0xa4] sm:$0xf]
  %v96 = vld [vmem:[%s1 + $0xa8] sm:$0xf]
  %v97 = vld [vmem:[%s1 + $0xac] sm:$0xf]
  %v98 = vld [vmem:[%s1 + $0xb0] sm:$0xf]
  %v99 = vld [vmem:[%s1 + $0xb4] sm:$0xf]
  %v100 = vld [vmem:[%s1 + $0xb8] sm:$0xf]
  %v101 = vld [vmem:[%s1 + $0xbc] sm:$0xf]
  %v102 = vld [vmem:[%s1 + $0xc0] sm:$0xf]
  %v103 = vld [vmem:[%s1 + $0xc4] sm:$0xf]
  %v104 = vld [vmem:[%s1 + $0xc8] sm:$0xf]
  %v105 = vld [vmem:[%s1 + $0xcc] sm:$0xf]
  %v106 = vld [vmem:[%s1 + $0xd0] sm:$0xf]
  %v107 = vld [vmem:[%s1 + $0xd4] sm:$0xf]
  %v108 = vld [vmem:[%s1 + $0xd8] sm:$0xf]
  %v109 = vld [vmem:[%s1 + $0xdc] sm:$0xf]
  %v110 = vld [vmem:[%s1 + $0xe0] sm:$0xf]
  %v111 = vld [vmem:[%s1 + $0xe4] sm:$0xf]
  %v112 = vld [vmem:[%s1 + $0xe8] sm:$0xf]
  %v113 = vld [vmem:[%s1 + $0xec] sm:$0xf]
  %v114 = vld [vmem:[%s1 + $0xf0] sm:$0xf]
  %v115 = vld [vmem:[%s1 + $0xf4] sm:$0xf]
  %v116 = vld [vmem:[%s1 + $0xf8] sm:$0xf]
  %v117 = vld [vmem:[%s1 + $0xfc] sm:$0xf]
  %v134 = vunpack.c.l.b16 %v38
  %v135 = vunpack.c.h.b16 %v38
  %v136 = vunpack.c.l.b16 %v39
  %v137 = vunpack.c.h.b16 %v39
  %v138 = vunpack.c.l.b16 %v40
  %v139 = vunpack.c.h.b16 %v40
  %v140 = vunpack.c.l.b16 %v41
  %v141 = vunpack.c.h.b16 %v41
  %v142 = vunpack.c.l.b16 %v42
  %v143 = vunpack.c.h.b16 %v42
  %v144 = vunpack.c.l.b16 %v43
  %v145 = vunpack.c.h.b16 %v43
  %v146 = vunpack.c.l.b16 %v44
  %v147 = vunpack.c.h.b16 %v44
  %v148 = vunpack.c.l.b16 %v45
  %v149 = vunpack.c.h.b16 %v45
  %v150 = vunpack.c.l.b16 %v46
  %v151 = vunpack.c.h.b16 %v46
  %v152 = vunpack.c.l.b16 %v47
  %v153 = vunpack.c.h.b16 %v47
  %v154 = vunpack.c.l.b16 %v48
  %v155 = vunpack.c.h.b16 %v48
  %v156 = vunpack.c.l.b16 %v49
  %v157 = vunpack.c.h.b16 %v49
  %v158 = vunpack.c.l.b16 %v50
  %v159 = vunpack.c.h.b16 %v50
  %v160 = vunpack.c.l.b16 %v51
  %v161 = vunpack.c.h.b16 %v51
  %v162 = vunpack.c.l.b16 %v52
  %v163 = vunpack.c.h.b16 %v52
  %v164 = vunpack.c.l.b16 %v53
  %v165 = vunpack.c.h.b16 %v53
  %v166 = vpack.c.b16 %v138, %v134
  %v167 = vpack.c.b16 %v139, %v135
  %v168 = vpack.c.b16 %v140, %v136
  %v169 = vpack.c.b16 %v141, %v137
  %v170 = vpack.c.b16 %v146, %v142
  %v171 = vpack.c.b16 %v147, %v143
  %v172 = vpack.c.b16 %v148, %v144
  %v173 = vpack.c.b16 %v149, %v145
  %v174 = vpack.c.b16 %v154, %v150
  %v175 = vpack.c.b16 %v155, %v151
  %v176 = vpack.c.b16 %v156, %v152
  %v177 = vpack.c.b16 %v157, %v153
  %v178 = vpack.c.b16 %v162, %v158
  %v179 = vpack.c.b16 %v163, %v159
  %v180 = vpack.c.b16 %v164, %v160
  %v181 = vpack.c.b16 %v165, %v161
  %v262 = vunpack.c.l.b16 %v54
  %v263 = vunpack.c.l.b16 %v55
  %v264 = vunpack.c.l.b16 %v56
  %v265 = vunpack.c.l.b16 %v57
  %v266 = vunpack.c.l.b16 %v58
  %v267 = vunpack.c.l.b16 %v59
  %v268 = vunpack.c.l.b16 %v60
  %v269 = vunpack.c.l.b16 %v61
  %v270 = vunpack.c.l.b16 %v62
  %v271 = vunpack.c.l.b16 %v63
  %v272 = vunpack.c.l.b16 %v64
  %v273 = vunpack.c.l.b16 %v65
  %v274 = vunpack.c.l.b16 %v66
  %v275 = vunpack.c.l.b16 %v67
  %v276 = vunpack.c.l.b16 %v68
  %v277 = vunpack.c.l.b16 %v69
  %v278 = vunpack.c.l.b16 %v70
  %v279 = vunpack.c.l.b16 %v71
  %v280 = vunpack.c.l.b16 %v72
  %v281 = vunpack.c.l.b16 %v73
  %v282 = vunpack.c.l.b16 %v74
  %v283 = vunpack.c.l.b16 %v75
  %v284 = vunpack.c.l.b16 %v76
  %v285 = vunpack.c.l.b16 %v77
  %v286 = vunpack.c.l.b16 %v78
  %v287 = vunpack.c.l.b16 %v79
  %v288 = vunpack.c.l.b16 %v80
  %v289 = vunpack.c.l.b16 %v81
  %v290 = vunpack.c.l.b16 %v82
  %v291 = vunpack.c.l.b16 %v83
  %v292 = vunpack.c.l.b16 %v84
  %v293 = vunpack.c.l.b16 %v85
  %v294 = vunpack.c.l.b16 %v86
  %v295 = vunpack.c.l.b16 %v87
  %v296 = vunpack.c.l.b16 %v88
  %v297 = vunpack.c.l.b16 %v89
  %v298 = vunpack.c.l.b16 %v90
  %v299 = vunpack.c.l.b16 %v91
  %v300 = vunpack.c.l.b16 %v92
  %v301 = vunpack.c.l.b16 %v93
  %v302 = vunpack.c.l.b16 %v94
  %v303 = vunpack.c.l.b16 %v95
  %v304 = vunpack.c.l.b16 %v96
  %v305 = vunpack.c.l.b16 %v97
  %v306 = vunpack.c.l.b16 %v98
  %v307 = vunpack.c.l.b16 %v99
  %v308 = vunpack.c.l.b16 %v100
  %v309 = vunpack.c.l.b16 %v101
  %v310 = vunpack.c.l.b16 %v102
  %v311 = vunpack.c.l.b16 %v103
  %v312 = vunpack.c.l.b16 %v104
  %v313 = vunpack.c.l.b16 %v105
  %v314 = vunpack.c.l.b16 %v106
  %v315 = vunpack.c.l.b16 %v107
  %v316 = vunpack.c.l.b16 %v108
  %v317 = vunpack.c.l.b16 %v109
  %v318 = vunpack.c.l.b16 %v110
  %v319 = vunpack.c.l.b16 %v111
  %v320 = vunpack.c.l.b16 %v112
  %v321 = vunpack.c.l.b16 %v113
  %v322 = vunpack.c.l.b16 %v114
  %v323 = vunpack.c.l.b16 %v115
  %v324 = vunpack.c.l.b16 %v116
  %v325 = vunpack.c.l.b16 %v117
  %v326 = vpack.c.b16 %v263, %v262
  %v327 = vpack.c.b16 %v265, %v264
  %v328 = vpack.c.b16 %v267, %v266
  %v329 = vpack.c.b16 %v269, %v268
  %v330 = vpack.c.b16 %v271, %v270
  %v331 = vpack.c.b16 %v273, %v272
  %v332 = vpack.c.b16 %v275, %v274
  %v333 = vpack.c.b16 %v277, %v276
  %v334 = vpack.c.b16 %v279, %v278
  %v335 = vpack.c.b16 %v281, %v280
  %v336 = vpack.c.b16 %v283, %v282
  %v337 = vpack.c.b16 %v285, %v284
  %v338 = vpack.c.b16 %v287, %v286
  %v339 = vpack.c.b16 %v289, %v288
  %v340 = vpack.c.b16 %v291, %v290
  %v341 = vpack.c.b16 %v293, %v292
  %v342 = vpack.c.b16 %v295, %v294
  %v343 = vpack.c.b16 %v297, %v296
  %v344 = vpack.c.b16 %v299, %v298
  %v345 = vpack.c.b16 %v301, %v300
  %v346 = vpack.c.b16 %v303, %v302
  %v347 = vpack.c.b16 %v305, %v304
  %v348 = vpack.c.b16 %v307, %v306
  %v349 = vpack.c.b16 %v309, %v308
  %v350 = vpack.c.b16 %v311, %v310
  %v351 = vpack.c.b16 %v313, %v312
  %v352 = vpack.c.b16 %v315, %v314
  %v353 = vpack.c.b16 %v317, %v316
  %v354 = vpack.c.b16 %v319, %v318
  %v355 = vpack.c.b16 %v321, %v320
  %v356 = vpack.c.b16 %v323, %v322
  %v357 = vpack.c.b16 %v325, %v324
  %390 = vmatprep.subr.bf16.mxu0 0
  %391 = vmatpush1.bf16.msra.mxu0 %v333
  %392 = vmatprep.subr.bf16.mxu0 0
  %393 = vmatpush1.bf16.msra.mxu0 %v332
  %394 = vmatprep.subr.bf16.mxu0 0
  %395 = vmatpush1.bf16.msra.mxu0 %v331
  %396 = vmatprep.subr.bf16.mxu0 0
  %397 = vmatpush1.bf16.msra.mxu0 %v330
  %398 = vmatprep.subr.bf16.mxu0 0
  %399 = vmatpush1.bf16.msra.mxu0 %v329
  %400 = vmatprep.subr.bf16.mxu0 0
  %401 = vmatpush1.bf16.msra.mxu0 %v328
  %402 = vmatprep.subr.bf16.mxu0 0
  %403 = vmatpush1.bf16.msra.mxu0 %v327
  %404 = vmatprep.subr.bf16.mxu0 0
  %405 = vmatpush1.bf16.msra.mxu0 %v326
  %406 = vmatprep.subr.bf16.mxu0 0
  %407 = vmatpush2.bf16.msra.mxu0 %v341
  %408 = vmatprep.subr.bf16.mxu0 0
  %409 = vmatpush2.bf16.msra.mxu0 %v340
  %410 = vmatprep.subr.bf16.mxu0 0
  %411 = vmatpush2.bf16.msra.mxu0 %v339
  %412 = vmatprep.subr.bf16.mxu0 0
  %413 = vmatpush2.bf16.msra.mxu0 %v338
  %414 = vmatprep.subr.bf16.mxu0 0
  %415 = vmatpush2.bf16.msra.mxu0 %v337
  %416 = vmatprep.subr.bf16.mxu0 0
  %417 = vmatpush2.bf16.msra.mxu0 %v336
  %418 = vmatprep.subr.bf16.mxu0 0
  %419 = vmatpush2.bf16.msra.mxu0 %v335
  %420 = vmatprep.subr.bf16.mxu0 0
  %421 = vmatpush2.bf16.msra.mxu0 %v334
  %422 = vmatprep.mubr.bf16.mxu0 %v167
  %423 = vmatmul.mubr.bf16.gmra.mxu0 %v166
  %v424 = vpop.f32.mrf.mxu0
  %v425 = vadd.f32 0.0, %v424
  %v426 = vpop.f32.mrf.mxu0
  %v427 = vpop.f32.mrf.mxu0
  %v428 = vadd.f32 0.0, %v427
  %v429 = vpop.f32.mrf.mxu0
  %430 = vmatprep.mubr.bf16.mxu0 %v171
  %431 = vmatmul.mubr.bf16.gmra.mxu0 %v170
  %v432 = vpop.f32.mrf.mxu0
  %v433 = vadd.f32 0.0, %v432
  %v434 = vpop.f32.mrf.mxu0
  %v435 = vpop.f32.mrf.mxu0
  %v436 = vadd.f32 0.0, %v435
  %v437 = vpop.f32.mrf.mxu0
  %438 = vmatprep.mubr.bf16.mxu0 %v175
  %439 = vmatmul.mubr.bf16.gmra.mxu0 %v174
  %v440 = vpop.f32.mrf.mxu0
  %v441 = vadd.f32 0.0, %v440
  %v442 = vpop.f32.mrf.mxu0
  %v443 = vpop.f32.mrf.mxu0
  %v444 = vadd.f32 0.0, %v443
  %v445 = vpop.f32.mrf.mxu0
  %446 = vmatprep.mubr.bf16.mxu0 %v179
  %447 = vmatmul.mubr.bf16.gmra.mxu0 %v178
  %v448 = vpop.f32.mrf.mxu0
  %v449 = vadd.f32 0.0, %v448
  %v450 = vpop.f32.mrf.mxu0
  %v451 = vpop.f32.mrf.mxu0
  %v452 = vadd.f32 0.0, %v451
  %v453 = vpop.f32.mrf.mxu0
  %454 = vdwg.mxu0
  %455 = vmatprep.subr.bf16.mxu0 0
  %456 = vmatpush1.bf16.msra.mxu0 %v349
  %457 = vmatprep.subr.bf16.mxu0 0
  %458 = vmatpush1.bf16.msra.mxu0 %v348
  %459 = vmatprep.subr.bf16.mxu0 0
  %460 = vmatpush1.bf16.msra.mxu0 %v347
  %461 = vmatprep.subr.bf16.mxu0 0
  %462 = vmatpush1.bf16.msra.mxu0 %v346
  %463 = vmatprep.subr.bf16.mxu0 0
  %464 = vmatpush1.bf16.msra.mxu0 %v345
  %465 = vmatprep.subr.bf16.mxu0 0
  %466 = vmatpush1.bf16.msra.mxu0 %v344
  %467 = vmatprep.subr.bf16.mxu0 0
  %468 = vmatpush1.bf16.msra.mxu0 %v343
  %469 = vmatprep.subr.bf16.mxu0 0
  %470 = vmatpush1.bf16.msra.mxu0 %v342
  %471 = vmatprep.subr.bf16.mxu0 0
  %472 = vmatpush2.bf16.msra.mxu0 %v357
  %473 = vmatprep.subr.bf16.mxu0 0
  %474 = vmatpush2.bf16.msra.mxu0 %v356
  %475 = vmatprep.subr.bf16.mxu0 0
  %476 = vmatpush2.bf16.msra.mxu0 %v355
  %477 = vmatprep.subr.bf16.mxu0 0
  %478 = vmatpush2.bf16.msra.mxu0 %v354
  %479 = vmatprep.subr.bf16.mxu0 0
  %480 = vmatpush2.bf16.msra.mxu0 %v353
  %481 = vmatprep.subr.bf16.mxu0 0
  %482 = vmatpush2.bf16.msra.mxu0 %v352
  %483 = vmatprep.subr.bf16.mxu0 0
  %484 = vmatpush2.bf16.msra.mxu0 %v351
  %485 = vmatprep.subr.bf16.mxu0 0
  %486 = vmatpush2.bf16.msra.mxu0 %v350
  %487 = vmatprep.mubr.bf16.mxu0 %v169
  %488 = vmatmul.mubr.bf16.gmra.mxu0 %v168
  %v489 = vpop.f32.mrf.mxu0
  %v490 = vadd.f32 %v425, %v489
  %v491 = vpop.f32.mrf.mxu0
  %v492 = vpop.f32.mrf.mxu0
  %v493 = vadd.f32 %v428, %v492
  %v494 = vpop.f32.mrf.mxu0
  %495 = vmatprep.mubr.bf16.mxu0 %v173
  %496 = vmatmul.mubr.bf16.gmra.mxu0 %v172
  %v497 = vpop.f32.mrf.mxu0
  %v498 = vadd.f32 %v433, %v497
  %v499 = vpop.f32.mrf.mxu0
  %v500 = vpop.f32.mrf.mxu0
  %v501 = vadd.f32 %v436, %v500
  %v502 = vpop.f32.mrf.mxu0
  %503 = vmatprep.mubr.bf16.mxu0 %v177
  %504 = vmatmul.mubr.bf16.gmra.mxu0 %v176
  %v505 = vpop.f32.mrf.mxu0
  %v506 = vadd.f32 %v441, %v505
  %v507 = vpop.f32.mrf.mxu0
  %v508 = vpop.f32.mrf.mxu0
  %v509 = vadd.f32 %v444, %v508
  %v510 = vpop.f32.mrf.mxu0
  %511 = vmatprep.mubr.bf16.mxu0 %v181
  %512 = vmatmul.mubr.bf16.gmra.mxu0 %v180
  %v513 = vpop.f32.mrf.mxu0
  %v514 = vadd.f32 %v449, %v513
  %v515 = vpop.f32.mrf.mxu0
  %v516 = vpop.f32.mrf.mxu0
  %v517 = vadd.f32 %v452, %v516
  %v518 = vpop.f32.mrf.mxu0
  %519 = vdwg.mxu0
  %v520 = vadd.f32 %v30, %v490
  %v521 = vadd.f32 %v31, %v493
  %v522 = vadd.f32 %v32, %v498
  %v523 = vadd.f32 %v33, %v501
  %v524 = vadd.f32 %v34, %v506
  %v525 = vadd.f32 %v35, %v509
  %v526 = vadd.f32 %v36, %v514
  %v527 = vadd.f32 %v37, %v517
  %528 = vst [vmem:[#allocation2] sm:$0xff] %v520
  %529 = vst [vmem:[#allocation2 + $0x8] sm:$0xff] %v521
  %530 = vst [vmem:[#allocation2 + $0x10] sm:$0xff] %v522
  %531 = vst [vmem:[#allocation2 + $0x18] sm:$0xff] %v523
  %532 = vst [vmem:[#allocation2 + $0x20] sm:$0xff] %v524
  %533 = vst [vmem:[#allocation2 + $0x28] sm:$0xff] %v525
  %534 = vst [vmem:[#allocation2 + $0x30] sm:$0xff] %v526
  %535 = vst [vmem:[#allocation2 + $0x38] sm:$0xff] %v527
  // Predicated region
  $region18: #{unet3d_forward.57} parent=0 // pred_check
    %p536 = pneg %p18
  $region19: #{unet3d_forward.57} parent=0 // pred_check_branch
    %538 = sbr.rel (%p536) target = $region21
  $region20: #{unet3d_forward.57} parent=0 // pred_region
    %v539 = vld [vmem:[#allocation2] sm:$0xff]
    %v540 = vld [vmem:[#allocation2 + $0x8] sm:$0xff]
    %v541 = vld [vmem:[#allocation2 + $0x10] sm:$0xff]
    %v542 = vld [vmem:[#allocation2 + $0x18] sm:$0xff]
    %v543 = vld [vmem:[#allocation2 + $0x20] sm:$0xff]
    %v544 = vld [vmem:[#allocation2 + $0x28] sm:$0xff]
    %v545 = vld [vmem:[#allocation2 + $0x30] sm:$0xff]
    %v546 = vld [vmem:[#allocation2 + $0x38] sm:$0xff]
    %v547 = vld [vmem:[%s2] sm:$0x1]
    %v549 = vlaneseq
    %v550 = vshrl.u32 %v549, 7
    %v551 = vsub.s32 0, %v550
    %v552 = vrot.slane %v547, %v551
    %v554 = vadd.f32 %v539, %v552
    %v555 = vadd.f32 %v540, %v552
    %v556 = vadd.f32 %v541, %v552
    %v557 = vadd.f32 %v542, %v552
    %v558 = vadd.f32 %v543, %v552
    %v559 = vadd.f32 %v544, %v552
    %v560 = vadd.f32 %v545, %v552
    %v561 = vadd.f32 %v546, %v552
    %562 = vst [vmem:[%s3] sm:$0xff] %v554
    %563 = vst [vmem:[%s3 + $0x8] sm:$0xff] %v555
    %564 = vst [vmem:[%s3 + $0x10] sm:$0xff] %v556
    %565 = vst [vmem:[%s3 + $0x18] sm:$0xff] %v557
    %566 = vst [vmem:[%s3 + $0x20] sm:$0xff] %v558
    %567 = vst [vmem:[%s3 + $0x28] sm:$0xff] %v559
    %568 = vst [vmem:[%s3 + $0x30] sm:$0xff] %v560
    %569 = vst [vmem:[%s3 + $0x38] sm:$0xff] %v561
    %v570 = vadd.f32 %v554, %v555
    %v571 = vadd.f32 %v570, %v556
    %v572 = vadd.f32 %v571, %v557
    %v573 = vadd.f32 %v572, %v558
    %v574 = vadd.f32 %v573, %v559
    %v575 = vadd.f32 %v574, %v560
    %v576 = vadd.f32 %v575, %v561
    %v577 = vrot.slane %v576, 4
    %v578 = vadd.f32 %v576, %v577
    %v579 = vrot.slane %v578, 2
    %v580 = vadd.f32 %v578, %v579
    %v581 = vrot.slane %v580, 1
    %v582 = vadd.f32 %v580, %v581
    %583 = vst [vmem:[%s4] sm:$0xff] %v582
    %v584 = vmul.f32 %v554, %v554
    %v585 = vmul.f32 %v555, %v555
    %v586 = vmul.f32 %v556, %v556
    %v587 = vmul.f32 %v557, %v557
    %v588 = vmul.f32 %v558, %v558
    %v589 = vmul.f32 %v559, %v559
    %v590 = vmul.f32 %v560, %v560
    %v591 = vmul.f32 %v561, %v561
    %v592 = vadd.f32 %v584, %v585
    %v593 = vadd.f32 %v592, %v586
    %v594 = vadd.f32 %v593, %v587
    %v595 = vadd.f32 %v594, %v588
    %v596 = vadd.f32 %v595, %v589
    %v597 = vadd.f32 %v596, %v590
    %v598 = vadd.f32 %v597, %v591
    %v599 = vrot.slane %v598, 4
    %v600 = vadd.f32 %v598, %v599
    %v601 = vrot.slane %v600, 2
    %v602 = vadd.f32 %v600, %v601
    %v603 = vrot.slane %v602, 1
    %v604 = vadd.f32 %v602, %v603
    %605 = vst [vmem:[%s5] sm:$0xff] %v604
  $region21: #{unet3d_forward.57} parent=0 // pred_fallthru
    _
  // Predicated region
  $region22: #{unet3d_forward.57} parent=0 // pred_check
    _
  $region23: #{unet3d_forward.57} parent=0 // pred_check_branch
    %607 = sbr.rel (0) target = $region25
  $region24: #{unet3d_forward.57} parent=0 // pred_region
    _
  $region25: #{unet3d_forward.57} parent=0 // pred_fallthru
    _
  // Predicated region
  $region26: #{unet3d_forward.57} parent=0 // pred_check
    _
  $region27: #{unet3d_forward.57} parent=0 // pred_check_branch
    %609 = sbr.rel (0) target = $region29
  $region28: #{unet3d_forward.57} parent=0 // pred_region
    _
  $region29: #{unet3d_forward.57} parent=0 // pred_fallthru
    _
  // Predicated region
  $region30: #{unet3d_forward.57} parent=0 // pred_check
    _
  $region31: #{unet3d_forward.57} parent=0 // pred_check_branch
    %611 = sbr.rel (0) target = $region33
  $region32: #{unet3d_forward.57} parent=0 // pred_region
    _
  $region33: #{unet3d_forward.57} parent=0 // pred_fallthru
    _
  // Predicated region
  $region34: #{unet3d_forward.57} parent=0 // pred_check
    _
  $region35: #{unet3d_forward.57} parent=0 // pred_check_branch
    %613 = sbr.rel (0) target = $region37
  $region36: #{unet3d_forward.57} parent=0 // pred_region
    _
  $region37: #{unet3d_forward.57} parent=0 // pred_fallthru
    _
  // Predicated region
  $region38: #{unet3d_forward.57} parent=0 // pred_check
    _
  $region39: #{unet3d_forward.57} parent=0 // pred_check_branch
    %615 = sbr.rel (0) target = $region41
  $region40: #{unet3d_forward.57} parent=0 // pred_region
    _
  $region41: #{unet3d_forward.57} parent=0 // pred_fallthru
    _
  // Predicated region
  $region42: #{unet3d_forward.57} parent=0 // pred_check
    _
  $region43: #{unet3d_forward.57} parent=0 // pred_check_branch
    %617 = sbr.rel (0) target = $region45
  $region44: #{unet3d_forward.57} parent=0 // pred_region
    _
  $region45: #{unet3d_forward.57} parent=0 // pred_fallthru
    _

// kernel: unet3d_forward.68
$region0: #{unet3d_forward.68}
  #allocation0 [shape = 'u32[]', space=smem, size = 0x4, offset = 0x4, fixed_abs, tag = 'smem constant byte address 0x4 - core index']
  #allocation1 [shape = 'u32[144,128]{1,0:T(1,128)}', space=vmem, size = 0x12000, scoped, tag = 'internal scratch']
  #allocation2 [shape = 'f32[64,128]{1,0:T(8,128)}', space=vmem, size = 0x8000, scoped, tag = 'scratch operand']
  %s0 = inlined_call_operand.vmem [shape: bf16[64,128], index: 0, kind: input, shape index: {}]
  %s1 = inlined_call_operand.vmem [shape: bf16[128,128], index: 1, kind: input, shape index: {}]
  %s2 = inlined_call_operand.vmem [shape: f32[1,128], index: 2, kind: input, shape index: {}]
  %s3 = inlined_call_operand.vmem [shape: f32[64,128], index: 3, kind: output, shape index: {0}]
  %s4 = inlined_call_operand.hbm [shape: f32[1,8,128], index: 4, kind: output, shape index: {1}]
  %s5 = inlined_call_operand.hbm [shape: f32[1,8,128], index: 5, kind: output, shape index: {2}]
  %6 = xla_tuple %s3, %s4, %s5
  %s7 = sld [smem:[#allocation0]]
  $region46: #{unet3d_forward.68} parent=0
    _
  %s9 = ssub.s32 1, %s7
  %s10 = scalar_select 0, %s9, %s7
  $region1: #{unet3d_forward.68} parent=0
    #allocation3 [shape = 'u8[4096]{0}', space=vmem, size = 0x1000, scoped, tag = 'output window, operand 1, single buffered']
    #allocation4 [shape = 's32[1]{0}', space=sflag, size = 0x4, scoped, tag = 'scoped memory for unet3d_forward.68']
    #allocation5 [shape = 'u8[4096]{0}', space=vmem, size = 0x1000, scoped, tag = 'output window, operand 2, single buffered']
    #allocation6 [shape = 's32[1]{0}', space=sflag, size = 0x4, scoped, tag = 'scoped memory for unet3d_forward.68']
    %11 = vsyncpa [#allocation4], 0
    %12 = vsyncpa [#allocation6], 0
    // Predicated region
    $region2: #{unet3d_forward.68} parent=1 // pred_check
      _
    $region3: #{unet3d_forward.68} parent=1 // pred_check_branch
      %14 = sbr.rel (0) target = $region5
    $region4: #{unet3d_forward.68} parent=1 // pred_region
      _
    $region5: #{unet3d_forward.68} parent=1 // pred_fallthru
      _
    // Predicated region
    $region6: #{unet3d_forward.68} parent=1 // pred_check
      _
    $region7: #{unet3d_forward.68} parent=1 // pred_check_branch
      %16 = sbr.rel (0) target = $region9
    $region8: #{unet3d_forward.68} parent=1 // pred_region
      _
    $region9: #{unet3d_forward.68} parent=1 // pred_fallthru
      _
    // Predicated region
    $region10: #{unet3d_forward.68} parent=1 // pred_check
      _
    $region11: #{unet3d_forward.68} parent=1 // pred_check_branch
      %18 = sbr.rel (0) target = $region13
    $region12: #{unet3d_forward.68} parent=1 // pred_region
      _
    $region13: #{unet3d_forward.68} parent=1 // pred_fallthru
      _
    %p20 = scmp.eq.s32.totalorder 0, 0
    // Predicated region
    $region14: #{unet3d_forward.68} parent=1 // pred_check
      %p21 = pneg %p20
    $region15: #{unet3d_forward.68} parent=1 // pred_check_branch
      %23 = sbr.rel (%p21) target = $region17
    $region16: #{unet3d_forward.68} parent=1 // pred_region
      %24 = vst [vmem:[#allocation2] sm:$0xff] 0.0
      %25 = vst [vmem:[#allocation2 + $0x8] sm:$0xff] 0.0
      %26 = vst [vmem:[#allocation2 + $0x10] sm:$0xff] 0.0
      %27 = vst [vmem:[#allocation2 + $0x18] sm:$0xff] 0.0
      %28 = vst [vmem:[#allocation2 + $0x20] sm:$0xff] 0.0
      %29 = vst [vmem:[#allocation2 + $0x28] sm:$0xff] 0.0
      %30 = vst [vmem:[#allocation2 + $0x30] sm:$0xff] 0.0
      %31 = vst [vmem:[#allocation2 + $0x38] sm:$0xff] 0.0
    $region17: #{unet3d_forward.68} parent=1 // pred_fallthru
      _
    %v32 = vld [vmem:[#allocation2] sm:$0xff]
    %v33 = vld [vmem:[#allocation2 + $0x8] sm:$0xff]
    %v34 = vld [vmem:[#allocation2 + $0x10] sm:$0xff]
    %v35 = vld [vmem:[#allocation2 + $0x18] sm:$0xff]
    %v36 = vld [vmem:[#allocation2 + $0x20] sm:$0xff]
    %v37 = vld [vmem:[#allocation2 + $0x28] sm:$0xff]
    %v38 = vld [vmem:[#allocation2 + $0x30] sm:$0xff]
    %v39 = vld [vmem:[#allocation2 + $0x38] sm:$0xff]
    %v40 = vld [vmem:[%s0] sm:$0xf]
    %v41 = vld [vmem:[%s0 + $0x4] sm:$0xf]
    %v42 = vld [vmem:[%s0 + $0x8] sm:$0xf]
    %v43 = vld [vmem:[%s0 + $0xc] sm:$0xf]
    %v44 = vld [vmem:[%s0 + $0x10] sm:$0xf]
    %v45 = vld [vmem:[%s0 + $0x14] sm:$0xf]
    %v46 = vld [vmem:[%s0 + $0x18] sm:$0xf]
    %v47 = vld [vmem:[%s0 + $0x1c] sm:$0xf]
    %v48 = vld [vmem:[%s1] sm:$0xf]
    %v49 = vld [vmem:[%s1 + $0x4] sm:$0xf]
    %v50 = vld [vmem:[%s1 + $0x8] sm:$0xf]
    %v51 = vld [vmem:[%s1 + $0xc] sm:$0xf]
    %v52 = vld [vmem:[%s1 + $0x10] sm:$0xf]
    %v53 = vld [vmem:[%s1 + $0x14] sm:$0xf]
    %v54 = vld [vmem:[%s1 + $0x18] sm:$0xf]
    %v55 = vld [vmem:[%s1 + $0x1c] sm:$0xf]
    %v56 = vld [vmem:[%s1 + $0x20] sm:$0xf]
    %v57 = vld [vmem:[%s1 + $0x24] sm:$0xf]
    %v58 = vld [vmem:[%s1 + $0x28] sm:$0xf]
    %v59 = vld [vmem:[%s1 + $0x2c] sm:$0xf]
    %v60 = vld [vmem:[%s1 + $0x30] sm:$0xf]
    %v61 = vld [vmem:[%s1 + $0x34] sm:$0xf]
    %v62 = vld [vmem:[%s1 + $0x38] sm:$0xf]
    %v63 = vld [vmem:[%s1 + $0x3c] sm:$0xf]
    %v72 = vunpack.c.l.b16 %v40
    %v73 = vunpack.c.l.b16 %v41
    %v74 = vunpack.c.l.b16 %v42
    %v75 = vunpack.c.l.b16 %v43
    %v76 = vunpack.c.l.b16 %v44
    %v77 = vunpack.c.l.b16 %v45
    %v78 = vunpack.c.l.b16 %v46
    %v79 = vunpack.c.l.b16 %v47
    %v80 = vpack.c.b16 %v73, %v72
    %v81 = vpack.c.b16 %v75, %v74
    %v82 = vpack.c.b16 %v77, %v76
    %v83 = vpack.c.b16 %v79, %v78
    %v104 = vunpack.c.l.b16 %v48
    %v105 = vunpack.c.l.b16 %v49
    %v106 = vunpack.c.l.b16 %v50
    %v107 = vunpack.c.l.b16 %v51
    %v108 = vunpack.c.l.b16 %v52
    %v109 = vunpack.c.l.b16 %v53
    %v110 = vunpack.c.l.b16 %v54
    %v111 = vunpack.c.l.b16 %v55
    %v112 = vunpack.c.l.b16 %v56
    %v113 = vunpack.c.l.b16 %v57
    %v114 = vunpack.c.l.b16 %v58
    %v115 = vunpack.c.l.b16 %v59
    %v116 = vunpack.c.l.b16 %v60
    %v117 = vunpack.c.l.b16 %v61
    %v118 = vunpack.c.l.b16 %v62
    %v119 = vunpack.c.l.b16 %v63
    %v120 = vpack.c.b16 %v105, %v104
    %v121 = vpack.c.b16 %v107, %v106
    %v122 = vpack.c.b16 %v109, %v108
    %v123 = vpack.c.b16 %v111, %v110
    %v124 = vpack.c.b16 %v113, %v112
    %v125 = vpack.c.b16 %v115, %v114
    %v126 = vpack.c.b16 %v117, %v116
    %v127 = vpack.c.b16 %v119, %v118
    %136 = vmatprep.subr.bf16.mxu0 0
    %137 = vmatpush1.bf16.msra.mxu0 %v127
    %138 = vmatprep.subr.bf16.mxu0 0
    %139 = vmatpush1.bf16.msra.mxu0 %v126
    %140 = vmatprep.subr.bf16.mxu0 0
    %141 = vmatpush1.bf16.msra.mxu0 %v125
    %142 = vmatprep.subr.bf16.mxu0 0
    %143 = vmatpush1.bf16.msra.mxu0 %v124
    %144 = vmatprep.subr.bf16.mxu0 0
    %145 = vmatpush1.bf16.msra.mxu0 %v123
    %146 = vmatprep.subr.bf16.mxu0 0
    %147 = vmatpush1.bf16.msra.mxu0 %v122
    %148 = vmatprep.subr.bf16.mxu0 0
    %149 = vmatpush1.bf16.msra.mxu0 %v121
    %150 = vmatprep.subr.bf16.mxu0 0
    %151 = vmatpush1.bf16.msra.mxu0 %v120
    %152 = vmatprep.subr.bf16.mxu0 0
    %153 = vmatpush2.bf16.msra.mxu0 0
    %154 = vmatprep.subr.bf16.mxu0 0
    %155 = vmatpush2.bf16.msra.mxu0 0
    %156 = vmatprep.subr.bf16.mxu0 0
    %157 = vmatpush2.bf16.msra.mxu0 0
    %158 = vmatprep.subr.bf16.mxu0 0
    %159 = vmatpush2.bf16.msra.mxu0 0
    %160 = vmatprep.subr.bf16.mxu0 0
    %161 = vmatpush2.bf16.msra.mxu0 0
    %162 = vmatprep.subr.bf16.mxu0 0
    %163 = vmatpush2.bf16.msra.mxu0 0
    %164 = vmatprep.subr.bf16.mxu0 0
    %165 = vmatpush2.bf16.msra.mxu0 0
    %166 = vmatprep.subr.bf16.mxu0 0
    %167 = vmatpush2.bf16.msra.mxu0 0
    %168 = vmatprep.mubr.bf16.mxu0 0
    %169 = vmatmul.mubr.bf16.gmra.mxu0 %v80
    %v170 = vpop.f32.mrf.mxu0
    %v171 = vadd.f32 0.0, %v170
    %v172 = vpop.f32.mrf.mxu0
    %v173 = vpop.f32.mrf.mxu0
    %v174 = vadd.f32 0.0, %v173
    %v175 = vpop.f32.mrf.mxu0
    %176 = vmatprep.mubr.bf16.mxu0 0
    %177 = vmatmul.mubr.bf16.gmra.mxu0 %v81
    %v178 = vpop.f32.mrf.mxu0
    %v179 = vadd.f32 0.0, %v178
    %v180 = vpop.f32.mrf.mxu0
    %v181 = vpop.f32.mrf.mxu0
    %v182 = vadd.f32 0.0, %v181
    %v183 = vpop.f32.mrf.mxu0
    %184 = vmatprep.mubr.bf16.mxu0 0
    %185 = vmatmul.mubr.bf16.gmra.mxu0 %v82
    %v186 = vpop.f32.mrf.mxu0
    %v187 = vadd.f32 0.0, %v186
    %v188 = vpop.f32.mrf.mxu0
    %v189 = vpop.f32.mrf.mxu0
    %v190 = vadd.f32 0.0, %v189
    %v191 = vpop.f32.mrf.mxu0
    %192 = vmatprep.mubr.bf16.mxu0 0
    %193 = vmatmul.mubr.bf16.gmra.mxu0 %v83
    %v194 = vpop.f32.mrf.mxu0
    %v195 = vadd.f32 0.0, %v194
    %v196 = vpop.f32.mrf.mxu0
    %v197 = vpop.f32.mrf.mxu0
    %v198 = vadd.f32 0.0, %v197
    %v199 = vpop.f32.mrf.mxu0
    %200 = vdwg.mxu0
    %v201 = vadd.f32 %v32, %v171
    %v202 = vadd.f32 %v33, %v174
    %v203 = vadd.f32 %v34, %v179
    %v204 = vadd.f32 %v35, %v182
    %v205 = vadd.f32 %v36, %v187
    %v206 = vadd.f32 %v37, %v190
    %v207 = vadd.f32 %v38, %v195
    %v208 = vadd.f32 %v39, %v198
    %209 = vst [vmem:[#allocation2] sm:$0xff] %v201
    %210 = vst [vmem:[#allocation2 + $0x8] sm:$0xff] %v202
    %211 = vst [vmem:[#allocation2 + $0x10] sm:$0xff] %v203
    %212 = vst [vmem:[#allocation2 + $0x18] sm:$0xff] %v204
    %213 = vst [vmem:[#allocation2 + $0x20] sm:$0xff] %v205
    %214 = vst [vmem:[#allocation2 + $0x28] sm:$0xff] %v206
    %215 = vst [vmem:[#allocation2 + $0x30] sm:$0xff] %v207
    %216 = vst [vmem:[#allocation2 + $0x38] sm:$0xff] %v208
    // Predicated region
    $region18: #{unet3d_forward.68} parent=1 // pred_check
      %p217 = pneg %p20
    $region19: #{unet3d_forward.68} parent=1 // pred_check_branch
      %219 = sbr.rel (%p217) target = $region21
    $region20: #{unet3d_forward.68} parent=1 // pred_region
      %v220 = vld [vmem:[#allocation2] sm:$0xff]
      %v221 = vld [vmem:[#allocation2 + $0x8] sm:$0xff]
      %v222 = vld [vmem:[#allocation2 + $0x10] sm:$0xff]
      %v223 = vld [vmem:[#allocation2 + $0x18] sm:$0xff]
      %v224 = vld [vmem:[#allocation2 + $0x20] sm:$0xff]
      %v225 = vld [vmem:[#allocation2 + $0x28] sm:$0xff]
      %v226 = vld [vmem:[#allocation2 + $0x30] sm:$0xff]
      %v227 = vld [vmem:[#allocation2 + $0x38] sm:$0xff]
      %v228 = vld [vmem:[%s2] sm:$0x1]
      %v230 = vlaneseq
      %v231 = vshrl.u32 %v230, 7
      %v232 = vsub.s32 0, %v231
      %v233 = vrot.slane %v228, %v232
      %v235 = vadd.f32 %v220, %v233
      %v236 = vadd.f32 %v221, %v233
      %v237 = vadd.f32 %v222, %v233
      %v238 = vadd.f32 %v223, %v233
      %v239 = vadd.f32 %v224, %v233
      %v240 = vadd.f32 %v225, %v233
      %v241 = vadd.f32 %v226, %v233
      %v242 = vadd.f32 %v227, %v233
      %243 = vst [vmem:[%s3] sm:$0xff] %v235
      %244 = vst [vmem:[%s3 + $0x8] sm:$0xff] %v236
      %245 = vst [vmem:[%s3 + $0x10] sm:$0xff] %v237
      %246 = vst [vmem:[%s3 + $0x18] sm:$0xff] %v238
      %247 = vst [vmem:[%s3 + $0x20] sm:$0xff] %v239
      %248 = vst [vmem:[%s3 + $0x28] sm:$0xff] %v240
      %249 = vst [vmem:[%s3 + $0x30] sm:$0xff] %v241
      %250 = vst [vmem:[%s3 + $0x38] sm:$0xff] %v242
      %v251 = vadd.f32 %v235, %v236
      %v252 = vadd.f32 %v251, %v237
      %v253 = vadd.f32 %v252, %v238
      %v254 = vadd.f32 %v253, %v239
      %v255 = vadd.f32 %v254, %v240
      %v256 = vadd.f32 %v255, %v241
      %v257 = vadd.f32 %v256, %v242
      %v258 = vrot.slane %v257, 4
      %v259 = vadd.f32 %v257, %v258
      %v260 = vrot.slane %v259, 2
      %v261 = vadd.f32 %v259, %v260
      %v262 = vrot.slane %v261, 1
      %v263 = vadd.f32 %v261, %v262
      %264 = vst [vmem:[#allocation3] sm:$0xff] %v263
      %v265 = vmul.f32 %v235, %v235
      %v266 = vmul.f32 %v236, %v236
      %v267 = vmul.f32 %v237, %v237
      %v268 = vmul.f32 %v238, %v238
      %v269 = vmul.f32 %v239, %v239
      %v270 = vmul.f32 %v240, %v240
      %v271 = vmul.f32 %v241, %v241
      %v272 = vmul.f32 %v242, %v242
      %v273 = vadd.f32 %v265, %v266
      %v274 = vadd.f32 %v273, %v267
      %v275 = vadd.f32 %v274, %v268
      %v276 = vadd.f32 %v275, %v269
      %v277 = vadd.f32 %v276, %v270
      %v278 = vadd.f32 %v277, %v271
      %v279 = vadd.f32 %v278, %v272
      %v280 = vrot.slane %v279, 4
      %v281 = vadd.f32 %v279, %v280
      %v282 = vrot.slane %v281, 2
      %v283 = vadd.f32 %v281, %v282
      %v284 = vrot.slane %v283, 1
      %v285 = vadd.f32 %v283, %v284
      %286 = vst [vmem:[#allocation5] sm:$0xff] %v285
    $region21: #{unet3d_forward.68} parent=1 // pred_fallthru
      _
    // Predicated region
    $region22: #{unet3d_forward.68} parent=1 // pred_check
      _
    $region23: #{unet3d_forward.68} parent=1 // pred_check_branch
      %288 = sbr.rel (0) target = $region25
    $region24: #{unet3d_forward.68} parent=1 // pred_region
      _
    $region25: #{unet3d_forward.68} parent=1 // pred_fallthru
      _
    // Predicated region
    $region26: #{unet3d_forward.68} parent=1 // pred_check
      _
    $region27: #{unet3d_forward.68} parent=1 // pred_check_branch
      %290 = sbr.rel (0) target = $region29
    $region28: #{unet3d_forward.68} parent=1 // pred_region
      %s292 = ssub.s32 128, 128
      %293 = vsyncadd [#allocation4], %s292
      %s295 = sshll.u32 [#allocation3], 4
      %s296 = int_to_ptr.vmem [resolvable:$true] %s295
      %298 = dma.vmem_to_hbm [thread:$0]  %s296, 128, %s4, [#allocation4]
    $region29: #{unet3d_forward.68} parent=1 // pred_fallthru
      _
    // Predicated region
    $region30: #{unet3d_forward.68} parent=1 // pred_check
      _
    $region31: #{unet3d_forward.68} parent=1 // pred_check_branch
      %300 = sbr.rel (0) target = $region33
    $region32: #{unet3d_forward.68} parent=1 // pred_region
      %s302 = ssub.s32 128, 128
      %303 = vsyncadd [#allocation6], %s302
      %s305 = sshll.u32 [#allocation5], 4
      %s306 = int_to_ptr.vmem [resolvable:$true] %s305
      %308 = dma.vmem_to_hbm [thread:$0]  %s306, 128, %s5, [#allocation6]
    $region33: #{unet3d_forward.68} parent=1 // pred_fallthru
      _
    // Predicated region
    $region34: #{unet3d_forward.68} parent=1 // pred_check
      _
    $region35: #{unet3d_forward.68} parent=1 // pred_check_branch
      %310 = sbr.rel (0) target = $region37
    $region36: #{unet3d_forward.68} parent=1 // pred_region
      _
    $region37: #{unet3d_forward.68} parent=1 // pred_fallthru
      _
    // Predicated region
    $region38: #{unet3d_forward.68} parent=1 // pred_check
      _
    $region39: #{unet3d_forward.68} parent=1 // pred_check_branch
      %312 = sbr.rel (0) target = $region41
    $region40: #{unet3d_forward.68} parent=1 // pred_region
      %313 = dma.done [#allocation4], 128
    $region41: #{unet3d_forward.68} parent=1 // pred_fallthru
      _
    // Predicated region
    $region42: #{unet3d_forward.68} parent=1 // pred_check
      _
    $region43: #{unet3d_forward.68} parent=1 // pred_check_branch
      %315 = sbr.rel (0) target = $region45
    $region44: #{unet3d_forward.68} parent=1 // pred_region
      %316 = dma.done [#allocation6], 128
    $region45: #{unet3d_forward.68} parent=1 // pred_fallthru
      _
    %317 = vsyncpa [#allocation4], 1
    %318 = vsyncpa [#allocation6], 1

// kernel: unet3d_forward.69
$region0: #{unet3d_forward.69}
  #allocation0 [shape = 'u32[]', space=smem, size = 0x4, offset = 0x4, fixed_abs, tag = 'smem constant byte address 0x4 - core index']
  #allocation1 [shape = 'u32[144,128]{1,0:T(1,128)}', space=vmem, size = 0x12000, scoped, tag = 'internal scratch']
  #allocation2 [shape = 'f32[512,128]{1,0:T(8,128)}', space=vmem, size = 0x40000, scoped, tag = 'scratch operand']
  %s0 = inlined_call_operand.vmem [shape: bf16[512,256], index: 0, kind: input, shape index: {}]
  %s1 = inlined_call_operand.vmem [shape: bf16[256,128], index: 1, kind: input, shape index: {}]
  %s2 = inlined_call_operand.vmem [shape: f32[1,128], index: 2, kind: input, shape index: {}]
  %s3 = inlined_call_operand.vmem [shape: f32[512,128], index: 3, kind: output, shape index: {0}]
  %s4 = inlined_call_operand.vmem [shape: f32[1,8,128], index: 4, kind: output, shape index: {1}]
  %s5 = inlined_call_operand.vmem [shape: f32[1,8,128], index: 5, kind: output, shape index: {2}]
  %6 = xla_tuple %s3, %s4, %s5
  %s7 = sld [smem:[#allocation0]]
  $region46: #{unet3d_forward.69} parent=0
    _
  %s9 = ssub.s32 1, %s7
  %s10 = scalar_select 0, %s9, %s7
  // Predicated region
  $region2: #{unet3d_forward.69} parent=0 // pred_check
    _
  $region3: #{unet3d_forward.69} parent=0 // pred_check_branch
    %12 = sbr.rel (0) target = $region5
  $region4: #{unet3d_forward.69} parent=0 // pred_region
    _
  $region5: #{unet3d_forward.69} parent=0 // pred_fallthru
    _
  // Predicated region
  $region6: #{unet3d_forward.69} parent=0 // pred_check
    _
  $region7: #{unet3d_forward.69} parent=0 // pred_check_branch
    %14 = sbr.rel (0) target = $region9
  $region8: #{unet3d_forward.69} parent=0 // pred_region
    _
  $region9: #{unet3d_forward.69} parent=0 // pred_fallthru
    _
  // Predicated region
  $region10: #{unet3d_forward.69} parent=0 // pred_check
    _
  $region11: #{unet3d_forward.69} parent=0 // pred_check_branch
    %16 = sbr.rel (0) target = $region13
  $region12: #{unet3d_forward.69} parent=0 // pred_region
    _
  $region13: #{unet3d_forward.69} parent=0 // pred_fallthru
    _
  %p18 = scmp.eq.s32.totalorder 0, 0
  // Predicated region
  $region14: #{unet3d_forward.69} parent=0 // pred_check
    %p19 = pneg %p18
  $region15: #{unet3d_forward.69} parent=0 // pred_check_branch
    %21 = sbr.rel (%p19) target = $region17
  $region16: #{unet3d_forward.69} parent=0 // pred_region
    %22 = vst [vmem:[#allocation2] sm:$0xff] 0.0
    %23 = vst [vmem:[#allocation2 + $0x8] sm:$0xff] 0.0
    %24 = vst [vmem:[#allocation2 + $0x10] sm:$0xff] 0.0
    %25 = vst [vmem:[#allocation2 + $0x18] sm:$0xff] 0.0
    %26 = vst [vmem:[#allocation2 + $0x20] sm:$0xff] 0.0
    %27 = vst [vmem:[#allocation2 + $0x28] sm:$0xff] 0.0
    %28 = vst [vmem:[#allocation2 + $0x30] sm:$0xff] 0.0
    %29 = vst [vmem:[#allocation2 + $0x38] sm:$0xff] 0.0
    %30 = vst [vmem:[#allocation2 + $0x40] sm:$0xff] 0.0
    %31 = vst [vmem:[#allocation2 + $0x48] sm:$0xff] 0.0
    %32 = vst [vmem:[#allocation2 + $0x50] sm:$0xff] 0.0
    %33 = vst [vmem:[#allocation2 + $0x58] sm:$0xff] 0.0
    %34 = vst [vmem:[#allocation2 + $0x60] sm:$0xff] 0.0
    %35 = vst [vmem:[#allocation2 + $0x68] sm:$0xff] 0.0
    %36 = vst [vmem:[#allocation2 + $0x70] sm:$0xff] 0.0
    %37 = vst [vmem:[#allocation2 + $0x78] sm:$0xff] 0.0
    %38 = vst [vmem:[#allocation2 + $0x80] sm:$0xff] 0.0
    %39 = vst [vmem:[#allocation2 + $0x88] sm:$0xff] 0.0
    %40 = vst [vmem:[#allocation2 + $0x90] sm:$0xff] 0.0
    %41 = vst [vmem:[#allocation2 + $0x98] sm:$0xff] 0.0
    %42 = vst [vmem:[#allocation2 + $0xa0] sm:$0xff] 0.0
    %43 = vst [vmem:[#allocation2 + $0xa8] sm:$0xff] 0.0
    %44 = vst [vmem:[#allocation2 + $0xb0] sm:$0xff] 0.0
    %45 = vst [vmem:[#allocation2 + $0xb8] sm:$0xff] 0.0
    %46 = vst [vmem:[#allocation2 + $0xc0] sm:$0xff] 0.0
    %47 = vst [vmem:[#allocation2 + $0xc8] sm:$0xff] 0.0
    %48 = vst [vmem:[#allocation2 + $0xd0] sm:$0xff] 0.0
    %49 = vst [vmem:[#allocation2 + $0xd8] sm:$0xff] 0.0
    %50 = vst [vmem:[#allocation2 + $0xe0] sm:$0xff] 0.0
    %51 = vst [vmem:[#allocation2 + $0xe8] sm:$0xff] 0.0
    %52 = vst [vmem:[#allocation2 + $0xf0] sm:$0xff] 0.0
    %53 = vst [vmem:[#allocation2 + $0xf8] sm:$0xff] 0.0
    %54 = vst [vmem:[#allocation2 + $0x100] sm:$0xff] 0.0
    %55 = vst [vmem:[#allocation2 + $0x108] sm:$0xff] 0.0
    %56 = vst [vmem:[#allocation2 + $0x110] sm:$0xff] 0.0
    %57 = vst [vmem:[#allocation2 + $0x118] sm:$0xff] 0.0
    %58 = vst [vmem:[#allocation2 + $0x120] sm:$0xff] 0.0
    %59 = vst [vmem:[#allocation2 + $0x128] sm:$0xff] 0.0
    %60 = vst [vmem:[#allocation2 + $0x130] sm:$0xff] 0.0
    %61 = vst [vmem:[#allocation2 + $0x138] sm:$0xff] 0.0
    %62 = vst [vmem:[#allocation2 + $0x140] sm:$0xff] 0.0
    %63 = vst [vmem:[#allocation2 + $0x148] sm:$0xff] 0.0
    %64 = vst [vmem:[#allocation2 + $0x150] sm:$0xff] 0.0
    %65 = vst [vmem:[#allocation2 + $0x158] sm:$0xff] 0.0
    %66 = vst [vmem:[#allocation2 + $0x160] sm:$0xff] 0.0
    %67 = vst [vmem:[#allocation2 + $0x168] sm:$0xff] 0.0
    %68 = vst [vmem:[#allocation2 + $0x170] sm:$0xff] 0.0
    %69 = vst [vmem:[#allocation2 + $0x178] sm:$0xff] 0.0
    %70 = vst [vmem:[#allocation2 + $0x180] sm:$0xff] 0.0
    %71 = vst [vmem:[#allocation2 + $0x188] sm:$0xff] 0.0
    %72 = vst [vmem:[#allocation2 + $0x190] sm:$0xff] 0.0
    %73 = vst [vmem:[#allocation2 + $0x198] sm:$0xff] 0.0
    %74 = vst [vmem:[#allocation2 + $0x1a0] sm:$0xff] 0.0
    %75 = vst [vmem:[#allocation2 + $0x1a8] sm:$0xff] 0.0
    %76 = vst [vmem:[#allocation2 + $0x1b0] sm:$0xff] 0.0
    %77 = vst [vmem:[#allocation2 + $0x1b8] sm:$0xff] 0.0
    %78 = vst [vmem:[#allocation2 + $0x1c0] sm:$0xff] 0.0
    %79 = vst [vmem:[#allocation2 + $0x1c8] sm:$0xff] 0.0
    %80 = vst [vmem:[#allocation2 + $0x1d0] sm:$0xff] 0.0
    %81 = vst [vmem:[#allocation2 + $0x1d8] sm:$0xff] 0.0
    %82 = vst [vmem:[#allocation2 + $0x1e0] sm:$0xff] 0.0
    %83 = vst [vmem:[#allocation2 + $0x1e8] sm:$0xff] 0.0
    %84 = vst [vmem:[#allocation2 + $0x1f0] sm:$0xff] 0.0
    %85 = vst [vmem:[#allocation2 + $0x1f8] sm:$0xff] 0.0
  $region17: #{unet3d_forward.69} parent=0 // pred_fallthru
    _
  %v86 = vld [vmem:[#allocation2] sm:$0xff]
  %v87 = vld [vmem:[#allocation2 + $0x8] sm:$0xff]
  %v88 = vld [vmem:[#allocation2 + $0x10] sm:$0xff]
  %v89 = vld [vmem:[#allocation2 + $0x18] sm:$0xff]
  %v90 = vld [vmem:[#allocation2 + $0x20] sm:$0xff]
  %v91 = vld [vmem:[#allocation2 + $0x28] sm:$0xff]
  %v92 = vld [vmem:[#allocation2 + $0x30] sm:$0xff]
  %v93 = vld [vmem:[#allocation2 + $0x38] sm:$0xff]
  %v94 = vld [vmem:[#allocation2 + $0x40] sm:$0xff]
  %v95 = vld [vmem:[#allocation2 + $0x48] sm:$0xff]
  %v96 = vld [vmem:[#allocation2 + $0x50] sm:$0xff]
  %v97 = vld [vmem:[#allocation2 + $0x58] sm:$0xff]
  %v98 = vld [vmem:[#allocation2 + $0x60] sm:$0xff]
  %v99 = vld [vmem:[#allocation2 + $0x68] sm:$0xff]
  %v100 = vld [vmem:[#allocation2 + $0x70] sm:$0xff]
  %v101 = vld [vmem:[#allocation2 + $0x78] sm:$0xff]
  %v102 = vld [vmem:[#allocation2 + $0x80] sm:$0xff]
  %v103 = vld [vmem:[#allocation2 + $0x88] sm:$0xff]
  %v104 = vld [vmem:[#allocation2 + $0x90] sm:$0xff]
  %v105 = vld [vmem:[#allocation2 + $0x98] sm:$0xff]
  %v106 = vld [vmem:[#allocation2 + $0xa0] sm:$0xff]
  %v107 = vld [vmem:[#allocation2 + $0xa8] sm:$0xff]
  %v108 = vld [vmem:[#allocation2 + $0xb0] sm:$0xff]
  %v109 = vld [vmem:[#allocation2 + $0xb8] sm:$0xff]
  %v110 = vld [vmem:[#allocation2 + $0xc0] sm:$0xff]
  %v111 = vld [vmem:[#allocation2 + $0xc8] sm:$0xff]
  %v112 = vld [vmem:[#allocation2 + $0xd0] sm:$0xff]
  %v113 = vld [vmem:[#allocation2 + $0xd8] sm:$0xff]
  %v114 = vld [vmem:[#allocation2 + $0xe0] sm:$0xff]
  %v115 = vld [vmem:[#allocation2 + $0xe8] sm:$0xff]
  %v116 = vld [vmem:[#allocation2 + $0xf0] sm:$0xff]
  %v117 = vld [vmem:[#allocation2 + $0xf8] sm:$0xff]
  %v118 = vld [vmem:[#allocation2 + $0x100] sm:$0xff]
  %v119 = vld [vmem:[#allocation2 + $0x108] sm:$0xff]
  %v120 = vld [vmem:[#allocation2 + $0x110] sm:$0xff]
  %v121 = vld [vmem:[#allocation2 + $0x118] sm:$0xff]
  %v122 = vld [vmem:[#allocation2 + $0x120] sm:$0xff]
  %v123 = vld [vmem:[#allocation2 + $0x128] sm:$0xff]
  %v124 = vld [vmem:[#allocation2 + $0x130] sm:$0xff]
  %v125 = vld [vmem:[#allocation2 + $0x138] sm:$0xff]
  %v126 = vld [vmem:[#allocation2 + $0x140] sm:$0xff]
  %v127 = vld [vmem:[#allocation2 + $0x148] sm:$0xff]
  %v128 = vld [vmem:[#allocation2 + $0x150] sm:$0xff]
  %v129 = vld [vmem:[#allocation2 + $0x158] sm:$0xff]
  %v130 = vld [vmem:[#allocation2 + $0x160] sm:$0xff]
  %v131 = vld [vmem:[#allocation2 + $0x168] sm:$0xff]
  %v132 = vld [vmem:[#allocation2 + $0x170] sm:$0xff]
  %v133 = vld [vmem:[#allocation2 + $0x178] sm:$0xff]
  %v134 = vld [vmem:[#allocation2 + $0x180] sm:$0xff]
  %v135 = vld [vmem:[#allocation2 + $0x188] sm:$0xff]
  %v136 = vld [vmem:[#allocation2 + $0x190] sm:$0xff]
  %v137 = vld [vmem:[#allocation2 + $0x198] sm:$0xff]
  %v138 = vld [vmem:[#allocation2 + $0x1a0] sm:$0xff]
  %v139 = vld [vmem:[#allocation2 + $0x1a8] sm:$0xff]
  %v140 = vld [vmem:[#allocation2 + $0x1b0] sm:$0xff]
  %v141 = vld [vmem:[#allocation2 + $0x1b8] sm:$0xff]
  %v142 = vld [vmem:[#allocation2 + $0x1c0] sm:$0xff]
  %v143 = vld [vmem:[#allocation2 + $0x1c8] sm:$0xff]
  %v144 = vld [vmem:[#allocation2 + $0x1d0] sm:$0xff]
  %v145 = vld [vmem:[#allocation2 + $0x1d8] sm:$0xff]
  %v146 = vld [vmem:[#allocation2 + $0x1e0] sm:$0xff]
  %v147 = vld [vmem:[#allocation2 + $0x1e8] sm:$0xff]
  %v148 = vld [vmem:[#allocation2 + $0x1f0] sm:$0xff]
  %v149 = vld [vmem:[#allocation2 + $0x1f8] sm:$0xff]
  %v150 = vld [vmem:[%s0] sm:$0xff]
  %v151 = vld [vmem:[%s0 + $0x8] sm:$0xff]
  %v152 = vld [vmem:[%s0 + $0x10] sm:$0xff]
  %v153 = vld [vmem:[%s0 + $0x18] sm:$0xff]
  %v154 = vld [vmem:[%s0 + $0x20] sm:$0xff]
  %v155 = vld [vmem:[%s0 + $0x28] sm:$0xff]
  %v156 = vld [vmem:[%s0 + $0x30] sm:$0xff]
  %v157 = vld [vmem:[%s0 + $0x38] sm:$0xff]
  %v158 = vld [vmem:[%s0 + $0x40] sm:$0xff]
  %v159 = vld [vmem:[%s0 + $0x48] sm:$0xff]
  %v160 = vld [vmem:[%s0 + $0x50] sm:$0xff]
  %v161 = vld [vmem:[%s0 + $0x58] sm:$0xff]
  %v162 = vld [vmem:[%s0 + $0x60] sm:$0xff]
  %v163 = vld [vmem:[%s0 + $0x68] sm:$0xff]
  %v164 = vld [vmem:[%s0 + $0x70] sm:$0xff]
  %v165 = vld [vmem:[%s0 + $0x78] sm:$0xff]
  %v166 = vld [vmem:[%s0 + $0x80] sm:$0xff]
  %v167 = vld [vmem:[%s0 + $0x88] sm:$0xff]
  %v168 = vld [vmem:[%s0 + $0x90] sm:$0xff]
  %v169 = vld [vmem:[%s0 + $0x98] sm:$0xff]
  %v170 = vld [vmem:[%s0 + $0xa0] sm:$0xff]
  %v171 = vld [vmem:[%s0 + $0xa8] sm:$0xff]
  %v172 = vld [vmem:[%s0 + $0xb0] sm:$0xff]
  %v173 = vld [vmem:[%s0 + $0xb8] sm:$0xff]
  %v174 = vld [vmem:[%s0 + $0xc0] sm:$0xff]
  %v175 = vld [vmem:[%s0 + $0xc8] sm:$0xff]
  %v176 = vld [vmem:[%s0 + $0xd0] sm:$0xff]
  %v177 = vld [vmem:[%s0 + $0xd8] sm:$0xff]
  %v178 = vld [vmem:[%s0 + $0xe0] sm:$0xff]
  %v179 = vld [vmem:[%s0 + $0xe8] sm:$0xff]
  %v180 = vld [vmem:[%s0 + $0xf0] sm:$0xff]
  %v181 = vld [vmem:[%s0 + $0xf8] sm:$0xff]
  %v182 = vld [vmem:[%s0 + $0x100] sm:$0xff]
  %v183 = vld [vmem:[%s0 + $0x108] sm:$0xff]
  %v184 = vld [vmem:[%s0 + $0x110] sm:$0xff]
  %v185 = vld [vmem:[%s0 + $0x118] sm:$0xff]
  %v186 = vld [vmem:[%s0 + $0x120] sm:$0xff]
  %v187 = vld [vmem:[%s0 + $0x128] sm:$0xff]
  %v188 = vld [vmem:[%s0 + $0x130] sm:$0xff]
  %v189 = vld [vmem:[%s0 + $0x138] sm:$0xff]
  %v190 = vld [vmem:[%s0 + $0x140] sm:$0xff]
  %v191 = vld [vmem:[%s0 + $0x148] sm:$0xff]
  %v192 = vld [vmem:[%s0 + $0x150] sm:$0xff]
  %v193 = vld [vmem:[%s0 + $0x158] sm:$0xff]
  %v194 = vld [vmem:[%s0 + $0x160] sm:$0xff]
  %v195 = vld [vmem:[%s0 + $0x168] sm:$0xff]
  %v196 = vld [vmem:[%s0 + $0x170] sm:$0xff]
  %v197 = vld [vmem:[%s0 + $0x178] sm:$0xff]
  %v198 = vld [vmem:[%s0 + $0x180] sm:$0xff]
  %v199 = vld [vmem:[%s0 + $0x188] sm:$0xff]
  %v200 = vld [vmem:[%s0 + $0x190] sm:$0xff]
  %v201 = vld [vmem:[%s0 + $0x198] sm:$0xff]
  %v202 = vld [vmem:[%s0 + $0x1a0] sm:$0xff]
  %v203 = vld [vmem:[%s0 + $0x1a8] sm:$0xff]
  %v204 = vld [vmem:[%s0 + $0x1b0] sm:$0xff]
  %v205 = vld [vmem:[%s0 + $0x1b8] sm:$0xff]
  %v206 = vld [vmem:[%s0 + $0x1c0] sm:$0xff]
  %v207 = vld [vmem:[%s0 + $0x1c8] sm:$0xff]
  %v208 = vld [vmem:[%s0 + $0x1d0] sm:$0xff]
  %v209 = vld [vmem:[%s0 + $0x1d8] sm:$0xff]
  %v210 = vld [vmem:[%s0 + $0x1e0] sm:$0xff]
  %v211 = vld [vmem:[%s0 + $0x1e8] sm:$0xff]
  %v212 = vld [vmem:[%s0 + $0x1f0] sm:$0xff]
  %v213 = vld [vmem:[%s0 + $0x1f8] sm:$0xff]
  %v214 = vld [vmem:[%s1] sm:$0xf]
  %v215 = vld [vmem:[%s1 + $0x4] sm:$0xf]
  %v216 = vld [vmem:[%s1 + $0x8] sm:$0xf]
  %v217 = vld [vmem:[%s1 + $0xc] sm:$0xf]
  %v218 = vld [vmem:[%s1 + $0x10] sm:$0xf]
  %v219 = vld [vmem:[%s1 + $0x14] sm:$0xf]
  %v220 = vld [vmem:[%s1 + $0x18] sm:$0xf]
  %v221 = vld [vmem:[%s1 + $0x1c] sm:$0xf]
  %v222 = vld [vmem:[%s1 + $0x20] sm:$0xf]
  %v223 = vld [vmem:[%s1 + $0x24] sm:$0xf]
  %v224 = vld [vmem:[%s1 + $0x28] sm:$0xf]
  %v225 = vld [vmem:[%s1 + $0x2c] sm:$0xf]
  %v226 = vld [vmem:[%s1 + $0x30] sm:$0xf]
  %v227 = vld [vmem:[%s1 + $0x34] sm:$0xf]
  %v228 = vld [vmem:[%s1 + $0x38] sm:$0xf]
  %v229 = vld [vmem:[%s1 + $0x3c] sm:$0xf]
  %v230 = vld [vmem:[%s1 + $0x40] sm:$0xf]
  %v231 = vld [vmem:[%s1 + $0x44] sm:$0xf]
  %v232 = vld [vmem:[%s1 + $0x48] sm:$0xf]
  %v233 = vld [vmem:[%s1 + $0x4c] sm:$0xf]
  %v234 = vld [vmem:[%s1 + $0x50] sm:$0xf]
  %v235 = vld [vmem:[%s1 + $0x54] sm:$0xf]
  %v236 = vld [vmem:[%s1 + $0x58] sm:$0xf]
  %v237 = vld [vmem:[%s1 + $0x5c] sm:$0xf]
  %v238 = vld [vmem:[%s1 + $0x60] sm:$0xf]
  %v239 = vld [vmem:[%s1 + $0x64] sm:$0xf]
  %v240 = vld [vmem:[%s1 + $0x68] sm:$0xf]
  %v241 = vld [vmem:[%s1 + $0x6c] sm:$0xf]
  %v242 = vld [vmem:[%s1 + $0x70] sm:$0xf]
  %v243 = vld [vmem:[%s1 + $0x74] sm:$0xf]
  %v244 = vld [vmem:[%s1 + $0x78] sm:$0xf]
  %v245 = vld [vmem:[%s1 + $0x7c] sm:$0xf]
  %v310 = vunpack.c.l.b16 %v150
  %v311 = vunpack.c.h.b16 %v150
  %v312 = vunpack.c.l.b16 %v151
  %v313 = vunpack.c.h.b16 %v151
  %v314 = vunpack.c.l.b16 %v152
  %v315 = vunpack.c.h.b16 %v152
  %v316 = vunpack.c.l.b16 %v153
  %v317 = vunpack.c.h.b16 %v153
  %v318 = vunpack.c.l.b16 %v154
  %v319 = vunpack.c.h.b16 %v154
  %v320 = vunpack.c.l.b16 %v155
  %v321 = vunpack.c.h.b16 %v155
  %v322 = vunpack.c.l.b16 %v156
  %v323 = vunpack.c.h.b16 %v156
  %v324 = vunpack.c.l.b16 %v157
  %v325 = vunpack.c.h.b16 %v157
  %v326 = vunpack.c.l.b16 %v158
  %v327 = vunpack.c.h.b16 %v158
  %v328 = vunpack.c.l.b16 %v159
  %v329 = vunpack.c.h.b16 %v159
  %v330 = vunpack.c.l.b16 %v160
  %v331 = vunpack.c.h.b16 %v160
  %v332 = vunpack.c.l.b16 %v161
  %v333 = vunpack.c.h.b16 %v161
  %v334 = vunpack.c.l.b16 %v162
  %v335 = vunpack.c.h.b16 %v162
  %v336 = vunpack.c.l.b16 %v163
  %v337 = vunpack.c.h.b16 %v163
  %v338 = vunpack.c.l.b16 %v164
  %v339 = vunpack.c.h.b16 %v164
  %v340 = vunpack.c.l.b16 %v165
  %v341 = vunpack.c.h.b16 %v165
  %v342 = vunpack.c.l.b16 %v166
  %v343 = vunpack.c.h.b16 %v166
  %v344 = vunpack.c.l.b16 %v167
  %v345 = vunpack.c.h.b16 %v167
  %v346 = vunpack.c.l.b16 %v168
  %v347 = vunpack.c.h.b16 %v168
  %v348 = vunpack.c.l.b16 %v169
  %v349 = vunpack.c.h.b16 %v169
  %v350 = vunpack.c.l.b16 %v170
  %v351 = vunpack.c.h.b16 %v170
  %v352 = vunpack.c.l.b16 %v171
  %v353 = vunpack.c.h.b16 %v171
  %v354 = vunpack.c.l.b16 %v172
  %v355 = vunpack.c.h.b16 %v172
  %v356 = vunpack.c.l.b16 %v173
  %v357 = vunpack.c.h.b16 %v173
  %v358 = vunpack.c.l.b16 %v174
  %v359 = vunpack.c.h.b16 %v174
  %v360 = vunpack.c.l.b16 %v175
  %v361 = vunpack.c.h.b16 %v175
  %v362 = vunpack.c.l.b16 %v176
  %v363 = vunpack.c.h.b16 %v176
  %v364 = vunpack.c.l.b16 %v177
  %v365 = vunpack.c.h.b16 %v177
  %v366 = vunpack.c.l.b16 %v178
  %v367 = vunpack.c.h.b16 %v178
  %v368 = vunpack.c.l.b16 %v179
  %v369 = vunpack.c.h.b16 %v179
  %v370 = vunpack.c.l.b16 %v180
  %v371 = vunpack.c.h.b16 %v180
  %v372 = vunpack.c.l.b16 %v181
  %v373 = vunpack.c.h.b16 %v181
  %v374 = vunpack.c.l.b16 %v182
  %v375 = vunpack.c.h.b16 %v182
  %v376 = vunpack.c.l.b16 %v183
  %v377 = vunpack.c.h.b16 %v183
  %v378 = vunpack.c.l.b16 %v184
  %v379 = vunpack.c.h.b16 %v184
  %v380 = vunpack.c.l.b16 %v185
  %v381 = vunpack.c.h.b16 %v185
  %v382 = vunpack.c.l.b16 %v186
  %v383 = vunpack.c.h.b16 %v186
  %v384 = vunpack.c.l.b16 %v187
  %v385 = vunpack.c.h.b16 %v187
  %v386 = vunpack.c.l.b16 %v188
  %v387 = vunpack.c.h.b16 %v188
  %v388 = vunpack.c.l.b16 %v189
  %v389 = vunpack.c.h.b16 %v189
  %v390 = vunpack.c.l.b16 %v190
  %v391 = vunpack.c.h.b16 %v190
  %v392 = vunpack.c.l.b16 %v191
  %v393 = vunpack.c.h.b16 %v191
  %v394 = vunpack.c.l.b16 %v192
  %v395 = vunpack.c.h.b16 %v192
  %v396 = vunpack.c.l.b16 %v193
  %v397 = vunpack.c.h.b16 %v193
  %v398 = vunpack.c.l.b16 %v194
  %v399 = vunpack.c.h.b16 %v194
  %v400 = vunpack.c.l.b16 %v195
  %v401 = vunpack.c.h.b16 %v195
  %v402 = vunpack.c.l.b16 %v196
  %v403 = vunpack.c.h.b16 %v196
  %v404 = vunpack.c.l.b16 %v197
  %v405 = vunpack.c.h.b16 %v197
  %v406 = vunpack.c.l.b16 %v198
  %v407 = vunpack.c.h.b16 %v198
  %v408 = vunpack.c.l.b16 %v199
  %v409 = vunpack.c.h.b16 %v199
  %v410 = vunpack.c.l.b16 %v200
  %v411 = vunpack.c.h.b16 %v200
  %v412 = vunpack.c.l.b16 %v201
  %v413 = vunpack.c.h.b16 %v201
  %v414 = vunpack.c.l.b16 %v202
  %v415 = vunpack.c.h.b16 %v202
  %v416 = vunpack.c.l.b16 %v203
  %v417 = vunpack.c.h.b16 %v203
  %v418 = vunpack.c.l.b16 %v204
  %v419 = vunpack.c.h.b16 %v204
  %v420 = vunpack.c.l.b16 %v205
  %v421 = vunpack.c.h.b16 %v205
  %v422 = vunpack.c.l.b16 %v206
  %v423 = vunpack.c.h.b16 %v206
  %v424 = vunpack.c.l.b16 %v207
  %v425 = vunpack.c.h.b16 %v207
  %v426 = vunpack.c.l.b16 %v208
  %v427 = vunpack.c.h.b16 %v208
  %v428 = vunpack.c.l.b16 %v209
  %v429 = vunpack.c.h.b16 %v209
  %v430 = vunpack.c.l.b16 %v210
  %v431 = vunpack.c.h.b16 %v210
  %v432 = vunpack.c.l.b16 %v211
  %v433 = vunpack.c.h.b16 %v211
  %v434 = vunpack.c.l.b16 %v212
  %v435 = vunpack.c.h.b16 %v212
  %v436 = vunpack.c.l.b16 %v213
  %v437 = vunpack.c.h.b16 %v213
  %v438 = vpack.c.b16 %v312, %v310
  %v439 = vpack.c.b16 %v313, %v311
  %v440 = vpack.c.b16 %v316, %v314
  %v441 = vpack.c.b16 %v317, %v315
  %v442 = vpack.c.b16 %v320, %v318
  %v443 = vpack.c.b16 %v321, %v319
  %v444 = vpack.c.b16 %v324, %v322
  %v445 = vpack.c.b16 %v325, %v323
  %v446 = vpack.c.b16 %v328, %v326
  %v447 = vpack.c.b16 %v329, %v327
  %v448 = vpack.c.b16 %v332, %v330
  %v449 = vpack.c.b16 %v333, %v331
  %v450 = vpack.c.b16 %v336, %v334
  %v451 = vpack.c.b16 %v337, %v335
  %v452 = vpack.c.b16 %v340, %v338
  %v453 = vpack.c.b16 %v341, %v339
  %v454 = vpack.c.b16 %v344, %v342
  %v455 = vpack.c.b16 %v345, %v343
  %v456 = vpack.c.b16 %v348, %v346
  %v457 = vpack.c.b16 %v349, %v347
  %v458 = vpack.c.b16 %v352, %v350
  %v459 = vpack.c.b16 %v353, %v351
  %v460 = vpack.c.b16 %v356, %v354
  %v461 = vpack.c.b16 %v357, %v355
  %v462 = vpack.c.b16 %v360, %v358
  %v463 = vpack.c.b16 %v361, %v359
  %v464 = vpack.c.b16 %v364, %v362
  %v465 = vpack.c.b16 %v365, %v363
  %v466 = vpack.c.b16 %v368, %v366
  %v467 = vpack.c.b16 %v369, %v367
  %v468 = vpack.c.b16 %v372, %v370
  %v469 = vpack.c.b16 %v373, %v371
  %v470 = vpack.c.b16 %v376, %v374
  %v471 = vpack.c.b16 %v377, %v375
  %v472 = vpack.c.b16 %v380, %v378
  %v473 = vpack.c.b16 %v381, %v379
  %v474 = vpack.c.b16 %v384, %v382
  %v475 = vpack.c.b16 %v385, %v383
  %v476 = vpack.c.b16 %v388, %v386
  %v477 = vpack.c.b16 %v389, %v387
  %v478 = vpack.c.b16 %v392, %v390
  %v479 = vpack.c.b16 %v393, %v391
  %v480 = vpack.c.b16 %v396, %v394
  %v481 = vpack.c.b16 %v397, %v395
  %v482 = vpack.c.b16 %v400, %v398
  %v483 = vpack.c.b16 %v401, %v399
  %v484 = vpack.c.b16 %v404, %v402
  %v485 = vpack.c.b16 %v405, %v403
  %v486 = vpack.c.b16 %v408, %v406
  %v487 = vpack.c.b16 %v409, %v407
  %v488 = vpack.c.b16 %v412, %v410
  %v489 = vpack.c.b16 %v413, %v411
  %v490 = vpack.c.b16 %v416, %v414
  %v491 = vpack.c.b16 %v417, %v415
  %v492 = vpack.c.b16 %v420, %v418
  %v493 = vpack.c.b16 %v421, %v419
  %v494 = vpack.c.b16 %v424, %v422
  %v495 = vpack.c.b16 %v425, %v423
  %v496 = vpack.c.b16 %v428, %v426
  %v497 = vpack.c.b16 %v429, %v427
  %v498 = vpack.c.b16 %v432, %v430
  %v499 = vpack.c.b16 %v433, %v431
  %v500 = vpack.c.b16 %v436, %v434
  %v501 = vpack.c.b16 %v437, %v435
  %v598 = vunpack.c.l.b16 %v214
  %v599 = vunpack.c.l.b16 %v215
  %v600 = vunpack.c.l.b16 %v216
  %v601 = vunpack.c.l.b16 %v217
  %v602 = vunpack.c.l.b16 %v218
  %v603 = vunpack.c.l.b16 %v219
  %v604 = vunpack.c.l.b16 %v220
  %v605 = vunpack.c.l.b16 %v221
  %v606 = vunpack.c.l.b16 %v222
  %v607 = vunpack.c.l.b16 %v223
  %v608 = vunpack.c.l.b16 %v224
  %v609 = vunpack.c.l.b16 %v225
  %v610 = vunpack.c.l.b16 %v226
  %v611 = vunpack.c.l.b16 %v227
  %v612 = vunpack.c.l.b16 %v228
  %v613 = vunpack.c.l.b16 %v229
  %v614 = vunpack.c.l.b16 %v230
  %v615 = vunpack.c.l.b16 %v231
  %v616 = vunpack.c.l.b16 %v232
  %v617 = vunpack.c.l.b16 %v233
  %v618 = vunpack.c.l.b16 %v234
  %v619 = vunpack.c.l.b16 %v235
  %v620 = vunpack.c.l.b16 %v236
  %v621 = vunpack.c.l.b16 %v237
  %v622 = vunpack.c.l.b16 %v238
  %v623 = vunpack.c.l.b16 %v239
  %v624 = vunpack.c.l.b16 %v240
  %v625 = vunpack.c.l.b16 %v241
  %v626 = vunpack.c.l.b16 %v242
  %v627 = vunpack.c.l.b16 %v243
  %v628 = vunpack.c.l.b16 %v244
  %v629 = vunpack.c.l.b16 %v245
  %v630 = vpack.c.b16 %v599, %v598
  %v631 = vpack.c.b16 %v601, %v600
  %v632 = vpack.c.b16 %v603, %v602
  %v633 = vpack.c.b16 %v605, %v604
  %v634 = vpack.c.b16 %v607, %v606
  %v635 = vpack.c.b16 %v609, %v608
  %v636 = vpack.c.b16 %v611, %v610
  %v637 = vpack.c.b16 %v613, %v612
  %v638 = vpack.c.b16 %v615, %v614
  %v639 = vpack.c.b16 %v617, %v616
  %v640 = vpack.c.b16 %v619, %v618
  %v641 = vpack.c.b16 %v621, %v620
  %v642 = vpack.c.b16 %v623, %v622
  %v643 = vpack.c.b16 %v625, %v624
  %v644 = vpack.c.b16 %v627, %v626
  %v645 = vpack.c.b16 %v629, %v628
  %662 = vmatprep.subr.bf16.mxu0 0
  %663 = vmatpush1.bf16.msra.mxu0 %v637
  %664 = vmatprep.subr.bf16.mxu0 0
  %665 = vmatpush1.bf16.msra.mxu0 %v636
  %666 = vmatprep.subr.bf16.mxu0 0
  %667 = vmatpush1.bf16.msra.mxu0 %v635
  %668 = vmatprep.subr.bf16.mxu0 0
  %669 = vmatpush1.bf16.msra.mxu0 %v634
  %670 = vmatprep.subr.bf16.mxu0 0
  %671 = vmatpush1.bf16.msra.mxu0 %v633
  %672 = vmatprep.subr.bf16.mxu0 0
  %673 = vmatpush1.bf16.msra.mxu0 %v632
  %674 = vmatprep.subr.bf16.mxu0 0
  %675 = vmatpush1.bf16.msra.mxu0 %v631
  %676 = vmatprep.subr.bf16.mxu0 0
  %677 = vmatpush1.bf16.msra.mxu0 %v630
  %678 = vmatprep.subr.bf16.mxu0 0
  %679 = vmatpush2.bf16.msra.mxu0 %v645
  %680 = vmatprep.subr.bf16.mxu0 0
  %681 = vmatpush2.bf16.msra.mxu0 %v644
  %682 = vmatprep.subr.bf16.mxu0 0
  %683 = vmatpush2.bf16.msra.mxu0 %v643
  %684 = vmatprep.subr.bf16.mxu0 0
  %685 = vmatpush2.bf16.msra.mxu0 %v642
  %686 = vmatprep.subr.bf16.mxu0 0
  %687 = vmatpush2.bf16.msra.mxu0 %v641
  %688 = vmatprep.subr.bf16.mxu0 0
  %689 = vmatpush2.bf16.msra.mxu0 %v640
  %690 = vmatprep.subr.bf16.mxu0 0
  %691 = vmatpush2.bf16.msra.mxu0 %v639
  %692 = vmatprep.subr.bf16.mxu0 0
  %693 = vmatpush2.bf16.msra.mxu0 %v638
  %694 = vmatprep.mubr.bf16.mxu0 %v439
  %695 = vmatmul.mubr.bf16.gmra.mxu0 %v438
  %v696 = vpop.f32.mrf.mxu0
  %v697 = vadd.f32 0.0, %v696
  %v698 = vpop.f32.mrf.mxu0
  %v699 = vpop.f32.mrf.mxu0
  %v700 = vadd.f32 0.0, %v699
  %v701 = vpop.f32.mrf.mxu0
  %702 = vmatprep.mubr.bf16.mxu0 %v441
  %703 = vmatmul.mubr.bf16.gmra.mxu0 %v440
  %v704 = vpop.f32.mrf.mxu0
  %v705 = vadd.f32 0.0, %v704
  %v706 = vpop.f32.mrf.mxu0
  %v707 = vpop.f32.mrf.mxu0
  %v708 = vadd.f32 0.0, %v707
  %v709 = vpop.f32.mrf.mxu0
  %710 = vmatprep.mubr.bf16.mxu0 %v443
  %711 = vmatmul.mubr.bf16.gmra.mxu0 %v442
  %v712 = vpop.f32.mrf.mxu0
  %v713 = vadd.f32 0.0, %v712
  %v714 = vpop.f32.mrf.mxu0
  %v715 = vpop.f32.mrf.mxu0
  %v716 = vadd.f32 0.0, %v715
  %v717 = vpop.f32.mrf.mxu0
  %718 = vmatprep.mubr.bf16.mxu0 %v445
  %719 = vmatmul.mubr.bf16.gmra.mxu0 %v444
  %v720 = vpop.f32.mrf.mxu0
  %v721 = vadd.f32 0.0, %v720
  %v722 = vpop.f32.mrf.mxu0
  %v723 = vpop.f32.mrf.mxu0
  %v724 = vadd.f32 0.0, %v723
  %v725 = vpop.f32.mrf.mxu0
  %726 = vmatprep.mubr.bf16.mxu0 %v447
  %727 = vmatmul.mubr.bf16.gmra.mxu0 %v446
  %v728 = vpop.f32.mrf.mxu0
  %v729 = vadd.f32 0.0, %v728
  %v730 = vpop.f32.mrf.mxu0
  %v731 = vpop.f32.mrf.mxu0
  %v732 = vadd.f32 0.0, %v731
  %v733 = vpop.f32.mrf.mxu0
  %734 = vmatprep.mubr.bf16.mxu0 %v449
  %735 = vmatmul.mubr.bf16.gmra.mxu0 %v448
  %v736 = vpop.f32.mrf.mxu0
  %v737 = vadd.f32 0.0, %v736
  %v738 = vpop.f32.mrf.mxu0
  %v739 = vpop.f32.mrf.mxu0
  %v740 = vadd.f32 0.0, %v739
  %v741 = vpop.f32.mrf.mxu0
  %742 = vmatprep.mubr.bf16.mxu0 %v451
  %743 = vmatmul.mubr.bf16.gmra.mxu0 %v450
  %v744 = vpop.f32.mrf.mxu0
  %v745 = vadd.f32 0.0, %v744
  %v746 = vpop.f32.mrf.mxu0
  %v747 = vpop.f32.mrf.mxu0
  %v748 = vadd.f32 0.0, %v747
  %v749 = vpop.f32.mrf.mxu0
  %750 = vmatprep.mubr.bf16.mxu0 %v453
  %751 = vmatmul.mubr.bf16.gmra.mxu0 %v452
  %v752 = vpop.f32.mrf.mxu0
  %v753 = vadd.f32 0.0, %v752
  %v754 = vpop.f32.mrf.mxu0
  %v755 = vpop.f32.mrf.mxu0
  %v756 = vadd.f32 0.0, %v755
  %v757 = vpop.f32.mrf.mxu0
  %758 = vmatprep.mubr.bf16.mxu0 %v455
  %759 = vmatmul.mubr.bf16.gmra.mxu0 %v454
  %v760 = vpop.f32.mrf.mxu0
  %v761 = vadd.f32 0.0, %v760
  %v762 = vpop.f32.mrf.mxu0
  %v763 = vpop.f32.mrf.mxu0
  %v764 = vadd.f32 0.0, %v763
  %v765 = vpop.f32.mrf.mxu0
  %766 = vmatprep.mubr.bf16.mxu0 %v457
  %767 = vmatmul.mubr.bf16.gmra.mxu0 %v456
  %v768 = vpop.f32.mrf.mxu0
  %v769 = vadd.f32 0.0, %v768
  %v770 = vpop.f32.mrf.mxu0
  %v771 = vpop.f32.mrf.mxu0
  %v772 = vadd.f32 0.0, %v771
  %v773 = vpop.f32.mrf.mxu0
  %774 = vmatprep.mubr.bf16.mxu0 %v459
  %775 = vmatmul.mubr.bf16.gmra.mxu0 %v458
  %v776 = vpop.f32.mrf.mxu0
  %v777 = vadd.f32 0.0, %v776
  %v778 = vpop.f32.mrf.mxu0
  %v779 = vpop.f32.mrf.mxu0
  %v780 = vadd.f32 0.0, %v779
  %v781 = vpop.f32.mrf.mxu0
  %782 = vmatprep.mubr.bf16.mxu0 %v461
  %783 = vmatmul.mubr.bf16.gmra.mxu0 %v460
  %v784 = vpop.f32.mrf.mxu0
  %v785 = vadd.f32 0.0, %v784
  %v786 = vpop.f32.mrf.mxu0
  %v787 = vpop.f32.mrf.mxu0
  %v788 = vadd.f32 0.0, %v787
  %v789 = vpop.f32.mrf.mxu0
  %790 = vmatprep.mubr.bf16.mxu0 %v463
  %791 = vmatmul.mubr.bf16.gmra.mxu0 %v462
  %v792 = vpop.f32.mrf.mxu0
  %v793 = vadd.f32 0.0, %v792
  %v794 = vpop.f32.mrf.mxu0
  %v795 = vpop.f32.mrf.mxu0
  %v796 = vadd.f32 0.0, %v795
  %v797 = vpop.f32.mrf.mxu0
  %798 = vmatprep.mubr.bf16.mxu0 %v465
  %799 = vmatmul.mubr.bf16.gmra.mxu0 %v464
  %v800 = vpop.f32.mrf.mxu0
  %v801 = vadd.f32 0.0, %v800
  %v802 = vpop.f32.mrf.mxu0
  %v803 = vpop.f32.mrf.mxu0
  %v804 = vadd.f32 0.0, %v803
  %v805 = vpop.f32.mrf.mxu0
  %806 = vmatprep.mubr.bf16.mxu0 %v467
  %807 = vmatmul.mubr.bf16.gmra.mxu0 %v466
  %v808 = vpop.f32.mrf.mxu0
  %v809 = vadd.f32 0.0, %v808
  %v810 = vpop.f32.mrf.mxu0
  %v811 = vpop.f32.mrf.mxu0
  %v812 = vadd.f32 0.0, %v811
  %v813 = vpop.f32.mrf.mxu0
  %814 = vmatprep.mubr.bf16.mxu0 %v469
  %815 = vmatmul.mubr.bf16.gmra.mxu0 %v468
  %v816 = vpop.f32.mrf.mxu0
  %v817 = vadd.f32 0.0, %v816
  %v818 = vpop.f32.mrf.mxu0
  %v819 = vpop.f32.mrf.mxu0
  %v820 = vadd.f32 0.0, %v819
  %v821 = vpop.f32.mrf.mxu0
  %822 = vmatprep.mubr.bf16.mxu0 %v471
  %823 = vmatmul.mubr.bf16.gmra.mxu0 %v470
  %v824 = vpop.f32.mrf.mxu0
  %v825 = vadd.f32 0.0, %v824
  %v826 = vpop.f32.mrf.mxu0
  %v827 = vpop.f32.mrf.mxu0
  %v828 = vadd.f32 0.0, %v827
  %v829 = vpop.f32.mrf.mxu0
  %830 = vmatprep.mubr.bf16.mxu0 %v473
  %831 = vmatmul.mubr.bf16.gmra.mxu0 %v472
  %v832 = vpop.f32.mrf.mxu0
  %v833 = vadd.f32 0.0, %v832
  %v834 = vpop.f32.mrf.mxu0
  %v835 = vpop.f32.mrf.mxu0
  %v836 = vadd.f32 0.0, %v835
  %v837 = vpop.f32.mrf.mxu0
  %838 = vmatprep.mubr.bf16.mxu0 %v475
  %839 = vmatmul.mubr.bf16.gmra.mxu0 %v474
  %v840 = vpop.f32.mrf.mxu0
  %v841 = vadd.f32 0.0, %v840
  %v842 = vpop.f32.mrf.mxu0
  %v843 = vpop.f32.mrf.mxu0
  %v844 = vadd.f32 0.0, %v843
  %v845 = vpop.f32.mrf.mxu0
  %846 = vmatprep.mubr.bf16.mxu0 %v477
  %847 = vmatmul.mubr.bf16.gmra.mxu0 %v476
  %v848 = vpop.f32.mrf.mxu0
  %v849 = vadd.f32 0.0, %v848
  %v850 = vpop.f32.mrf.mxu0
  %v851 = vpop.f32.mrf.mxu0
  %v852 = vadd.f32 0.0, %v851
  %v853 = vpop.f32.mrf.mxu0
  %854 = vmatprep.mubr.bf16.mxu0 %v479
  %855 = vmatmul.mubr.bf16.gmra.mxu0 %v478
  %v856 = vpop.f32.mrf.mxu0
  %v857 = vadd.f32 0.0, %v856
  %v858 = vpop.f32.mrf.mxu0
  %v859 = vpop.f32.mrf.mxu0
  %v860 = vadd.f32 0.0, %v859
  %v861 = vpop.f32.mrf.mxu0
  %862 = vmatprep.mubr.bf16.mxu0 %v481
  %863 = vmatmul.mubr.bf16.gmra.mxu0 %v480
  %v864 = vpop.f32.mrf.mxu0
  %v865 = vadd.f32 0.0, %v864
  %v866 = vpop.f32.mrf.mxu0
  %v867 = vpop.f32.mrf.mxu0
  %v868 = vadd.f32 0.0, %v867
  %v869 = vpop.f32.mrf.mxu0
  %870 = vmatprep.mubr.bf16.mxu0 %v483
  %871 = vmatmul.mubr.bf16.gmra.mxu0 %v482
  %v872 = vpop.f32.mrf.mxu0
  %v873 = vadd.f32 0.0, %v872
  %v874 = vpop.f32.mrf.mxu0
  %v875 = vpop.f32.mrf.mxu0
  %v876 = vadd.f32 0.0, %v875
  %v877 = vpop.f32.mrf.mxu0
  %878 = vmatprep.mubr.bf16.mxu0 %v485
  %879 = vmatmul.mubr.bf16.gmra.mxu0 %v484
  %v880 = vpop.f32.mrf.mxu0
  %v881 = vadd.f32 0.0, %v880
  %v882 = vpop.f32.mrf.mxu0
  %v883 = vpop.f32.mrf.mxu0
  %v884 = vadd.f32 0.0, %v883
  %v885 = vpop.f32.mrf.mxu0
  %886 = vmatprep.mubr.bf16.mxu0 %v487
  %887 = vmatmul.mubr.bf16.gmra.mxu0 %v486
  %v888 = vpop.f32.mrf.mxu0
  %v889 = vadd.f32 0.0, %v888
  %v890 = vpop.f32.mrf.mxu0
  %v891 = vpop.f32.mrf.mxu0
  %v892 = vadd.f32 0.0, %v891
  %v893 = vpop.f32.mrf.mxu0
  %894 = vmatprep.mubr.bf16.mxu0 %v489
  %895 = vmatmul.mubr.bf16.gmra.mxu0 %v488
  %v896 = vpop.f32.mrf.mxu0
  %v897 = vadd.f32 0.0, %v896
  %v898 = vpop.f32.mrf.mxu0
  %v899 = vpop.f32.mrf.mxu0
  %v900 = vadd.f32 0.0, %v899
  %v901 = vpop.f32.mrf.mxu0
  %902 = vmatprep.mubr.bf16.mxu0 %v491
  %903 = vmatmul.mubr.bf16.gmra.mxu0 %v490
  %v904 = vpop.f32.mrf.mxu0
  %v905 = vadd.f32 0.0, %v904
  %v906 = vpop.f32.mrf.mxu0
  %v907 = vpop.f32.mrf.mxu0
  %v908 = vadd.f32 0.0, %v907
  %v909 = vpop.f32.mrf.mxu0
  %910 = vmatprep.mubr.bf16.mxu0 %v493
  %911 = vmatmul.mubr.bf16.gmra.mxu0 %v492
  %v912 = vpop.f32.mrf.mxu0
  %v913 = vadd.f32 0.0, %v912
  %v914 = vpop.f32.mrf.mxu0
  %v915 = vpop.f32.mrf.mxu0
  %v916 = vadd.f32 0.0, %v915
  %v917 = vpop.f32.mrf.mxu0
  %918 = vmatprep.mubr.bf16.mxu0 %v495
  %919 = vmatmul.mubr.bf16.gmra.mxu0 %v494
  %v920 = vpop.f32.mrf.mxu0
  %v921 = vadd.f32 0.0, %v920
  %v922 = vpop.f32.mrf.mxu0
  %v923 = vpop.f32.mrf.mxu0
  %v924 = vadd.f32 0.0, %v923
  %v925 = vpop.f32.mrf.mxu0
  %926 = vmatprep.mubr.bf16.mxu0 %v497
  %927 = vmatmul.mubr.bf16.gmra.mxu0 %v496
  %v928 = vpop.f32.mrf.mxu0
  %v929 = vadd.f32 0.0, %v928
  %v930 = vpop.f32.mrf.mxu0
  %v931 = vpop.f32.mrf.mxu0
  %v932 = vadd.f32 0.0, %v931
  %v933 = vpop.f32.mrf.mxu0
  %934 = vmatprep.mubr.bf16.mxu0 %v499
  %935 = vmatmul.mubr.bf16.gmra.mxu0 %v498
  %v936 = vpop.f32.mrf.mxu0
  %v937 = vadd.f32 0.0, %v936
  %v938 = vpop.f32.mrf.mxu0
  %v939 = vpop.f32.mrf.mxu0
  %v940 = vadd.f32 0.0, %v939
  %v941 = vpop.f32.mrf.mxu0
  %942 = vmatprep.mubr.bf16.mxu0 %v501
  %943 = vmatmul.mubr.bf16.gmra.mxu0 %v500
  %v944 = vpop.f32.mrf.mxu0
  %v945 = vadd.f32 0.0, %v944
  %v946 = vpop.f32.mrf.mxu0
  %v947 = vpop.f32.mrf.mxu0
  %v948 = vadd.f32 0.0, %v947
  %v949 = vpop.f32.mrf.mxu0
  %950 = vdwg.mxu0
  %v951 = vadd.f32 %v86, %v697
  %v952 = vadd.f32 %v87, %v700
  %v953 = vadd.f32 %v88, %v705
  %v954 = vadd.f32 %v89, %v708
  %v955 = vadd.f32 %v90, %v713
  %v956 = vadd.f32 %v91, %v716
  %v957 = vadd.f32 %v92, %v721
  %v958 = vadd.f32 %v93, %v724
  %v959 = vadd.f32 %v94, %v729
  %v960 = vadd.f32 %v95, %v732
  %v961 = vadd.f32 %v96, %v737
  %v962 = vadd.f32 %v97, %v740
  %v963 = vadd.f32 %v98, %v745
  %v964 = vadd.f32 %v99, %v748
  %v965 = vadd.f32 %v100, %v753
  %v966 = vadd.f32 %v101, %v756
  %v967 = vadd.f32 %v102, %v761
  %v968 = vadd.f32 %v103, %v764
  %v969 = vadd.f32 %v104, %v769
  %v970 = vadd.f32 %v105, %v772
  %v971 = vadd.f32 %v106, %v777
  %v972 = vadd.f32 %v107, %v780
  %v973 = vadd.f32 %v108, %v785
  %v974 = vadd.f32 %v109, %v788
  %v975 = vadd.f32 %v110, %v793
  %v976 = vadd.f32 %v111, %v796
  %v977 = vadd.f32 %v112, %v801
  %v978 = vadd.f32 %v113, %v804
  %v979 = vadd.f32 %v114, %v809
  %v980 = vadd.f32 %v115, %v812
  %v981 = vadd.f32 %v116, %v817
  %v982 = vadd.f32 %v117, %v820
  %v983 = vadd.f32 %v118, %v825
  %v984 = vadd.f32 %v119, %v828
  %v985 = vadd.f32 %v120, %v833
  %v986 = vadd.f32 %v121, %v836
  %v987 = vadd.f32 %v122, %v841
  %v988 = vadd.f32 %v123, %v844
  %v989 = vadd.f32 %v124, %v849
  %v990 = vadd.f32 %v125, %v852
  %v991 = vadd.f32 %v126, %v857
  %v992 = vadd.f32 %v127, %v860
  %v993 = vadd.f32 %v128, %v865
  %v994 = vadd.f32 %v129, %v868
  %v995 = vadd.f32 %v130, %v873
  %v996 = vadd.f32 %v131, %v876
  %v997 = vadd.f32 %v132, %v881
  %v998 = vadd.f32 %v133, %v884
  %v999 = vadd.f32 %v134, %v889
  %v1000 = vadd.f32 %v135, %v892
  %v1001 = vadd.f32 %v136, %v897
  %v1002 = vadd.f32 %v137, %v900
  %v1003 = vadd.f32 %v138, %v905
  %v1004 = vadd.f32 %v139, %v908
  %v1005 = vadd.f32 %v140, %v913
  %v1006 = vadd.f32 %v141, %v916
  %v1007 = vadd.f32 %v142, %v921
  %v1008 = vadd.f32 %v143, %v924
  %v1009 = vadd.f32 %v144, %v929
  %v1010 = vadd.f32 %v145, %v932
  %v1011 = vadd.f32 %v146, %v937
  %v1012 = vadd.f32 %v147, %v940
  %v1013 = vadd.f32 %v148, %v945
  %v1014 = vadd.f32 %v149, %v948
  %1015 = vst [vmem:[#allocation2] sm:$0xff] %v951
  %1016 = vst [vmem:[#allocation2 + $0x8] sm:$0xff] %v952
  %1017 = vst [vmem:[#allocation2 + $0x10] sm:$0xff] %v953
  %1018 = vst [vmem:[#allocation2 + $0x18] sm:$0xff] %v954
  %1019 = vst [vmem:[#allocation2 + $0x20] sm:$0xff] %v955
  %1020 = vst [vmem:[#allocation2 + $0x28] sm:$0xff] %v956
  %1021 = vst [vmem:[#allocation2 + $0x30] sm:$0xff] %v957
  %1022 = vst [vmem:[#allocation2 + $0x38] sm:$0xff] %v958
  %1023 = vst [vmem:[#allocation2 + $0x40] sm:$0xff] %v959
  %1024 = vst [vmem:[#allocation2 + $0x48] sm:$0xff] %v960
  %1025 = vst [vmem:[#allocation2 + $0x50] sm:$0xff] %v961
  %1026 = vst [vmem:[#allocation2 + $0x58] sm:$0xff] %v962
  %1027 = vst [vmem:[#allocation2 + $0x60] sm:$0xff] %v963
  %1028 = vst [vmem:[#allocation2 + $0x68] sm:$0xff] %v964
  %1029 = vst [vmem:[#allocation2 + $0x70] sm:$0xff] %v965
  %1030 = vst [vmem:[#allocation2 + $0x78] sm:$0xff] %v966
  %1031 = vst [vmem:[#allocation2 + $0x80] sm:$0xff] %v967
  %1032 = vst [vmem:[#allocation2 + $0x88] sm:$0xff] %v968
  %1033 = vst [vmem:[#allocation2 + $0x90] sm:$0xff] %v969
  %1034 = vst [vmem:[#allocation2 + $0x98] sm:$0xff] %v970
  %1035 = vst [vmem:[#allocation2 + $0xa0] sm:$0xff] %v971
  %1036 = vst [vmem:[#allocation2 + $0xa8] sm:$0xff] %v972
  %1037 = vst [vmem:[#allocation2 + $0xb0] sm:$0xff] %v973
  %1038 = vst [vmem:[#allocation2 + $0xb8] sm:$0xff] %v974
  %1039 = vst [vmem:[#allocation2 + $0xc0] sm:$0xff] %v975
  %1040 = vst [vmem:[#allocation2 + $0xc8] sm:$0xff] %v976
  %1041 = vst [vmem:[#allocation2 + $0xd0] sm:$0xff] %v977
  %1042 = vst [vmem:[#allocation2 + $0xd8] sm:$0xff] %v978
  %1043 = vst [vmem:[#allocation2 + $0xe0] sm:$0xff] %v979
  %1044 = vst [vmem:[#allocation2 + $0xe8] sm:$0xff] %v980
  %1045 = vst [vmem:[#allocation2 + $0xf0] sm:$0xff] %v981
  %1046 = vst [vmem:[#allocation2 + $0xf8] sm:$0xff] %v982
  %1047 = vst [vmem:[#allocation2 + $0x100] sm:$0xff] %v983
  %1048 = vst [vmem:[#allocation2 + $0x108] sm:$0xff] %v984
  %1049 = vst [vmem:[#allocation2 + $0x110] sm:$0xff] %v985
  %1050 = vst [vmem:[#allocation2 + $0x118] sm:$0xff] %v986
  %1051 = vst [vmem:[#allocation2 + $0x120] sm:$0xff] %v987
  %1052 = vst [vmem:[#allocation2 + $0x128] sm:$0xff] %v988
  %1053 = vst [vmem:[#allocation2 + $0x130] sm:$0xff] %v989
  %1054 = vst [vmem:[#allocation2 + $0x138] sm:$0xff] %v990
  %1055 = vst [vmem:[#allocation2 + $0x140] sm:$0xff] %v991
  %1056 = vst [vmem:[#allocation2 + $0x148] sm:$0xff] %v992
  %1057 = vst [vmem:[#allocation2 + $0x150] sm:$0xff] %v993
  %1058 = vst [vmem:[#allocation2 + $0x158] sm:$0xff] %v994
  %1059 = vst [vmem:[#allocation2 + $0x160] sm:$0xff] %v995
  %1060 = vst [vmem:[#allocation2 + $0x168] sm:$0xff] %v996
  %1061 = vst [vmem:[#allocation2 + $0x170] sm:$0xff] %v997
  %1062 = vst [vmem:[#allocation2 + $0x178] sm:$0xff] %v998
  %1063 = vst [vmem:[#allocation2 + $0x180] sm:$0xff] %v999
  %1064 = vst [vmem:[#allocation2 + $0x188] sm:$0xff] %v1000
  %1065 = vst [vmem:[#allocation2 + $0x190] sm:$0xff] %v1001
  %1066 = vst [vmem:[#allocation2 + $0x198] sm:$0xff] %v1002
  %1067 = vst [vmem:[#allocation2 + $0x1a0] sm:$0xff] %v1003
  %1068 = vst [vmem:[#allocation2 + $0x1a8] sm:$0xff] %v1004
  %1069 = vst [vmem:[#allocation2 + $0x1b0] sm:$0xff] %v1005
  %1070 = vst [vmem:[#allocation2 + $0x1b8] sm:$0xff] %v1006
  %1071 = vst [vmem:[#allocation2 + $0x1c0] sm:$0xff] %v1007
  %1072 = vst [vmem:[#allocation2 + $0x1c8] sm:$0xff] %v1008
  %1073 = vst [vmem:[#allocation2 + $0x1d0] sm:$0xff] %v1009
  %1074 = vst [vmem:[#allocation2 + $0x1d8] sm:$0xff] %v1010
  %1075 = vst [vmem:[#allocation2 + $0x1e0] sm:$0xff] %v1011
  %1076 = vst [vmem:[#allocation2 + $0x1e8] sm:$0xff] %v1012
  %1077 = vst [vmem:[#allocation2 + $0x1f0] sm:$0xff] %v1013
  %1078 = vst [vmem:[#allocation2 + $0x1f8] sm:$0xff] %v1014
  // Predicated region
  $region18: #{unet3d_forward.69} parent=0 // pred_check
    %p1079 = pneg %p18
  $region19: #{unet3d_forward.69} parent=0 // pred_check_branch
    %1081 = sbr.rel (%p1079) target = $region21
  $region20: #{unet3d_forward.69} parent=0 // pred_region
    %v1082 = vld [vmem:[#allocation2] sm:$0xff]
    %v1083 = vld [vmem:[#allocation2 + $0x8] sm:$0xff]
    %v1084 = vld [vmem:[#allocation2 + $0x10] sm:$0xff]
    %v1085 = vld [vmem:[#allocation2 + $0x18] sm:$0xff]
    %v1086 = vld [vmem:[#allocation2 + $0x20] sm:$0xff]
    %v1087 = vld [vmem:[#allocation2 + $0x28] sm:$0xff]
    %v1088 = vld [vmem:[#allocation2 + $0x30] sm:$0xff]
    %v1089 = vld [vmem:[#allocation2 + $0x38] sm:$0xff]
    %v1090 = vld [vmem:[#allocation2 + $0x40] sm:$0xff]
    %v1091 = vld [vmem:[#allocation2 + $0x48] sm:$0xff]
    %v1092 = vld [vmem:[#allocation2 + $0x50] sm:$0xff]
    %v1093 = vld [vmem:[#allocation2 + $0x58] sm:$0xff]
    %v1094 = vld [vmem:[#allocation2 + $0x60] sm:$0xff]
    %v1095 = vld [vmem:[#allocation2 + $0x68] sm:$0xff]
    %v1096 = vld [vmem:[#allocation2 + $0x70] sm:$0xff]
    %v1097 = vld [vmem:[#allocation2 + $0x78] sm:$0xff]
    %v1098 = vld [vmem:[#allocation2 + $0x80] sm:$0xff]
    %v1099 = vld [vmem:[#allocation2 + $0x88] sm:$0xff]
    %v1100 = vld [vmem:[#allocation2 + $0x90] sm:$0xff]
    %v1101 = vld [vmem:[#allocation2 + $0x98] sm:$0xff]
    %v1102 = vld [vmem:[#allocation2 + $0xa0] sm:$0xff]
    %v1103 = vld [vmem:[#allocation2 + $0xa8] sm:$0xff]
    %v1104 = vld [vmem:[#allocation2 + $0xb0] sm:$0xff]
    %v1105 = vld [vmem:[#allocation2 + $0xb8] sm:$0xff]
    %v1106 = vld [vmem:[#allocation2 + $0xc0] sm:$0xff]
    %v1107 = vld [vmem:[#allocation2 + $0xc8] sm:$0xff]
    %v1108 = vld [vmem:[#allocation2 + $0xd0] sm:$0xff]
    %v1109 = vld [vmem:[#allocation2 + $0xd8] sm:$0xff]
    %v1110 = vld [vmem:[#allocation2 + $0xe0] sm:$0xff]
    %v1111 = vld [vmem:[#allocation2 + $0xe8] sm:$0xff]
    %v1112 = vld [vmem:[#allocation2 + $0xf0] sm:$0xff]
    %v1113 = vld [vmem:[#allocation2 + $0xf8] sm:$0xff]
    %v1114 = vld [vmem:[#allocation2 + $0x100] sm:$0xff]
    %v1115 = vld [vmem:[#allocation2 + $0x108] sm:$0xff]
    %v1116 = vld [vmem:[#allocation2 + $0x110] sm:$0xff]
    %v1117 = vld [vmem:[#allocation2 + $0x118] sm:$0xff]
    %v1118 = vld [vmem:[#allocation2 + $0x120] sm:$0xff]
    %v1119 = vld [vmem:[#allocation2 + $0x128] sm:$0xff]
    %v1120 = vld [vmem:[#allocation2 + $0x130] sm:$0xff]
    %v1121 = vld [vmem:[#allocation2 + $0x138] sm:$0xff]
    %v1122 = vld [vmem:[#allocation2 + $0x140] sm:$0xff]
    %v1123 = vld [vmem:[#allocation2 + $0x148] sm:$0xff]
    %v1124 = vld [vmem:[#allocation2 + $0x150] sm:$0xff]
    %v1125 = vld [vmem:[#allocation2 + $0x158] sm:$0xff]
    %v1126 = vld [vmem:[#allocation2 + $0x160] sm:$0xff]
    %v1127 = vld [vmem:[#allocation2 + $0x168] sm:$0xff]
    %v1128 = vld [vmem:[#allocation2 + $0x170] sm:$0xff]
    %v1129 = vld [vmem:[#allocation2 + $0x178] sm:$0xff]
    %v1130 = vld [vmem:[#allocation2 + $0x180] sm:$0xff]
    %v1131 = vld [vmem:[#allocation2 + $0x188] sm:$0xff]
    %v1132 = vld [vmem:[#allocation2 + $0x190] sm:$0xff]
    %v1133 = vld [vmem:[#allocation2 + $0x198] sm:$0xff]
    %v1134 = vld [vmem:[#allocation2 + $0x1a0] sm:$0xff]
    %v1135 = vld [vmem:[#allocation2 + $0x1a8] sm:$0xff]
    %v1136 = vld [vmem:[#allocation2 + $0x1b0] sm:$0xff]
    %v1137 = vld [vmem:[#allocation2 + $0x1b8] sm:$0xff]
    %v1138 = vld [vmem:[#allocation2 + $0x1c0] sm:$0xff]
    %v1139 = vld [vmem:[#allocation2 + $0x1c8] sm:$0xff]
    %v1140 = vld [vmem:[#allocation2 + $0x1d0] sm:$0xff]
    %v1141 = vld [vmem:[#allocation2 + $0x1d8] sm:$0xff]
    %v1142 = vld [vmem:[#allocation2 + $0x1e0] sm:$0xff]
    %v1143 = vld [vmem:[#allocation2 + $0x1e8] sm:$0xff]
    %v1144 = vld [vmem:[#allocation2 + $0x1f0] sm:$0xff]
    %v1145 = vld [vmem:[#allocation2 + $0x1f8] sm:$0xff]
    %v1146 = vld [vmem:[%s2] sm:$0x1]
    %v1148 = vlaneseq
    %v1149 = vshrl.u32 %v1148, 7
    %v1150 = vsub.s32 0, %v1149
    %v1151 = vrot.slane %v1146, %v1150
    %v1153 = vadd.f32 %v1082, %v1151
    %v1154 = vadd.f32 %v1083, %v1151
    %v1155 = vadd.f32 %v1084, %v1151
    %v1156 = vadd.f32 %v1085, %v1151
    %v1157 = vadd.f32 %v1086, %v1151
    %v1158 = vadd.f32 %v1087, %v1151
    %v1159 = vadd.f32 %v1088, %v1151
    %v1160 = vadd.f32 %v1089, %v1151
    %v1161 = vadd.f32 %v1090, %v1151
    %v1162 = vadd.f32 %v1091, %v1151
    %v1163 = vadd.f32 %v1092, %v1151
    %v1164 = vadd.f32 %v1093, %v1151
    %v1165 = vadd.f32 %v1094, %v1151
    %v1166 = vadd.f32 %v1095, %v1151
    %v1167 = vadd.f32 %v1096, %v1151
    %v1168 = vadd.f32 %v1097, %v1151
    %v1169 = vadd.f32 %v1098, %v1151
    %v1170 = vadd.f32 %v1099, %v1151
    %v1171 = vadd.f32 %v1100, %v1151
    %v1172 = vadd.f32 %v1101, %v1151
    %v1173 = vadd.f32 %v1102, %v1151
    %v1174 = vadd.f32 %v1103, %v1151
    %v1175 = vadd.f32 %v1104, %v1151
    %v1176 = vadd.f32 %v1105, %v1151
    %v1177 = vadd.f32 %v1106, %v1151
    %v1178 = vadd.f32 %v1107, %v1151
    %v1179 = vadd.f32 %v1108, %v1151
    %v1180 = vadd.f32 %v1109, %v1151
    %v1181 = vadd.f32 %v1110, %v1151
    %v1182 = vadd.f32 %v1111, %v1151
    %v1183 = vadd.f32 %v1112, %v1151
    %v1184 = vadd.f32 %v1113, %v1151
    %v1185 = vadd.f32 %v1114, %v1151
    %v1186 = vadd.f32 %v1115, %v1151
    %v1187 = vadd.f32 %v1116, %v1151
    %v1188 = vadd.f32 %v1117, %v1151
    %v1189 = vadd.f32 %v1118, %v1151
    %v1190 = vadd.f32 %v1119, %v1151
    %v1191 = vadd.f32 %v1120, %v1151
    %v1192 = vadd.f32 %v1121, %v1151
    %v1193 = vadd.f32 %v1122, %v1151
    %v1194 = vadd.f32 %v1123, %v1151
    %v1195 = vadd.f32 %v1124, %v1151
    %v1196 = vadd.f32 %v1125, %v1151
    %v1197 = vadd.f32 %v1126, %v1151
    %v1198 = vadd.f32 %v1127, %v1151
    %v1199 = vadd.f32 %v1128, %v1151
    %v1200 = vadd.f32 %v1129, %v1151
    %v1201 = vadd.f32 %v1130, %v1151
    %v1202 = vadd.f32 %v1131, %v1151
    %v1203 = vadd.f32 %v1132, %v1151
    %v1204 = vadd.f32 %v1133, %v1151
    %v1205 = vadd.f32 %v1134, %v1151
    %v1206 = vadd.f32 %v1135, %v1151
    %v1207 = vadd.f32 %v1136, %v1151
    %v1208 = vadd.f32 %v1137, %v1151
    %v1209 = vadd.f32 %v1138, %v1151
    %v1210 = vadd.f32 %v1139, %v1151
    %v1211 = vadd.f32 %v1140, %v1151
    %v1212 = vadd.f32 %v1141, %v1151
    %v1213 = vadd.f32 %v1142, %v1151
    %v1214 = vadd.f32 %v1143, %v1151
    %v1215 = vadd.f32 %v1144, %v1151
    %v1216 = vadd.f32 %v1145, %v1151
    %1217 = vst [vmem:[%s3] sm:$0xff] %v1153
    %1218 = vst [vmem:[%s3 + $0x8] sm:$0xff] %v1154
    %1219 = vst [vmem:[%s3 + $0x10] sm:$0xff] %v1155
    %1220 = vst [vmem:[%s3 + $0x18] sm:$0xff] %v1156
    %1221 = vst [vmem:[%s3 + $0x20] sm:$0xff] %v1157
    %1222 = vst [vmem:[%s3 + $0x28] sm:$0xff] %v1158
    %1223 = vst [vmem:[%s3 + $0x30] sm:$0xff] %v1159
    %1224 = vst [vmem:[%s3 + $0x38] sm:$0xff] %v1160
    %1225 = vst [vmem:[%s3 + $0x40] sm:$0xff] %v1161
    %1226 = vst [vmem:[%s3 + $0x48] sm:$0xff] %v1162
    %1227 = vst [vmem:[%s3 + $0x50] sm:$0xff] %v1163
    %1228 = vst [vmem:[%s3 + $0x58] sm:$0xff] %v1164
    %1229 = vst [vmem:[%s3 + $0x60] sm:$0xff] %v1165
    %1230 = vst [vmem:[%s3 + $0x68] sm:$0xff] %v1166
    %1231 = vst [vmem:[%s3 + $0x70] sm:$0xff] %v1167
    %1232 = vst [vmem:[%s3 + $0x78] sm:$0xff] %v1168
    %1233 = vst [vmem:[%s3 + $0x80] sm:$0xff] %v1169
    %1234 = vst [vmem:[%s3 + $0x88] sm:$0xff] %v1170
    %1235 = vst [vmem:[%s3 + $0x90] sm:$0xff] %v1171
    %1236 = vst [vmem:[%s3 + $0x98] sm:$0xff] %v1172
    %1237 = vst [vmem:[%s3 + $0xa0] sm:$0xff] %v1173
    %1238 = vst [vmem:[%s3 + $0xa8] sm:$0xff] %v1174
    %1239 = vst [vmem:[%s3 + $0xb0] sm:$0xff] %v1175
    %1240 = vst [vmem:[%s3 + $0xb8] sm:$0xff] %v1176
    %1241 = vst [vmem:[%s3 + $0xc0] sm:$0xff] %v1177
    %1242 = vst [vmem:[%s3 + $0xc8] sm:$0xff] %v1178
    %1243 = vst [vmem:[%s3 + $0xd0] sm:$0xff] %v1179
    %1244 = vst [vmem:[%s3 + $0xd8] sm:$0xff] %v1180
    %1245 = vst [vmem:[%s3 + $0xe0] sm:$0xff] %v1181
    %1246 = vst [vmem:[%s3 + $0xe8] sm:$0xff] %v1182
    %1247 = vst [vmem:[%s3 + $0xf0] sm:$0xff] %v1183
    %1248 = vst [vmem:[%s3 + $0xf8] sm:$0xff] %v1184
    %1249 = vst [vmem:[%s3 + $0x100] sm:$0xff] %v1185
    %1250 = vst [vmem:[%s3 + $0x108] sm:$0xff] %v1186
    %1251 = vst [vmem:[%s3 + $0x110] sm:$0xff] %v1187
    %1252 = vst [vmem:[%s3 + $0x118] sm:$0xff] %v1188
    %1253 = vst [vmem:[%s3 + $0x120] sm:$0xff] %v1189
    %1254 = vst [vmem:[%s3 + $0x128] sm:$0xff] %v1190
    %1255 = vst [vmem:[%s3 + $0x130] sm:$0xff] %v1191
    %1256 = vst [vmem:[%s3 + $0x138] sm:$0xff] %v1192
    %1257 = vst [vmem:[%s3 + $0x140] sm:$0xff] %v1193
    %1258 = vst [vmem:[%s3 + $0x148] sm:$0xff] %v1194
    %1259 = vst [vmem:[%s3 + $0x150] sm:$0xff] %v1195
    %1260 = vst [vmem:[%s3 + $0x158] sm:$0xff] %v1196
    %1261 = vst [vmem:[%s3 + $0x160] sm:$0xff] %v1197
    %1262 = vst [vmem:[%s3 + $0x168] sm:$0xff] %v1198
    %1263 = vst [vmem:[%s3 + $0x170] sm:$0xff] %v1199
    %1264 = vst [vmem:[%s3 + $0x178] sm:$0xff] %v1200
    %1265 = vst [vmem:[%s3 + $0x180] sm:$0xff] %v1201
    %1266 = vst [vmem:[%s3 + $0x188] sm:$0xff] %v1202
    %1267 = vst [vmem:[%s3 + $0x190] sm:$0xff] %v1203
    %1268 = vst [vmem:[%s3 + $0x198] sm:$0xff] %v1204
    %1269 = vst [vmem:[%s3 + $0x1a0] sm:$0xff] %v1205
    %1270 = vst [vmem:[%s3 + $0x1a8] sm:$0xff] %v1206
    %1271 = vst [vmem:[%s3 + $0x1b0] sm:$0xff] %v1207
    %1272 = vst [vmem:[%s3 + $0x1b8] sm:$0xff] %v1208
    %1273 = vst [vmem:[%s3 + $0x1c0] sm:$0xff] %v1209
    %1274 = vst [vmem:[%s3 + $0x1c8] sm:$0xff] %v1210
    %1275 = vst [vmem:[%s3 + $0x1d0] sm:$0xff] %v1211
    %1276 = vst [vmem:[%s3 + $0x1d8] sm:$0xff] %v1212
    %1277 = vst [vmem:[%s3 + $0x1e0] sm:$0xff] %v1213
    %1278 = vst [vmem:[%s3 + $0x1e8] sm:$0xff] %v1214
    %1279 = vst [vmem:[%s3 + $0x1f0] sm:$0xff] %v1215
    %1280 = vst [vmem:[%s3 + $0x1f8] sm:$0xff] %v1216
    %v1281 = vadd.f32 %v1153, %v1154
    %v1282 = vadd.f32 %v1281, %v1155
    %v1283 = vadd.f32 %v1282, %v1156
    %v1284 = vadd.f32 %v1283, %v1157
    %v1285 = vadd.f32 %v1284, %v1158
    %v1286 = vadd.f32 %v1285, %v1159
    %v1287 = vadd.f32 %v1286, %v1160
    %v1288 = vadd.f32 %v1287, %v1161
    %v1289 = vadd.f32 %v1288, %v1162
    %v1290 = vadd.f32 %v1289, %v1163
    %v1291 = vadd.f32 %v1290, %v1164
    %v1292 = vadd.f32 %v1291, %v1165
    %v1293 = vadd.f32 %v1292, %v1166
    %v1294 = vadd.f32 %v1293, %v1167
    %v1295 = vadd.f32 %v1294, %v1168
    %v1296 = vadd.f32 %v1295, %v1169
    %v1297 = vadd.f32 %v1296, %v1170
    %v1298 = vadd.f32 %v1297, %v1171
    %v1299 = vadd.f32 %v1298, %v1172
    %v1300 = vadd.f32 %v1299, %v1173
    %v1301 = vadd.f32 %v1300, %v1174
    %v1302 = vadd.f32 %v1301, %v1175
    %v1303 = vadd.f32 %v1302, %v1176
    %v1304 = vadd.f32 %v1303, %v1177
    %v1305 = vadd.f32 %v1304, %v1178
    %v1306 = vadd.f32 %v1305, %v1179
    %v1307 = vadd.f32 %v1306, %v1180
    %v1308 = vadd.f32 %v1307, %v1181
    %v1309 = vadd.f32 %v1308, %v1182
    %v1310 = vadd.f32 %v1309, %v1183
    %v1311 = vadd.f32 %v1310, %v1184
    %v1312 = vadd.f32 %v1311, %v1185
    %v1313 = vadd.f32 %v1312, %v1186
    %v1314 = vadd.f32 %v1313, %v1187
    %v1315 = vadd.f32 %v1314, %v1188
    %v1316 = vadd.f32 %v1315, %v1189
    %v1317 = vadd.f32 %v1316, %v1190
    %v1318 = vadd.f32 %v1317, %v1191
    %v1319 = vadd.f32 %v1318, %v1192
    %v1320 = vadd.f32 %v1319, %v1193
    %v1321 = vadd.f32 %v1320, %v1194
    %v1322 = vadd.f32 %v1321, %v1195
    %v1323 = vadd.f32 %v1322, %v1196
    %v1324 = vadd.f32 %v1323, %v1197
    %v1325 = vadd.f32 %v1324, %v1198
    %v1326 = vadd.f32 %v1325, %v1199
    %v1327 = vadd.f32 %v1326, %v1200
    %v1328 = vadd.f32 %v1327, %v1201
    %v1329 = vadd.f32 %v1328, %v1202
    %v1330 = vadd.f32 %v1329, %v1203
    %v1331 = vadd.f32 %v1330, %v1204
    %v1332 = vadd.f32 %v1331, %v1205
    %v1333 = vadd.f32 %v1332, %v1206
    %v1334 = vadd.f32 %v1333, %v1207
    %v1335 = vadd.f32 %v1334, %v1208
    %v1336 = vadd.f32 %v1335, %v1209
    %v1337 = vadd.f32 %v1336, %v1210
    %v1338 = vadd.f32 %v1337, %v1211
    %v1339 = vadd.f32 %v1338, %v1212
    %v1340 = vadd.f32 %v1339, %v1213
    %v1341 = vadd.f32 %v1340, %v1214
    %v1342 = vadd.f32 %v1341, %v1215
    %v1343 = vadd.f32 %v1342, %v1216
    %v1344 = vrot.slane %v1343, 4
    %v1345 = vadd.f32 %v1343, %v1344
    %v1346 = vrot.slane %v1345, 2
    %v1347 = vadd.f32 %v1345, %v1346
    %v1348 = vrot.slane %v1347, 1
    %v1349 = vadd.f32 %v1347, %v1348
    %1350 = vst [vmem:[%s4] sm:$0xff] %v1349
    %v1351 = vmul.f32 %v1153, %v1153
    %v1352 = vmul.f32 %v1154, %v1154
    %v1353 = vmul.f32 %v1155, %v1155
    %v1354 = vmul.f32 %v1156, %v1156
    %v1355 = vmul.f32 %v1157, %v1157
    %v1356 = vmul.f32 %v1158, %v1158
    %v1357 = vmul.f32 %v1159, %v1159
    %v1358 = vmul.f32 %v1160, %v1160
    %v1359 = vmul.f32 %v1161, %v1161
    %v1360 = vmul.f32 %v1162, %v1162
    %v1361 = vmul.f32 %v1163, %v1163
    %v1362 = vmul.f32 %v1164, %v1164
    %v1363 = vmul.f32 %v1165, %v1165
    %v1364 = vmul.f32 %v1166, %v1166
    %v1365 = vmul.f32 %v1167, %v1167
    %v1366 = vmul.f32 %v1168, %v1168
    %v1367 = vmul.f32 %v1169, %v1169
    %v1368 = vmul.f32 %v1170, %v1170
    %v1369 = vmul.f32 %v1171, %v1171
    %v1370 = vmul.f32 %v1172, %v1172
    %v1371 = vmul.f32 %v1173, %v1173
    %v1372 = vmul.f32 %v1174, %v1174
    %v1373 = vmul.f32 %v1175, %v1175
    %v1374 = vmul.f32 %v1176, %v1176
    %v1375 = vmul.f32 %v1177, %v1177
    %v1376 = vmul.f32 %v1178, %v1178
    %v1377 = vmul.f32 %v1179, %v1179
    %v1378 = vmul.f32 %v1180, %v1180
    %v1379 = vmul.f32 %v1181, %v1181
    %v1380 = vmul.f32 %v1182, %v1182
    %v1381 = vmul.f32 %v1183, %v1183
    %v1382 = vmul.f32 %v1184, %v1184
    %v1383 = vmul.f32 %v1185, %v1185
    %v1384 = vmul.f32 %v1186, %v1186
    %v1385 = vmul.f32 %v1187, %v1187
    %v1386 = vmul.f32 %v1188, %v1188
    %v1387 = vmul.f32 %v1189, %v1189
    %v1388 = vmul.f32 %v1190, %v1190
    %v1389 = vmul.f32 %v1191, %v1191
    %v1390 = vmul.f32 %v1192, %v1192
    %v1391 = vmul.f32 %v1193, %v1193
    %v1392 = vmul.f32 %v1194, %v1194
    %v1393 = vmul.f32 %v1195, %v1195
    %v1394 = vmul.f32 %v1196, %v1196
    %v1395 = vmul.f32 %v1197, %v1197
    %v1396 = vmul.f32 %v1198, %v1198
    %v1397 = vmul.f32 %v1199, %v1199
    %v1398 = vmul.f32 %v1200, %v1200
    %v1399 = vmul.f32 %v1201, %v1201
    %v1400 = vmul.f32 %v1202, %v1202
    %v1401 = vmul.f32 %v1203, %v1203
    %v1402 = vmul.f32 %v1204, %v1204
    %v1403 = vmul.f32 %v1205, %v1205
    %v1404 = vmul.f32 %v1206, %v1206
    %v1405 = vmul.f32 %v1207, %v1207
    %v1406 = vmul.f32 %v1208, %v1208
    %v1407 = vmul.f32 %v1209, %v1209
    %v1408 = vmul.f32 %v1210, %v1210
    %v1409 = vmul.f32 %v1211, %v1211
    %v1410 = vmul.f32 %v1212, %v1212
    %v1411 = vmul.f32 %v1213, %v1213
    %v1412 = vmul.f32 %v1214, %v1214
    %v1413 = vmul.f32 %v1215, %v1215
    %v1414 = vmul.f32 %v1216, %v1216
    %v1415 = vadd.f32 %v1351, %v1352
    %v1416 = vadd.f32 %v1415, %v1353
    %v1417 = vadd.f32 %v1416, %v1354
    %v1418 = vadd.f32 %v1417, %v1355
    %v1419 = vadd.f32 %v1418, %v1356
    %v1420 = vadd.f32 %v1419, %v1357
    %v1421 = vadd.f32 %v1420, %v1358
    %v1422 = vadd.f32 %v1421, %v1359
    %v1423 = vadd.f32 %v1422, %v1360
    %v1424 = vadd.f32 %v1423, %v1361
    %v1425 = vadd.f32 %v1424, %v1362
    %v1426 = vadd.f32 %v1425, %v1363
    %v1427 = vadd.f32 %v1426, %v1364
    %v1428 = vadd.f32 %v1427, %v1365
    %v1429 = vadd.f32 %v1428, %v1366
    %v1430 = vadd.f32 %v1429, %v1367
    %v1431 = vadd.f32 %v1430, %v1368
    %v1432 = vadd.f32 %v1431, %v1369
    %v1433 = vadd.f32 %v1432, %v1370
    %v1434 = vadd.f32 %v1433, %v1371
    %v1435 = vadd.f32 %v1434, %v1372
    %v1436 = vadd.f32 %v1435, %v1373
    %v1437 = vadd.f32 %v1436, %v1374
    %v1438 = vadd.f32 %v1437, %v1375
    %v1439 = vadd.f32 %v1438, %v1376
    %v1440 = vadd.f32 %v1439, %v1377
    %v1441 = vadd.f32 %v1440, %v1378
    %v1442 = vadd.f32 %v1441, %v1379
    %v1443 = vadd.f32 %v1442, %v1380
    %v1444 = vadd.f32 %v1443, %v1381
    %v1445 = vadd.f32 %v1444, %v1382
    %v1446 = vadd.f32 %v1445, %v1383
    %v1447 = vadd.f32 %v1446, %v1384
    %v1448 = vadd.f32 %v1447, %v1385
    %v1449 = vadd.f32 %v1448, %v1386
    %v1450 = vadd.f32 %v1449, %v1387
    %v1451 = vadd.f32 %v1450, %v1388
    %v1452 = vadd.f32 %v1451, %v1389
    %v1453 = vadd.f32 %v1452, %v1390
    %v1454 = vadd.f32 %v1453, %v1391
    %v1455 = vadd.f32 %v1454, %v1392
    %v1456 = vadd.f32 %v1455, %v1393
    %v1457 = vadd.f32 %v1456, %v1394
    %v1458 = vadd.f32 %v1457, %v1395
    %v1459 = vadd.f32 %v1458, %v1396
    %v1460 = vadd.f32 %v1459, %v1397
    %v1461 = vadd.f32 %v1460, %v1398
    %v1462 = vadd.f32 %v1461, %v1399
    %v1463 = vadd.f32 %v1462, %v1400
    %v1464 = vadd.f32 %v1463, %v1401
    %v1465 = vadd.f32 %v1464, %v1402
    %v1466 = vadd.f32 %v1465, %v1403
    %v1467 = vadd.f32 %v1466, %v1404
    %v1468 = vadd.f32 %v1467, %v1405
    %v1469 = vadd.f32 %v1468, %v1406
    %v1470 = vadd.f32 %v1469, %v1407
    %v1471 = vadd.f32 %v1470, %v1408
    %v1472 = vadd.f32 %v1471, %v1409
    %v1473 = vadd.f32 %v1472, %v1410
    %v1474 = vadd.f32 %v1473, %v1411
    %v1475 = vadd.f32 %v1474, %v1412
    %v1476 = vadd.f32 %v1475, %v1413
    %v1477 = vadd.f32 %v1476, %v1414
    %v1478 = vrot.slane %v1477, 4
    %v1479 = vadd.f32 %v1477, %v1478
    %v1480 = vrot.slane %v1479, 2
    %v1481 = vadd.f32 %v1479, %v1480
    %v1482 = vrot.slane %v1481, 1
    %v1483 = vadd.f32 %v1481, %v1482
    %1484 = vst [vmem:[%s5] sm:$0xff] %v1483
  $region21: #{unet3d_forward.69} parent=0 // pred_fallthru
    _
  // Predicated region
  $region22: #{unet3d_forward.69} parent=0 // pred_check
    _
  $region23: #{unet3d_forward.69} parent=0 // pred_check_branch
    %1486 = sbr.rel (0) target = $region25
  $region24: #{unet3d_forward.69} parent=0 // pred_region
    _
  $region25: #{unet3d_forward.69} parent=0 // pred_fallthru
    _
  // Predicated region
  $region26: #{unet3d_forward.69} parent=0 // pred_check
    _
  $region27: #{unet3d_forward.69} parent=0 // pred_check_branch
    %1488 = sbr.rel (0) target = $region29
  $region28: #{unet3d_forward.69} parent=0 // pred_region
    _
  $region29: #{unet3d_forward.69} parent=0 // pred_fallthru
    _
  // Predicated region
  $region30: #{unet3d_forward.69} parent=0 // pred_check
    _
  $region31: #{unet3d_forward.69} parent=0 // pred_check_branch
    %1490 = sbr.rel (0) target = $region33
  $region32: #{unet3d_forward.69} parent=0 // pred_region
    _
  $region33: #{unet3d_forward.69} parent=0 // pred_fallthru
    _
  // Predicated region
  $region34: #{unet3d_forward.69} parent=0 // pred_check
    _
  $region35: #{unet3d_forward.69} parent=0 // pred_check_branch
    %1492 = sbr.rel (0) target = $region37
  $region36: #{unet3d_forward.69} parent=0 // pred_region
    _
  $region37: #{unet3d_forward.69} parent=0 // pred_fallthru
    _
  // Predicated region
  $region38: #{unet3d_forward.69} parent=0 // pred_check
    _
  $region39: #{unet3d_forward.69} parent=0 // pred_check_branch
    %1494 = sbr.rel (0) target = $region41
  $region40: #{unet3d_forward.69} parent=0 // pred_region
    _
  $region41: #{unet3d_forward.69} parent=0 // pred_fallthru
    _
  // Predicated region
  $region42: #{unet3d_forward.69} parent=0 // pred_check
    _
  $region43: #{unet3d_forward.69} parent=0 // pred_check_branch
    %1496 = sbr.rel (0) target = $region45
  $region44: #{unet3d_forward.69} parent=0 // pred_region
    _
  $region45: #{unet3d_forward.69} parent=0 // pred_fallthru
    _

// kernel: unet3d_forward.73
$region0: #{unet3d_forward.73}
  #allocation0 [shape = 'u32[]', space=smem, size = 0x4, offset = 0x4, fixed_abs, tag = 'smem constant byte address 0x4 - core index']
  #allocation1 [shape = 'u32[144,128]{1,0:T(1,128)}', space=vmem, size = 0x12000, scoped, tag = 'internal scratch']
  #allocation2 [shape = 'f32[512,128]{1,0:T(8,128)}', space=vmem, size = 0x40000, scoped, tag = 'scratch operand']
  %s0 = inlined_call_operand.vmem [shape: bf16[512,128], index: 0, kind: input, shape index: {}]
  %s1 = inlined_call_operand.vmem [shape: bf16[128,128], index: 1, kind: input, shape index: {}]
  %s2 = inlined_call_operand.vmem [shape: f32[1,128], index: 2, kind: input, shape index: {}]
  %s3 = inlined_call_operand.vmem [shape: f32[512,128], index: 3, kind: output, shape index: {0}]
  %s4 = inlined_call_operand.hbm [shape: f32[1,8,128], index: 4, kind: output, shape index: {1}]
  %s5 = inlined_call_operand.hbm [shape: f32[1,8,128], index: 5, kind: output, shape index: {2}]
  %6 = xla_tuple %s3, %s4, %s5
  %s7 = sld [smem:[#allocation0]]
  $region46: #{unet3d_forward.73} parent=0
    _
  %s9 = ssub.s32 1, %s7
  %s10 = scalar_select 0, %s9, %s7
  $region1: #{unet3d_forward.73} parent=0
    #allocation3 [shape = 'u8[4096]{0}', space=vmem, size = 0x1000, scoped, tag = 'output window, operand 1, single buffered']
    #allocation4 [shape = 's32[1]{0}', space=sflag, size = 0x4, scoped, tag = 'scoped memory for unet3d_forward.73']
    #allocation5 [shape = 'u8[4096]{0}', space=vmem, size = 0x1000, scoped, tag = 'output window, operand 2, single buffered']
    #allocation6 [shape = 's32[1]{0}', space=sflag, size = 0x4, scoped, tag = 'scoped memory for unet3d_forward.73']
    %11 = vsyncpa [#allocation4], 0
    %12 = vsyncpa [#allocation6], 0
    // Predicated region
    $region2: #{unet3d_forward.73} parent=1 // pred_check
      _
    $region3: #{unet3d_forward.73} parent=1 // pred_check_branch
      %14 = sbr.rel (0) target = $region5
    $region4: #{unet3d_forward.73} parent=1 // pred_region
      _
    $region5: #{unet3d_forward.73} parent=1 // pred_fallthru
      _
    // Predicated region
    $region6: #{unet3d_forward.73} parent=1 // pred_check
      _
    $region7: #{unet3d_forward.73} parent=1 // pred_check_branch
      %16 = sbr.rel (0) target = $region9
    $region8: #{unet3d_forward.73} parent=1 // pred_region
      _
    $region9: #{unet3d_forward.73} parent=1 // pred_fallthru
      _
    // Predicated region
    $region10: #{unet3d_forward.73} parent=1 // pred_check
      _
    $region11: #{unet3d_forward.73} parent=1 // pred_check_branch
      %18 = sbr.rel (0) target = $region13
    $region12: #{unet3d_forward.73} parent=1 // pred_region
      _
    $region13: #{unet3d_forward.73} parent=1 // pred_fallthru
      _
    %p20 = scmp.eq.s32.totalorder 0, 0
    // Predicated region
    $region14: #{unet3d_forward.73} parent=1 // pred_check
      %p21 = pneg %p20
    $region15: #{unet3d_forward.73} parent=1 // pred_check_branch
      %23 = sbr.rel (%p21) target = $region17
    $region16: #{unet3d_forward.73} parent=1 // pred_region
      %24 = vst [vmem:[#allocation2] sm:$0xff] 0.0
      %25 = vst [vmem:[#allocation2 + $0x8] sm:$0xff] 0.0
      %26 = vst [vmem:[#allocation2 + $0x10] sm:$0xff] 0.0
      %27 = vst [vmem:[#allocation2 + $0x18] sm:$0xff] 0.0
      %28 = vst [vmem:[#allocation2 + $0x20] sm:$0xff] 0.0
      %29 = vst [vmem:[#allocation2 + $0x28] sm:$0xff] 0.0
      %30 = vst [vmem:[#allocation2 + $0x30] sm:$0xff] 0.0
      %31 = vst [vmem:[#allocation2 + $0x38] sm:$0xff] 0.0
      %32 = vst [vmem:[#allocation2 + $0x40] sm:$0xff] 0.0
      %33 = vst [vmem:[#allocation2 + $0x48] sm:$0xff] 0.0
      %34 = vst [vmem:[#allocation2 + $0x50] sm:$0xff] 0.0
      %35 = vst [vmem:[#allocation2 + $0x58] sm:$0xff] 0.0
      %36 = vst [vmem:[#allocation2 + $0x60] sm:$0xff] 0.0
      %37 = vst [vmem:[#allocation2 + $0x68] sm:$0xff] 0.0
      %38 = vst [vmem:[#allocation2 + $0x70] sm:$0xff] 0.0
      %39 = vst [vmem:[#allocation2 + $0x78] sm:$0xff] 0.0
      %40 = vst [vmem:[#allocation2 + $0x80] sm:$0xff] 0.0
      %41 = vst [vmem:[#allocation2 + $0x88] sm:$0xff] 0.0
      %42 = vst [vmem:[#allocation2 + $0x90] sm:$0xff] 0.0
      %43 = vst [vmem:[#allocation2 + $0x98] sm:$0xff] 0.0
      %44 = vst [vmem:[#allocation2 + $0xa0] sm:$0xff] 0.0
      %45 = vst [vmem:[#allocation2 + $0xa8] sm:$0xff] 0.0
      %46 = vst [vmem:[#allocation2 + $0xb0] sm:$0xff] 0.0
      %47 = vst [vmem:[#allocation2 + $0xb8] sm:$0xff] 0.0
      %48 = vst [vmem:[#allocation2 + $0xc0] sm:$0xff] 0.0
      %49 = vst [vmem:[#allocation2 + $0xc8] sm:$0xff] 0.0
      %50 = vst [vmem:[#allocation2 + $0xd0] sm:$0xff] 0.0
      %51 = vst [vmem:[#allocation2 + $0xd8] sm:$0xff] 0.0
      %52 = vst [vmem:[#allocation2 + $0xe0] sm:$0xff] 0.0
      %53 = vst [vmem:[#allocation2 + $0xe8] sm:$0xff] 0.0
      %54 = vst [vmem:[#allocation2 + $0xf0] sm:$0xff] 0.0
      %55 = vst [vmem:[#allocation2 + $0xf8] sm:$0xff] 0.0
      %56 = vst [vmem:[#allocation2 + $0x100] sm:$0xff] 0.0
      %57 = vst [vmem:[#allocation2 + $0x108] sm:$0xff] 0.0
      %58 = vst [vmem:[#allocation2 + $0x110] sm:$0xff] 0.0
      %59 = vst [vmem:[#allocation2 + $0x118] sm:$0xff] 0.0
      %60 = vst [vmem:[#allocation2 + $0x120] sm:$0xff] 0.0
      %61 = vst [vmem:[#allocation2 + $0x128] sm:$0xff] 0.0
      %62 = vst [vmem:[#allocation2 + $0x130] sm:$0xff] 0.0
      %63 = vst [vmem:[#allocation2 + $0x138] sm:$0xff] 0.0
      %64 = vst [vmem:[#allocation2 + $0x140] sm:$0xff] 0.0
      %65 = vst [vmem:[#allocation2 + $0x148] sm:$0xff] 0.0
      %66 = vst [vmem:[#allocation2 + $0x150] sm:$0xff] 0.0
      %67 = vst [vmem:[#allocation2 + $0x158] sm:$0xff] 0.0
      %68 = vst [vmem:[#allocation2 + $0x160] sm:$0xff] 0.0
      %69 = vst [vmem:[#allocation2 + $0x168] sm:$0xff] 0.0
      %70 = vst [vmem:[#allocation2 + $0x170] sm:$0xff] 0.0
      %71 = vst [vmem:[#allocation2 + $0x178] sm:$0xff] 0.0
      %72 = vst [vmem:[#allocation2 + $0x180] sm:$0xff] 0.0
      %73 = vst [vmem:[#allocation2 + $0x188] sm:$0xff] 0.0
      %74 = vst [vmem:[#allocation2 + $0x190] sm:$0xff] 0.0
      %75 = vst [vmem:[#allocation2 + $0x198] sm:$0xff] 0.0
      %76 = vst [vmem:[#allocation2 + $0x1a0] sm:$0xff] 0.0
      %77 = vst [vmem:[#allocation2 + $0x1a8] sm:$0xff] 0.0
      %78 = vst [vmem:[#allocation2 + $0x1b0] sm:$0xff] 0.0
      %79 = vst [vmem:[#allocation2 + $0x1b8] sm:$0xff] 0.0
      %80 = vst [vmem:[#allocation2 + $0x1c0] sm:$0xff] 0.0
      %81 = vst [vmem:[#allocation2 + $0x1c8] sm:$0xff] 0.0
      %82 = vst [vmem:[#allocation2 + $0x1d0] sm:$0xff] 0.0
      %83 = vst [vmem:[#allocation2 + $0x1d8] sm:$0xff] 0.0
      %84 = vst [vmem:[#allocation2 + $0x1e0] sm:$0xff] 0.0
      %85 = vst [vmem:[#allocation2 + $0x1e8] sm:$0xff] 0.0
      %86 = vst [vmem:[#allocation2 + $0x1f0] sm:$0xff] 0.0
      %87 = vst [vmem:[#allocation2 + $0x1f8] sm:$0xff] 0.0
    $region17: #{unet3d_forward.73} parent=1 // pred_fallthru
      _
    %v88 = vld [vmem:[#allocation2] sm:$0xff]
    %v89 = vld [vmem:[#allocation2 + $0x8] sm:$0xff]
    %v90 = vld [vmem:[#allocation2 + $0x10] sm:$0xff]
    %v91 = vld [vmem:[#allocation2 + $0x18] sm:$0xff]
    %v92 = vld [vmem:[#allocation2 + $0x20] sm:$0xff]
    %v93 = vld [vmem:[#allocation2 + $0x28] sm:$0xff]
    %v94 = vld [vmem:[#allocation2 + $0x30] sm:$0xff]
    %v95 = vld [vmem:[#allocation2 + $0x38] sm:$0xff]
    %v96 = vld [vmem:[#allocation2 + $0x40] sm:$0xff]
    %v97 = vld [vmem:[#allocation2 + $0x48] sm:$0xff]
    %v98 = vld [vmem:[#allocation2 + $0x50] sm:$0xff]
    %v99 = vld [vmem:[#allocation2 + $0x58] sm:$0xff]
    %v100 = vld [vmem:[#allocation2 + $0x60] sm:$0xff]
    %v101 = vld [vmem:[#allocation2 + $0x68] sm:$0xff]
    %v102 = vld [vmem:[#allocation2 + $0x70] sm:$0xff]
    %v103 = vld [vmem:[#allocation2 + $0x78] sm:$0xff]
    %v104 = vld [vmem:[#allocation2 + $0x80] sm:$0xff]
    %v105 = vld [vmem:[#allocation2 + $0x88] sm:$0xff]
    %v106 = vld [vmem:[#allocation2 + $0x90] sm:$0xff]
    %v107 = vld [vmem:[#allocation2 + $0x98] sm:$0xff]
    %v108 = vld [vmem:[#allocation2 + $0xa0] sm:$0xff]
    %v109 = vld [vmem:[#allocation2 + $0xa8] sm:$0xff]
    %v110 = vld [vmem:[#allocation2 + $0xb0] sm:$0xff]
    %v111 = vld [vmem:[#allocation2 + $0xb8] sm:$0xff]
    %v112 = vld [vmem:[#allocation2 + $0xc0] sm:$0xff]
    %v113 = vld [vmem:[#allocation2 + $0xc8] sm:$0xff]
    %v114 = vld [vmem:[#allocation2 + $0xd0] sm:$0xff]
    %v115 = vld [vmem:[#allocation2 + $0xd8] sm:$0xff]
    %v116 = vld [vmem:[#allocation2 + $0xe0] sm:$0xff]
    %v117 = vld [vmem:[#allocation2 + $0xe8] sm:$0xff]
    %v118 = vld [vmem:[#allocation2 + $0xf0] sm:$0xff]
    %v119 = vld [vmem:[#allocation2 + $0xf8] sm:$0xff]
    %v120 = vld [vmem:[#allocation2 + $0x100] sm:$0xff]
    %v121 = vld [vmem:[#allocation2 + $0x108] sm:$0xff]
    %v122 = vld [vmem:[#allocation2 + $0x110] sm:$0xff]
    %v123 = vld [vmem:[#allocation2 + $0x118] sm:$0xff]
    %v124 = vld [vmem:[#allocation2 + $0x120] sm:$0xff]
    %v125 = vld [vmem:[#allocation2 + $0x128] sm:$0xff]
    %v126 = vld [vmem:[#allocation2 + $0x130] sm:$0xff]
    %v127 = vld [vmem:[#allocation2 + $0x138] sm:$0xff]
    %v128 = vld [vmem:[#allocation2 + $0x140] sm:$0xff]
    %v129 = vld [vmem:[#allocation2 + $0x148] sm:$0xff]
    %v130 = vld [vmem:[#allocation2 + $0x150] sm:$0xff]
    %v131 = vld [vmem:[#allocation2 + $0x158] sm:$0xff]
    %v132 = vld [vmem:[#allocation2 + $0x160] sm:$0xff]
    %v133 = vld [vmem:[#allocation2 + $0x168] sm:$0xff]
    %v134 = vld [vmem:[#allocation2 + $0x170] sm:$0xff]
    %v135 = vld [vmem:[#allocation2 + $0x178] sm:$0xff]
    %v136 = vld [vmem:[#allocation2 + $0x180] sm:$0xff]
    %v137 = vld [vmem:[#allocation2 + $0x188] sm:$0xff]
    %v138 = vld [vmem:[#allocation2 + $0x190] sm:$0xff]
    %v139 = vld [vmem:[#allocation2 + $0x198] sm:$0xff]
    %v140 = vld [vmem:[#allocation2 + $0x1a0] sm:$0xff]
    %v141 = vld [vmem:[#allocation2 + $0x1a8] sm:$0xff]
    %v142 = vld [vmem:[#allocation2 + $0x1b0] sm:$0xff]
    %v143 = vld [vmem:[#allocation2 + $0x1b8] sm:$0xff]
    %v144 = vld [vmem:[#allocation2 + $0x1c0] sm:$0xff]
    %v145 = vld [vmem:[#allocation2 + $0x1c8] sm:$0xff]
    %v146 = vld [vmem:[#allocation2 + $0x1d0] sm:$0xff]
    %v147 = vld [vmem:[#allocation2 + $0x1d8] sm:$0xff]
    %v148 = vld [vmem:[#allocation2 + $0x1e0] sm:$0xff]
    %v149 = vld [vmem:[#allocation2 + $0x1e8] sm:$0xff]
    %v150 = vld [vmem:[#allocation2 + $0x1f0] sm:$0xff]
    %v151 = vld [vmem:[#allocation2 + $0x1f8] sm:$0xff]
    %v152 = vld [vmem:[%s0] sm:$0xf]
    %v153 = vld [vmem:[%s0 + $0x4] sm:$0xf]
    %v154 = vld [vmem:[%s0 + $0x8] sm:$0xf]
    %v155 = vld [vmem:[%s0 + $0xc] sm:$0xf]
    %v156 = vld [vmem:[%s0 + $0x10] sm:$0xf]
    %v157 = vld [vmem:[%s0 + $0x14] sm:$0xf]
    %v158 = vld [vmem:[%s0 + $0x18] sm:$0xf]
    %v159 = vld [vmem:[%s0 + $0x1c] sm:$0xf]
    %v160 = vld [vmem:[%s0 + $0x20] sm:$0xf]
    %v161 = vld [vmem:[%s0 + $0x24] sm:$0xf]
    %v162 = vld [vmem:[%s0 + $0x28] sm:$0xf]
    %v163 = vld [vmem:[%s0 + $0x2c] sm:$0xf]
    %v164 = vld [vmem:[%s0 + $0x30] sm:$0xf]
    %v165 = vld [vmem:[%s0 + $0x34] sm:$0xf]
    %v166 = vld [vmem:[%s0 + $0x38] sm:$0xf]
    %v167 = vld [vmem:[%s0 + $0x3c] sm:$0xf]
    %v168 = vld [vmem:[%s0 + $0x40] sm:$0xf]
    %v169 = vld [vmem:[%s0 + $0x44] sm:$0xf]
    %v170 = vld [vmem:[%s0 + $0x48] sm:$0xf]
    %v171 = vld [vmem:[%s0 + $0x4c] sm:$0xf]
    %v172 = vld [vmem:[%s0 + $0x50] sm:$0xf]
    %v173 = vld [vmem:[%s0 + $0x54] sm:$0xf]
    %v174 = vld [vmem:[%s0 + $0x58] sm:$0xf]
    %v175 = vld [vmem:[%s0 + $0x5c] sm:$0xf]
    %v176 = vld [vmem:[%s0 + $0x60] sm:$0xf]
    %v177 = vld [vmem:[%s0 + $0x64] sm:$0xf]
    %v178 = vld [vmem:[%s0 + $0x68] sm:$0xf]
    %v179 = vld [vmem:[%s0 + $0x6c] sm:$0xf]
    %v180 = vld [vmem:[%s0 + $0x70] sm:$0xf]
    %v181 = vld [vmem:[%s0 + $0x74] sm:$0xf]
    %v182 = vld [vmem:[%s0 + $0x78] sm:$0xf]
    %v183 = vld [vmem:[%s0 + $0x7c] sm:$0xf]
    %v184 = vld [vmem:[%s0 + $0x80] sm:$0xf]
    %v185 = vld [vmem:[%s0 + $0x84] sm:$0xf]
    %v186 = vld [vmem:[%s0 + $0x88] sm:$0xf]
    %v187 = vld [vmem:[%s0 + $0x8c] sm:$0xf]
    %v188 = vld [vmem:[%s0 + $0x90] sm:$0xf]
    %v189 = vld [vmem:[%s0 + $0x94] sm:$0xf]
    %v190 = vld [vmem:[%s0 + $0x98] sm:$0xf]
    %v191 = vld [vmem:[%s0 + $0x9c] sm:$0xf]
    %v192 = vld [vmem:[%s0 + $0xa0] sm:$0xf]
    %v193 = vld [vmem:[%s0 + $0xa4] sm:$0xf]
    %v194 = vld [vmem:[%s0 + $0xa8] sm:$0xf]
    %v195 = vld [vmem:[%s0 + $0xac] sm:$0xf]
    %v196 = vld [vmem:[%s0 + $0xb0] sm:$0xf]
    %v197 = vld [vmem:[%s0 + $0xb4] sm:$0xf]
    %v198 = vld [vmem:[%s0 + $0xb8] sm:$0xf]
    %v199 = vld [vmem:[%s0 + $0xbc] sm:$0xf]
    %v200 = vld [vmem:[%s0 + $0xc0] sm:$0xf]
    %v201 = vld [vmem:[%s0 + $0xc4] sm:$0xf]
    %v202 = vld [vmem:[%s0 + $0xc8] sm:$0xf]
    %v203 = vld [vmem:[%s0 + $0xcc] sm:$0xf]
    %v204 = vld [vmem:[%s0 + $0xd0] sm:$0xf]
    %v205 = vld [vmem:[%s0 + $0xd4] sm:$0xf]
    %v206 = vld [vmem:[%s0 + $0xd8] sm:$0xf]
    %v207 = vld [vmem:[%s0 + $0xdc] sm:$0xf]
    %v208 = vld [vmem:[%s0 + $0xe0] sm:$0xf]
    %v209 = vld [vmem:[%s0 + $0xe4] sm:$0xf]
    %v210 = vld [vmem:[%s0 + $0xe8] sm:$0xf]
    %v211 = vld [vmem:[%s0 + $0xec] sm:$0xf]
    %v212 = vld [vmem:[%s0 + $0xf0] sm:$0xf]
    %v213 = vld [vmem:[%s0 + $0xf4] sm:$0xf]
    %v214 = vld [vmem:[%s0 + $0xf8] sm:$0xf]
    %v215 = vld [vmem:[%s0 + $0xfc] sm:$0xf]
    %v216 = vld [vmem:[%s1] sm:$0xf]
    %v217 = vld [vmem:[%s1 + $0x4] sm:$0xf]
    %v218 = vld [vmem:[%s1 + $0x8] sm:$0xf]
    %v219 = vld [vmem:[%s1 + $0xc] sm:$0xf]
    %v220 = vld [vmem:[%s1 + $0x10] sm:$0xf]
    %v221 = vld [vmem:[%s1 + $0x14] sm:$0xf]
    %v222 = vld [vmem:[%s1 + $0x18] sm:$0xf]
    %v223 = vld [vmem:[%s1 + $0x1c] sm:$0xf]
    %v224 = vld [vmem:[%s1 + $0x20] sm:$0xf]
    %v225 = vld [vmem:[%s1 + $0x24] sm:$0xf]
    %v226 = vld [vmem:[%s1 + $0x28] sm:$0xf]
    %v227 = vld [vmem:[%s1 + $0x2c] sm:$0xf]
    %v228 = vld [vmem:[%s1 + $0x30] sm:$0xf]
    %v229 = vld [vmem:[%s1 + $0x34] sm:$0xf]
    %v230 = vld [vmem:[%s1 + $0x38] sm:$0xf]
    %v231 = vld [vmem:[%s1 + $0x3c] sm:$0xf]
    %v296 = vunpack.c.l.b16 %v152
    %v297 = vunpack.c.l.b16 %v153
    %v298 = vunpack.c.l.b16 %v154
    %v299 = vunpack.c.l.b16 %v155
    %v300 = vunpack.c.l.b16 %v156
    %v301 = vunpack.c.l.b16 %v157
    %v302 = vunpack.c.l.b16 %v158
    %v303 = vunpack.c.l.b16 %v159
    %v304 = vunpack.c.l.b16 %v160
    %v305 = vunpack.c.l.b16 %v161
    %v306 = vunpack.c.l.b16 %v162
    %v307 = vunpack.c.l.b16 %v163
    %v308 = vunpack.c.l.b16 %v164
    %v309 = vunpack.c.l.b16 %v165
    %v310 = vunpack.c.l.b16 %v166
    %v311 = vunpack.c.l.b16 %v167
    %v312 = vunpack.c.l.b16 %v168
    %v313 = vunpack.c.l.b16 %v169
    %v314 = vunpack.c.l.b16 %v170
    %v315 = vunpack.c.l.b16 %v171
    %v316 = vunpack.c.l.b16 %v172
    %v317 = vunpack.c.l.b16 %v173
    %v318 = vunpack.c.l.b16 %v174
    %v319 = vunpack.c.l.b16 %v175
    %v320 = vunpack.c.l.b16 %v176
    %v321 = vunpack.c.l.b16 %v177
    %v322 = vunpack.c.l.b16 %v178
    %v323 = vunpack.c.l.b16 %v179
    %v324 = vunpack.c.l.b16 %v180
    %v325 = vunpack.c.l.b16 %v181
    %v326 = vunpack.c.l.b16 %v182
    %v327 = vunpack.c.l.b16 %v183
    %v328 = vunpack.c.l.b16 %v184
    %v329 = vunpack.c.l.b16 %v185
    %v330 = vunpack.c.l.b16 %v186
    %v331 = vunpack.c.l.b16 %v187
    %v332 = vunpack.c.l.b16 %v188
    %v333 = vunpack.c.l.b16 %v189
    %v334 = vunpack.c.l.b16 %v190
    %v335 = vunpack.c.l.b16 %v191
    %v336 = vunpack.c.l.b16 %v192
    %v337 = vunpack.c.l.b16 %v193
    %v338 = vunpack.c.l.b16 %v194
    %v339 = vunpack.c.l.b16 %v195
    %v340 = vunpack.c.l.b16 %v196
    %v341 = vunpack.c.l.b16 %v197
    %v342 = vunpack.c.l.b16 %v198
    %v343 = vunpack.c.l.b16 %v199
    %v344 = vunpack.c.l.b16 %v200
    %v345 = vunpack.c.l.b16 %v201
    %v346 = vunpack.c.l.b16 %v202
    %v347 = vunpack.c.l.b16 %v203
    %v348 = vunpack.c.l.b16 %v204
    %v349 = vunpack.c.l.b16 %v205
    %v350 = vunpack.c.l.b16 %v206
    %v351 = vunpack.c.l.b16 %v207
    %v352 = vunpack.c.l.b16 %v208
    %v353 = vunpack.c.l.b16 %v209
    %v354 = vunpack.c.l.b16 %v210
    %v355 = vunpack.c.l.b16 %v211
    %v356 = vunpack.c.l.b16 %v212
    %v357 = vunpack.c.l.b16 %v213
    %v358 = vunpack.c.l.b16 %v214
    %v359 = vunpack.c.l.b16 %v215
    %v360 = vpack.c.b16 %v297, %v296
    %v361 = vpack.c.b16 %v299, %v298
    %v362 = vpack.c.b16 %v301, %v300
    %v363 = vpack.c.b16 %v303, %v302
    %v364 = vpack.c.b16 %v305, %v304
    %v365 = vpack.c.b16 %v307, %v306
    %v366 = vpack.c.b16 %v309, %v308
    %v367 = vpack.c.b16 %v311, %v310
    %v368 = vpack.c.b16 %v313, %v312
    %v369 = vpack.c.b16 %v315, %v314
    %v370 = vpack.c.b16 %v317, %v316
    %v371 = vpack.c.b16 %v319, %v318
    %v372 = vpack.c.b16 %v321, %v320
    %v373 = vpack.c.b16 %v323, %v322
    %v374 = vpack.c.b16 %v325, %v324
    %v375 = vpack.c.b16 %v327, %v326
    %v376 = vpack.c.b16 %v329, %v328
    %v377 = vpack.c.b16 %v331, %v330
    %v378 = vpack.c.b16 %v333, %v332
    %v379 = vpack.c.b16 %v335, %v334
    %v380 = vpack.c.b16 %v337, %v336
    %v381 = vpack.c.b16 %v339, %v338
    %v382 = vpack.c.b16 %v341, %v340
    %v383 = vpack.c.b16 %v343, %v342
    %v384 = vpack.c.b16 %v345, %v344
    %v385 = vpack.c.b16 %v347, %v346
    %v386 = vpack.c.b16 %v349, %v348
    %v387 = vpack.c.b16 %v351, %v350
    %v388 = vpack.c.b16 %v353, %v352
    %v389 = vpack.c.b16 %v355, %v354
    %v390 = vpack.c.b16 %v357, %v356
    %v391 = vpack.c.b16 %v359, %v358
    %v440 = vunpack.c.l.b16 %v216
    %v441 = vunpack.c.l.b16 %v217
    %v442 = vunpack.c.l.b16 %v218
    %v443 = vunpack.c.l.b16 %v219
    %v444 = vunpack.c.l.b16 %v220
    %v445 = vunpack.c.l.b16 %v221
    %v446 = vunpack.c.l.b16 %v222
    %v447 = vunpack.c.l.b16 %v223
    %v448 = vunpack.c.l.b16 %v224
    %v449 = vunpack.c.l.b16 %v225
    %v450 = vunpack.c.l.b16 %v226
    %v451 = vunpack.c.l.b16 %v227
    %v452 = vunpack.c.l.b16 %v228
    %v453 = vunpack.c.l.b16 %v229
    %v454 = vunpack.c.l.b16 %v230
    %v455 = vunpack.c.l.b16 %v231
    %v456 = vpack.c.b16 %v441, %v440
    %v457 = vpack.c.b16 %v443, %v442
    %v458 = vpack.c.b16 %v445, %v444
    %v459 = vpack.c.b16 %v447, %v446
    %v460 = vpack.c.b16 %v449, %v448
    %v461 = vpack.c.b16 %v451, %v450
    %v462 = vpack.c.b16 %v453, %v452
    %v463 = vpack.c.b16 %v455, %v454
    %472 = vmatprep.subr.bf16.mxu0 0
    %473 = vmatpush1.bf16.msra.mxu0 %v463
    %474 = vmatprep.subr.bf16.mxu0 0
    %475 = vmatpush1.bf16.msra.mxu0 %v462
    %476 = vmatprep.subr.bf16.mxu0 0
    %477 = vmatpush1.bf16.msra.mxu0 %v461
    %478 = vmatprep.subr.bf16.mxu0 0
    %479 = vmatpush1.bf16.msra.mxu0 %v460
    %480 = vmatprep.subr.bf16.mxu0 0
    %481 = vmatpush1.bf16.msra.mxu0 %v459
    %482 = vmatprep.subr.bf16.mxu0 0
    %483 = vmatpush1.bf16.msra.mxu0 %v458
    %484 = vmatprep.subr.bf16.mxu0 0
    %485 = vmatpush1.bf16.msra.mxu0 %v457
    %486 = vmatprep.subr.bf16.mxu0 0
    %487 = vmatpush1.bf16.msra.mxu0 %v456
    %488 = vmatprep.subr.bf16.mxu0 0
    %489 = vmatpush2.bf16.msra.mxu0 0
    %490 = vmatprep.subr.bf16.mxu0 0
    %491 = vmatpush2.bf16.msra.mxu0 0
    %492 = vmatprep.subr.bf16.mxu0 0
    %493 = vmatpush2.bf16.msra.mxu0 0
    %494 = vmatprep.subr.bf16.mxu0 0
    %495 = vmatpush2.bf16.msra.mxu0 0
    %496 = vmatprep.subr.bf16.mxu0 0
    %497 = vmatpush2.bf16.msra.mxu0 0
    %498 = vmatprep.subr.bf16.mxu0 0
    %499 = vmatpush2.bf16.msra.mxu0 0
    %500 = vmatprep.subr.bf16.mxu0 0
    %501 = vmatpush2.bf16.msra.mxu0 0
    %502 = vmatprep.subr.bf16.mxu0 0
    %503 = vmatpush2.bf16.msra.mxu0 0
    %504 = vmatprep.mubr.bf16.mxu0 0
    %505 = vmatmul.mubr.bf16.gmra.mxu0 %v360
    %v506 = vpop.f32.mrf.mxu0
    %v507 = vadd.f32 0.0, %v506
    %v508 = vpop.f32.mrf.mxu0
    %v509 = vpop.f32.mrf.mxu0
    %v510 = vadd.f32 0.0, %v509
    %v511 = vpop.f32.mrf.mxu0
    %512 = vmatprep.mubr.bf16.mxu0 0
    %513 = vmatmul.mubr.bf16.gmra.mxu0 %v361
    %v514 = vpop.f32.mrf.mxu0
    %v515 = vadd.f32 0.0, %v514
    %v516 = vpop.f32.mrf.mxu0
    %v517 = vpop.f32.mrf.mxu0
    %v518 = vadd.f32 0.0, %v517
    %v519 = vpop.f32.mrf.mxu0
    %520 = vmatprep.mubr.bf16.mxu0 0
    %521 = vmatmul.mubr.bf16.gmra.mxu0 %v362
    %v522 = vpop.f32.mrf.mxu0
    %v523 = vadd.f32 0.0, %v522
    %v524 = vpop.f32.mrf.mxu0
    %v525 = vpop.f32.mrf.mxu0
    %v526 = vadd.f32 0.0, %v525
    %v527 = vpop.f32.mrf.mxu0
    %528 = vmatprep.mubr.bf16.mxu0 0
    %529 = vmatmul.mubr.bf16.gmra.mxu0 %v363
    %v530 = vpop.f32.mrf.mxu0
    %v531 = vadd.f32 0.0, %v530
    %v532 = vpop.f32.mrf.mxu0
    %v533 = vpop.f32.mrf.mxu0
    %v534 = vadd.f32 0.0, %v533
    %v535 = vpop.f32.mrf.mxu0
    %536 = vmatprep.mubr.bf16.mxu0 0
    %537 = vmatmul.mubr.bf16.gmra.mxu0 %v364
    %v538 = vpop.f32.mrf.mxu0
    %v539 = vadd.f32 0.0, %v538
    %v540 = vpop.f32.mrf.mxu0
    %v541 = vpop.f32.mrf.mxu0
    %v542 = vadd.f32 0.0, %v541
    %v543 = vpop.f32.mrf.mxu0
    %544 = vmatprep.mubr.bf16.mxu0 0
    %545 = vmatmul.mubr.bf16.gmra.mxu0 %v365
    %v546 = vpop.f32.mrf.mxu0
    %v547 = vadd.f32 0.0, %v546
    %v548 = vpop.f32.mrf.mxu0
    %v549 = vpop.f32.mrf.mxu0
    %v550 = vadd.f32 0.0, %v549
    %v551 = vpop.f32.mrf.mxu0
    %552 = vmatprep.mubr.bf16.mxu0 0
    %553 = vmatmul.mubr.bf16.gmra.mxu0 %v366
    %v554 = vpop.f32.mrf.mxu0
    %v555 = vadd.f32 0.0, %v554
    %v556 = vpop.f32.mrf.mxu0
    %v557 = vpop.f32.mrf.mxu0
    %v558 = vadd.f32 0.0, %v557
    %v559 = vpop.f32.mrf.mxu0
    %560 = vmatprep.mubr.bf16.mxu0 0
    %561 = vmatmul.mubr.bf16.gmra.mxu0 %v367
    %v562 = vpop.f32.mrf.mxu0
    %v563 = vadd.f32 0.0, %v562
    %v564 = vpop.f32.mrf.mxu0
    %v565 = vpop.f32.mrf.mxu0
    %v566 = vadd.f32 0.0, %v565
    %v567 = vpop.f32.mrf.mxu0
    %568 = vmatprep.mubr.bf16.mxu0 0
    %569 = vmatmul.mubr.bf16.gmra.mxu0 %v368
    %v570 = vpop.f32.mrf.mxu0
    %v571 = vadd.f32 0.0, %v570
    %v572 = vpop.f32.mrf.mxu0
    %v573 = vpop.f32.mrf.mxu0
    %v574 = vadd.f32 0.0, %v573
    %v575 = vpop.f32.mrf.mxu0
    %576 = vmatprep.mubr.bf16.mxu0 0
    %577 = vmatmul.mubr.bf16.gmra.mxu0 %v369
    %v578 = vpop.f32.mrf.mxu0
    %v579 = vadd.f32 0.0, %v578
    %v580 = vpop.f32.mrf.mxu0
    %v581 = vpop.f32.mrf.mxu0
    %v582 = vadd.f32 0.0, %v581
    %v583 = vpop.f32.mrf.mxu0
    %584 = vmatprep.mubr.bf16.mxu0 0
    %585 = vmatmul.mubr.bf16.gmra.mxu0 %v370
    %v586 = vpop.f32.mrf.mxu0
    %v587 = vadd.f32 0.0, %v586
    %v588 = vpop.f32.mrf.mxu0
    %v589 = vpop.f32.mrf.mxu0
    %v590 = vadd.f32 0.0, %v589
    %v591 = vpop.f32.mrf.mxu0
    %592 = vmatprep.mubr.bf16.mxu0 0
    %593 = vmatmul.mubr.bf16.gmra.mxu0 %v371
    %v594 = vpop.f32.mrf.mxu0
    %v595 = vadd.f32 0.0, %v594
    %v596 = vpop.f32.mrf.mxu0
    %v597 = vpop.f32.mrf.mxu0
    %v598 = vadd.f32 0.0, %v597
    %v599 = vpop.f32.mrf.mxu0
    %600 = vmatprep.mubr.bf16.mxu0 0
    %601 = vmatmul.mubr.bf16.gmra.mxu0 %v372
    %v602 = vpop.f32.mrf.mxu0
    %v603 = vadd.f32 0.0, %v602
    %v604 = vpop.f32.mrf.mxu0
    %v605 = vpop.f32.mrf.mxu0
    %v606 = vadd.f32 0.0, %v605
    %v607 = vpop.f32.mrf.mxu0
    %608 = vmatprep.mubr.bf16.mxu0 0
    %609 = vmatmul.mubr.bf16.gmra.mxu0 %v373
    %v610 = vpop.f32.mrf.mxu0
    %v611 = vadd.f32 0.0, %v610
    %v612 = vpop.f32.mrf.mxu0
    %v613 = vpop.f32.mrf.mxu0
    %v614 = vadd.f32 0.0, %v613
    %v615 = vpop.f32.mrf.mxu0
    %616 = vmatprep.mubr.bf16.mxu0 0
    %617 = vmatmul.mubr.bf16.gmra.mxu0 %v374
    %v618 = vpop.f32.mrf.mxu0
    %v619 = vadd.f32 0.0, %v618
    %v620 = vpop.f32.mrf.mxu0
    %v621 = vpop.f32.mrf.mxu0
    %v622 = vadd.f32 0.0, %v621
    %v623 = vpop.f32.mrf.mxu0
    %624 = vmatprep.mubr.bf16.mxu0 0
    %625 = vmatmul.mubr.bf16.gmra.mxu0 %v375
    %v626 = vpop.f32.mrf.mxu0
    %v627 = vadd.f32 0.0, %v626
    %v628 = vpop.f32.mrf.mxu0
    %v629 = vpop.f32.mrf.mxu0
    %v630 = vadd.f32 0.0, %v629
    %v631 = vpop.f32.mrf.mxu0
    %632 = vmatprep.mubr.bf16.mxu0 0
    %633 = vmatmul.mubr.bf16.gmra.mxu0 %v376
    %v634 = vpop.f32.mrf.mxu0
    %v635 = vadd.f32 0.0, %v634
    %v636 = vpop.f32.mrf.mxu0
    %v637 = vpop.f32.mrf.mxu0
    %v638 = vadd.f32 0.0, %v637
    %v639 = vpop.f32.mrf.mxu0
    %640 = vmatprep.mubr.bf16.mxu0 0
    %641 = vmatmul.mubr.bf16.gmra.mxu0 %v377
    %v642 = vpop.f32.mrf.mxu0
    %v643 = vadd.f32 0.0, %v642
    %v644 = vpop.f32.mrf.mxu0
    %v645 = vpop.f32.mrf.mxu0
    %v646 = vadd.f32 0.0, %v645
    %v647 = vpop.f32.mrf.mxu0
    %648 = vmatprep.mubr.bf16.mxu0 0
    %649 = vmatmul.mubr.bf16.gmra.mxu0 %v378
    %v650 = vpop.f32.mrf.mxu0
    %v651 = vadd.f32 0.0, %v650
    %v652 = vpop.f32.mrf.mxu0
    %v653 = vpop.f32.mrf.mxu0
    %v654 = vadd.f32 0.0, %v653
    %v655 = vpop.f32.mrf.mxu0
    %656 = vmatprep.mubr.bf16.mxu0 0
    %657 = vmatmul.mubr.bf16.gmra.mxu0 %v379
    %v658 = vpop.f32.mrf.mxu0
    %v659 = vadd.f32 0.0, %v658
    %v660 = vpop.f32.mrf.mxu0
    %v661 = vpop.f32.mrf.mxu0
    %v662 = vadd.f32 0.0, %v661
    %v663 = vpop.f32.mrf.mxu0
    %664 = vmatprep.mubr.bf16.mxu0 0
    %665 = vmatmul.mubr.bf16.gmra.mxu0 %v380
    %v666 = vpop.f32.mrf.mxu0
    %v667 = vadd.f32 0.0, %v666
    %v668 = vpop.f32.mrf.mxu0
    %v669 = vpop.f32.mrf.mxu0
    %v670 = vadd.f32 0.0, %v669
    %v671 = vpop.f32.mrf.mxu0
    %672 = vmatprep.mubr.bf16.mxu0 0
    %673 = vmatmul.mubr.bf16.gmra.mxu0 %v381
    %v674 = vpop.f32.mrf.mxu0
    %v675 = vadd.f32 0.0, %v674
    %v676 = vpop.f32.mrf.mxu0
    %v677 = vpop.f32.mrf.mxu0
    %v678 = vadd.f32 0.0, %v677
    %v679 = vpop.f32.mrf.mxu0
    %680 = vmatprep.mubr.bf16.mxu0 0
    %681 = vmatmul.mubr.bf16.gmra.mxu0 %v382
    %v682 = vpop.f32.mrf.mxu0
    %v683 = vadd.f32 0.0, %v682
    %v684 = vpop.f32.mrf.mxu0
    %v685 = vpop.f32.mrf.mxu0
    %v686 = vadd.f32 0.0, %v685
    %v687 = vpop.f32.mrf.mxu0
    %688 = vmatprep.mubr.bf16.mxu0 0
    %689 = vmatmul.mubr.bf16.gmra.mxu0 %v383
    %v690 = vpop.f32.mrf.mxu0
    %v691 = vadd.f32 0.0, %v690
    %v692 = vpop.f32.mrf.mxu0
    %v693 = vpop.f32.mrf.mxu0
    %v694 = vadd.f32 0.0, %v693
    %v695 = vpop.f32.mrf.mxu0
    %696 = vmatprep.mubr.bf16.mxu0 0
    %697 = vmatmul.mubr.bf16.gmra.mxu0 %v384
    %v698 = vpop.f32.mrf.mxu0
    %v699 = vadd.f32 0.0, %v698
    %v700 = vpop.f32.mrf.mxu0
    %v701 = vpop.f32.mrf.mxu0
    %v702 = vadd.f32 0.0, %v701
    %v703 = vpop.f32.mrf.mxu0
    %704 = vmatprep.mubr.bf16.mxu0 0
    %705 = vmatmul.mubr.bf16.gmra.mxu0 %v385
    %v706 = vpop.f32.mrf.mxu0
    %v707 = vadd.f32 0.0, %v706
    %v708 = vpop.f32.mrf.mxu0
    %v709 = vpop.f32.mrf.mxu0
    %v710 = vadd.f32 0.0, %v709
    %v711 = vpop.f32.mrf.mxu0
    %712 = vmatprep.mubr.bf16.mxu0 0
    %713 = vmatmul.mubr.bf16.gmra.mxu0 %v386
    %v714 = vpop.f32.mrf.mxu0
    %v715 = vadd.f32 0.0, %v714
    %v716 = vpop.f32.mrf.mxu0
    %v717 = vpop.f32.mrf.mxu0
    %v718 = vadd.f32 0.0, %v717
    %v719 = vpop.f32.mrf.mxu0
    %720 = vmatprep.mubr.bf16.mxu0 0
    %721 = vmatmul.mubr.bf16.gmra.mxu0 %v387
    %v722 = vpop.f32.mrf.mxu0
    %v723 = vadd.f32 0.0, %v722
    %v724 = vpop.f32.mrf.mxu0
    %v725 = vpop.f32.mrf.mxu0
    %v726 = vadd.f32 0.0, %v725
    %v727 = vpop.f32.mrf.mxu0
    %728 = vmatprep.mubr.bf16.mxu0 0
    %729 = vmatmul.mubr.bf16.gmra.mxu0 %v388
    %v730 = vpop.f32.mrf.mxu0
    %v731 = vadd.f32 0.0, %v730
    %v732 = vpop.f32.mrf.mxu0
    %v733 = vpop.f32.mrf.mxu0
    %v734 = vadd.f32 0.0, %v733
    %v735 = vpop.f32.mrf.mxu0
    %736 = vmatprep.mubr.bf16.mxu0 0
    %737 = vmatmul.mubr.bf16.gmra.mxu0 %v389
    %v738 = vpop.f32.mrf.mxu0
    %v739 = vadd.f32 0.0, %v738
    %v740 = vpop.f32.mrf.mxu0
    %v741 = vpop.f32.mrf.mxu0
    %v742 = vadd.f32 0.0, %v741
    %v743 = vpop.f32.mrf.mxu0
    %744 = vmatprep.mubr.bf16.mxu0 0
    %745 = vmatmul.mubr.bf16.gmra.mxu0 %v390
    %v746 = vpop.f32.mrf.mxu0
    %v747 = vadd.f32 0.0, %v746
    %v748 = vpop.f32.mrf.mxu0
    %v749 = vpop.f32.mrf.mxu0
    %v750 = vadd.f32 0.0, %v749
    %v751 = vpop.f32.mrf.mxu0
    %752 = vmatprep.mubr.bf16.mxu0 0
    %753 = vmatmul.mubr.bf16.gmra.mxu0 %v391
    %v754 = vpop.f32.mrf.mxu0
    %v755 = vadd.f32 0.0, %v754
    %v756 = vpop.f32.mrf.mxu0
    %v757 = vpop.f32.mrf.mxu0
    %v758 = vadd.f32 0.0, %v757
    %v759 = vpop.f32.mrf.mxu0
    %760 = vdwg.mxu0
    %v761 = vadd.f32 %v88, %v507
    %v762 = vadd.f32 %v89, %v510
    %v763 = vadd.f32 %v90, %v515
    %v764 = vadd.f32 %v91, %v518
    %v765 = vadd.f32 %v92, %v523
    %v766 = vadd.f32 %v93, %v526
    %v767 = vadd.f32 %v94, %v531
    %v768 = vadd.f32 %v95, %v534
    %v769 = vadd.f32 %v96, %v539
    %v770 = vadd.f32 %v97, %v542
    %v771 = vadd.f32 %v98, %v547
    %v772 = vadd.f32 %v99, %v550
    %v773 = vadd.f32 %v100, %v555
    %v774 = vadd.f32 %v101, %v558
    %v775 = vadd.f32 %v102, %v563
    %v776 = vadd.f32 %v103, %v566
    %v777 = vadd.f32 %v104, %v571
    %v778 = vadd.f32 %v105, %v574
    %v779 = vadd.f32 %v106, %v579
    %v780 = vadd.f32 %v107, %v582
    %v781 = vadd.f32 %v108, %v587
    %v782 = vadd.f32 %v109, %v590
    %v783 = vadd.f32 %v110, %v595
    %v784 = vadd.f32 %v111, %v598
    %v785 = vadd.f32 %v112, %v603
    %v786 = vadd.f32 %v113, %v606
    %v787 = vadd.f32 %v114, %v611
    %v788 = vadd.f32 %v115, %v614
    %v789 = vadd.f32 %v116, %v619
    %v790 = vadd.f32 %v117, %v622
    %v791 = vadd.f32 %v118, %v627
    %v792 = vadd.f32 %v119, %v630
    %v793 = vadd.f32 %v120, %v635
    %v794 = vadd.f32 %v121, %v638
    %v795 = vadd.f32 %v122, %v643
    %v796 = vadd.f32 %v123, %v646
    %v797 = vadd.f32 %v124, %v651
    %v798 = vadd.f32 %v125, %v654
    %v799 = vadd.f32 %v126, %v659
    %v800 = vadd.f32 %v127, %v662
    %v801 = vadd.f32 %v128, %v667
    %v802 = vadd.f32 %v129, %v670
    %v803 = vadd.f32 %v130, %v675
    %v804 = vadd.f32 %v131, %v678
    %v805 = vadd.f32 %v132, %v683
    %v806 = vadd.f32 %v133, %v686
    %v807 = vadd.f32 %v134, %v691
    %v808 = vadd.f32 %v135, %v694
    %v809 = vadd.f32 %v136, %v699
    %v810 = vadd.f32 %v137, %v702
    %v811 = vadd.f32 %v138, %v707
    %v812 = vadd.f32 %v139, %v710
    %v813 = vadd.f32 %v140, %v715
    %v814 = vadd.f32 %v141, %v718
    %v815 = vadd.f32 %v142, %v723
    %v816 = vadd.f32 %v143, %v726
    %v817 = vadd.f32 %v144, %v731
    %v818 = vadd.f32 %v145, %v734
    %v819 = vadd.f32 %v146, %v739
    %v820 = vadd.f32 %v147, %v742
    %v821 = vadd.f32 %v148, %v747
    %v822 = vadd.f32 %v149, %v750
    %v823 = vadd.f32 %v150, %v755
    %v824 = vadd.f32 %v151, %v758
    %825 = vst [vmem:[#allocation2] sm:$0xff] %v761
    %826 = vst [vmem:[#allocation2 + $0x8] sm:$0xff] %v762
    %827 = vst [vmem:[#allocation2 + $0x10] sm:$0xff] %v763
    %828 = vst [vmem:[#allocation2 + $0x18] sm:$0xff] %v764
    %829 = vst [vmem:[#allocation2 + $0x20] sm:$0xff] %v765
    %830 = vst [vmem:[#allocation2 + $0x28] sm:$0xff] %v766
    %831 = vst [vmem:[#allocation2 + $0x30] sm:$0xff] %v767
    %832 = vst [vmem:[#allocation2 + $0x38] sm:$0xff] %v768
    %833 = vst [vmem:[#allocation2 + $0x40] sm:$0xff] %v769
    %834 = vst [vmem:[#allocation2 + $0x48] sm:$0xff] %v770
    %835 = vst [vmem:[#allocation2 + $0x50] sm:$0xff] %v771
    %836 = vst [vmem:[#allocation2 + $0x58] sm:$0xff] %v772
    %837 = vst [vmem:[#allocation2 + $0x60] sm:$0xff] %v773
    %838 = vst [vmem:[#allocation2 + $0x68] sm:$0xff] %v774
    %839 = vst [vmem:[#allocation2 + $0x70] sm:$0xff] %v775
    %840 = vst [vmem:[#allocation2 + $0x78] sm:$0xff] %v776
    %841 = vst [vmem:[#allocation2 + $0x80] sm:$0xff] %v777
    %842 = vst [vmem:[#allocation2 + $0x88] sm:$0xff] %v778
    %843 = vst [vmem:[#allocation2 + $0x90] sm:$0xff] %v779
    %844 = vst [vmem:[#allocation2 + $0x98] sm:$0xff] %v780
    %845 = vst [vmem:[#allocation2 + $0xa0] sm:$0xff] %v781
    %846 = vst [vmem:[#allocation2 + $0xa8] sm:$0xff] %v782
    %847 = vst [vmem:[#allocation2 + $0xb0] sm:$0xff] %v783
    %848 = vst [vmem:[#allocation2 + $0xb8] sm:$0xff] %v784
    %849 = vst [vmem:[#allocation2 + $0xc0] sm:$0xff] %v785
    %850 = vst [vmem:[#allocation2 + $0xc8] sm:$0xff] %v786
    %851 = vst [vmem:[#allocation2 + $0xd0] sm:$0xff] %v787
    %852 = vst [vmem:[#allocation2 + $0xd8] sm:$0xff] %v788
    %853 = vst [vmem:[#allocation2 + $0xe0] sm:$0xff] %v789
    %854 = vst [vmem:[#allocation2 + $0xe8] sm:$0xff] %v790
    %855 = vst [vmem:[#allocation2 + $0xf0] sm:$0xff] %v791
    %856 = vst [vmem:[#allocation2 + $0xf8] sm:$0xff] %v792
    %857 = vst [vmem:[#allocation2 + $0x100] sm:$0xff] %v793
    %858 = vst [vmem:[#allocation2 + $0x108] sm:$0xff] %v794
    %859 = vst [vmem:[#allocation2 + $0x110] sm:$0xff] %v795
    %860 = vst [vmem:[#allocation2 + $0x118] sm:$0xff] %v796
    %861 = vst [vmem:[#allocation2 + $0x120] sm:$0xff] %v797
    %862 = vst [vmem:[#allocation2 + $0x128] sm:$0xff] %v798
    %863 = vst [vmem:[#allocation2 + $0x130] sm:$0xff] %v799
    %864 = vst [vmem:[#allocation2 + $0x138] sm:$0xff] %v800
    %865 = vst [vmem:[#allocation2 + $0x140] sm:$0xff] %v801
    %866 = vst [vmem:[#allocation2 + $0x148] sm:$0xff] %v802
    %867 = vst [vmem:[#allocation2 + $0x150] sm:$0xff] %v803
    %868 = vst [vmem:[#allocation2 + $0x158] sm:$0xff] %v804
    %869 = vst [vmem:[#allocation2 + $0x160] sm:$0xff] %v805
    %870 = vst [vmem:[#allocation2 + $0x168] sm:$0xff] %v806
    %871 = vst [vmem:[#allocation2 + $0x170] sm:$0xff] %v807
    %872 = vst [vmem:[#allocation2 + $0x178] sm:$0xff] %v808
    %873 = vst [vmem:[#allocation2 + $0x180] sm:$0xff] %v809
    %874 = vst [vmem:[#allocation2 + $0x188] sm:$0xff] %v810
    %875 = vst [vmem:[#allocation2 + $0x190] sm:$0xff] %v811
    %876 = vst [vmem:[#allocation2 + $0x198] sm:$0xff] %v812
    %877 = vst [vmem:[#allocation2 + $0x1a0] sm:$0xff] %v813
    %878 = vst [vmem:[#allocation2 + $0x1a8] sm:$0xff] %v814
    %879 = vst [vmem:[#allocation2 + $0x1b0] sm:$0xff] %v815
    %880 = vst [vmem:[#allocation2 + $0x1b8] sm:$0xff] %v816
    %881 = vst [vmem:[#allocation2 + $0x1c0] sm:$0xff] %v817
    %882 = vst [vmem:[#allocation2 + $0x1c8] sm:$0xff] %v818
    %883 = vst [vmem:[#allocation2 + $0x1d0] sm:$0xff] %v819
    %884 = vst [vmem:[#allocation2 + $0x1d8] sm:$0xff] %v820
    %885 = vst [vmem:[#allocation2 + $0x1e0] sm:$0xff] %v821
    %886 = vst [vmem:[#allocation2 + $0x1e8] sm:$0xff] %v822
    %887 = vst [vmem:[#allocation2 + $0x1f0] sm:$0xff] %v823
    %888 = vst [vmem:[#allocation2 + $0x1f8] sm:$0xff] %v824
    // Predicated region
    $region18: #{unet3d_forward.73} parent=1 // pred_check
      %p889 = pneg %p20
    $region19: #{unet3d_forward.73} parent=1 // pred_check_branch
      %891 = sbr.rel (%p889) target = $region21
    $region20: #{unet3d_forward.73} parent=1 // pred_region
      %v892 = vld [vmem:[#allocation2] sm:$0xff]
      %v893 = vld [vmem:[#allocation2 + $0x8] sm:$0xff]
      %v894 = vld [vmem:[#allocation2 + $0x10] sm:$0xff]
      %v895 = vld [vmem:[#allocation2 + $0x18] sm:$0xff]
      %v896 = vld [vmem:[#allocation2 + $0x20] sm:$0xff]
      %v897 = vld [vmem:[#allocation2 + $0x28] sm:$0xff]
      %v898 = vld [vmem:[#allocation2 + $0x30] sm:$0xff]
      %v899 = vld [vmem:[#allocation2 + $0x38] sm:$0xff]
      %v900 = vld [vmem:[#allocation2 + $0x40] sm:$0xff]
      %v901 = vld [vmem:[#allocation2 + $0x48] sm:$0xff]
      %v902 = vld [vmem:[#allocation2 + $0x50] sm:$0xff]
      %v903 = vld [vmem:[#allocation2 + $0x58] sm:$0xff]
      %v904 = vld [vmem:[#allocation2 + $0x60] sm:$0xff]
      %v905 = vld [vmem:[#allocation2 + $0x68] sm:$0xff]
      %v906 = vld [vmem:[#allocation2 + $0x70] sm:$0xff]
      %v907 = vld [vmem:[#allocation2 + $0x78] sm:$0xff]
      %v908 = vld [vmem:[#allocation2 + $0x80] sm:$0xff]
      %v909 = vld [vmem:[#allocation2 + $0x88] sm:$0xff]
      %v910 = vld [vmem:[#allocation2 + $0x90] sm:$0xff]
      %v911 = vld [vmem:[#allocation2 + $0x98] sm:$0xff]
      %v912 = vld [vmem:[#allocation2 + $0xa0] sm:$0xff]
      %v913 = vld [vmem:[#allocation2 + $0xa8] sm:$0xff]
      %v914 = vld [vmem:[#allocation2 + $0xb0] sm:$0xff]
      %v915 = vld [vmem:[#allocation2 + $0xb8] sm:$0xff]
      %v916 = vld [vmem:[#allocation2 + $0xc0] sm:$0xff]
      %v917 = vld [vmem:[#allocation2 + $0xc8] sm:$0xff]
      %v918 = vld [vmem:[#allocation2 + $0xd0] sm:$0xff]
      %v919 = vld [vmem:[#allocation2 + $0xd8] sm:$0xff]
      %v920 = vld [vmem:[#allocation2 + $0xe0] sm:$0xff]
      %v921 = vld [vmem:[#allocation2 + $0xe8] sm:$0xff]
      %v922 = vld [vmem:[#allocation2 + $0xf0] sm:$0xff]
      %v923 = vld [vmem:[#allocation2 + $0xf8] sm:$0xff]
      %v924 = vld [vmem:[#allocation2 + $0x100] sm:$0xff]
      %v925 = vld [vmem:[#allocation2 + $0x108] sm:$0xff]
      %v926 = vld [vmem:[#allocation2 + $0x110] sm:$0xff]
      %v927 = vld [vmem:[#allocation2 + $0x118] sm:$0xff]
      %v928 = vld [vmem:[#allocation2 + $0x120] sm:$0xff]
      %v929 = vld [vmem:[#allocation2 + $0x128] sm:$0xff]
      %v930 = vld [vmem:[#allocation2 + $0x130] sm:$0xff]
      %v931 = vld [vmem:[#allocation2 + $0x138] sm:$0xff]
      %v932 = vld [vmem:[#allocation2 + $0x140] sm:$0xff]
      %v933 = vld [vmem:[#allocation2 + $0x148] sm:$0xff]
      %v934 = vld [vmem:[#allocation2 + $0x150] sm:$0xff]
      %v935 = vld [vmem:[#allocation2 + $0x158] sm:$0xff]
      %v936 = vld [vmem:[#allocation2 + $0x160] sm:$0xff]
      %v937 = vld [vmem:[#allocation2 + $0x168] sm:$0xff]
      %v938 = vld [vmem:[#allocation2 + $0x170] sm:$0xff]
      %v939 = vld [vmem:[#allocation2 + $0x178] sm:$0xff]
      %v940 = vld [vmem:[#allocation2 + $0x180] sm:$0xff]
      %v941 = vld [vmem:[#allocation2 + $0x188] sm:$0xff]
      %v942 = vld [vmem:[#allocation2 + $0x190] sm:$0xff]
      %v943 = vld [vmem:[#allocation2 + $0x198] sm:$0xff]
      %v944 = vld [vmem:[#allocation2 + $0x1a0] sm:$0xff]
      %v945 = vld [vmem:[#allocation2 + $0x1a8] sm:$0xff]
      %v946 = vld [vmem:[#allocation2 + $0x1b0] sm:$0xff]
      %v947 = vld [vmem:[#allocation2 + $0x1b8] sm:$0xff]
      %v948 = vld [vmem:[#allocation2 + $0x1c0] sm:$0xff]
      %v949 = vld [vmem:[#allocation2 + $0x1c8] sm:$0xff]
      %v950 = vld [vmem:[#allocation2 + $0x1d0] sm:$0xff]
      %v951 = vld [vmem:[#allocation2 + $0x1d8] sm:$0xff]
      %v952 = vld [vmem:[#allocation2 + $0x1e0] sm:$0xff]
      %v953 = vld [vmem:[#allocation2 + $0x1e8] sm:$0xff]
      %v954 = vld [vmem:[#allocation2 + $0x1f0] sm:$0xff]
      %v955 = vld [vmem:[#allocation2 + $0x1f8] sm:$0xff]
      %v956 = vld [vmem:[%s2] sm:$0x1]
      %v958 = vlaneseq
      %v959 = vshrl.u32 %v958, 7
      %v960 = vsub.s32 0, %v959
      %v961 = vrot.slane %v956, %v960
      %v963 = vadd.f32 %v892, %v961
      %v964 = vadd.f32 %v893, %v961
      %v965 = vadd.f32 %v894, %v961
      %v966 = vadd.f32 %v895, %v961
      %v967 = vadd.f32 %v896, %v961
      %v968 = vadd.f32 %v897, %v961
      %v969 = vadd.f32 %v898, %v961
      %v970 = vadd.f32 %v899, %v961
      %v971 = vadd.f32 %v900, %v961
      %v972 = vadd.f32 %v901, %v961
      %v973 = vadd.f32 %v902, %v961
      %v974 = vadd.f32 %v903, %v961
      %v975 = vadd.f32 %v904, %v961
      %v976 = vadd.f32 %v905, %v961
      %v977 = vadd.f32 %v906, %v961
      %v978 = vadd.f32 %v907, %v961
      %v979 = vadd.f32 %v908, %v961
      %v980 = vadd.f32 %v909, %v961
      %v981 = vadd.f32 %v910, %v961
      %v982 = vadd.f32 %v911, %v961
      %v983 = vadd.f32 %v912, %v961
      %v984 = vadd.f32 %v913, %v961
      %v985 = vadd.f32 %v914, %v961
      %v986 = vadd.f32 %v915, %v961
      %v987 = vadd.f32 %v916, %v961
      %v988 = vadd.f32 %v917, %v961
      %v989 = vadd.f32 %v918, %v961
      %v990 = vadd.f32 %v919, %v961
      %v991 = vadd.f32 %v920, %v961
      %v992 = vadd.f32 %v921, %v961
      %v993 = vadd.f32 %v922, %v961
      %v994 = vadd.f32 %v923, %v961
      %v995 = vadd.f32 %v924, %v961
      %v996 = vadd.f32 %v925, %v961
      %v997 = vadd.f32 %v926, %v961
      %v998 = vadd.f32 %v927, %v961
      %v999 = vadd.f32 %v928, %v961
      %v1000 = vadd.f32 %v929, %v961
      %v1001 = vadd.f32 %v930, %v961
      %v1002 = vadd.f32 %v931, %v961
      %v1003 = vadd.f32 %v932, %v961
      %v1004 = vadd.f32 %v933, %v961
      %v1005 = vadd.f32 %v934, %v961
      %v1006 = vadd.f32 %v935, %v961
      %v1007 = vadd.f32 %v936, %v961
      %v1008 = vadd.f32 %v937, %v961
      %v1009 = vadd.f32 %v938, %v961
      %v1010 = vadd.f32 %v939, %v961
      %v1011 = vadd.f32 %v940, %v961
      %v1012 = vadd.f32 %v941, %v961
      %v1013 = vadd.f32 %v942, %v961
      %v1014 = vadd.f32 %v943, %v961
      %v1015 = vadd.f32 %v944, %v961
      %v1016 = vadd.f32 %v945, %v961
      %v1017 = vadd.f32 %v946, %v961
      %v1018 = vadd.f32 %v947, %v961
      %v1019 = vadd.f32 %v948, %v961
      %v1020 = vadd.f32 %v949, %v961
      %v1021 = vadd.f32 %v950, %v961
      %v1022 = vadd.f32 %v951, %v961
      %v1023 = vadd.f32 %v952, %v961
      %v1024 = vadd.f32 %v953, %v961
      %v1025 = vadd.f32 %v954, %v961
      %v1026 = vadd.f32 %v955, %v961
      %1027 = vst [vmem:[%s3] sm:$0xff] %v963
      %1028 = vst [vmem:[%s3 + $0x8] sm:$0xff] %v964
      %1029 = vst [vmem:[%s3 + $0x10] sm:$0xff] %v965
      %1030 = vst [vmem:[%s3 + $0x18] sm:$0xff] %v966
      %1031 = vst [vmem:[%s3 + $0x20] sm:$0xff] %v967
      %1032 = vst [vmem:[%s3 + $0x28] sm:$0xff] %v968
      %1033 = vst [vmem:[%s3 + $0x30] sm:$0xff] %v969
      %1034 = vst [vmem:[%s3 + $0x38] sm:$0xff] %v970
      %1035 = vst [vmem:[%s3 + $0x40] sm:$0xff] %v971
      %1036 = vst [vmem:[%s3 + $0x48] sm:$0xff] %v972
      %1037 = vst [vmem:[%s3 + $0x50] sm:$0xff] %v973
      %1038 = vst [vmem:[%s3 + $0x58] sm:$0xff] %v974
      %1039 = vst [vmem:[%s3 + $0x60] sm:$0xff] %v975
      %1040 = vst [vmem:[%s3 + $0x68] sm:$0xff] %v976
      %1041 = vst [vmem:[%s3 + $0x70] sm:$0xff] %v977
      %1042 = vst [vmem:[%s3 + $0x78] sm:$0xff] %v978
      %1043 = vst [vmem:[%s3 + $0x80] sm:$0xff] %v979
      %1044 = vst [vmem:[%s3 + $0x88] sm:$0xff] %v980
      %1045 = vst [vmem:[%s3 + $0x90] sm:$0xff] %v981
      %1046 = vst [vmem:[%s3 + $0x98] sm:$0xff] %v982
      %1047 = vst [vmem:[%s3 + $0xa0] sm:$0xff] %v983
      %1048 = vst [vmem:[%s3 + $0xa8] sm:$0xff] %v984
      %1049 = vst [vmem:[%s3 + $0xb0] sm:$0xff] %v985
      %1050 = vst [vmem:[%s3 + $0xb8] sm:$0xff] %v986
      %1051 = vst [vmem:[%s3 + $0xc0] sm:$0xff] %v987
      %1052 = vst [vmem:[%s3 + $0xc8] sm:$0xff] %v988
      %1053 = vst [vmem:[%s3 + $0xd0] sm:$0xff] %v989
      %1054 = vst [vmem:[%s3 + $0xd8] sm:$0xff] %v990
      %1055 = vst [vmem:[%s3 + $0xe0] sm:$0xff] %v991
      %1056 = vst [vmem:[%s3 + $0xe8] sm:$0xff] %v992
      %1057 = vst [vmem:[%s3 + $0xf0] sm:$0xff] %v993
      %1058 = vst [vmem:[%s3 + $0xf8] sm:$0xff] %v994
      %1059 = vst [vmem:[%s3 + $0x100] sm:$0xff] %v995
      %1060 = vst [vmem:[%s3 + $0x108] sm:$0xff] %v996
      %1061 = vst [vmem:[%s3 + $0x110] sm:$0xff] %v997
      %1062 = vst [vmem:[%s3 + $0x118] sm:$0xff] %v998
      %1063 = vst [vmem:[%s3 + $0x120] sm:$0xff] %v999
      %1064 = vst [vmem:[%s3 + $0x128] sm:$0xff] %v1000
      %1065 = vst [vmem:[%s3 + $0x130] sm:$0xff] %v1001
      %1066 = vst [vmem:[%s3 + $0x138] sm:$0xff] %v1002
      %1067 = vst [vmem:[%s3 + $0x140] sm:$0xff] %v1003
      %1068 = vst [vmem:[%s3 + $0x148] sm:$0xff] %v1004
      %1069 = vst [vmem:[%s3 + $0x150] sm:$0xff] %v1005
      %1070 = vst [vmem:[%s3 + $0x158] sm:$0xff] %v1006
      %1071 = vst [vmem:[%s3 + $0x160] sm:$0xff] %v1007
      %1072 = vst [vmem:[%s3 + $0x168] sm:$0xff] %v1008
      %1073 = vst [vmem:[%s3 + $0x170] sm:$0xff] %v1009
      %1074 = vst [vmem:[%s3 + $0x178] sm:$0xff] %v1010
      %1075 = vst [vmem:[%s3 + $0x180] sm:$0xff] %v1011
      %1076 = vst [vmem:[%s3 + $0x188] sm:$0xff] %v1012
      %1077 = vst [vmem:[%s3 + $0x190] sm:$0xff] %v1013
      %1078 = vst [vmem:[%s3 + $0x198] sm:$0xff] %v1014
      %1079 = vst [vmem:[%s3 + $0x1a0] sm:$0xff] %v1015
      %1080 = vst [vmem:[%s3 + $0x1a8] sm:$0xff] %v1016
      %1081 = vst [vmem:[%s3 + $0x1b0] sm:$0xff] %v1017
      %1082 = vst [vmem:[%s3 + $0x1b8] sm:$0xff] %v1018
      %1083 = vst [vmem:[%s3 + $0x1c0] sm:$0xff] %v1019
      %1084 = vst [vmem:[%s3 + $0x1c8] sm:$0xff] %v1020
      %1085 = vst [vmem:[%s3 + $0x1d0] sm:$0xff] %v1021
      %1086 = vst [vmem:[%s3 + $0x1d8] sm:$0xff] %v1022
      %1087 = vst [vmem:[%s3 + $0x1e0] sm:$0xff] %v1023
      %1088 = vst [vmem:[%s3 + $0x1e8] sm:$0xff] %v1024
      %1089 = vst [vmem:[%s3 + $0x1f0] sm:$0xff] %v1025
      %1090 = vst [vmem:[%s3 + $0x1f8] sm:$0xff] %v1026
      %v1091 = vadd.f32 %v963, %v964
      %v1092 = vadd.f32 %v1091, %v965
      %v1093 = vadd.f32 %v1092, %v966
      %v1094 = vadd.f32 %v1093, %v967
      %v1095 = vadd.f32 %v1094, %v968
      %v1096 = vadd.f32 %v1095, %v969
      %v1097 = vadd.f32 %v1096, %v970
      %v1098 = vadd.f32 %v1097, %v971
      %v1099 = vadd.f32 %v1098, %v972
      %v1100 = vadd.f32 %v1099, %v973
      %v1101 = vadd.f32 %v1100, %v974
      %v1102 = vadd.f32 %v1101, %v975
      %v1103 = vadd.f32 %v1102, %v976
      %v1104 = vadd.f32 %v1103, %v977
      %v1105 = vadd.f32 %v1104, %v978
      %v1106 = vadd.f32 %v1105, %v979
      %v1107 = vadd.f32 %v1106, %v980
      %v1108 = vadd.f32 %v1107, %v981
      %v1109 = vadd.f32 %v1108, %v982
      %v1110 = vadd.f32 %v1109, %v983
      %v1111 = vadd.f32 %v1110, %v984
      %v1112 = vadd.f32 %v1111, %v985
      %v1113 = vadd.f32 %v1112, %v986
      %v1114 = vadd.f32 %v1113, %v987
      %v1115 = vadd.f32 %v1114, %v988
      %v1116 = vadd.f32 %v1115, %v989
      %v1117 = vadd.f32 %v1116, %v990
      %v1118 = vadd.f32 %v1117, %v991
      %v1119 = vadd.f32 %v1118, %v992
      %v1120 = vadd.f32 %v1119, %v993
      %v1121 = vadd.f32 %v1120, %v994
      %v1122 = vadd.f32 %v1121, %v995
      %v1123 = vadd.f32 %v1122, %v996
      %v1124 = vadd.f32 %v1123, %v997
      %v1125 = vadd.f32 %v1124, %v998
      %v1126 = vadd.f32 %v1125, %v999
      %v1127 = vadd.f32 %v1126, %v1000
      %v1128 = vadd.f32 %v1127, %v1001
      %v1129 = vadd.f32 %v1128, %v1002
      %v1130 = vadd.f32 %v1129, %v1003
      %v1131 = vadd.f32 %v1130, %v1004
      %v1132 = vadd.f32 %v1131, %v1005
      %v1133 = vadd.f32 %v1132, %v1006
      %v1134 = vadd.f32 %v1133, %v1007
      %v1135 = vadd.f32 %v1134, %v1008
      %v1136 = vadd.f32 %v1135, %v1009
      %v1137 = vadd.f32 %v1136, %v1010
      %v1138 = vadd.f32 %v1137, %v1011
      %v1139 = vadd.f32 %v1138, %v1012
      %v1140 = vadd.f32 %v1139, %v1013
      %v1141 = vadd.f32 %v1140, %v1014
      %v1142 = vadd.f32 %v1141, %v1015
      %v1143 = vadd.f32 %v1142, %v1016
      %v1144 = vadd.f32 %v1143, %v1017
      %v1145 = vadd.f32 %v1144, %v1018
      %v1146 = vadd.f32 %v1145, %v1019
      %v1147 = vadd.f32 %v1146, %v1020
      %v1148 = vadd.f32 %v1147, %v1021
      %v1149 = vadd.f32 %v1148, %v1022
      %v1150 = vadd.f32 %v1149, %v1023
      %v1151 = vadd.f32 %v1150, %v1024
      %v1152 = vadd.f32 %v1151, %v1025
      %v1153 = vadd.f32 %v1152, %v1026
      %v1154 = vrot.slane %v1153, 4
      %v1155 = vadd.f32 %v1153, %v1154
      %v1156 = vrot.slane %v1155, 2
      %v1157 = vadd.f32 %v1155, %v1156
      %v1158 = vrot.slane %v1157, 1
      %v1159 = vadd.f32 %v1157, %v1158
      %1160 = vst [vmem:[#allocation3] sm:$0xff] %v1159
      %v1161 = vmul.f32 %v963, %v963
      %v1162 = vmul.f32 %v964, %v964
      %v1163 = vmul.f32 %v965, %v965
      %v1164 = vmul.f32 %v966, %v966
      %v1165 = vmul.f32 %v967, %v967
      %v1166 = vmul.f32 %v968, %v968
      %v1167 = vmul.f32 %v969, %v969
      %v1168 = vmul.f32 %v970, %v970
      %v1169 = vmul.f32 %v971, %v971
      %v1170 = vmul.f32 %v972, %v972
      %v1171 = vmul.f32 %v973, %v973
      %v1172 = vmul.f32 %v974, %v974
      %v1173 = vmul.f32 %v975, %v975
      %v1174 = vmul.f32 %v976, %v976
      %v1175 = vmul.f32 %v977, %v977
      %v1176 = vmul.f32 %v978, %v978
      %v1177 = vmul.f32 %v979, %v979
      %v1178 = vmul.f32 %v980, %v980
      %v1179 = vmul.f32 %v981, %v981
      %v1180 = vmul.f32 %v982, %v982
      %v1181 = vmul.f32 %v983, %v983
      %v1182 = vmul.f32 %v984, %v984
      %v1183 = vmul.f32 %v985, %v985
      %v1184 = vmul.f32 %v986, %v986
      %v1185 = vmul.f32 %v987, %v987
      %v1186 = vmul.f32 %v988, %v988
      %v1187 = vmul.f32 %v989, %v989
      %v1188 = vmul.f32 %v990, %v990
      %v1189 = vmul.f32 %v991, %v991
      %v1190 = vmul.f32 %v992, %v992
      %v1191 = vmul.f32 %v993, %v993
      %v1192 = vmul.f32 %v994, %v994
      %v1193 = vmul.f32 %v995, %v995
      %v1194 = vmul.f32 %v996, %v996
      %v1195 = vmul.f32 %v997, %v997
      %v1196 = vmul.f32 %v998, %v998
      %v1197 = vmul.f32 %v999, %v999
      %v1198 = vmul.f32 %v1000, %v1000
      %v1199 = vmul.f32 %v1001, %v1001
      %v1200 = vmul.f32 %v1002, %v1002
      %v1201 = vmul.f32 %v1003, %v1003
      %v1202 = vmul.f32 %v1004, %v1004
      %v1203 = vmul.f32 %v1005, %v1005
      %v1204 = vmul.f32 %v1006, %v1006
      %v1205 = vmul.f32 %v1007, %v1007
      %v1206 = vmul.f32 %v1008, %v1008
      %v1207 = vmul.f32 %v1009, %v1009
      %v1208 = vmul.f32 %v1010, %v1010
      %v1209 = vmul.f32 %v1011, %v1011
      %v1210 = vmul.f32 %v1012, %v1012
      %v1211 = vmul.f32 %v1013, %v1013
      %v1212 = vmul.f32 %v1014, %v1014
      %v1213 = vmul.f32 %v1015, %v1015
      %v1214 = vmul.f32 %v1016, %v1016
      %v1215 = vmul.f32 %v1017, %v1017
      %v1216 = vmul.f32 %v1018, %v1018
      %v1217 = vmul.f32 %v1019, %v1019
      %v1218 = vmul.f32 %v1020, %v1020
      %v1219 = vmul.f32 %v1021, %v1021
      %v1220 = vmul.f32 %v1022, %v1022
      %v1221 = vmul.f32 %v1023, %v1023
      %v1222 = vmul.f32 %v1024, %v1024
      %v1223 = vmul.f32 %v1025, %v1025
      %v1224 = vmul.f32 %v1026, %v1026
      %v1225 = vadd.f32 %v1161, %v1162
      %v1226 = vadd.f32 %v1225, %v1163
      %v1227 = vadd.f32 %v1226, %v1164
      %v1228 = vadd.f32 %v1227, %v1165
      %v1229 = vadd.f32 %v1228, %v1166
      %v1230 = vadd.f32 %v1229, %v1167
      %v1231 = vadd.f32 %v1230, %v1168
      %v1232 = vadd.f32 %v1231, %v1169
      %v1233 = vadd.f32 %v1232, %v1170
      %v1234 = vadd.f32 %v1233, %v1171
      %v1235 = vadd.f32 %v1234, %v1172
      %v1236 = vadd.f32 %v1235, %v1173
      %v1237 = vadd.f32 %v1236, %v1174
      %v1238 = vadd.f32 %v1237, %v1175
      %v1239 = vadd.f32 %v1238, %v1176
      %v1240 = vadd.f32 %v1239, %v1177
      %v1241 = vadd.f32 %v1240, %v1178
      %v1242 = vadd.f32 %v1241, %v1179
      %v1243 = vadd.f32 %v1242, %v1180
      %v1244 = vadd.f32 %v1243, %v1181
      %v1245 = vadd.f32 %v1244, %v1182
      %v1246 = vadd.f32 %v1245, %v1183
      %v1247 = vadd.f32 %v1246, %v1184
      %v1248 = vadd.f32 %v1247, %v1185
      %v1249 = vadd.f32 %v1248, %v1186
      %v1250 = vadd.f32 %v1249, %v1187
      %v1251 = vadd.f32 %v1250, %v1188
      %v1252 = vadd.f32 %v1251, %v1189
      %v1253 = vadd.f32 %v1252, %v1190
      %v1254 = vadd.f32 %v1253, %v1191
      %v1255 = vadd.f32 %v1254, %v1192
      %v1256 = vadd.f32 %v1255, %v1193
      %v1257 = vadd.f32 %v1256, %v1194
      %v1258 = vadd.f32 %v1257, %v1195
      %v1259 = vadd.f32 %v1258, %v1196
      %v1260 = vadd.f32 %v1259, %v1197
      %v1261 = vadd.f32 %v1260, %v1198
      %v1262 = vadd.f32 %v1261, %v1199
      %v1263 = vadd.f32 %v1262, %v1200
      %v1264 = vadd.f32 %v1263, %v1201
      %v1265 = vadd.f32 %v1264, %v1202
      %v1266 = vadd.f32 %v1265, %v1203
      %v1267 = vadd.f32 %v1266, %v1204
      %v1268 = vadd.f32 %v1267, %v1205
      %v1269 = vadd.f32 %v1268, %v1206
      %v1270 = vadd.f32 %v1269, %v1207
      %v1271 = vadd.f32 %v1270, %v1208
      %v1272 = vadd.f32 %v1271, %v1209
      %v1273 = vadd.f32 %v1272, %v1210
      %v1274 = vadd.f32 %v1273, %v1211
      %v1275 = vadd.f32 %v1274, %v1212
      %v1276 = vadd.f32 %v1275, %v1213
      %v1277 = vadd.f32 %v1276, %v1214
      %v1278 = vadd.f32 %v1277, %v1215
      %v1279 = vadd.f32 %v1278, %v1216
      %v1280 = vadd.f32 %v1279, %v1217
      %v1281 = vadd.f32 %v1280, %v1218
      %v1282 = vadd.f32 %v1281, %v1219
      %v1283 = vadd.f32 %v1282, %v1220
      %v1284 = vadd.f32 %v1283, %v1221
      %v1285 = vadd.f32 %v1284, %v1222
      %v1286 = vadd.f32 %v1285, %v1223
      %v1287 = vadd.f32 %v1286, %v1224
      %v1288 = vrot.slane %v1287, 4
      %v1289 = vadd.f32 %v1287, %v1288
      %v1290 = vrot.slane %v1289, 2
      %v1291 = vadd.f32 %v1289, %v1290
      %v1292 = vrot.slane %v1291, 1
      %v1293 = vadd.f32 %v1291, %v1292
      %1294 = vst [vmem:[#allocation5] sm:$0xff] %v1293
    $region21: #{unet3d_forward.73} parent=1 // pred_fallthru
      _
    // Predicated region
    $region22: #{unet3d_forward.73} parent=1 // pred_check
      _
    $region23: #{unet3d_forward.73} parent=1 // pred_check_branch
      %1296 = sbr.rel (0) target = $region25
    $region24: #{unet3d_forward.73} parent=1 // pred_region
      _
    $region25: #{unet3d_forward.73} parent=1 // pred_fallthru
      _
    // Predicated region
    $region26: #{unet3d_forward.73} parent=1 // pred_check
      _
    $region27: #{unet3d_forward.73} parent=1 // pred_check_branch
      %1298 = sbr.rel (0) target = $region29
    $region28: #{unet3d_forward.73} parent=1 // pred_region
      %s1300 = ssub.s32 128, 128
      %1301 = vsyncadd [#allocation4], %s1300
      %s1303 = sshll.u32 [#allocation3], 4
      %s1304 = int_to_ptr.vmem [resolvable:$true] %s1303
      %1306 = dma.vmem_to_hbm [thread:$0]  %s1304, 128, %s4, [#allocation4]
    $region29: #{unet3d_forward.73} parent=1 // pred_fallthru
      _
    // Predicated region
    $region30: #{unet3d_forward.73} parent=1 // pred_check
      _
    $region31: #{unet3d_forward.73} parent=1 // pred_check_branch
      %1308 = sbr.rel (0) target = $region33
    $region32: #{unet3d_forward.73} parent=1 // pred_region
      %s1310 = ssub.s32 128, 128
      %1311 = vsyncadd [#allocation6], %s1310
      %s1313 = sshll.u32 [#allocation5], 4
      %s1314 = int_to_ptr.vmem [resolvable:$true] %s1313
      %1316 = dma.vmem_to_hbm [thread:$0]  %s1314, 128, %s5, [#allocation6]
    $region33: #{unet3d_forward.73} parent=1 // pred_fallthru
      _
    // Predicated region
    $region34: #{unet3d_forward.73} parent=1 // pred_check
      _
    $region35: #{unet3d_forward.73} parent=1 // pred_check_branch
      %1318 = sbr.rel (0) target = $region37
    $region36: #{unet3d_forward.73} parent=1 // pred_region
      _
    $region37: #{unet3d_forward.73} parent=1 // pred_fallthru
      _
    // Predicated region
    $region38: #{unet3d_forward.73} parent=1 // pred_check
      _
    $region39: #{unet3d_forward.73} parent=1 // pred_check_branch
      %1320 = sbr.rel (0) target = $region41
    $region40: #{unet3d_forward.73} parent=1 // pred_region
      %1321 = dma.done [#allocation4], 128
    $region41: #{unet3d_forward.73} parent=1 // pred_fallthru
      _
    // Predicated region
    $region42: #{unet3d_forward.73} parent=1 // pred_check
      _
    $region43: #{unet3d_forward.73} parent=1 // pred_check_branch
      %1323 = sbr.rel (0) target = $region45
    $region44: #{unet3d_forward.73} parent=1 // pred_region
      %1324 = dma.done [#allocation6], 128
    $region45: #{unet3d_forward.73} parent=1 // pred_fallthru
      _
    %1325 = vsyncpa [#allocation4], 1
    %1326 = vsyncpa [#allocation6], 1

</llo_original>
